<compile_context>
chip_gen: v7x
topology: tpu7x:2x2x1
jax: 0.10.0
libtpu: 0.0.40
codegen_flags: <defaults>
</compile_context>

<pallas_src>
import functools

import jax
import jax.numpy as jnp
from jax.experimental import pallas as pl
from jax.experimental.pallas import tpu as pltpu

CTRLSHAPE = (6, 6)
NCTRL = CTRLSHAPE[0] * CTRLSHAPE[1]        # 36
NPARAM = NCTRL + 2                         # 38


# ------------------------- GEMM (+bias, +activation) -------------------------

def _matmul_bias_act_kernel(x_ref, w_ref, b_ref, o_ref, *, act):
    y = jnp.dot(x_ref[...], w_ref[...], preferred_element_type=jnp.float32)
    y = y + b_ref[...]
    if act == "relu":
        y = jnp.maximum(y, 0.0)
    elif act == "tanh":
        y = jnp.tanh(y)
    o_ref[...] = y.astype(o_ref.dtype)


def matmul_bias_act(x, w, b, act=None, tm=256):
    """y = act(x @ w + b). M-tiled grid, bf16 operands on the MXU, f32 accumulate."""
    m, k = x.shape
    n = w.shape[1]
    x = x.astype(jnp.bfloat16)
    w = w.astype(jnp.bfloat16)
    b = b.reshape(1, n).astype(jnp.float32)
    tm = m if m <= tm else tm                       # small-M: one full block
    return pl.pallas_call(
        functools.partial(_matmul_bias_act_kernel, act=act),
        grid=(pl.cdiv(m, tm),),
        in_specs=[
            pl.BlockSpec((tm, k), lambda i: (i, 0)),
            pl.BlockSpec((k, n), lambda i: (0, 0)),
            pl.BlockSpec((1, n), lambda i: (0, 0)),
        ],
        out_specs=pl.BlockSpec((tm, n), lambda i: (i, 0)),
        out_shape=jax.ShapeDtypeStruct((m, n), jnp.float32),
        compiler_params=pltpu.CompilerParams(dimension_semantics=("parallel",)),
    )(x, w, b)


# ------------------------- MaxPool2d(2) + ReLU (channels-last) ---------------

def _pool2_relu_kernel(x_ref, o_ref, *, co):
    x = x_ref[0]                                    # (hp, 2, wp, 2*co)
    m = jnp.maximum(x[:, 0], x[:, 1])               # vertical 2x window
    m = jnp.maximum(m[..., :co], m[..., co:])       # horizontal 2x window (lane halves)
    o_ref[0] = jnp.maximum(m, 0.0)                  # fused ReLU(True)


def maxpool2_relu_nhwc(y_rows, n, ho, wo, co):
    """MaxPool2d(2) + ReLU on channels-last conv-GEMM output rows (n*ho*wo, co)."""
    hp, wp = ho // 2, wo // 2
    y = y_rows.reshape(n, ho, wo, co)
    if (ho != 2 * hp) or (wo != 2 * wp):            # floor semantics: drop odd edge
        y = y[:, :2 * hp, :2 * wp, :]
    y = y.reshape(n, hp, 2, wp, 2 * co)             # free row-major reshape
    return pl.pallas_call(
        functools.partial(_pool2_relu_kernel, co=co),
        grid=(n,),
        in_specs=[pl.BlockSpec((1, hp, 2, wp, 2 * co),
                               lambda i: (i, 0, 0, 0, 0))],
        out_specs=pl.BlockSpec((1, hp, wp, co), lambda i: (i, 0, 0, 0)),
        out_shape=jax.ShapeDtypeStruct((n, hp, wp, co), jnp.float32),
        compiler_params=pltpu.CompilerParams(dimension_semantics=("parallel",)),
    )(y)


def conv3x3_pool_relu(x_nhwc, weight, bias):
    """Conv2d(k=3, s=1, valid) -> MaxPool2d(2) -> ReLU, channels-last throughout."""
    n, h, w, c = x_nhwc.shape
    co = weight.shape[0]
    ho, wo = h - 2, w - 2
    # TODO(synk): build the im2col patches from a haloed VMEM block inside the GEMM
    # kernel (pl.ANY + manual DMA) to remove the 9x HBM read amplification.
    cols = [x_nhwc[:, di:di + ho, dj:dj + wo, :]
            for di in range(3) for dj in range(3)]
    patches = jnp.concatenate(cols, axis=-1).reshape(n * ho * wo, 9 * c)
    w_mat = jnp.transpose(weight, (2, 3, 1, 0)).reshape(9 * c, co)  # (kh,kw,cin,co)
    y = matmul_bias_act(patches, w_mat, bias, act=None)             # (n*ho*wo, co)
    return maxpool2_relu_nhwc(y, n, ho, wo, co)


# ------------------------- TPS sampling grid ---------------------------------

def _tps_grid_kernel(gxy_ref, ctrl_ref, w_ref, a_ref, o_ref):
    """Thin-plate-spline sampling grid, lane-dense (2, HW) layout.

    gxy_ref : (2, HWt)    row0 = x, row1 = y, pixel coords in [0, 1]
    ctrl_ref: (T, 2)      control points (x, y)
    w_ref   : (1, 2, T)   full (non-reduced) TPS weights, transposed
    a_ref   : (1, 2, 3)   affine part, columns = [const, x, y]
    o_ref   : (1, 2, HWt) sampling grid in [-1, 1]
    """
    gx = gxy_ref[0:1, :]
    gy = gxy_ref[1:2, :]
    cx = ctrl_ref[:, 0:1]
    cy = ctrl_ref[:, 1:2]
    dx = gx - cx                                    # (T, HWt)
    dy = gy - cy
    d2 = dx * dx + dy * dy
    # U(r) = r^2 log(r) == 0.5 * d2 * log(d2); eps keeps log finite at d2 == 0.
    u = 0.5 * d2 * jnp.log(d2 + 1e-12)
    b = jnp.dot(w_ref[0], u, preferred_element_type=jnp.float32)    # (2, HWt)
    a = a_ref[0]                                    # (2, 3)
    affine = a[:, 0:1] + a[:, 1:2] * gx + a[:, 2:3] * gy
    o_ref[0] = (gxy_ref[...] + b + affine) * 2.0 - 1.0


def tps_sampling_grid(theta, ctrl, out_hw):
    """theta: (N, T+2, 2), ctrl: (T, 2). Returns (N, 2, H*W) grid in [-1, 1]."""
    n = theta.shape[0]
    t = ctrl.shape[0]
    h, w = out_hw
    hw = h * w
    hw_tile = 512 if hw % 512 == 0 else hw

    xs = jnp.linspace(0.0, 1.0, w)
    ys = jnp.linspace(0.0, 1.0, h)
    gxy = jnp.stack([jnp.tile(xs, h), jnp.repeat(ys, w)], axis=0).astype(jnp.float32)

    # reduced TPS parameterisation -> full weights (tiny glue on theta)
    w_rest = theta[:, : t - 1, :]                                    # (N, T-1, 2)
    w_full = jnp.concatenate(
        [-jnp.sum(w_rest, axis=1, keepdims=True), w_rest], axis=1)   # (N, T, 2)
    w_t = jnp.transpose(w_full, (0, 2, 1))                           # (N, 2, T)
    a_t = jnp.transpose(theta[:, t - 1:, :], (0, 2, 1))              # (N, 2, 3)

    return pl.pallas_call(
        _tps_grid_kernel,
        grid=(n, hw // hw_tile),
        in_specs=[
            pl.BlockSpec((2, hw_tile), lambda i, j: (0, j)),
            pl.BlockSpec((t, 2), lambda i, j: (0, 0)),
            pl.BlockSpec((1, 2, t), lambda i, j: (i, 0, 0)),
            pl.BlockSpec((1, 2, 3), lambda i, j: (i, 0, 0)),
        ],
        out_specs=pl.BlockSpec((1, 2, hw_tile), lambda i, j: (i, 0, j)),
        out_shape=jax.ShapeDtypeStruct((n, 2, hw), jnp.float32),
        compiler_params=pltpu.CompilerParams(
            dimension_semantics=("parallel", "parallel")),
    )(gxy, ctrl.astype(jnp.float32), w_t, a_t)


# ------------------------- grid_sample (bilinear, zeros) ----------------------

def _grid_sample_kernel(grid_ref, img_ref, o_ref, *, h_in, w_in):
    """Bilinear grid_sample (padding_mode='zeros', align_corners=False).

    Separable gather: a (H_in, HWt) row selector and a (W_in, HWt) column
    selector carry the bilinear weights.  Out-of-range corner indices match no
    selector row, which reproduces zero padding exactly (no index wrap-around).
    grid_ref: (1, 2, HWt)   row0 = x, row1 = y in [-1, 1]
    img_ref : (1, C, W, H)  image with the two spatial axes swapped
    o_ref   : (1, C, HWt)
    """
    g = grid_ref[0]
    gx = g[0:1, :]
    gy = g[1:2, :]
    ix = ((gx + 1.0) * w_in - 1.0) * 0.5            # align_corners=False unnormalise
    iy = ((gy + 1.0) * h_in - 1.0) * 0.5
    x0f = jnp.floor(ix)
    y0f = jnp.floor(iy)
    x0 = x0f.astype(jnp.int32)
    y0 = y0f.astype(jnp.int32)
    wx1 = ix - x0f
    wx0 = 1.0 - wx1
    wy1 = iy - y0f
    wy0 = 1.0 - wy1

    hwt = g.shape[1]
    row_iota = jax.lax.broadcasted_iota(jnp.int32, (h_in, hwt), 0)
    col_iota = jax.lax.broadcasted_iota(jnp.int32, (w_in, hwt), 0)
    sy = (jnp.where(row_iota == y0, wy0, 0.0)
          + jnp.where(row_iota == y0 + 1, wy1, 0.0))        # (H_in, HWt)
    sx = (jnp.where(col_iota == x0, wx0, 0.0)
          + jnp.where(col_iota == x0 + 1, wx1, 0.0))        # (W_in, HWt)

    img = img_ref[0]                                        # (C, W_in, H_in)
    rows = []
    for ci in range(img.shape[0]):
        m = jnp.dot(img[ci], sy, preferred_element_type=jnp.float32)   # (W_in, HWt)
        rows.append(jnp.sum(sx * m, axis=0, keepdims=True))            # (1, HWt)
    o_ref[0] = jnp.concatenate(rows, axis=0)                # (C, HWt), lane-dense


def grid_sample_zeros_bilinear(img_nchw, grid_n2hw):
    n, c, h, w = img_nchw.shape
    hw = grid_n2hw.shape[2]
    hw_tile = 512 if hw % 512 == 0 else hw
    img_t = jnp.transpose(img_nchw, (0, 1, 3, 2))           # (N, C, W, H), tiny glue
    out = pl.pallas_call(
        functools.partial(_grid_sample_kernel, h_in=h, w_in=w),
        grid=(n, hw // hw_tile),
        in_specs=[
            pl.BlockSpec((1, 2, hw_tile), lambda i, j: (i, 0, j)),
            pl.BlockSpec((1, c, w, h), lambda i, j: (i, 0, 0, 0)),
        ],
        out_specs=pl.BlockSpec((1, c, hw_tile), lambda i, j: (i, 0, j)),
        out_shape=jax.ShapeDtypeStruct((n, c, hw), jnp.float32),
        compiler_params=pltpu.CompilerParams(
            dimension_semantics=("parallel", "parallel")),
    )(grid_n2hw, img_t)
    return out.reshape(n, c, h, w)                          # (C, HW) == NCHW flatten


# ------------------------- model glue -------------------------

def uniform_grid_ctrl(shape):
    """tps.uniform_grid(shape).view(-1, 2): (H*W, 2) control points in [0,1]^2."""
    h, w = shape
    xs = jnp.linspace(0.0, 1.0, w)
    ys = jnp.linspace(0.0, 1.0, h)
    return jnp.stack([jnp.tile(xs, h), jnp.repeat(ys, w)], axis=-1).astype(jnp.float32)


def init_params(key, feat_dim):
    keys = jax.random.split(key, 8)

    def u(k, shape, fan_in):
        bound = 1.0 / (float(fan_in) ** 0.5)
        return jax.random.uniform(k, shape, jnp.float32, -bound, bound)

    return {
        "conv1_w": u(keys[0], (32, 6, 3, 3), 6 * 9),
        "conv1_b": u(keys[1], (32,), 6 * 9),
        "conv2_w": u(keys[2], (64, 32, 3, 3), 32 * 9),
        "conv2_b": u(keys[3], (64,), 32 * 9),
        "conv3_w": u(keys[4], (128, 64, 3, 3), 64 * 9),
        "conv3_b": u(keys[5], (128,), 64 * 9),
        "fc1_w": u(keys[6], (512, feat_dim), feat_dim),
        "fc1_b": u(keys[7], (512,), feat_dim),
        # fc_loc[2]: weight ~ N(0, 0.001), bias = 0 (as in the PyTorch __init__)
        "fc2_w": 0.001 * jax.random.normal(jax.random.fold_in(key, 99),
                                           (NPARAM * 2, 512), jnp.float32),
        "fc2_b": jnp.zeros((NPARAM * 2,), jnp.float32),
    }


def stn_tpn_forward(params, ctrl, background, foreground):
    x = jnp.concatenate([background, foreground], axis=1)          # (N, 6, H, W)
    n = x.shape[0]
    x = jnp.transpose(x, (0, 2, 3, 1))                             # NHWC for loc stack
    # loc: (Conv3x3 -> MaxPool2 -> ReLU) x 3, channels-last
    x = conv3x3_pool_relu(x, params["conv1_w"], params["conv1_b"])
    x = conv3x3_pool_relu(x, params["conv2_w"], params["conv2_b"])
    x = conv3x3_pool_relu(x, params["conv3_w"], params["conv3_b"])
    # flatten in torch NCHW order so fc_loc matches x.view(bs, -1) exactly
    feat = jnp.transpose(x, (0, 3, 1, 2)).reshape(n, -1)
    # fc_loc: Linear -> ReLU -> Linear -> Tanh (activations fused into the GEMMs)
    h1 = matmul_bias_act(feat, params["fc1_w"].T, params["fc1_b"], act="relu")
    theta = matmul_bias_act(h1, params["fc2_w"].T, params["fc2_b"], act="tanh")
    theta = theta.reshape(n, NPARAM, 2)
    # TPS sampling grid over foreground.size(), then grid_sample(foreground, grid)
    _, _, h, w = foreground.shape
    grid = tps_sampling_grid(theta, ctrl, (h, w))                  # (N, 2, H*W)
    return grid_sample_zeros_bilinear(foreground, grid)            # (N, 3, H, W)


if __name__ == "__main__":
    key = jax.random.PRNGKey(0)
    k_bg, k_fg, k_par = jax.random.split(key, 3)

    # Small demo shapes (original module expects 256x256 -> 128*30*30 features).
    N, C, H, W = 2, 3, 32, 32
    background = jax.random.normal(k_bg, (N, C, H, W), jnp.float32)
    foreground = jax.random.normal(k_fg, (N, C, H, W), jnp.float32)

    feat_dim = 128 * 2 * 2      # feature size after the loc stack for 32x32 inputs
    params = init_params(k_par, feat_dim)
    ctrl = uniform_grid_ctrl(CTRLSHAPE)

    out = jax.jit(stn_tpn_forward)(params, ctrl, background, foreground)
    jax.block_until_ready(out)
    assert out.shape == (N, C, H, W) and out.dtype == jnp.float32
    print("KERNEL_OK")
</pallas_src>

<mosaic_0001>
module attributes {stable_mosaic.version = 11 : i64} {
  func.func @_matmul_bias_act_kernel(%arg0: i32, %arg1: memref<256x54xbf16, #tpu.memory_space<vmem>>, %arg2: memref<54x32xbf16, #tpu.memory_space<vmem>>, %arg3: memref<1x32xf32, #tpu.memory_space<vmem>>, %arg4: memref<256x32xf32, #tpu.memory_space<vmem>>) attributes {dimension_semantics = [#tpu.dimension_semantics<parallel>], iteration_bounds = array<i64: 8>, scalar_prefetch = 0 : i64, scratch_operands = 0 : i64, tpu.core_type = #tpu.core_type<tc>, window_params = [{transform_indices = @transform_0, window_bounds = array<i64: 256, 54>}, {pipeline_mode = #tpu.pipeline_mode<synchronous>, transform_indices = @transform_1, window_bounds = array<i64: 54, 32>}, {pipeline_mode = #tpu.pipeline_mode<synchronous>, transform_indices = @transform_2, window_bounds = array<i64: 1, 32>}, {transform_indices = @transform_3, window_bounds = array<i64: 256, 32>}]} {
    %c0 = arith.constant 0 : index
    %c0_0 = arith.constant 0 : index
    %0 = vector.load %arg1[%c0, %c0_0] : memref<256x54xbf16, #tpu.memory_space<vmem>>, vector<256x54xbf16>
    %c0_1 = arith.constant 0 : index
    %c0_2 = arith.constant 0 : index
    %1 = vector.load %arg2[%c0_1, %c0_2] : memref<54x32xbf16, #tpu.memory_space<vmem>>, vector<54x32xbf16>
    %cst = arith.constant dense<0.000000e+00> : vector<256x32xf32>
    %2 = tpu.matmul %0, %1, %cst {dimension_numbers = #tpu.dot_dimension_numbers<[1], [0], [0], [1], [0, 0, 1, 1], [], []>} : vector<256x54xbf16>, vector<54x32xbf16>, vector<256x32xf32> -> vector<256x32xf32>
    %c0_3 = arith.constant 0 : index
    %c0_4 = arith.constant 0 : index
    %3 = vector.load %arg3[%c0_3, %c0_4] : memref<1x32xf32, #tpu.memory_space<vmem>>, vector<1x32xf32>
    %4 = vector.broadcast %3 : vector<1x32xf32> to vector<256x32xf32>
    %5 = arith.addf %2, %4 : vector<256x32xf32>
    %c0_5 = arith.constant 0 : index
    %c0_6 = arith.constant 0 : index
    %6 = vector.load %arg4[%c0_5, %c0_6] : memref<256x32xf32, #tpu.memory_space<vmem>>, vector<256x32xf32>
    tpu.vector_store %arg4[%c0_5, %c0_6], %5 {strides = array<i32>} : memref<256x32xf32, #tpu.memory_space<vmem>>, vector<256x32xf32>,
    return
  }
  func.func @transform_0(%arg0: i32) -> (i32, i32) {
    %c0_i32 = arith.constant 0 : i32
    %c0_i32_0 = arith.constant 0 : i32
    return %arg0, %c0_i32 : i32, i32
  }
  func.func @transform_1(%arg0: i32) -> (i32, i32) {
    %c0_i32 = arith.constant 0 : i32
    %c0_i32_0 = arith.constant 0 : i32
    %c0_i32_1 = arith.constant 0 : i32
    return %c0_i32, %c0_i32_0 : i32, i32
  }
  func.func @transform_2(%arg0: i32) -> (i32, i32) {
    %c0_i32 = arith.constant 0 : i32
    %c0_i32_0 = arith.constant 0 : i32
    %c0_i32_1 = arith.constant 0 : i32
    return %c0_i32, %c0_i32_0 : i32, i32
  }
  func.func @transform_3(%arg0: i32) -> (i32, i32) {
    %c0_i32 = arith.constant 0 : i32
    %c0_i32_0 = arith.constant 0 : i32
    return %arg0, %c0_i32 : i32, i32
  }
}

module attributes {stable_mosaic.version = 11 : i64} {
  func.func @_pool2_relu_kernel(%arg0: i32, %arg1: memref<1x15x2x15x64xf32, #tpu.memory_space<vmem>>, %arg2: memref<1x15x15x32xf32, #tpu.memory_space<vmem>>) attributes {dimension_semantics = [#tpu.dimension_semantics<parallel>], iteration_bounds = array<i64: 2>, scalar_prefetch = 0 : i64, scratch_operands = 0 : i64, tpu.core_type = #tpu.core_type<tc>, window_params = [{transform_indices = @transform_0, window_bounds = array<i64: 1, 15, 2, 15, 64>}, {transform_indices = @transform_1, window_bounds = array<i64: 1, 15, 15, 32>}]} {
    %c0 = arith.constant 0 : index
    %c0_0 = arith.constant 0 : index
    %c0_1 = arith.constant 0 : index
    %c0_2 = arith.constant 0 : index
    %c0_3 = arith.constant 0 : index
    %0 = vector.load %arg1[%c0, %c0_0, %c0_1, %c0_2, %c0_3] : memref<1x15x2x15x64xf32, #tpu.memory_space<vmem>>, vector<1x15x2x15x64xf32>
    %1 = vector.shape_cast %0 : vector<1x15x2x15x64xf32> to vector<15x2x15x64xf32>
    %2 = vector.extract_strided_slice %1 {offsets = [0, 0, 0, 0], sizes = [15, 1, 15, 64], strides = [1, 1, 1, 1]} : vector<15x2x15x64xf32> to vector<15x1x15x64xf32>
    %3 = vector.shape_cast %2 : vector<15x1x15x64xf32> to vector<15x15x64xf32>
    %4 = vector.extract_strided_slice %1 {offsets = [0, 1, 0, 0], sizes = [15, 1, 15, 64], strides = [1, 1, 1, 1]} : vector<15x2x15x64xf32> to vector<15x1x15x64xf32>
    %5 = vector.shape_cast %4 : vector<15x1x15x64xf32> to vector<15x15x64xf32>
    %6 = arith.maximumf %3, %5 : vector<15x15x64xf32>
    %7 = vector.extract_strided_slice %6 {offsets = [0, 0, 0], sizes = [15, 15, 32], strides = [1, 1, 1]} : vector<15x15x64xf32> to vector<15x15x32xf32>
    %8 = vector.extract_strided_slice %6 {offsets = [0, 0, 32], sizes = [15, 15, 32], strides = [1, 1, 1]} : vector<15x15x64xf32> to vector<15x15x32xf32>
    %9 = arith.maximumf %7, %8 : vector<15x15x32xf32>
    %cst = arith.constant 0.000000e+00 : f32
    %10 = vector.broadcast %cst : f32 to vector<15x15x32xf32>
    %11 = arith.maximumf %9, %10 : vector<15x15x32xf32>
    %c0_4 = arith.constant 0 : index
    %c0_5 = arith.constant 0 : index
    %c0_6 = arith.constant 0 : index
    %c0_7 = arith.constant 0 : index
    %12 = vector.load %arg2[%c0_4, %c0_5, %c0_6, %c0_7] : memref<1x15x15x32xf32, #tpu.memory_space<vmem>>, vector<1x15x15x32xf32>
    %13 = vector.shape_cast %12 : vector<1x15x15x32xf32> to vector<15x15x32xf32>
    %14 = vector.shape_cast %11 : vector<15x15x32xf32> to vector<1x15x15x32xf32>
    tpu.vector_store %arg2[%c0_4, %c0_5, %c0_6, %c0_7], %14 {strides = array<i32>} : memref<1x15x15x32xf32, #tpu.memory_space<vmem>>, vector<1x15x15x32xf32>,
    return
  }
  func.func @transform_0(%arg0: i32) -> (i32, i32, i32, i32, i32) {
    %c0_i32 = arith.constant 0 : i32
    %c0_i32_0 = arith.constant 0 : i32
    %c0_i32_1 = arith.constant 0 : i32
    %c0_i32_2 = arith.constant 0 : i32
    %c0_i32_3 = arith.constant 0 : i32
    return %arg0, %c0_i32, %c0_i32_0, %c0_i32_1, %c0_i32_2 : i32, i32, i32, i32, i32
  }
  func.func @transform_1(%arg0: i32) -> (i32, i32, i32, i32) {
    %c0_i32 = arith.constant 0 : i32
    %c0_i32_0 = arith.constant 0 : i32
    %c0_i32_1 = arith.constant 0 : i32
    %c0_i32_2 = arith.constant 0 : i32
    return %arg0, %c0_i32, %c0_i32_0, %c0_i32_1 : i32, i32, i32, i32
  }
}

module attributes {stable_mosaic.version = 11 : i64} {
  func.func @_matmul_bias_act_kernel(%arg0: i32, %arg1: memref<256x288xbf16, #tpu.memory_space<vmem>>, %arg2: memref<288x64xbf16, #tpu.memory_space<vmem>>, %arg3: memref<1x64xf32, #tpu.memory_space<vmem>>, %arg4: memref<256x64xf32, #tpu.memory_space<vmem>>) attributes {dimension_semantics = [#tpu.dimension_semantics<parallel>], iteration_bounds = array<i64: 2>, scalar_prefetch = 0 : i64, scratch_operands = 0 : i64, tpu.core_type = #tpu.core_type<tc>, window_params = [{transform_indices = @transform_0, window_bounds = array<i64: 256, 288>}, {pipeline_mode = #tpu.pipeline_mode<synchronous>, transform_indices = @transform_1, window_bounds = array<i64: 288, 64>}, {pipeline_mode = #tpu.pipeline_mode<synchronous>, transform_indices = @transform_2, window_bounds = array<i64: 1, 64>}, {transform_indices = @transform_3, window_bounds = array<i64: 256, 64>}]} {
    %c0 = arith.constant 0 : index
    %c0_0 = arith.constant 0 : index
    %0 = vector.load %arg1[%c0, %c0_0] : memref<256x288xbf16, #tpu.memory_space<vmem>>, vector<256x288xbf16>
    %c0_1 = arith.constant 0 : index
    %c0_2 = arith.constant 0 : index
    %1 = vector.load %arg2[%c0_1, %c0_2] : memref<288x64xbf16, #tpu.memory_space<vmem>>, vector<288x64xbf16>
    %cst = arith.constant dense<0.000000e+00> : vector<256x64xf32>
    %2 = tpu.matmul %0, %1, %cst {dimension_numbers = #tpu.dot_dimension_numbers<[1], [0], [0], [1], [0, 0, 1, 1], [], []>} : vector<256x288xbf16>, vector<288x64xbf16>, vector<256x64xf32> -> vector<256x64xf32>
    %c0_3 = arith.constant 0 : index
    %c0_4 = arith.constant 0 : index
    %3 = vector.load %arg3[%c0_3, %c0_4] : memref<1x64xf32, #tpu.memory_space<vmem>>, vector<1x64xf32>
    %4 = vector.broadcast %3 : vector<1x64xf32> to vector<256x64xf32>
    %5 = arith.addf %2, %4 : vector<256x64xf32>
    %c0_5 = arith.constant 0 : index
    %c0_6 = arith.constant 0 : index
    %6 = vector.load %arg4[%c0_5, %c0_6] : memref<256x64xf32, #tpu.memory_space<vmem>>, vector<256x64xf32>
    tpu.vector_store %arg4[%c0_5, %c0_6], %5 {strides = array<i32>} : memref<256x64xf32, #tpu.memory_space<vmem>>, vector<256x64xf32>,
    return
  }
  func.func @transform_0(%arg0: i32) -> (i32, i32) {
    %c0_i32 = arith.constant 0 : i32
    %c0_i32_0 = arith.constant 0 : i32
    return %arg0, %c0_i32 : i32, i32
  }
  func.func @transform_1(%arg0: i32) -> (i32, i32) {
    %c0_i32 = arith.constant 0 : i32
    %c0_i32_0 = arith.constant 0 : i32
    %c0_i32_1 = arith.constant 0 : i32
    return %c0_i32, %c0_i32_0 : i32, i32
  }
  func.func @transform_2(%arg0: i32) -> (i32, i32) {
    %c0_i32 = arith.constant 0 : i32
    %c0_i32_0 = arith.constant 0 : i32
    %c0_i32_1 = arith.constant 0 : i32
    return %c0_i32, %c0_i32_0 : i32, i32
  }
  func.func @transform_3(%arg0: i32) -> (i32, i32) {
    %c0_i32 = arith.constant 0 : i32
    %c0_i32_0 = arith.constant 0 : i32
    return %arg0, %c0_i32 : i32, i32
  }
}

module attributes {stable_mosaic.version = 11 : i64} {
  func.func @_pool2_relu_kernel(%arg0: i32, %arg1: memref<1x6x2x6x128xf32, #tpu.memory_space<vmem>>, %arg2: memref<1x6x6x64xf32, #tpu.memory_space<vmem>>) attributes {dimension_semantics = [#tpu.dimension_semantics<parallel>], iteration_bounds = array<i64: 2>, scalar_prefetch = 0 : i64, scratch_operands = 0 : i64, tpu.core_type = #tpu.core_type<tc>, window_params = [{transform_indices = @transform_0, window_bounds = array<i64: 1, 6, 2, 6, 128>}, {transform_indices = @transform_1, window_bounds = array<i64: 1, 6, 6, 64>}]} {
    %c0 = arith.constant 0 : index
    %c0_0 = arith.constant 0 : index
    %c0_1 = arith.constant 0 : index
    %c0_2 = arith.constant 0 : index
    %c0_3 = arith.constant 0 : index
    %0 = vector.load %arg1[%c0, %c0_0, %c0_1, %c0_2, %c0_3] : memref<1x6x2x6x128xf32, #tpu.memory_space<vmem>>, vector<1x6x2x6x128xf32>
    %1 = vector.shape_cast %0 : vector<1x6x2x6x128xf32> to vector<6x2x6x128xf32>
    %2 = vector.extract_strided_slice %1 {offsets = [0, 0, 0, 0], sizes = [6, 1, 6, 128], strides = [1, 1, 1, 1]} : vector<6x2x6x128xf32> to vector<6x1x6x128xf32>
    %3 = vector.shape_cast %2 : vector<6x1x6x128xf32> to vector<6x6x128xf32>
    %4 = vector.extract_strided_slice %1 {offsets = [0, 1, 0, 0], sizes = [6, 1, 6, 128], strides = [1, 1, 1, 1]} : vector<6x2x6x128xf32> to vector<6x1x6x128xf32>
    %5 = vector.shape_cast %4 : vector<6x1x6x128xf32> to vector<6x6x128xf32>
    %6 = arith.maximumf %3, %5 : vector<6x6x128xf32>
    %7 = vector.extract_strided_slice %6 {offsets = [0, 0, 0], sizes = [6, 6, 64], strides = [1, 1, 1]} : vector<6x6x128xf32> to vector<6x6x64xf32>
    %8 = vector.extract_strided_slice %6 {offsets = [0, 0, 64], sizes = [6, 6, 64], strides = [1, 1, 1]} : vector<6x6x128xf32> to vector<6x6x64xf32>
    %9 = arith.maximumf %7, %8 : vector<6x6x64xf32>
    %cst = arith.constant 0.000000e+00 : f32
    %10 = vector.broadcast %cst : f32 to vector<6x6x64xf32>
    %11 = arith.maximumf %9, %10 : vector<6x6x64xf32>
    %c0_4 = arith.constant 0 : index
    %c0_5 = arith.constant 0 : index
    %c0_6 = arith.constant 0 : index
    %c0_7 = arith.constant 0 : index
    %12 = vector.load %arg2[%c0_4, %c0_5, %c0_6, %c0_7] : memref<1x6x6x64xf32, #tpu.memory_space<vmem>>, vector<1x6x6x64xf32>
    %13 = vector.shape_cast %12 : vector<1x6x6x64xf32> to vector<6x6x64xf32>
    %14 = vector.shape_cast %11 : vector<6x6x64xf32> to vector<1x6x6x64xf32>
    tpu.vector_store %arg2[%c0_4, %c0_5, %c0_6, %c0_7], %14 {strides = array<i32>} : memref<1x6x6x64xf32, #tpu.memory_space<vmem>>, vector<1x6x6x64xf32>,
    return
  }
  func.func @transform_0(%arg0: i32) -> (i32, i32, i32, i32, i32) {
    %c0_i32 = arith.constant 0 : i32
    %c0_i32_0 = arith.constant 0 : i32
    %c0_i32_1 = arith.constant 0 : i32
    %c0_i32_2 = arith.constant 0 : i32
    %c0_i32_3 = arith.constant 0 : i32
    return %arg0, %c0_i32, %c0_i32_0, %c0_i32_1, %c0_i32_2 : i32, i32, i32, i32, i32
  }
  func.func @transform_1(%arg0: i32) -> (i32, i32, i32, i32) {
    %c0_i32 = arith.constant 0 : i32
    %c0_i32_0 = arith.constant 0 : i32
    %c0_i32_1 = arith.constant 0 : i32
    %c0_i32_2 = arith.constant 0 : i32
    return %arg0, %c0_i32, %c0_i32_0, %c0_i32_1 : i32, i32, i32, i32
  }
}

module attributes {stable_mosaic.version = 11 : i64} {
  func.func @_matmul_bias_act_kernel(%arg0: i32, %arg1: memref<32x576xbf16, #tpu.memory_space<vmem>>, %arg2: memref<576x128xbf16, #tpu.memory_space<vmem>>, %arg3: memref<1x128xf32, #tpu.memory_space<vmem>>, %arg4: memref<32x128xf32, #tpu.memory_space<vmem>>) attributes {dimension_semantics = [#tpu.dimension_semantics<parallel>], iteration_bounds = array<i64: 1>, scalar_prefetch = 0 : i64, scratch_operands = 0 : i64, tpu.core_type = #tpu.core_type<tc>, window_params = [{transform_indices = @transform_0, window_bounds = array<i64: 32, 576>}, {pipeline_mode = #tpu.pipeline_mode<synchronous>, transform_indices = @transform_1, window_bounds = array<i64: 576, 128>}, {pipeline_mode = #tpu.pipeline_mode<synchronous>, transform_indices = @transform_2, window_bounds = array<i64: 1, 128>}, {transform_indices = @transform_3, window_bounds = array<i64: 32, 128>}]} {
    %c0 = arith.constant 0 : index
    %c0_0 = arith.constant 0 : index
    %0 = vector.load %arg1[%c0, %c0_0] : memref<32x576xbf16, #tpu.memory_space<vmem>>, vector<32x576xbf16>
    %c0_1 = arith.constant 0 : index
    %c0_2 = arith.constant 0 : index
    %1 = vector.load %arg2[%c0_1, %c0_2] : memref<576x128xbf16, #tpu.memory_space<vmem>>, vector<576x128xbf16>
    %cst = arith.constant dense<0.000000e+00> : vector<32x128xf32>
    %2 = tpu.matmul %0, %1, %cst {dimension_numbers = #tpu.dot_dimension_numbers<[1], [0], [0], [1], [0, 0, 1, 1], [], []>} : vector<32x576xbf16>, vector<576x128xbf16>, vector<32x128xf32> -> vector<32x128xf32>
    %c0_3 = arith.constant 0 : index
    %c0_4 = arith.constant 0 : index
    %3 = vector.load %arg3[%c0_3, %c0_4] : memref<1x128xf32, #tpu.memory_space<vmem>>, vector<1x128xf32>
    %4 = vector.broadcast %3 : vector<1x128xf32> to vector<32x128xf32>
    %5 = arith.addf %2, %4 : vector<32x128xf32>
    %c0_5 = arith.constant 0 : index
    %c0_6 = arith.constant 0 : index
    %6 = vector.load %arg4[%c0_5, %c0_6] : memref<32x128xf32, #tpu.memory_space<vmem>>, vector<32x128xf32>
    tpu.vector_store %arg4[%c0_5, %c0_6], %5 {strides = array<i32>} : memref<32x128xf32, #tpu.memory_space<vmem>>, vector<32x128xf32>,
    return
  }
  func.func @transform_0(%arg0: i32) -> (i32, i32) {
    %c0_i32 = arith.constant 0 : i32
    %c0_i32_0 = arith.constant 0 : i32
    return %arg0, %c0_i32 : i32, i32
  }
  func.func @transform_1(%arg0: i32) -> (i32, i32) {
    %c0_i32 = arith.constant 0 : i32
    %c0_i32_0 = arith.constant 0 : i32
    %c0_i32_1 = arith.constant 0 : i32
    return %c0_i32, %c0_i32_0 : i32, i32
  }
  func.func @transform_2(%arg0: i32) -> (i32, i32) {
    %c0_i32 = arith.constant 0 : i32
    %c0_i32_0 = arith.constant 0 : i32
    %c0_i32_1 = arith.constant 0 : i32
    return %c0_i32, %c0_i32_0 : i32, i32
  }
  func.func @transform_3(%arg0: i32) -> (i32, i32) {
    %c0_i32 = arith.constant 0 : i32
    %c0_i32_0 = arith.constant 0 : i32
    return %arg0, %c0_i32 : i32, i32
  }
}

module attributes {stable_mosaic.version = 11 : i64} {
  func.func @_pool2_relu_kernel(%arg0: i32, %arg1: memref<1x2x2x2x256xf32, #tpu.memory_space<vmem>>, %arg2: memref<1x2x2x128xf32, #tpu.memory_space<vmem>>) attributes {dimension_semantics = [#tpu.dimension_semantics<parallel>], iteration_bounds = array<i64: 2>, scalar_prefetch = 0 : i64, scratch_operands = 0 : i64, tpu.core_type = #tpu.core_type<tc>, window_params = [{transform_indices = @transform_0, window_bounds = array<i64: 1, 2, 2, 2, 256>}, {transform_indices = @transform_1, window_bounds = array<i64: 1, 2, 2, 128>}]} {
    %c0 = arith.constant 0 : index
    %c0_0 = arith.constant 0 : index
    %c0_1 = arith.constant 0 : index
    %c0_2 = arith.constant 0 : index
    %c0_3 = arith.constant 0 : index
    %0 = vector.load %arg1[%c0, %c0_0, %c0_1, %c0_2, %c0_3] : memref<1x2x2x2x256xf32, #tpu.memory_space<vmem>>, vector<1x2x2x2x256xf32>
    %1 = vector.shape_cast %0 : vector<1x2x2x2x256xf32> to vector<2x2x2x256xf32>
    %2 = vector.extract_strided_slice %1 {offsets = [0, 0, 0, 0], sizes = [2, 1, 2, 256], strides = [1, 1, 1, 1]} : vector<2x2x2x256xf32> to vector<2x1x2x256xf32>
    %3 = vector.shape_cast %2 : vector<2x1x2x256xf32> to vector<2x2x256xf32>
    %4 = vector.extract_strided_slice %1 {offsets = [0, 1, 0, 0], sizes = [2, 1, 2, 256], strides = [1, 1, 1, 1]} : vector<2x2x2x256xf32> to vector<2x1x2x256xf32>
    %5 = vector.shape_cast %4 : vector<2x1x2x256xf32> to vector<2x2x256xf32>
    %6 = arith.maximumf %3, %5 : vector<2x2x256xf32>
    %7 = vector.extract_strided_slice %6 {offsets = [0, 0, 0], sizes = [2, 2, 128], strides = [1, 1, 1]} : vector<2x2x256xf32> to vector<2x2x128xf32>
    %8 = vector.extract_strided_slice %6 {offsets = [0, 0, 128], sizes = [2, 2, 128], strides = [1, 1, 1]} : vector<2x2x256xf32> to vector<2x2x128xf32>
    %9 = arith.maximumf %7, %8 : vector<2x2x128xf32>
    %cst = arith.constant 0.000000e+00 : f32
    %10 = vector.broadcast %cst : f32 to vector<2x2x128xf32>
    %11 = arith.maximumf %9, %10 : vector<2x2x128xf32>
    %c0_4 = arith.constant 0 : index
    %c0_5 = arith.constant 0 : index
    %c0_6 = arith.constant 0 : index
    %c0_7 = arith.constant 0 : index
    %12 = vector.load %arg2[%c0_4, %c0_5, %c0_6, %c0_7] : memref<1x2x2x128xf32, #tpu.memory_space<vmem>>, vector<1x2x2x128xf32>
    %13 = vector.shape_cast %12 : vector<1x2x2x128xf32> to vector<2x2x128xf32>
    %14 = vector.shape_cast %11 : vector<2x2x128xf32> to vector<1x2x2x128xf32>
    tpu.vector_store %arg2[%c0_4, %c0_5, %c0_6, %c0_7], %14 {strides = array<i32>} : memref<1x2x2x128xf32, #tpu.memory_space<vmem>>, vector<1x2x2x128xf32>,
    return
  }
  func.func @transform_0(%arg0: i32) -> (i32, i32, i32, i32, i32) {
    %c0_i32 = arith.constant 0 : i32
    %c0_i32_0 = arith.constant 0 : i32
    %c0_i32_1 = arith.constant 0 : i32
    %c0_i32_2 = arith.constant 0 : i32
    %c0_i32_3 = arith.constant 0 : i32
    return %arg0, %c0_i32, %c0_i32_0, %c0_i32_1, %c0_i32_2 : i32, i32, i32, i32, i32
  }
  func.func @transform_1(%arg0: i32) -> (i32, i32, i32, i32) {
    %c0_i32 = arith.constant 0 : i32
    %c0_i32_0 = arith.constant 0 : i32
    %c0_i32_1 = arith.constant 0 : i32
    %c0_i32_2 = arith.constant 0 : i32
    return %arg0, %c0_i32, %c0_i32_0, %c0_i32_1 : i32, i32, i32, i32
  }
}

module attributes {stable_mosaic.version = 11 : i64} {
  func.func @_matmul_bias_act_kernel(%arg0: i32, %arg1: memref<2x512xbf16, #tpu.memory_space<vmem>>, %arg2: memref<512x512xbf16, #tpu.memory_space<vmem>>, %arg3: memref<1x512xf32, #tpu.memory_space<vmem>>, %arg4: memref<2x512xf32, #tpu.memory_space<vmem>>) attributes {dimension_semantics = [#tpu.dimension_semantics<parallel>], iteration_bounds = array<i64: 1>, scalar_prefetch = 0 : i64, scratch_operands = 0 : i64, tpu.core_type = #tpu.core_type<tc>, window_params = [{transform_indices = @transform_0, window_bounds = array<i64: 2, 512>}, {pipeline_mode = #tpu.pipeline_mode<synchronous>, transform_indices = @transform_1, window_bounds = array<i64: 512, 512>}, {pipeline_mode = #tpu.pipeline_mode<synchronous>, transform_indices = @transform_2, window_bounds = array<i64: 1, 512>}, {transform_indices = @transform_3, window_bounds = array<i64: 2, 512>}]} {
    %c0 = arith.constant 0 : index
    %c0_0 = arith.constant 0 : index
    %0 = vector.load %arg1[%c0, %c0_0] : memref<2x512xbf16, #tpu.memory_space<vmem>>, vector<2x512xbf16>
    %c0_1 = arith.constant 0 : index
    %c0_2 = arith.constant 0 : index
    %1 = vector.load %arg2[%c0_1, %c0_2] : memref<512x512xbf16, #tpu.memory_space<vmem>>, vector<512x512xbf16>
    %cst = arith.constant dense<0.000000e+00> : vector<2x512xf32>
    %2 = tpu.matmul %0, %1, %cst {dimension_numbers = #tpu.dot_dimension_numbers<[1], [0], [0], [1], [0, 0, 1, 1], [], []>} : vector<2x512xbf16>, vector<512x512xbf16>, vector<2x512xf32> -> vector<2x512xf32>
    %c0_3 = arith.constant 0 : index
    %c0_4 = arith.constant 0 : index
    %3 = vector.load %arg3[%c0_3, %c0_4] : memref<1x512xf32, #tpu.memory_space<vmem>>, vector<1x512xf32>
    %4 = vector.broadcast %3 : vector<1x512xf32> to vector<2x512xf32>
    %5 = arith.addf %2, %4 : vector<2x512xf32>
    %cst_5 = arith.constant 0.000000e+00 : f32
    %6 = vector.broadcast %cst_5 : f32 to vector<2x512xf32>
    %7 = arith.maximumf %5, %6 : vector<2x512xf32>
    %c0_6 = arith.constant 0 : index
    %c0_7 = arith.constant 0 : index
    %8 = vector.load %arg4[%c0_6, %c0_7] : memref<2x512xf32, #tpu.memory_space<vmem>>, vector<2x512xf32>
    tpu.vector_store %arg4[%c0_6, %c0_7], %7 {strides = array<i32>} : memref<2x512xf32, #tpu.memory_space<vmem>>, vector<2x512xf32>,
    return
  }
  func.func @transform_0(%arg0: i32) -> (i32, i32) {
    %c0_i32 = arith.constant 0 : i32
    %c0_i32_0 = arith.constant 0 : i32
    return %arg0, %c0_i32 : i32, i32
  }
  func.func @transform_1(%arg0: i32) -> (i32, i32) {
    %c0_i32 = arith.constant 0 : i32
    %c0_i32_0 = arith.constant 0 : i32
    %c0_i32_1 = arith.constant 0 : i32
    return %c0_i32, %c0_i32_0 : i32, i32
  }
  func.func @transform_2(%arg0: i32) -> (i32, i32) {
    %c0_i32 = arith.constant 0 : i32
    %c0_i32_0 = arith.constant 0 : i32
    %c0_i32_1 = arith.constant 0 : i32
    return %c0_i32, %c0_i32_0 : i32, i32
  }
  func.func @transform_3(%arg0: i32) -> (i32, i32) {
    %c0_i32 = arith.constant 0 : i32
    %c0_i32_0 = arith.constant 0 : i32
    return %arg0, %c0_i32 : i32, i32
  }
}

module attributes {stable_mosaic.version = 11 : i64} {
  func.func @_matmul_bias_act_kernel(%arg0: i32, %arg1: memref<2x512xbf16, #tpu.memory_space<vmem>>, %arg2: memref<512x76xbf16, #tpu.memory_space<vmem>>, %arg3: memref<1x76xf32, #tpu.memory_space<vmem>>, %arg4: memref<2x76xf32, #tpu.memory_space<vmem>>) attributes {dimension_semantics = [#tpu.dimension_semantics<parallel>], iteration_bounds = array<i64: 1>, scalar_prefetch = 0 : i64, scratch_operands = 0 : i64, tpu.core_type = #tpu.core_type<tc>, window_params = [{transform_indices = @transform_0, window_bounds = array<i64: 2, 512>}, {pipeline_mode = #tpu.pipeline_mode<synchronous>, transform_indices = @transform_1, window_bounds = array<i64: 512, 76>}, {pipeline_mode = #tpu.pipeline_mode<synchronous>, transform_indices = @transform_2, window_bounds = array<i64: 1, 76>}, {transform_indices = @transform_3, window_bounds = array<i64: 2, 76>}]} {
    %c0 = arith.constant 0 : index
    %c0_0 = arith.constant 0 : index
    %0 = vector.load %arg1[%c0, %c0_0] : memref<2x512xbf16, #tpu.memory_space<vmem>>, vector<2x512xbf16>
    %c0_1 = arith.constant 0 : index
    %c0_2 = arith.constant 0 : index
    %1 = vector.load %arg2[%c0_1, %c0_2] : memref<512x76xbf16, #tpu.memory_space<vmem>>, vector<512x76xbf16>
    %cst = arith.constant dense<0.000000e+00> : vector<2x76xf32>
    %2 = tpu.matmul %0, %1, %cst {dimension_numbers = #tpu.dot_dimension_numbers<[1], [0], [0], [1], [0, 0, 1, 1], [], []>} : vector<2x512xbf16>, vector<512x76xbf16>, vector<2x76xf32> -> vector<2x76xf32>
    %c0_3 = arith.constant 0 : index
    %c0_4 = arith.constant 0 : index
    %3 = vector.load %arg3[%c0_3, %c0_4] : memref<1x76xf32, #tpu.memory_space<vmem>>, vector<1x76xf32>
    %4 = vector.broadcast %3 : vector<1x76xf32> to vector<2x76xf32>
    %5 = arith.addf %2, %4 : vector<2x76xf32>
    %6 = math.tanh %5 : vector<2x76xf32>
    %c0_5 = arith.constant 0 : index
    %c0_6 = arith.constant 0 : index
    %7 = vector.load %arg4[%c0_5, %c0_6] : memref<2x76xf32, #tpu.memory_space<vmem>>, vector<2x76xf32>
    tpu.vector_store %arg4[%c0_5, %c0_6], %6 {strides = array<i32>} : memref<2x76xf32, #tpu.memory_space<vmem>>, vector<2x76xf32>,
    return
  }
  func.func @transform_0(%arg0: i32) -> (i32, i32) {
    %c0_i32 = arith.constant 0 : i32
    %c0_i32_0 = arith.constant 0 : i32
    return %arg0, %c0_i32 : i32, i32
  }
  func.func @transform_1(%arg0: i32) -> (i32, i32) {
    %c0_i32 = arith.constant 0 : i32
    %c0_i32_0 = arith.constant 0 : i32
    %c0_i32_1 = arith.constant 0 : i32
    return %c0_i32, %c0_i32_0 : i32, i32
  }
  func.func @transform_2(%arg0: i32) -> (i32, i32) {
    %c0_i32 = arith.constant 0 : i32
    %c0_i32_0 = arith.constant 0 : i32
    %c0_i32_1 = arith.constant 0 : i32
    return %c0_i32, %c0_i32_0 : i32, i32
  }
  func.func @transform_3(%arg0: i32) -> (i32, i32) {
    %c0_i32 = arith.constant 0 : i32
    %c0_i32_0 = arith.constant 0 : i32
    return %arg0, %c0_i32 : i32, i32
  }
}

module attributes {stable_mosaic.version = 11 : i64} {
  func.func @_tps_grid_kernel(%arg0: i32, %arg1: i32, %arg2: memref<2x512xf32, #tpu.memory_space<vmem>>, %arg3: memref<36x2xf32, #tpu.memory_space<vmem>>, %arg4: memref<1x2x36xf32, #tpu.memory_space<vmem>>, %arg5: memref<1x2x3xf32, #tpu.memory_space<vmem>>, %arg6: memref<1x2x512xf32, #tpu.memory_space<vmem>>) attributes {dimension_semantics = [#tpu.dimension_semantics<parallel>, #tpu.dimension_semantics<parallel>], iteration_bounds = array<i64: 2, 2>, scalar_prefetch = 0 : i64, scratch_operands = 0 : i64, tpu.core_type = #tpu.core_type<tc>, window_params = [{transform_indices = @transform_0, window_bounds = array<i64: 2, 512>}, {pipeline_mode = #tpu.pipeline_mode<synchronous>, transform_indices = @transform_1, window_bounds = array<i64: 36, 2>}, {transform_indices = @transform_2, window_bounds = array<i64: 1, 2, 36>}, {transform_indices = @transform_3, window_bounds = array<i64: 1, 2, 3>}, {transform_indices = @transform_4, window_bounds = array<i64: 1, 2, 512>}]} {
    %c0 = arith.constant 0 : index
    %c0_0 = arith.constant 0 : index
    %0 = vector.load %arg2[%c0, %c0_0] : memref<2x512xf32, #tpu.memory_space<vmem>>, vector<1x512xf32>
    %c1 = arith.constant 1 : index
    %c0_1 = arith.constant 0 : index
    %1 = vector.load %arg2[%c1, %c0_1] : memref<2x512xf32, #tpu.memory_space<vmem>>, vector<1x512xf32>
    %c0_2 = arith.constant 0 : index
    %c0_3 = arith.constant 0 : index
    %2 = vector.load %arg3[%c0_2, %c0_3] : memref<36x2xf32, #tpu.memory_space<vmem>>, vector<36x1xf32>
    %c0_4 = arith.constant 0 : index
    %c1_5 = arith.constant 1 : index
    %3 = vector.load %arg3[%c0_4, %c1_5] : memref<36x2xf32, #tpu.memory_space<vmem>>, vector<36x1xf32>
    %4 = vector.broadcast %0 : vector<1x512xf32> to vector<36x512xf32>
    %5 = vector.broadcast %2 : vector<36x1xf32> to vector<36x512xf32>
    %6 = arith.subf %4, %5 : vector<36x512xf32>
    %7 = vector.broadcast %1 : vector<1x512xf32> to vector<36x512xf32>
    %8 = vector.broadcast %3 : vector<36x1xf32> to vector<36x512xf32>
    %9 = arith.subf %7, %8 : vector<36x512xf32>
    %10 = arith.mulf %6, %6 : vector<36x512xf32>
    %11 = arith.mulf %9, %9 : vector<36x512xf32>
    %12 = arith.addf %10, %11 : vector<36x512xf32>
    %cst = arith.constant 5.000000e-01 : f32
    %13 = vector.broadcast %cst : f32 to vector<36x512xf32>
    %14 = arith.mulf %13, %12 : vector<36x512xf32>
    %cst_6 = arith.constant 9.99999996E-13 : f32
    %15 = vector.broadcast %cst_6 : f32 to vector<36x512xf32>
    %16 = arith.addf %12, %15 : vector<36x512xf32>
    %17 = math.log %16 : vector<36x512xf32>
    %18 = arith.mulf %14, %17 : vector<36x512xf32>
    %c0_7 = arith.constant 0 : index
    %c0_8 = arith.constant 0 : index
    %c0_9 = arith.constant 0 : index
    %19 = vector.load %arg4[%c0_7, %c0_8, %c0_9] : memref<1x2x36xf32, #tpu.memory_space<vmem>>, vector<1x2x36xf32>
    %20 = vector.shape_cast %19 : vector<1x2x36xf32> to vector<2x36xf32>
    %cst_10 = arith.constant dense<0.000000e+00> : vector<2x512xf32>
    %21 = tpu.matmul %20, %18, %cst_10 {dimension_numbers = #tpu.dot_dimension_numbers<[1], [0], [0], [1], [0, 0, 1, 1], [], []>} : vector<2x36xf32>, vector<36x512xf32>, vector<2x512xf32> -> vector<2x512xf32>
    %c0_11 = arith.constant 0 : index
    %c0_12 = arith.constant 0 : index
    %c0_13 = arith.constant 0 : index
    %22 = vector.load %arg5[%c0_11, %c0_12, %c0_13] : memref<1x2x3xf32, #tpu.memory_space<vmem>>, vector<1x2x3xf32>
    %23 = vector.shape_cast %22 : vector<1x2x3xf32> to vector<2x3xf32>
    %24 = vector.extract_strided_slice %23 {offsets = [0, 0], sizes = [2, 1], strides = [1, 1]} : vector<2x3xf32> to vector<2x1xf32>
    %25 = vector.extract_strided_slice %23 {offsets = [0, 1], sizes = [2, 1], strides = [1, 1]} : vector<2x3xf32> to vector<2x1xf32>
    %26 = vector.broadcast %25 : vector<2x1xf32> to vector<2x512xf32>
    %27 = vector.broadcast %0 : vector<1x512xf32> to vector<2x512xf32>
    %28 = arith.mulf %26, %27 : vector<2x512xf32>
    %29 = vector.broadcast %24 : vector<2x1xf32> to vector<2x512xf32>
    %30 = arith.addf %29, %28 : vector<2x512xf32>
    %31 = vector.extract_strided_slice %23 {offsets = [0, 2], sizes = [2, 1], strides = [1, 1]} : vector<2x3xf32> to vector<2x1xf32>
    %32 = vector.broadcast %31 : vector<2x1xf32> to vector<2x512xf32>
    %33 = vector.broadcast %1 : vector<1x512xf32> to vector<2x512xf32>
    %34 = arith.mulf %32, %33 : vector<2x512xf32>
    %35 = arith.addf %30, %34 : vector<2x512xf32>
    %c0_14 = arith.constant 0 : index
    %c0_15 = arith.constant 0 : index
    %36 = vector.load %arg2[%c0_14, %c0_15] : memref<2x512xf32, #tpu.memory_space<vmem>>, vector<2x512xf32>
    %37 = arith.addf %36, %21 : vector<2x512xf32>
    %38 = arith.addf %37, %35 : vector<2x512xf32>
    %cst_16 = arith.constant 2.000000e+00 : f32
    %39 = vector.broadcast %cst_16 : f32 to vector<2x512xf32>
    %40 = arith.mulf %38, %39 : vector<2x512xf32>
    %cst_17 = arith.constant 1.000000e+00 : f32
    %41 = vector.broadcast %cst_17 : f32 to vector<2x512xf32>
    %42 = arith.subf %40, %41 : vector<2x512xf32>
    %c0_18 = arith.constant 0 : index
    %c0_19 = arith.constant 0 : index
    %c0_20 = arith.constant 0 : index
    %43 = vector.load %arg6[%c0_18, %c0_19, %c0_20] : memref<1x2x512xf32, #tpu.memory_space<vmem>>, vector<1x2x512xf32>
    %44 = vector.shape_cast %43 : vector<1x2x512xf32> to vector<2x512xf32>
    %45 = vector.shape_cast %42 : vector<2x512xf32> to vector<1x2x512xf32>
    tpu.vector_store %arg6[%c0_18, %c0_19, %c0_20], %45 {strides = array<i32>} : memref<1x2x512xf32, #tpu.memory_space<vmem>>, vector<1x2x512xf32>,
    return
  }
  func.func @transform_0(%arg0: i32, %arg1: i32) -> (i32, i32) {
    %c0_i32 = arith.constant 0 : i32
    %c0_i32_0 = arith.constant 0 : i32
    return %c0_i32, %arg1 : i32, i32
  }
  func.func @transform_1(%arg0: i32, %arg1: i32) -> (i32, i32) {
    %c0_i32 = arith.constant 0 : i32
    %c0_i32_0 = arith.constant 0 : i32
    %c0_i32_1 = arith.constant 0 : i32
    return %c0_i32, %c0_i32_0 : i32, i32
  }
  func.func @transform_2(%arg0: i32, %arg1: i32) -> (i32, i32, i32) {
    %c0_i32 = arith.constant 0 : i32
    %c0_i32_0 = arith.constant 0 : i32
    %c0_i32_1 = arith.constant 0 : i32
    return %arg0, %c0_i32, %c0_i32_0 : i32, i32, i32
  }
  func.func @transform_3(%arg0: i32, %arg1: i32) -> (i32, i32, i32) {
    %c0_i32 = arith.constant 0 : i32
    %c0_i32_0 = arith.constant 0 : i32
    %c0_i32_1 = arith.constant 0 : i32
    return %arg0, %c0_i32, %c0_i32_0 : i32, i32, i32
  }
  func.func @transform_4(%arg0: i32, %arg1: i32) -> (i32, i32, i32) {
    %c0_i32 = arith.constant 0 : i32
    %c0_i32_0 = arith.constant 0 : i32
    return %arg0, %c0_i32, %arg1 : i32, i32, i32
  }
}

module attributes {stable_mosaic.version = 11 : i64} {
  func.func @_grid_sample_kernel(%arg0: i32, %arg1: i32, %arg2: memref<1x2x512xf32, #tpu.memory_space<vmem>>, %arg3: memref<1x3x32x32xf32, #tpu.memory_space<vmem>>, %arg4: memref<1x3x512xf32, #tpu.memory_space<vmem>>) attributes {dimension_semantics = [#tpu.dimension_semantics<parallel>, #tpu.dimension_semantics<parallel>], iteration_bounds = array<i64: 2, 2>, scalar_prefetch = 0 : i64, scratch_operands = 0 : i64, tpu.core_type = #tpu.core_type<tc>, window_params = [{transform_indices = @transform_0, window_bounds = array<i64: 1, 2, 512>}, {transform_indices = @transform_1, window_bounds = array<i64: 1, 3, 32, 32>}, {transform_indices = @transform_2, window_bounds = array<i64: 1, 3, 512>}]} {
    %c0 = arith.constant 0 : index
    %c0_0 = arith.constant 0 : index
    %c0_1 = arith.constant 0 : index
    %0 = vector.load %arg2[%c0, %c0_0, %c0_1] : memref<1x2x512xf32, #tpu.memory_space<vmem>>, vector<1x2x512xf32>
    %1 = vector.shape_cast %0 : vector<1x2x512xf32> to vector<2x512xf32>
    %2 = vector.extract_strided_slice %1 {offsets = [0, 0], sizes = [1, 512], strides = [1, 1]} : vector<2x512xf32> to vector<1x512xf32>
    %3 = vector.extract_strided_slice %1 {offsets = [1, 0], sizes = [1, 512], strides = [1, 1]} : vector<2x512xf32> to vector<1x512xf32>
    %cst = arith.constant 1.000000e+00 : f32
    %4 = vector.broadcast %cst : f32 to vector<1x512xf32>
    %5 = arith.addf %2, %4 : vector<1x512xf32>
    %cst_2 = arith.constant 3.200000e+01 : f32
    %6 = vector.broadcast %cst_2 : f32 to vector<1x512xf32>
    %7 = arith.mulf %5, %6 : vector<1x512xf32>
    %cst_3 = arith.constant 1.000000e+00 : f32
    %8 = vector.broadcast %cst_3 : f32 to vector<1x512xf32>
    %9 = arith.subf %7, %8 : vector<1x512xf32>
    %cst_4 = arith.constant 5.000000e-01 : f32
    %10 = vector.broadcast %cst_4 : f32 to vector<1x512xf32>
    %11 = arith.mulf %9, %10 : vector<1x512xf32>
    %cst_5 = arith.constant 1.000000e+00 : f32
    %12 = vector.broadcast %cst_5 : f32 to vector<1x512xf32>
    %13 = arith.addf %3, %12 : vector<1x512xf32>
    %cst_6 = arith.constant 3.200000e+01 : f32
    %14 = vector.broadcast %cst_6 : f32 to vector<1x512xf32>
    %15 = arith.mulf %13, %14 : vector<1x512xf32>
    %cst_7 = arith.constant 1.000000e+00 : f32
    %16 = vector.broadcast %cst_7 : f32 to vector<1x512xf32>
    %17 = arith.subf %15, %16 : vector<1x512xf32>
    %cst_8 = arith.constant 5.000000e-01 : f32
    %18 = vector.broadcast %cst_8 : f32 to vector<1x512xf32>
    %19 = arith.mulf %17, %18 : vector<1x512xf32>
    %20 = math.floor %11 : vector<1x512xf32>
    %21 = math.floor %19 : vector<1x512xf32>
    %22 = arith.fptosi %20 : vector<1x512xf32> to vector<1x512xi32>
    %23 = arith.fptosi %21 : vector<1x512xf32> to vector<1x512xi32>
    %24 = arith.subf %11, %20 : vector<1x512xf32>
    %cst_9 = arith.constant 1.000000e+00 : f32
    %25 = vector.broadcast %cst_9 : f32 to vector<1x512xf32>
    %26 = arith.subf %25, %24 : vector<1x512xf32>
    %27 = arith.subf %19, %21 : vector<1x512xf32>
    %cst_10 = arith.constant 1.000000e+00 : f32
    %28 = vector.broadcast %cst_10 : f32 to vector<1x512xf32>
    %29 = arith.subf %28, %27 : vector<1x512xf32>
    %30 = tpu.iota {dimensions = array<i32: 0>} : vector<32x512xi32>
    %31 = tpu.iota {dimensions = array<i32: 0>} : vector<32x512xi32>
    %32 = vector.broadcast %23 : vector<1x512xi32> to vector<32x512xi32>
    %33 = arith.cmpi eq, %30, %32 : vector<32x512xi32>
    %cst_11 = arith.constant 0.000000e+00 : f32
    %34 = vector.shape_cast %29 : vector<1x512xf32> to vector<1x512xf32>
    %35 = vector.broadcast %34 : vector<1x512xf32> to vector<32x512xf32>
    %36 = vector.broadcast %cst_11 : f32 to vector<32x512xf32>
    %37 = arith.select %33, %35, %36 : vector<32x512xi1>, vector<32x512xf32>
    %c1_i32 = arith.constant 1 : i32
    %38 = vector.broadcast %c1_i32 : i32 to vector<1x512xi32>
    %39 = arith.addi %23, %38 : vector<1x512xi32>
    %40 = vector.broadcast %39 : vector<1x512xi32> to vector<32x512xi32>
    %41 = arith.cmpi eq, %30, %40 : vector<32x512xi32>
    %cst_12 = arith.constant 0.000000e+00 : f32
    %42 = vector.shape_cast %27 : vector<1x512xf32> to vector<1x512xf32>
    %43 = vector.broadcast %42 : vector<1x512xf32> to vector<32x512xf32>
    %44 = vector.broadcast %cst_12 : f32 to vector<32x512xf32>
    %45 = arith.select %41, %43, %44 : vector<32x512xi1>, vector<32x512xf32>
    %46 = arith.addf %37, %45 : vector<32x512xf32>
    %47 = vector.broadcast %22 : vector<1x512xi32> to vector<32x512xi32>
    %48 = arith.cmpi eq, %31, %47 : vector<32x512xi32>
    %cst_13 = arith.constant 0.000000e+00 : f32
    %49 = vector.shape_cast %26 : vector<1x512xf32> to vector<1x512xf32>
    %50 = vector.broadcast %49 : vector<1x512xf32> to vector<32x512xf32>
    %51 = vector.broadcast %cst_13 : f32 to vector<32x512xf32>
    %52 = arith.select %48, %50, %51 : vector<32x512xi1>, vector<32x512xf32>
    %c1_i32_14 = arith.constant 1 : i32
    %53 = vector.broadcast %c1_i32_14 : i32 to vector<1x512xi32>
    %54 = arith.addi %22, %53 : vector<1x512xi32>
    %55 = vector.broadcast %54 : vector<1x512xi32> to vector<32x512xi32>
    %56 = arith.cmpi eq, %31, %55 : vector<32x512xi32>
    %cst_15 = arith.constant 0.000000e+00 : f32
    %57 = vector.shape_cast %24 : vector<1x512xf32> to vector<1x512xf32>
    %58 = vector.broadcast %57 : vector<1x512xf32> to vector<32x512xf32>
    %59 = vector.broadcast %cst_15 : f32 to vector<32x512xf32>
    %60 = arith.select %56, %58, %59 : vector<32x512xi1>, vector<32x512xf32>
    %61 = arith.addf %52, %60 : vector<32x512xf32>
    %c0_16 = arith.constant 0 : index
    %c0_17 = arith.constant 0 : index
    %c0_18 = arith.constant 0 : index
    %c0_19 = arith.constant 0 : index
    %62 = vector.load %arg3[%c0_16, %c0_17, %c0_18, %c0_19] : memref<1x3x32x32xf32, #tpu.memory_space<vmem>>, vector<1x3x32x32xf32>
    %63 = vector.shape_cast %62 : vector<1x3x32x32xf32> to vector<3x32x32xf32>
    %64 = vector.extract_strided_slice %63 {offsets = [0, 0, 0], sizes = [1, 32, 32], strides = [1, 1, 1]} : vector<3x32x32xf32> to vector<1x32x32xf32>
    %65 = vector.shape_cast %64 : vector<1x32x32xf32> to vector<32x32xf32>
    %cst_20 = arith.constant dense<0.000000e+00> : vector<32x512xf32>
    %66 = tpu.matmul %65, %46, %cst_20 {dimension_numbers = #tpu.dot_dimension_numbers<[1], [0], [0], [1], [0, 0, 1, 1], [], []>} : vector<32x32xf32>, vector<32x512xf32>, vector<32x512xf32> -> vector<32x512xf32>
    %67 = arith.mulf %61, %66 : vector<32x512xf32>
    %cst_21 = arith.constant dense<0.000000e+00> : vector<512xf32>
    %68 = vector.multi_reduction <add>, %67, %cst_21 [0] : vector<32x512xf32> to vector<512xf32>
    %69 = vector.shape_cast %68 : vector<512xf32> to vector<1x512xf32>
    %70 = vector.extract_strided_slice %63 {offsets = [1, 0, 0], sizes = [1, 32, 32], strides = [1, 1, 1]} : vector<3x32x32xf32> to vector<1x32x32xf32>
    %71 = vector.shape_cast %70 : vector<1x32x32xf32> to vector<32x32xf32>
    %cst_22 = arith.constant dense<0.000000e+00> : vector<32x512xf32>
    %72 = tpu.matmul %71, %46, %cst_22 {dimension_numbers = #tpu.dot_dimension_numbers<[1], [0], [0], [1], [0, 0, 1, 1], [], []>} : vector<32x32xf32>, vector<32x512xf32>, vector<32x512xf32> -> vector<32x512xf32>
    %73 = arith.mulf %61, %72 : vector<32x512xf32>
    %cst_23 = arith.constant dense<0.000000e+00> : vector<512xf32>
    %74 = vector.multi_reduction <add>, %73, %cst_23 [0] : vector<32x512xf32> to vector<512xf32>
    %75 = vector.shape_cast %74 : vector<512xf32> to vector<1x512xf32>
    %76 = vector.extract_strided_slice %63 {offsets = [2, 0, 0], sizes = [1, 32, 32], strides = [1, 1, 1]} : vector<3x32x32xf32> to vector<1x32x32xf32>
    %77 = vector.shape_cast %76 : vector<1x32x32xf32> to vector<32x32xf32>
    %cst_24 = arith.constant dense<0.000000e+00> : vector<32x512xf32>
    %78 = tpu.matmul %77, %46, %cst_24 {dimension_numbers = #tpu.dot_dimension_numbers<[1], [0], [0], [1], [0, 0, 1, 1], [], []>} : vector<32x32xf32>, vector<32x512xf32>, vector<32x512xf32> -> vector<32x512xf32>
    %79 = arith.mulf %61, %78 : vector<32x512xf32>
    %cst_25 = arith.constant dense<0.000000e+00> : vector<512xf32>
    %80 = vector.multi_reduction <add>, %79, %cst_25 [0] : vector<32x512xf32> to vector<512xf32>
    %81 = vector.shape_cast %80 : vector<512xf32> to vector<1x512xf32>
    %82 = tpu.concatenate %69, %75, %81 in 0 : vector<1x512xf32>, vector<1x512xf32>, vector<1x512xf32> -> vector<3x512xf32>
    %c0_26 = arith.constant 0 : index
    %c0_27 = arith.constant 0 : index
    %c0_28 = arith.constant 0 : index
    %83 = vector.load %arg4[%c0_26, %c0_27, %c0_28] : memref<1x3x512xf32, #tpu.memory_space<vmem>>, vector<1x3x512xf32>
    %84 = vector.shape_cast %83 : vector<1x3x512xf32> to vector<3x512xf32>
    %85 = vector.shape_cast %82 : vector<3x512xf32> to vector<1x3x512xf32>
    tpu.vector_store %arg4[%c0_26, %c0_27, %c0_28], %85 {strides = array<i32>} : memref<1x3x512xf32, #tpu.memory_space<vmem>>, vector<1x3x512xf32>,
    return
  }
  func.func @transform_0(%arg0: i32, %arg1: i32) -> (i32, i32, i32) {
    %c0_i32 = arith.constant 0 : i32
    %c0_i32_0 = arith.constant 0 : i32
    return %arg0, %c0_i32, %arg1 : i32, i32, i32
  }
  func.func @transform_1(%arg0: i32, %arg1: i32) -> (i32, i32, i32, i32) {
    %c0_i32 = arith.constant 0 : i32
    %c0_i32_0 = arith.constant 0 : i32
    %c0_i32_1 = arith.constant 0 : i32
    %c0_i32_2 = arith.constant 0 : i32
    return %arg0, %c0_i32, %c0_i32_0, %c0_i32_1 : i32, i32, i32, i32
  }
  func.func @transform_2(%arg0: i32, %arg1: i32) -> (i32, i32, i32) {
    %c0_i32 = arith.constant 0 : i32
    %c0_i32_0 = arith.constant 0 : i32
    return %arg0, %c0_i32, %arg1 : i32, i32, i32
  }
}

</mosaic_0001>

<llo_original>
// kernel: stn_tpn_forward.10
$region0: #{stn_tpn_forward.10}
  #allocation0 [shape = 'u32[]', space=smem, size = 0x4, offset = 0x4, fixed_abs, tag = 'smem constant byte address 0x4 - core index']
  #allocation1 [shape = 'u32[144,128]{1,0:T(1,128)}', space=vmem, size = 0x12000, scoped, tag = 'internal scratch']
  %s0 = inlined_call_operand.vmem [shape: bf16[1800,54], index: 0, kind: input, shape index: {}]
  %s1 = inlined_call_operand.vmem [shape: bf16[54,32], index: 1, kind: input, shape index: {}]
  %s2 = inlined_call_operand.vmem [shape: f32[1,32], index: 2, kind: input, shape index: {}]
  %s3 = inlined_call_operand.vmem [shape: f32[1800,32], index: 3, kind: output, shape index: {}]
  %s4 = sld [smem:[#allocation0]]
  $region93: #{stn_tpn_forward.10} parent=0
    _
  %s6 = ssub.s32 1, %s4
  %s7 = scalar_select 0, %s6, %s4
  $region1: #{stn_tpn_forward.10} parent=0
    #allocation2 [shape = 'u8[262144]{0}', space=vmem, size = 0x40000, scoped, tag = 'output window, operand 0']
    loop: start=0, step=1, limit=10
    $region2: #{stn_tpn_forward.10} parent=1 // loop_pre_header
      _
    $region3: #{stn_tpn_forward.10} parent=1 // loop_header
      %s9 = sphi 0, %s13
      %p10 = scmp.ge.s32.totalorder %s9, 10
      %s19 = sphi 0, %s21
      %s22 = sphi 0, %s19
      %s23 = sphi 0, %s22
      %s39 = sphi 0, %s23
      %s43 = sphi 0, %s43
      %s45 = sphi 0, %s43
      %s46 = sphi 0, %s45
      %s60 = sphi 0, %s46
      %s64 = sphi 0, %s64
      %s66 = sphi 0, %s64
      %s67 = sphi 0, %s66
      %s81 = sphi 0, %s67
      %s87 = sphi 0, %s89
      %s90 = sphi 0, %s87
      %s91 = sphi 0, %s90
      %s107 = sphi 0, %s91
    $region4: #{stn_tpn_forward.10} parent=1 // loop_header_branch
      %12 = sbr.rel (%p10) target = $region8
    $region5: #{stn_tpn_forward.10} parent=1 // loop_body
      %s14 = ssub.s32 %s9, 1
      %s15 = ssub.s32 %s9, 2
      %s16 = sadd.s32 %s9, 1
      %s17 = ssub.s32 %s9, %s16
      %p18 = scmp.eq.s32.totalorder %s17, 0
      %s20 = sadd.s32 %s19, 1
      %s21 = scalar_select %p18, %s19, %s20
      %p24 = pneg %p18
      %p25 = scmp.eq.s32.totalorder %s9, 7
      %p26 = por %p24, %p25
      %p27 = scmp.ne.s32.totalorder %s19, %s22
      %p28 = scmp.eq.s32.totalorder %s9, 0
      %p29 = por %p27, %p28
      %p30 = scmp.ne.s32.totalorder %s19, %s22
      %p31 = scmp.eq.s32.totalorder %s14, 7
      %p32 = por %p30, %p31
      %p33 = scmp.ne.s32.totalorder %s22, %s23
      %p34 = scmp.eq.s32.totalorder %s14, 0
      %p35 = por %p33, %p34
      %p36 = scmp.ne.s32.totalorder %s22, %s23
      %p37 = scmp.eq.s32.totalorder %s15, 7
      %p38 = por %p36, %p37
      %p40 = scmp.ne.s32.totalorder %s23, %s39
      %p41 = scmp.eq.s32.totalorder %s15, 0
      %p42 = por %p40, %p41
      %s44 = sadd.s32 %s43, 1
      %p47 = scmp.eq.s32.totalorder %s9, 7
      %p48 = scmp.ne.s32.totalorder %s43, %s45
      %p49 = scmp.eq.s32.totalorder %s9, 0
      %p50 = por %p48, %p49
      %p51 = scmp.ne.s32.totalorder %s43, %s45
      %p52 = scmp.eq.s32.totalorder %s14, 7
      %p53 = por %p51, %p52
      %p54 = scmp.ne.s32.totalorder %s45, %s46
      %p55 = scmp.eq.s32.totalorder %s14, 0
      %p56 = por %p54, %p55
      %p57 = scmp.ne.s32.totalorder %s45, %s46
      %p58 = scmp.eq.s32.totalorder %s15, 7
      %p59 = por %p57, %p58
      %p61 = scmp.ne.s32.totalorder %s46, %s60
      %p62 = scmp.eq.s32.totalorder %s15, 0
      %p63 = por %p61, %p62
      %s65 = sadd.s32 %s64, 1
      %p68 = scmp.eq.s32.totalorder %s9, 7
      %p69 = scmp.ne.s32.totalorder %s64, %s66
      %p70 = scmp.eq.s32.totalorder %s9, 0
      %p71 = por %p69, %p70
      %p72 = scmp.ne.s32.totalorder %s64, %s66
      %p73 = scmp.eq.s32.totalorder %s14, 7
      %p74 = por %p72, %p73
      %p75 = scmp.ne.s32.totalorder %s66, %s67
      %p76 = scmp.eq.s32.totalorder %s14, 0
      %p77 = por %p75, %p76
      %p78 = scmp.ne.s32.totalorder %s66, %s67
      %p79 = scmp.eq.s32.totalorder %s15, 7
      %p80 = por %p78, %p79
      %p82 = scmp.ne.s32.totalorder %s67, %s81
      %p83 = scmp.eq.s32.totalorder %s15, 0
      %p84 = por %p82, %p83
      %s85 = ssub.s32 %s9, %s16
      %p86 = scmp.eq.s32.totalorder %s85, 0
      %s88 = sadd.s32 %s87, 1
      %s89 = scalar_select %p86, %s87, %s88
      %p92 = pneg %p86
      %p93 = scmp.eq.s32.totalorder %s9, 7
      %p94 = por %p92, %p93
      %p95 = scmp.ne.s32.totalorder %s87, %s90
      %p96 = scmp.eq.s32.totalorder %s9, 0
      %p97 = por %p95, %p96
      %p98 = scmp.ne.s32.totalorder %s87, %s90
      %p99 = scmp.eq.s32.totalorder %s14, 7
      %p100 = por %p98, %p99
      %p101 = scmp.ne.s32.totalorder %s90, %s91
      %p102 = scmp.eq.s32.totalorder %s14, 0
      %p103 = por %p101, %p102
      %p104 = scmp.ne.s32.totalorder %s90, %s91
      %p105 = scmp.eq.s32.totalorder %s15, 7
      %p106 = por %p104, %p105
      %p108 = scmp.ne.s32.totalorder %s91, %s107
      %p109 = scmp.eq.s32.totalorder %s15, 0
      %p110 = por %p108, %p109
      %p111 = scmp.le.s32.totalorder 1, %s9
      %p112 = scmp.lt.s32.totalorder %s9, 9
      %p113 = pnand %p111, %p112
      %p114 = pneg %p113
      // Predicated region
      $region9: #{stn_tpn_forward.10} parent=5 // pred_check
        _
      $region10: #{stn_tpn_forward.10} parent=5 // pred_check_branch
        %116 = sbr.rel (%p113) target = $region12
      $region11: #{stn_tpn_forward.10} parent=5 // pred_region
        %s117 = ssub.s32 %s9, 1
        // Predicated region
        $region13: #{stn_tpn_forward.10} parent=11 // pred_check
          %p118 = pneg %p56
        $region14: #{stn_tpn_forward.10} parent=11 // pred_check_branch
          %120 = sbr.rel (%p118) target = $region16
        $region15: #{stn_tpn_forward.10} parent=11 // pred_region
          _
        $region16: #{stn_tpn_forward.10} parent=11 // pred_fallthru
          _
        // Predicated region
        $region17: #{stn_tpn_forward.10} parent=11 // pred_check
          %p121 = pneg %p77
        $region18: #{stn_tpn_forward.10} parent=11 // pred_check_branch
          %123 = sbr.rel (%p121) target = $region20
        $region19: #{stn_tpn_forward.10} parent=11 // pred_region
          _
        $region20: #{stn_tpn_forward.10} parent=11 // pred_fallthru
          _
      $region12: #{stn_tpn_forward.10} parent=5 // pred_fallthru
        _
      %p124 = scmp.lt.s32.totalorder %s9, 8
      // Predicated region
      $region21: #{stn_tpn_forward.10} parent=5 // pred_check
        %p125 = pneg %p124
      $region22: #{stn_tpn_forward.10} parent=5 // pred_check_branch
        %127 = sbr.rel (%p125) target = $region24
      $region23: #{stn_tpn_forward.10} parent=5 // pred_region
        // Predicated region
        $region25: #{stn_tpn_forward.10} parent=23 // pred_check
          %p128 = pneg %p29
        $region26: #{stn_tpn_forward.10} parent=23 // pred_check_branch
          %130 = sbr.rel (%p128) target = $region28
        $region27: #{stn_tpn_forward.10} parent=23 // pred_region
          %s131 = smul.u32 32, %s9
          %s132 = ssub.s32 225, %s131
          %p133 = scmp.lt.s32.totalorder %s132, 32
          %s134 = scalar_select %p133, %s132, 32
          %s135 = smul.u32 64, %s134
          %p136 = scmp.lt.s32.totalorder %s131, 224
          %s137 = scalar_select %p136, %s131, 224
          %s138 = smul.addr %s137, 4
          %s139 = scalar_lea.vmem %s0, %s138
          %s140 = smul.u32 32, %s9
          %s141 = ssub.s32 225, %s140
          %p142 = scmp.lt.s32.totalorder %s141, 32
          %s143 = scalar_select %p142, %s141, 32
          %s144 = smul.u32 64, %s143
        $region28: #{stn_tpn_forward.10} parent=23 // pred_fallthru
          _
      $region24: #{stn_tpn_forward.10} parent=5 // pred_fallthru
        _
      %p145 = scmp.le.s32.totalorder 1, %s9
      %p146 = scmp.lt.s32.totalorder %s9, 9
      %p147 = pnand %p145, %p146
      %p148 = pneg %p147
      // Predicated region
      $region29: #{stn_tpn_forward.10} parent=5 // pred_check
        _
      $region30: #{stn_tpn_forward.10} parent=5 // pred_check_branch
        %150 = sbr.rel (%p147) target = $region32
      $region31: #{stn_tpn_forward.10} parent=5 // pred_region
        %s151 = ssub.s32 %s9, 1
        %s152 = smul.u32 32, %s14
        %s153 = ssub.s32 225, %s152
        %p154 = scmp.lt.s32.totalorder %s153, 32
        %s155 = scalar_select %p154, %s153, 32
        %s156 = smul.u32 64, %s155
        %p157 = scmp.lt.s32.totalorder %s152, 224
        %s158 = scalar_select %p157, %s152, 224
        %s159 = smul.addr %s158, 4
        %s160 = scalar_lea.vmem %s0, %s159
        %p161 = pneg %p35
        %p162 = pneg %p32
        %p163 = pneg %p56
        %p164 = pneg %p53
        %p165 = pneg %p77
        %p166 = pneg %p74
        %p167 = pneg %p103
        %p168 = pneg %p100
        %s169 = sand.u32 %s90, 1
        %s170 = sand.u32 %s90, 1
        %s171 = smul.addr %s170, 256
        %s172 = scalar_lea.vmem [#allocation2], %s171
        %s173 = smul.u32 32, %s14
        %s174 = ssub.s32 225, %s173
        %p175 = scmp.lt.s32.totalorder %s174, 32
        %s176 = scalar_select %p175, %s174, 32
        %s177 = smul.u32 64, %s176
        %p178 = scmp.lt.s32.totalorder %s173, 224
        %s179 = scalar_select %p178, %s173, 224
        %s180 = smul.addr %s179, 4
        %s181 = scalar_lea.vmem %s0, %s180
        %s182 = smul.u32 32, %s14
        %s183 = ssub.s32 225, %s182
        %p184 = scmp.lt.s32.totalorder %s183, 32
        %s185 = scalar_select %p184, %s183, 32
        %s186 = smul.u32 64, %s185
        %s187 = smul.u32 32, %s14
        %s188 = ssub.s32 225, %s187
        %p189 = scmp.lt.s32.totalorder %s188, 32
        %s190 = scalar_select %p189, %s188, 32
        %s191 = smul.u32 128, %s190
        %v193 = vld [vmem:[%s181] sm:$0xf]
        %v194 = vld [vmem:[%s181 + $0x4] sm:$0xf]
        %v195 = vld [vmem:[%s181 + $0x8] sm:$0xf]
        %v196 = vld [vmem:[%s181 + $0xc] sm:$0xf]
        %v197 = vld [vmem:[%s181 + $0x10] sm:$0xf]
        %v198 = vld [vmem:[%s181 + $0x14] sm:$0xf]
        %v199 = vld [vmem:[%s181 + $0x18] sm:$0xf]
        %v200 = vld [vmem:[%s181 + $0x1c] sm:$0xf]
        %v201 = vld [vmem:[%s181 + $0x20] sm:$0xf]
        %v202 = vld [vmem:[%s181 + $0x24] sm:$0xf]
        %v203 = vld [vmem:[%s181 + $0x28] sm:$0xf]
        %v204 = vld [vmem:[%s181 + $0x2c] sm:$0xf]
        %v205 = vld [vmem:[%s181 + $0x30] sm:$0xf]
        %v206 = vld [vmem:[%s181 + $0x34] sm:$0xf]
        %v207 = vld [vmem:[%s181 + $0x38] sm:$0xf]
        %v208 = vld [vmem:[%s181 + $0x3c] sm:$0xf]
        %v209 = vld [vmem:[%s181 + $0x40] sm:$0xf]
        %v210 = vld [vmem:[%s181 + $0x44] sm:$0xf]
        %v211 = vld [vmem:[%s181 + $0x48] sm:$0xf]
        %v212 = vld [vmem:[%s181 + $0x4c] sm:$0xf]
        %v213 = vld [vmem:[%s181 + $0x50] sm:$0xf]
        %v214 = vld [vmem:[%s181 + $0x54] sm:$0xf]
        %v215 = vld [vmem:[%s181 + $0x58] sm:$0xf]
        %v216 = vld [vmem:[%s181 + $0x5c] sm:$0xf]
        %v217 = vld [vmem:[%s181 + $0x60] sm:$0xf]
        %v218 = vld [vmem:[%s181 + $0x64] sm:$0xf]
        %v219 = vld [vmem:[%s181 + $0x68] sm:$0xf]
        %v220 = vld [vmem:[%s181 + $0x6c] sm:$0xf]
        %v221 = vld [vmem:[%s181 + $0x70] sm:$0xf]
        %v222 = vld [vmem:[%s181 + $0x74] sm:$0xf]
        %v223 = vld [vmem:[%s181 + $0x78] sm:$0xf]
        %v224 = vld [vmem:[%s181 + $0x7c] sm:$0xf]
        %v225 = vld [vmem:[%s1] sm:$0xf]
        %v226 = vld [vmem:[%s1 + $0x4] sm:$0xf]
        %v227 = vld [vmem:[%s1 + $0x8] sm:$0xf]
        %v228 = vld [vmem:[%s1 + $0xc] sm:$0xf]
        %v229 = vld [vmem:[%s1 + $0x10] sm:$0xf]
        %v230 = vld [vmem:[%s1 + $0x14] sm:$0xf]
        %v231 = vld [vmem:[%s1 + $0x18] sm:$0x7]
        %v232 = vld [vmem:[%s2] sm:$0x1]
        %v234 = vlaneseq
        %v235 = vshrl.u32 %v234, 7
        %v236 = vsub.s32 0, %v235
        %v237 = vrot.slane %v232, %v236
        %v271 = vunpack.c.l.b16 %v193
        %v272 = vunpack.c.l.b16 %v194
        %v273 = vunpack.c.l.b16 %v195
        %v274 = vunpack.c.l.b16 %v196
        %v275 = vunpack.c.l.b16 %v197
        %v276 = vunpack.c.l.b16 %v198
        %v277 = vunpack.c.l.b16 %v199
        %v278 = vunpack.c.l.b16 %v200
        %v279 = vunpack.c.l.b16 %v201
        %v280 = vunpack.c.l.b16 %v202
        %v281 = vunpack.c.l.b16 %v203
        %v282 = vunpack.c.l.b16 %v204
        %v283 = vunpack.c.l.b16 %v205
        %v284 = vunpack.c.l.b16 %v206
        %v285 = vunpack.c.l.b16 %v207
        %v286 = vunpack.c.l.b16 %v208
        %v287 = vunpack.c.l.b16 %v209
        %v288 = vunpack.c.l.b16 %v210
        %v289 = vunpack.c.l.b16 %v211
        %v290 = vunpack.c.l.b16 %v212
        %v291 = vunpack.c.l.b16 %v213
        %v292 = vunpack.c.l.b16 %v214
        %v293 = vunpack.c.l.b16 %v215
        %v294 = vunpack.c.l.b16 %v216
        %v295 = vunpack.c.l.b16 %v217
        %v296 = vunpack.c.l.b16 %v218
        %v297 = vunpack.c.l.b16 %v219
        %v298 = vunpack.c.l.b16 %v220
        %v299 = vunpack.c.l.b16 %v221
        %v300 = vunpack.c.l.b16 %v222
        %v301 = vunpack.c.l.b16 %v223
        %v302 = vunpack.c.l.b16 %v224
        %v303 = vpack.c.b16 %v272, %v271
        %v304 = vpack.c.b16 %v274, %v273
        %v305 = vpack.c.b16 %v276, %v275
        %v306 = vpack.c.b16 %v278, %v277
        %v307 = vpack.c.b16 %v280, %v279
        %v308 = vpack.c.b16 %v282, %v281
        %v309 = vpack.c.b16 %v284, %v283
        %v310 = vpack.c.b16 %v286, %v285
        %v311 = vpack.c.b16 %v288, %v287
        %v312 = vpack.c.b16 %v290, %v289
        %v313 = vpack.c.b16 %v292, %v291
        %v314 = vpack.c.b16 %v294, %v293
        %v315 = vpack.c.b16 %v296, %v295
        %v316 = vpack.c.b16 %v298, %v297
        %v317 = vpack.c.b16 %v300, %v299
        %v318 = vpack.c.b16 %v302, %v301
        %v326 = vunpack.c.l.b16 %v225
        %v327 = vunpack.c.l.b16 %v226
        %v328 = vunpack.c.l.b16 %v227
        %v329 = vunpack.c.l.b16 %v228
        %v330 = vunpack.c.l.b16 %v229
        %v331 = vunpack.c.l.b16 %v230
        %v332 = vunpack.c.l.b16 %v231
        %v333 = vpack.c.b16 %v327, %v326
        %v334 = vpack.c.b16 %v329, %v328
        %v335 = vpack.c.b16 %v331, %v330
        %v336 = vpack.c.b16 %v332, %v332
        %vm340 = vcmask 441344
        %v342 = vsel %vm340, %v303, 0
        %v345 = vsel %vm340, %v304, 0
        %v348 = vsel %vm340, %v305, 0
        %v351 = vsel %vm340, %v306, 0
        %v354 = vsel %vm340, %v307, 0
        %v357 = vsel %vm340, %v308, 0
        %v360 = vsel %vm340, %v309, 0
        %v363 = vsel %vm340, %v310, 0
        %v366 = vsel %vm340, %v311, 0
        %v369 = vsel %vm340, %v312, 0
        %v372 = vsel %vm340, %v313, 0
        %v375 = vsel %vm340, %v314, 0
        %v378 = vsel %vm340, %v315, 0
        %v381 = vsel %vm340, %v316, 0
        %v384 = vsel %vm340, %v317, 0
        %v387 = vsel %vm340, %v318, 0
        %vm389 = vcmask 1042432
        %v391 = vsel %vm389, %v336, 0
        %393 = vmatprep.subr.bf16.mxu0 0
        %394 = vmatpush1.bf16.msra.mxu0 %v333
        %395 = vmatprep.subr.bf16.mxu0 0
        %396 = vmatpush1.bf16.msra.mxu0 %v334
        %397 = vmatprep.subr.bf16.mxu0 0
        %398 = vmatpush1.bf16.msra.mxu0 %v335
        %399 = vmatprep.subr.bf16.mxu0 0
        %400 = vmatpush1.bf16.msra.mxu0 %v391
        %401 = vmatprep.subr.bf16.mxu0 0
        %402 = vmatpush1.bf16.msra.mxu0 0
        %403 = vmatprep.subr.bf16.mxu0 0
        %404 = vmatpush1.bf16.msra.mxu0 0
        %405 = vmatprep.subr.bf16.mxu0 0
        %406 = vmatpush1.bf16.msra.mxu0 0
        %407 = vmatprep.subr.bf16.mxu0 0
        %408 = vmatpush1.bf16.msra.mxu0 0
        %409 = vmatprep.subr.bf16.mxu0 0
        %410 = vmatpush1.bf16.msra.mxu0 0
        %411 = vmatprep.subr.bf16.mxu0 0
        %412 = vmatpush1.bf16.msra.mxu0 0
        %413 = vmatprep.subr.bf16.mxu0 0
        %414 = vmatpush1.bf16.msra.mxu0 0
        %415 = vmatprep.subr.bf16.mxu0 0
        %416 = vmatpush1.bf16.msra.mxu0 0
        %417 = vmatprep.subr.bf16.mxu0 0
        %418 = vmatpush1.bf16.msra.mxu0 0
        %419 = vmatprep.subr.bf16.mxu0 0
        %420 = vmatpush1.bf16.msra.mxu0 0
        %421 = vmatprep.subr.bf16.mxu0 0
        %422 = vmatpush1.bf16.msra.mxu0 0
        %423 = vmatprep.subr.bf16.mxu0 0
        %424 = vmatpush1.bf16.msra.mxu0 0
        %425 = vmatprep.mubr.bf16.mxu0 0
        %426 = vmatmul.mubr.bf16.gmra.mrb[0].mxu0 %v342
        %v427 = vpop.f32.mrb[0].mxu0
        %v428 = vadd.f32 %v237, %v427
        %v429 = vpop.f32.mrb[0].mxu0
        %v430 = vpop.f32.mrb[0].mxu0
        %v431 = vadd.f32 %v237, %v430
        %v432 = vpop.f32.mrb[0].mxu0
        %433 = vmatprep.mubr.bf16.mxu0 0
        %434 = vmatmul.mubr.bf16.gmra.mrb[0].mxu0 %v345
        %v435 = vpop.f32.mrb[0].mxu0
        %v436 = vadd.f32 %v237, %v435
        %v437 = vpop.f32.mrb[0].mxu0
        %v438 = vpop.f32.mrb[0].mxu0
        %v439 = vadd.f32 %v237, %v438
        %v440 = vpop.f32.mrb[0].mxu0
        %441 = vmatprep.mubr.bf16.mxu0 0
        %442 = vmatmul.mubr.bf16.gmra.mrb[0].mxu0 %v348
        %v443 = vpop.f32.mrb[0].mxu0
        %v444 = vadd.f32 %v237, %v443
        %v445 = vpop.f32.mrb[0].mxu0
        %v446 = vpop.f32.mrb[0].mxu0
        %v447 = vadd.f32 %v237, %v446
        %v448 = vpop.f32.mrb[0].mxu0
        %449 = vmatprep.mubr.bf16.mxu0 0
        %450 = vmatmul.mubr.bf16.gmra.mrb[0].mxu0 %v351
        %v451 = vpop.f32.mrb[0].mxu0
        %v452 = vadd.f32 %v237, %v451
        %v453 = vpop.f32.mrb[0].mxu0
        %v454 = vpop.f32.mrb[0].mxu0
        %v455 = vadd.f32 %v237, %v454
        %v456 = vpop.f32.mrb[0].mxu0
        %457 = vmatprep.mubr.bf16.mxu0 0
        %458 = vmatmul.mubr.bf16.gmra.mrb[0].mxu0 %v354
        %v459 = vpop.f32.mrb[0].mxu0
        %v460 = vadd.f32 %v237, %v459
        %v461 = vpop.f32.mrb[0].mxu0
        %v462 = vpop.f32.mrb[0].mxu0
        %v463 = vadd.f32 %v237, %v462
        %v464 = vpop.f32.mrb[0].mxu0
        %465 = vmatprep.mubr.bf16.mxu0 0
        %466 = vmatmul.mubr.bf16.gmra.mrb[0].mxu0 %v357
        %v467 = vpop.f32.mrb[0].mxu0
        %v468 = vadd.f32 %v237, %v467
        %v469 = vpop.f32.mrb[0].mxu0
        %v470 = vpop.f32.mrb[0].mxu0
        %v471 = vadd.f32 %v237, %v470
        %v472 = vpop.f32.mrb[0].mxu0
        %473 = vmatprep.mubr.bf16.mxu0 0
        %474 = vmatmul.mubr.bf16.gmra.mrb[0].mxu0 %v360
        %v475 = vpop.f32.mrb[0].mxu0
        %v476 = vadd.f32 %v237, %v475
        %v477 = vpop.f32.mrb[0].mxu0
        %v478 = vpop.f32.mrb[0].mxu0
        %v479 = vadd.f32 %v237, %v478
        %v480 = vpop.f32.mrb[0].mxu0
        %481 = vmatprep.mubr.bf16.mxu0 0
        %482 = vmatmul.mubr.bf16.gmra.mrb[0].mxu0 %v363
        %v483 = vpop.f32.mrb[0].mxu0
        %v484 = vadd.f32 %v237, %v483
        %v485 = vpop.f32.mrb[0].mxu0
        %v486 = vpop.f32.mrb[0].mxu0
        %v487 = vadd.f32 %v237, %v486
        %v488 = vpop.f32.mrb[0].mxu0
        %489 = vmatprep.mubr.bf16.mxu0 0
        %490 = vmatmul.mubr.bf16.gmra.mrb[0].mxu0 %v366
        %v491 = vpop.f32.mrb[0].mxu0
        %v492 = vadd.f32 %v237, %v491
        %v493 = vpop.f32.mrb[0].mxu0
        %v494 = vpop.f32.mrb[0].mxu0
        %v495 = vadd.f32 %v237, %v494
        %v496 = vpop.f32.mrb[0].mxu0
        %497 = vmatprep.mubr.bf16.mxu0 0
        %498 = vmatmul.mubr.bf16.gmra.mrb[0].mxu0 %v369
        %v499 = vpop.f32.mrb[0].mxu0
        %v500 = vadd.f32 %v237, %v499
        %v501 = vpop.f32.mrb[0].mxu0
        %v502 = vpop.f32.mrb[0].mxu0
        %v503 = vadd.f32 %v237, %v502
        %v504 = vpop.f32.mrb[0].mxu0
        %505 = vmatprep.mubr.bf16.mxu0 0
        %506 = vmatmul.mubr.bf16.gmra.mrb[0].mxu0 %v372
        %v507 = vpop.f32.mrb[0].mxu0
        %v508 = vadd.f32 %v237, %v507
        %v509 = vpop.f32.mrb[0].mxu0
        %v510 = vpop.f32.mrb[0].mxu0
        %v511 = vadd.f32 %v237, %v510
        %v512 = vpop.f32.mrb[0].mxu0
        %513 = vmatprep.mubr.bf16.mxu0 0
        %514 = vmatmul.mubr.bf16.gmra.mrb[0].mxu0 %v375
        %v515 = vpop.f32.mrb[0].mxu0
        %v516 = vadd.f32 %v237, %v515
        %v517 = vpop.f32.mrb[0].mxu0
        %v518 = vpop.f32.mrb[0].mxu0
        %v519 = vadd.f32 %v237, %v518
        %v520 = vpop.f32.mrb[0].mxu0
        %521 = vmatprep.mubr.bf16.mxu0 0
        %522 = vmatmul.mubr.bf16.gmra.mrb[0].mxu0 %v378
        %v523 = vpop.f32.mrb[0].mxu0
        %v524 = vadd.f32 %v237, %v523
        %v525 = vpop.f32.mrb[0].mxu0
        %v526 = vpop.f32.mrb[0].mxu0
        %v527 = vadd.f32 %v237, %v526
        %v528 = vpop.f32.mrb[0].mxu0
        %529 = vmatprep.mubr.bf16.mxu0 0
        %530 = vmatmul.mubr.bf16.gmra.mrb[0].mxu0 %v381
        %v531 = vpop.f32.mrb[0].mxu0
        %v532 = vadd.f32 %v237, %v531
        %v533 = vpop.f32.mrb[0].mxu0
        %v534 = vpop.f32.mrb[0].mxu0
        %v535 = vadd.f32 %v237, %v534
        %v536 = vpop.f32.mrb[0].mxu0
        %537 = vmatprep.mubr.bf16.mxu0 0
        %538 = vmatmul.mubr.bf16.gmra.mrb[0].mxu0 %v384
        %v539 = vpop.f32.mrb[0].mxu0
        %v540 = vadd.f32 %v237, %v539
        %v541 = vpop.f32.mrb[0].mxu0
        %v542 = vpop.f32.mrb[0].mxu0
        %v543 = vadd.f32 %v237, %v542
        %v544 = vpop.f32.mrb[0].mxu0
        %545 = vmatprep.mubr.bf16.mxu0 0
        %546 = vmatmul.mubr.bf16.gmra.mrb[0].mxu0 %v387
        %v547 = vpop.f32.mrb[0].mxu0
        %v548 = vadd.f32 %v237, %v547
        %v549 = vpop.f32.mrb[0].mxu0
        %v550 = vpop.f32.mrb[0].mxu0
        %v551 = vadd.f32 %v237, %v550
        %v552 = vpop.f32.mrb[0].mxu0
        %553 = vdwg.mxu0
        %vm554 = vcmask 261120
        %555 = vst.msk [vmem:[%s172] sm:$0xff] %vm554, %v428
        %556 = vst.msk [vmem:[%s172 + $0x8] sm:$0xff] %vm554, %v431
        %557 = vst.msk [vmem:[%s172 + $0x10] sm:$0xff] %vm554, %v436
        %558 = vst.msk [vmem:[%s172 + $0x18] sm:$0xff] %vm554, %v439
        %559 = vst.msk [vmem:[%s172 + $0x20] sm:$0xff] %vm554, %v444
        %560 = vst.msk [vmem:[%s172 + $0x28] sm:$0xff] %vm554, %v447
        %561 = vst.msk [vmem:[%s172 + $0x30] sm:$0xff] %vm554, %v452
        %562 = vst.msk [vmem:[%s172 + $0x38] sm:$0xff] %vm554, %v455
        %563 = vst.msk [vmem:[%s172 + $0x40] sm:$0xff] %vm554, %v460
        %564 = vst.msk [vmem:[%s172 + $0x48] sm:$0xff] %vm554, %v463
        %565 = vst.msk [vmem:[%s172 + $0x50] sm:$0xff] %vm554, %v468
        %566 = vst.msk [vmem:[%s172 + $0x58] sm:$0xff] %vm554, %v471
        %567 = vst.msk [vmem:[%s172 + $0x60] sm:$0xff] %vm554, %v476
        %568 = vst.msk [vmem:[%s172 + $0x68] sm:$0xff] %vm554, %v479
        %569 = vst.msk [vmem:[%s172 + $0x70] sm:$0xff] %vm554, %v484
        %570 = vst.msk [vmem:[%s172 + $0x78] sm:$0xff] %vm554, %v487
        %571 = vst.msk [vmem:[%s172 + $0x80] sm:$0xff] %vm554, %v492
        %572 = vst.msk [vmem:[%s172 + $0x88] sm:$0xff] %vm554, %v495
        %573 = vst.msk [vmem:[%s172 + $0x90] sm:$0xff] %vm554, %v500
        %574 = vst.msk [vmem:[%s172 + $0x98] sm:$0xff] %vm554, %v503
        %575 = vst.msk [vmem:[%s172 + $0xa0] sm:$0xff] %vm554, %v508
        %576 = vst.msk [vmem:[%s172 + $0xa8] sm:$0xff] %vm554, %v511
        %577 = vst.msk [vmem:[%s172 + $0xb0] sm:$0xff] %vm554, %v516
        %578 = vst.msk [vmem:[%s172 + $0xb8] sm:$0xff] %vm554, %v519
        %579 = vst.msk [vmem:[%s172 + $0xc0] sm:$0xff] %vm554, %v524
        %580 = vst.msk [vmem:[%s172 + $0xc8] sm:$0xff] %vm554, %v527
        %581 = vst.msk [vmem:[%s172 + $0xd0] sm:$0xff] %vm554, %v532
        %582 = vst.msk [vmem:[%s172 + $0xd8] sm:$0xff] %vm554, %v535
        %583 = vst.msk [vmem:[%s172 + $0xe0] sm:$0xff] %vm554, %v540
        %584 = vst.msk [vmem:[%s172 + $0xe8] sm:$0xff] %vm554, %v543
        %585 = vst.msk [vmem:[%s172 + $0xf0] sm:$0xff] %vm554, %v548
        %586 = vst.msk [vmem:[%s172 + $0xf8] sm:$0xff] %vm554, %v551
        %s587 = sand.u32 %s90, 1
        %s588 = sand.u32 %s90, 1
        %s589 = smul.addr %s588, 256
        %s590 = scalar_lea.vmem [#allocation2], %s589
        // Predicated region
        $region33: #{stn_tpn_forward.10} parent=31 // pred_check
          %p591 = pneg %p100
        $region34: #{stn_tpn_forward.10} parent=31 // pred_check_branch
          %593 = sbr.rel (%p591) target = $region36
        $region35: #{stn_tpn_forward.10} parent=31 // pred_region
          %s594 = smul.u32 32, %s14
          %s595 = ssub.s32 225, %s594
          %p596 = scmp.lt.s32.totalorder %s595, 32
          %s597 = scalar_select %p596, %s595, 32
          %s598 = smul.u32 128, %s597
          %p599 = scmp.ne.s32.totalorder 0, %s598
          %s600 = smul.addr %s594, 8
          %s601 = scalar_lea.vmem %s3, %s600
          // Predicated region
          $region37: #{stn_tpn_forward.10} parent=35 // pred_check
            %p602 = pneg %p599
          $region38: #{stn_tpn_forward.10} parent=35 // pred_check_branch
            %604 = sbr.rel (%p602) target = $region40
          $region39: #{stn_tpn_forward.10} parent=35 // pred_region
            // Predicated region
            $region41: #{stn_tpn_forward.10} parent=39 // pred_check
              _
            $region42: #{stn_tpn_forward.10} parent=39 // pred_check_branch
              %606 = sbr.rel (0) target = $region44
            $region43: #{stn_tpn_forward.10} parent=39 // pred_region
              // Predicated region
              $region63: #{stn_tpn_forward.10} parent=43 // pred_check
                _
              $region64: #{stn_tpn_forward.10} parent=43 // pred_check_branch
                %717 = sbr.rel (0) target = $region66
              $region65: #{stn_tpn_forward.10} parent=43 // pred_region
                %s718 = sshrl.u32 %s597, 5
                // While loop
                $region67: #{stn_tpn_forward.10} parent=65 // loop_pre_header
                  _
                $region68: #{stn_tpn_forward.10} parent=65 // loop_header
                  %s720 = sphi 0, %s722
                  %p721 = scmp.ge.s32.totalorder %s720, %s718
                  %s725 = sphi 0, %s794
                  %s726 = sphi %s590, %s797
                  %s727 = sphi %s601, %s798
                $region69: #{stn_tpn_forward.10} parent=65 // loop_header_branch
                  %724 = sbr.rel (%p721) target = $region73
                $region70: #{stn_tpn_forward.10} parent=65 // loop_body
                  %v728 = vld [vmem:[%s726] sm:$0xff]
                  %729 = vst [vmem:[%s727] sm:$0xff] %v728
                  %v730 = vld [vmem:[%s726 + $0x8] sm:$0xff]
                  %731 = vst [vmem:[%s727 + $0x8] sm:$0xff] %v730
                  %v732 = vld [vmem:[%s726 + $0x10] sm:$0xff]
                  %733 = vst [vmem:[%s727 + $0x10] sm:$0xff] %v732
                  %v734 = vld [vmem:[%s726 + $0x18] sm:$0xff]
                  %735 = vst [vmem:[%s727 + $0x18] sm:$0xff] %v734
                  %v736 = vld [vmem:[%s726 + $0x20] sm:$0xff]
                  %737 = vst [vmem:[%s727 + $0x20] sm:$0xff] %v736
                  %v738 = vld [vmem:[%s726 + $0x28] sm:$0xff]
                  %739 = vst [vmem:[%s727 + $0x28] sm:$0xff] %v738
                  %v740 = vld [vmem:[%s726 + $0x30] sm:$0xff]
                  %741 = vst [vmem:[%s727 + $0x30] sm:$0xff] %v740
                  %v742 = vld [vmem:[%s726 + $0x38] sm:$0xff]
                  %743 = vst [vmem:[%s727 + $0x38] sm:$0xff] %v742
                  %v744 = vld [vmem:[%s726 + $0x40] sm:$0xff]
                  %745 = vst [vmem:[%s727 + $0x40] sm:$0xff] %v744
                  %v746 = vld [vmem:[%s726 + $0x48] sm:$0xff]
                  %747 = vst [vmem:[%s727 + $0x48] sm:$0xff] %v746
                  %v748 = vld [vmem:[%s726 + $0x50] sm:$0xff]
                  %749 = vst [vmem:[%s727 + $0x50] sm:$0xff] %v748
                  %v750 = vld [vmem:[%s726 + $0x58] sm:$0xff]
                  %751 = vst [vmem:[%s727 + $0x58] sm:$0xff] %v750
                  %v752 = vld [vmem:[%s726 + $0x60] sm:$0xff]
                  %753 = vst [vmem:[%s727 + $0x60] sm:$0xff] %v752
                  %v754 = vld [vmem:[%s726 + $0x68] sm:$0xff]
                  %755 = vst [vmem:[%s727 + $0x68] sm:$0xff] %v754
                  %v756 = vld [vmem:[%s726 + $0x70] sm:$0xff]
                  %757 = vst [vmem:[%s727 + $0x70] sm:$0xff] %v756
                  %v758 = vld [vmem:[%s726 + $0x78] sm:$0xff]
                  %759 = vst [vmem:[%s727 + $0x78] sm:$0xff] %v758
                  %v760 = vld [vmem:[%s726 + $0x80] sm:$0xff]
                  %761 = vst [vmem:[%s727 + $0x80] sm:$0xff] %v760
                  %v762 = vld [vmem:[%s726 + $0x88] sm:$0xff]
                  %763 = vst [vmem:[%s727 + $0x88] sm:$0xff] %v762
                  %v764 = vld [vmem:[%s726 + $0x90] sm:$0xff]
                  %765 = vst [vmem:[%s727 + $0x90] sm:$0xff] %v764
                  %v766 = vld [vmem:[%s726 + $0x98] sm:$0xff]
                  %767 = vst [vmem:[%s727 + $0x98] sm:$0xff] %v766
                  %v768 = vld [vmem:[%s726 + $0xa0] sm:$0xff]
                  %769 = vst [vmem:[%s727 + $0xa0] sm:$0xff] %v768
                  %v770 = vld [vmem:[%s726 + $0xa8] sm:$0xff]
                  %771 = vst [vmem:[%s727 + $0xa8] sm:$0xff] %v770
                  %v772 = vld [vmem:[%s726 + $0xb0] sm:$0xff]
                  %773 = vst [vmem:[%s727 + $0xb0] sm:$0xff] %v772
                  %v774 = vld [vmem:[%s726 + $0xb8] sm:$0xff]
                  %775 = vst [vmem:[%s727 + $0xb8] sm:$0xff] %v774
                  %v776 = vld [vmem:[%s726 + $0xc0] sm:$0xff]
                  %777 = vst [vmem:[%s727 + $0xc0] sm:$0xff] %v776
                  %v778 = vld [vmem:[%s726 + $0xc8] sm:$0xff]
                  %779 = vst [vmem:[%s727 + $0xc8] sm:$0xff] %v778
                  %v780 = vld [vmem:[%s726 + $0xd0] sm:$0xff]
                  %781 = vst [vmem:[%s727 + $0xd0] sm:$0xff] %v780
                  %v782 = vld [vmem:[%s726 + $0xd8] sm:$0xff]
                  %783 = vst [vmem:[%s727 + $0xd8] sm:$0xff] %v782
                  %v784 = vld [vmem:[%s726 + $0xe0] sm:$0xff]
                  %785 = vst [vmem:[%s727 + $0xe0] sm:$0xff] %v784
                  %v786 = vld [vmem:[%s726 + $0xe8] sm:$0xff]
                  %787 = vst [vmem:[%s727 + $0xe8] sm:$0xff] %v786
                  %v788 = vld [vmem:[%s726 + $0xf0] sm:$0xff]
                  %789 = vst [vmem:[%s727 + $0xf0] sm:$0xff] %v788
                  %v790 = vld [vmem:[%s726 + $0xf8] sm:$0xff]
                  %791 = vst [vmem:[%s727 + $0xf8] sm:$0xff] %v790
                  %s792 = sadd.s32 1, %s725
                  %p793 = scmp.ge.s32.totalorder %s792, %s718
                  %s794 = scalar_select %p793, 0, %s792
                  %s795 = smul.u32 %s794, 256
                  %s796 = smul.u32 %s794, 256
                  %s797 = scalar_lea.vmem %s590, %s795 [#allocation2]
                  %s798 = scalar_lea.vmem %s601, %s796
                $region71: #{stn_tpn_forward.10} parent=65 // loop_footer
                  %s722 = sadd.s32 %s720, 1
                $region72: #{stn_tpn_forward.10} parent=65 // loop_footer_branch
                  %719 = sbr.rel target = $region68
                $region73: #{stn_tpn_forward.10} parent=65 // loop_exit
                  _
                %s799 = sshrl.u32 %s597, 5
                %s800 = sand.u32 %s597, 31
                %s801 = smul.u32 %s799, 32
                %s802 = smul.u32 8, %s801
                %s803 = scalar_lea.vmem %s590, %s802 [#allocation2]
                %s804 = smul.u32 8, %s801
                %s805 = scalar_lea.vmem %s601, %s804
                // While loop
                $region74: #{stn_tpn_forward.10} parent=65 // loop_pre_header
                  _
                $region75: #{stn_tpn_forward.10} parent=65 // loop_header
                  %s807 = sphi 0, %s809
                  %p808 = scmp.ge.s32.totalorder %s807, %s800
                  %s812 = sphi 0, %s819
                  %s813 = sphi %s803, %s822
                  %s814 = sphi %s805, %s823
                $region76: #{stn_tpn_forward.10} parent=65 // loop_header_branch
                  %811 = sbr.rel (%p808) target = $region80
                $region77: #{stn_tpn_forward.10} parent=65 // loop_body
                  %v815 = vld [vmem:[%s813] sm:$0xff]
                  %816 = vst [vmem:[%s814] sm:$0xff] %v815
                  %s817 = sadd.s32 1, %s812
                  %p818 = scmp.ge.s32.totalorder %s817, %s800
                  %s819 = scalar_select %p818, 0, %s817
                  %s820 = smul.u32 %s819, 8
                  %s821 = smul.u32 %s819, 8
                  %s822 = scalar_lea.vmem %s803, %s820 [#allocation2]
                  %s823 = scalar_lea.vmem %s805, %s821
                $region78: #{stn_tpn_forward.10} parent=65 // loop_footer
                  %s809 = sadd.s32 %s807, 1
                $region79: #{stn_tpn_forward.10} parent=65 // loop_footer_branch
                  %806 = sbr.rel target = $region75
                $region80: #{stn_tpn_forward.10} parent=65 // loop_exit
                  _
              $region66: #{stn_tpn_forward.10} parent=43 // pred_fallthru
                _
              // Predicated region
              $region81: #{stn_tpn_forward.10} parent=43 // pred_check
                _
              $region82: #{stn_tpn_forward.10} parent=43 // pred_check_branch
                %825 = sbr.rel target = $region84
              $region83: #{stn_tpn_forward.10} parent=43 // pred_region
                _
              $region84: #{stn_tpn_forward.10} parent=43 // pred_fallthru
                _
            $region44: #{stn_tpn_forward.10} parent=39 // pred_fallthru
              _
            // Predicated region
            $region45: #{stn_tpn_forward.10} parent=39 // pred_check
              _
            $region46: #{stn_tpn_forward.10} parent=39 // pred_check_branch
              %608 = sbr.rel target = $region48
            $region47: #{stn_tpn_forward.10} parent=39 // pred_region
              %s610 = sshrl.u32 %s597, 5
              // While loop
              $region49: #{stn_tpn_forward.10} parent=47 // loop_pre_header
                _
              $region50: #{stn_tpn_forward.10} parent=47 // loop_header
                %s612 = sphi 0, %s614
                %p613 = scmp.ge.s32.totalorder %s612, %s610
                %s617 = sphi 0, %s686
                %s618 = sphi %s590, %s689
                %s619 = sphi %s601, %s690
              $region51: #{stn_tpn_forward.10} parent=47 // loop_header_branch
                %616 = sbr.rel (%p613) target = $region55
              $region52: #{stn_tpn_forward.10} parent=47 // loop_body
                %v620 = vld [vmem:[%s618] sm:$0xff]
                %621 = vst [vmem:[%s619] sm:$0xff] %v620
                %v622 = vld [vmem:[%s618 + $0x8] sm:$0xff]
                %623 = vst [vmem:[%s619 + $0x8] sm:$0xff] %v622
                %v624 = vld [vmem:[%s618 + $0x10] sm:$0xff]
                %625 = vst [vmem:[%s619 + $0x10] sm:$0xff] %v624
                %v626 = vld [vmem:[%s618 + $0x18] sm:$0xff]
                %627 = vst [vmem:[%s619 + $0x18] sm:$0xff] %v626
                %v628 = vld [vmem:[%s618 + $0x20] sm:$0xff]
                %629 = vst [vmem:[%s619 + $0x20] sm:$0xff] %v628
                %v630 = vld [vmem:[%s618 + $0x28] sm:$0xff]
                %631 = vst [vmem:[%s619 + $0x28] sm:$0xff] %v630
                %v632 = vld [vmem:[%s618 + $0x30] sm:$0xff]
                %633 = vst [vmem:[%s619 + $0x30] sm:$0xff] %v632
                %v634 = vld [vmem:[%s618 + $0x38] sm:$0xff]
                %635 = vst [vmem:[%s619 + $0x38] sm:$0xff] %v634
                %v636 = vld [vmem:[%s618 + $0x40] sm:$0xff]
                %637 = vst [vmem:[%s619 + $0x40] sm:$0xff] %v636
                %v638 = vld [vmem:[%s618 + $0x48] sm:$0xff]
                %639 = vst [vmem:[%s619 + $0x48] sm:$0xff] %v638
                %v640 = vld [vmem:[%s618 + $0x50] sm:$0xff]
                %641 = vst [vmem:[%s619 + $0x50] sm:$0xff] %v640
                %v642 = vld [vmem:[%s618 + $0x58] sm:$0xff]
                %643 = vst [vmem:[%s619 + $0x58] sm:$0xff] %v642
                %v644 = vld [vmem:[%s618 + $0x60] sm:$0xff]
                %645 = vst [vmem:[%s619 + $0x60] sm:$0xff] %v644
                %v646 = vld [vmem:[%s618 + $0x68] sm:$0xff]
                %647 = vst [vmem:[%s619 + $0x68] sm:$0xff] %v646
                %v648 = vld [vmem:[%s618 + $0x70] sm:$0xff]
                %649 = vst [vmem:[%s619 + $0x70] sm:$0xff] %v648
                %v650 = vld [vmem:[%s618 + $0x78] sm:$0xff]
                %651 = vst [vmem:[%s619 + $0x78] sm:$0xff] %v650
                %v652 = vld [vmem:[%s618 + $0x80] sm:$0xff]
                %653 = vst [vmem:[%s619 + $0x80] sm:$0xff] %v652
                %v654 = vld [vmem:[%s618 + $0x88] sm:$0xff]
                %655 = vst [vmem:[%s619 + $0x88] sm:$0xff] %v654
                %v656 = vld [vmem:[%s618 + $0x90] sm:$0xff]
                %657 = vst [vmem:[%s619 + $0x90] sm:$0xff] %v656
                %v658 = vld [vmem:[%s618 + $0x98] sm:$0xff]
                %659 = vst [vmem:[%s619 + $0x98] sm:$0xff] %v658
                %v660 = vld [vmem:[%s618 + $0xa0] sm:$0xff]
                %661 = vst [vmem:[%s619 + $0xa0] sm:$0xff] %v660
                %v662 = vld [vmem:[%s618 + $0xa8] sm:$0xff]
                %663 = vst [vmem:[%s619 + $0xa8] sm:$0xff] %v662
                %v664 = vld [vmem:[%s618 + $0xb0] sm:$0xff]
                %665 = vst [vmem:[%s619 + $0xb0] sm:$0xff] %v664
                %v666 = vld [vmem:[%s618 + $0xb8] sm:$0xff]
                %667 = vst [vmem:[%s619 + $0xb8] sm:$0xff] %v666
                %v668 = vld [vmem:[%s618 + $0xc0] sm:$0xff]
                %669 = vst [vmem:[%s619 + $0xc0] sm:$0xff] %v668
                %v670 = vld [vmem:[%s618 + $0xc8] sm:$0xff]
                %671 = vst [vmem:[%s619 + $0xc8] sm:$0xff] %v670
                %v672 = vld [vmem:[%s618 + $0xd0] sm:$0xff]
                %673 = vst [vmem:[%s619 + $0xd0] sm:$0xff] %v672
                %v674 = vld [vmem:[%s618 + $0xd8] sm:$0xff]
                %675 = vst [vmem:[%s619 + $0xd8] sm:$0xff] %v674
                %v676 = vld [vmem:[%s618 + $0xe0] sm:$0xff]
                %677 = vst [vmem:[%s619 + $0xe0] sm:$0xff] %v676
                %v678 = vld [vmem:[%s618 + $0xe8] sm:$0xff]
                %679 = vst [vmem:[%s619 + $0xe8] sm:$0xff] %v678
                %v680 = vld [vmem:[%s618 + $0xf0] sm:$0xff]
                %681 = vst [vmem:[%s619 + $0xf0] sm:$0xff] %v680
                %v682 = vld [vmem:[%s618 + $0xf8] sm:$0xff]
                %683 = vst [vmem:[%s619 + $0xf8] sm:$0xff] %v682
                %s684 = sadd.s32 1, %s617
                %p685 = scmp.ge.s32.totalorder %s684, %s610
                %s686 = scalar_select %p685, 0, %s684
                %s687 = smul.u32 %s686, 256
                %s688 = smul.u32 %s686, 256
                %s689 = scalar_lea.vmem %s590, %s687 [#allocation2]
                %s690 = scalar_lea.vmem %s601, %s688
              $region53: #{stn_tpn_forward.10} parent=47 // loop_footer
                %s614 = sadd.s32 %s612, 1
              $region54: #{stn_tpn_forward.10} parent=47 // loop_footer_branch
                %611 = sbr.rel target = $region50
              $region55: #{stn_tpn_forward.10} parent=47 // loop_exit
                _
              %s691 = sshrl.u32 %s597, 5
              %s692 = sand.u32 %s597, 31
              %s693 = smul.u32 %s691, 32
              %s694 = smul.u32 8, %s693
              %s695 = scalar_lea.vmem %s590, %s694 [#allocation2]
              %s696 = smul.u32 8, %s693
              %s697 = scalar_lea.vmem %s601, %s696
              // While loop
              $region56: #{stn_tpn_forward.10} parent=47 // loop_pre_header
                _
              $region57: #{stn_tpn_forward.10} parent=47 // loop_header
                %s699 = sphi 0, %s701
                %p700 = scmp.ge.s32.totalorder %s699, %s692
                %s704 = sphi 0, %s711
                %s705 = sphi %s695, %s714
                %s706 = sphi %s697, %s715
              $region58: #{stn_tpn_forward.10} parent=47 // loop_header_branch
                %703 = sbr.rel (%p700) target = $region62
              $region59: #{stn_tpn_forward.10} parent=47 // loop_body
                %v707 = vld [vmem:[%s705] sm:$0xff]
                %708 = vst [vmem:[%s706] sm:$0xff] %v707
                %s709 = sadd.s32 1, %s704
                %p710 = scmp.ge.s32.totalorder %s709, %s692
                %s711 = scalar_select %p710, 0, %s709
                %s712 = smul.u32 %s711, 8
                %s713 = smul.u32 %s711, 8
                %s714 = scalar_lea.vmem %s695, %s712 [#allocation2]
                %s715 = scalar_lea.vmem %s697, %s713
              $region60: #{stn_tpn_forward.10} parent=47 // loop_footer
                %s701 = sadd.s32 %s699, 1
              $region61: #{stn_tpn_forward.10} parent=47 // loop_footer_branch
                %698 = sbr.rel target = $region57
              $region62: #{stn_tpn_forward.10} parent=47 // loop_exit
                _
            $region48: #{stn_tpn_forward.10} parent=39 // pred_fallthru
              _
          $region40: #{stn_tpn_forward.10} parent=35 // pred_fallthru
            _
          %826 = vnop
        $region36: #{stn_tpn_forward.10} parent=31 // pred_fallthru
          _
      $region32: #{stn_tpn_forward.10} parent=5 // pred_fallthru
        _
      %p827 = scmp.le.s32.totalorder 2, %s9
      // Predicated region
      $region85: #{stn_tpn_forward.10} parent=5 // pred_check
        %p828 = pneg %p827
      $region86: #{stn_tpn_forward.10} parent=5 // pred_check_branch
        %830 = sbr.rel (%p828) target = $region88
      $region87: #{stn_tpn_forward.10} parent=5 // pred_region
        %s831 = ssub.s32 %s9, 2
        // Predicated region
        $region89: #{stn_tpn_forward.10} parent=87 // pred_check
          %p832 = pneg %p106
        $region90: #{stn_tpn_forward.10} parent=87 // pred_check_branch
          %834 = sbr.rel (%p832) target = $region92
        $region91: #{stn_tpn_forward.10} parent=87 // pred_region
          %s835 = sand.u32 %s91, 1
          %s836 = sand.u32 %s91, 1
          %s837 = smul.addr %s836, 256
          %s838 = scalar_lea.vmem [#allocation2], %s837
        $region92: #{stn_tpn_forward.10} parent=87 // pred_fallthru
          _
      $region88: #{stn_tpn_forward.10} parent=5 // pred_fallthru
        _
    $region6: #{stn_tpn_forward.10} parent=1 // loop_footer
      %s13 = sadd.s32 1, %s9
    $region7: #{stn_tpn_forward.10} parent=1 // loop_footer_branch
      %8 = sbr.rel target = $region3
    $region8: #{stn_tpn_forward.10} parent=1 // loop_exit
      _

// kernel: stn_tpn_forward.11
$region0: #{stn_tpn_forward.11}
  #allocation0 [shape = 'u32[]', space=smem, size = 0x4, offset = 0x4, fixed_abs, tag = 'smem constant byte address 0x4 - core index']
  #allocation1 [shape = 'u32[144,128]{1,0:T(1,128)}', space=vmem, size = 0x12000, scoped, tag = 'internal scratch']
  %s0 = inlined_call_operand.vmem [shape: f32[2,15,2,15,64], index: 0, kind: input, shape index: {}]
  %s1 = inlined_call_operand.vmem [shape: f32[2,15,15,32], index: 1, kind: output, shape index: {}]
  %s2 = sld [smem:[#allocation0]]
  $region37: #{stn_tpn_forward.11} parent=0
    _
  %s4 = ssub.s32 1, %s2
  %s5 = scalar_select 0, %s4, %s2
  loop: start=0, step=1, limit=4
  $region2: #{stn_tpn_forward.11} parent=0 // loop_pre_header
    _
  $region3: #{stn_tpn_forward.11} parent=0 // loop_header
    %s7 = sphi 0, %s11
    %p8 = scmp.ge.s32.totalorder %s7, 4
    %s17 = sphi 0, %s19
    %s20 = sphi 0, %s17
    %s21 = sphi 0, %s20
    %s37 = sphi 0, %s21
    %s43 = sphi 0, %s45
    %s46 = sphi 0, %s43
    %s47 = sphi 0, %s46
    %s63 = sphi 0, %s47
  $region4: #{stn_tpn_forward.11} parent=0 // loop_header_branch
    %10 = sbr.rel (%p8) target = $region8
  $region5: #{stn_tpn_forward.11} parent=0 // loop_body
    %s12 = ssub.s32 %s7, 1
    %s13 = ssub.s32 %s7, 2
    %s14 = sadd.s32 %s7, 1
    %s15 = ssub.s32 %s7, %s14
    %p16 = scmp.eq.s32.totalorder %s15, 0
    %s18 = sadd.s32 %s17, 1
    %s19 = scalar_select %p16, %s17, %s18
    %p22 = pneg %p16
    %p23 = scmp.eq.s32.totalorder %s7, 1
    %p24 = por %p22, %p23
    %p25 = scmp.ne.s32.totalorder %s17, %s20
    %p26 = scmp.eq.s32.totalorder %s7, 0
    %p27 = por %p25, %p26
    %p28 = scmp.ne.s32.totalorder %s17, %s20
    %p29 = scmp.eq.s32.totalorder %s12, 1
    %p30 = por %p28, %p29
    %p31 = scmp.ne.s32.totalorder %s20, %s21
    %p32 = scmp.eq.s32.totalorder %s12, 0
    %p33 = por %p31, %p32
    %p34 = scmp.ne.s32.totalorder %s20, %s21
    %p35 = scmp.eq.s32.totalorder %s13, 1
    %p36 = por %p34, %p35
    %p38 = scmp.ne.s32.totalorder %s21, %s37
    %p39 = scmp.eq.s32.totalorder %s13, 0
    %p40 = por %p38, %p39
    %s41 = ssub.s32 %s7, %s14
    %p42 = scmp.eq.s32.totalorder %s41, 0
    %s44 = sadd.s32 %s43, 1
    %s45 = scalar_select %p42, %s43, %s44
    %p48 = pneg %p42
    %p49 = scmp.eq.s32.totalorder %s7, 1
    %p50 = por %p48, %p49
    %p51 = scmp.ne.s32.totalorder %s43, %s46
    %p52 = scmp.eq.s32.totalorder %s7, 0
    %p53 = por %p51, %p52
    %p54 = scmp.ne.s32.totalorder %s43, %s46
    %p55 = scmp.eq.s32.totalorder %s12, 1
    %p56 = por %p54, %p55
    %p57 = scmp.ne.s32.totalorder %s46, %s47
    %p58 = scmp.eq.s32.totalorder %s12, 0
    %p59 = por %p57, %p58
    %p60 = scmp.ne.s32.totalorder %s46, %s47
    %p61 = scmp.eq.s32.totalorder %s13, 1
    %p62 = por %p60, %p61
    %p64 = scmp.ne.s32.totalorder %s47, %s63
    %p65 = scmp.eq.s32.totalorder %s13, 0
    %p66 = por %p64, %p65
    %p67 = scmp.le.s32.totalorder 1, %s7
    %p68 = scmp.lt.s32.totalorder %s7, 3
    %p69 = pnand %p67, %p68
    %p70 = pneg %p69
    // Predicated region
    $region9: #{stn_tpn_forward.11} parent=5 // pred_check
      _
    $region10: #{stn_tpn_forward.11} parent=5 // pred_check_branch
      %72 = sbr.rel (%p69) target = $region12
    $region11: #{stn_tpn_forward.11} parent=5 // pred_region
      %s73 = ssub.s32 %s7, 1
    $region12: #{stn_tpn_forward.11} parent=5 // pred_fallthru
      _
    %p74 = scmp.lt.s32.totalorder %s7, 2
    // Predicated region
    $region13: #{stn_tpn_forward.11} parent=5 // pred_check
      %p75 = pneg %p74
    $region14: #{stn_tpn_forward.11} parent=5 // pred_check_branch
      %77 = sbr.rel (%p75) target = $region16
    $region15: #{stn_tpn_forward.11} parent=5 // pred_region
      // Predicated region
      $region17: #{stn_tpn_forward.11} parent=15 // pred_check
        %p78 = pneg %p27
      $region18: #{stn_tpn_forward.11} parent=15 // pred_check_branch
        %80 = sbr.rel (%p78) target = $region20
      $region19: #{stn_tpn_forward.11} parent=15 // pred_region
        %p81 = scmp.lt.s32.totalorder %s7, 1
        %s82 = scalar_select %p81, %s7, 1
        %s83 = smul.addr %s82, 60
        %s84 = smul.addr %s83, 8
        %s85 = scalar_lea.vmem %s0, %s84
      $region20: #{stn_tpn_forward.11} parent=15 // pred_fallthru
        _
    $region16: #{stn_tpn_forward.11} parent=5 // pred_fallthru
      _
    %p86 = scmp.le.s32.totalorder 1, %s7
    %p87 = scmp.lt.s32.totalorder %s7, 3
    %p88 = pnand %p86, %p87
    %p89 = pneg %p88
    // Predicated region
    $region21: #{stn_tpn_forward.11} parent=5 // pred_check
      _
    $region22: #{stn_tpn_forward.11} parent=5 // pred_check_branch
      %91 = sbr.rel (%p88) target = $region24
    $region23: #{stn_tpn_forward.11} parent=5 // pred_region
      %s92 = ssub.s32 %s7, 1
      %p93 = scmp.lt.s32.totalorder %s12, 1
      %s94 = scalar_select %p93, %s12, 1
      %s95 = smul.addr %s94, 60
      %s96 = smul.addr %s95, 8
      %s97 = scalar_lea.vmem %s0, %s96
      %p98 = pneg %p33
      %p99 = pneg %p30
      %p100 = pneg %p59
      %p101 = pneg %p56
      %p102 = scmp.lt.s32.totalorder %s12, 1
      %s103 = scalar_select %p102, %s12, 1
      %s104 = smul.addr %s103, 30
      %s105 = smul.addr %s104, 8
      %s106 = scalar_lea.vmem %s1, %s105
      %p107 = scmp.lt.s32.totalorder %s12, 1
      %s108 = scalar_select %p107, %s12, 1
      %s109 = smul.addr %s108, 60
      %s110 = smul.addr %s109, 8
      %s111 = scalar_lea.vmem %s0, %s110
      %p112 = scmp.lt.s32.totalorder %s12, 1
      %s113 = scalar_select %p112, %s12, 1
      %s114 = smul.addr %s113, 30
      %s115 = smul.addr %s114, 8
      %s116 = scalar_lea.vmem %s1, %s115
      %v117 = vld [vmem:[%s111] sm:$0xff]
      %v118 = vld [vmem:[%s111 + $0x8] sm:$0x7f]
      %v119 = vld [vmem:[%s111 + $0x10] sm:$0xff]
      %v120 = vld [vmem:[%s111 + $0x18] sm:$0x7f]
      %v121 = vld [vmem:[%s111 + $0x20] sm:$0xff]
      %v122 = vld [vmem:[%s111 + $0x28] sm:$0x7f]
      %v123 = vld [vmem:[%s111 + $0x30] sm:$0xff]
      %v124 = vld [vmem:[%s111 + $0x38] sm:$0x7f]
      %v125 = vld [vmem:[%s111 + $0x40] sm:$0xff]
      %v126 = vld [vmem:[%s111 + $0x48] sm:$0x7f]
      %v127 = vld [vmem:[%s111 + $0x50] sm:$0xff]
      %v128 = vld [vmem:[%s111 + $0x58] sm:$0x7f]
      %v129 = vld [vmem:[%s111 + $0x60] sm:$0xff]
      %v130 = vld [vmem:[%s111 + $0x68] sm:$0x7f]
      %v131 = vld [vmem:[%s111 + $0x70] sm:$0xff]
      %v132 = vld [vmem:[%s111 + $0x78] sm:$0x7f]
      %v133 = vld [vmem:[%s111 + $0x80] sm:$0xff]
      %v134 = vld [vmem:[%s111 + $0x88] sm:$0x7f]
      %v135 = vld [vmem:[%s111 + $0x90] sm:$0xff]
      %v136 = vld [vmem:[%s111 + $0x98] sm:$0x7f]
      %v137 = vld [vmem:[%s111 + $0xa0] sm:$0xff]
      %v138 = vld [vmem:[%s111 + $0xa8] sm:$0x7f]
      %v139 = vld [vmem:[%s111 + $0xb0] sm:$0xff]
      %v140 = vld [vmem:[%s111 + $0xb8] sm:$0x7f]
      %v141 = vld [vmem:[%s111 + $0xc0] sm:$0xff]
      %v142 = vld [vmem:[%s111 + $0xc8] sm:$0x7f]
      %v143 = vld [vmem:[%s111 + $0xd0] sm:$0xff]
      %v144 = vld [vmem:[%s111 + $0xd8] sm:$0x7f]
      %v145 = vld [vmem:[%s111 + $0xe0] sm:$0xff]
      %v146 = vld [vmem:[%s111 + $0xe8] sm:$0x7f]
      %v147 = vld [vmem:[%s111 + $0xf0] sm:$0xff]
      %v148 = vld [vmem:[%s111 + $0xf8] sm:$0x7f]
      %v149 = vld [vmem:[%s111 + $0x100] sm:$0xff]
      %v150 = vld [vmem:[%s111 + $0x108] sm:$0x7f]
      %v151 = vld [vmem:[%s111 + $0x110] sm:$0xff]
      %v152 = vld [vmem:[%s111 + $0x118] sm:$0x7f]
      %v153 = vld [vmem:[%s111 + $0x120] sm:$0xff]
      %v154 = vld [vmem:[%s111 + $0x128] sm:$0x7f]
      %v155 = vld [vmem:[%s111 + $0x130] sm:$0xff]
      %v156 = vld [vmem:[%s111 + $0x138] sm:$0x7f]
      %v157 = vld [vmem:[%s111 + $0x140] sm:$0xff]
      %v158 = vld [vmem:[%s111 + $0x148] sm:$0x7f]
      %v159 = vld [vmem:[%s111 + $0x150] sm:$0xff]
      %v160 = vld [vmem:[%s111 + $0x158] sm:$0x7f]
      %v161 = vld [vmem:[%s111 + $0x160] sm:$0xff]
      %v162 = vld [vmem:[%s111 + $0x168] sm:$0x7f]
      %v163 = vld [vmem:[%s111 + $0x170] sm:$0xff]
      %v164 = vld [vmem:[%s111 + $0x178] sm:$0x7f]
      %v165 = vld [vmem:[%s111 + $0x180] sm:$0xff]
      %v166 = vld [vmem:[%s111 + $0x188] sm:$0x7f]
      %v167 = vld [vmem:[%s111 + $0x190] sm:$0xff]
      %v168 = vld [vmem:[%s111 + $0x198] sm:$0x7f]
      %v169 = vld [vmem:[%s111 + $0x1a0] sm:$0xff]
      %v170 = vld [vmem:[%s111 + $0x1a8] sm:$0x7f]
      %v171 = vld [vmem:[%s111 + $0x1b0] sm:$0xff]
      %v172 = vld [vmem:[%s111 + $0x1b8] sm:$0x7f]
      %v173 = vld [vmem:[%s111 + $0x1c0] sm:$0xff]
      %v174 = vld [vmem:[%s111 + $0x1c8] sm:$0x7f]
      %v175 = vld [vmem:[%s111 + $0x1d0] sm:$0xff]
      %v176 = vld [vmem:[%s111 + $0x1d8] sm:$0x7f]
      %v177 = vmax.f32 %v117, %v119
      %v178 = vmax.f32 %v118, %v120
      %v179 = vmax.f32 %v121, %v123
      %v180 = vmax.f32 %v122, %v124
      %v181 = vmax.f32 %v125, %v127
      %v182 = vmax.f32 %v126, %v128
      %v183 = vmax.f32 %v129, %v131
      %v184 = vmax.f32 %v130, %v132
      %v185 = vmax.f32 %v133, %v135
      %v186 = vmax.f32 %v134, %v136
      %v187 = vmax.f32 %v137, %v139
      %v188 = vmax.f32 %v138, %v140
      %v189 = vmax.f32 %v141, %v143
      %v190 = vmax.f32 %v142, %v144
      %v191 = vmax.f32 %v145, %v147
      %v192 = vmax.f32 %v146, %v148
      %v193 = vmax.f32 %v149, %v151
      %v194 = vmax.f32 %v150, %v152
      %v195 = vmax.f32 %v153, %v155
      %v196 = vmax.f32 %v154, %v156
      %v197 = vmax.f32 %v157, %v159
      %v198 = vmax.f32 %v158, %v160
      %v199 = vmax.f32 %v161, %v163
      %v200 = vmax.f32 %v162, %v164
      %v201 = vmax.f32 %v165, %v167
      %v202 = vmax.f32 %v166, %v168
      %v203 = vmax.f32 %v169, %v171
      %v204 = vmax.f32 %v170, %v172
      %v205 = vmax.f32 %v173, %v175
      %v206 = vmax.f32 %v174, %v176
      %237 = vrot.lane.b32.xlu0 %v177, 96
      %v238 = vpop.permute.xlu0 %237
      %239 = vrot.lane.b32.xlu0 %v178, 96
      %v240 = vpop.permute.xlu0 %239
      %241 = vrot.lane.b32.xlu0 %v179, 96
      %v242 = vpop.permute.xlu0 %241
      %243 = vrot.lane.b32.xlu0 %v180, 96
      %v244 = vpop.permute.xlu0 %243
      %245 = vrot.lane.b32.xlu0 %v181, 96
      %v246 = vpop.permute.xlu0 %245
      %247 = vrot.lane.b32.xlu0 %v182, 96
      %v248 = vpop.permute.xlu0 %247
      %249 = vrot.lane.b32.xlu0 %v183, 96
      %v250 = vpop.permute.xlu0 %249
      %251 = vrot.lane.b32.xlu0 %v184, 96
      %v252 = vpop.permute.xlu0 %251
      %253 = vrot.lane.b32.xlu0 %v185, 96
      %v254 = vpop.permute.xlu0 %253
      %255 = vrot.lane.b32.xlu0 %v186, 96
      %v256 = vpop.permute.xlu0 %255
      %257 = vrot.lane.b32.xlu0 %v187, 96
      %v258 = vpop.permute.xlu0 %257
      %259 = vrot.lane.b32.xlu0 %v188, 96
      %v260 = vpop.permute.xlu0 %259
      %261 = vrot.lane.b32.xlu0 %v189, 96
      %v262 = vpop.permute.xlu0 %261
      %263 = vrot.lane.b32.xlu0 %v190, 96
      %v264 = vpop.permute.xlu0 %263
      %265 = vrot.lane.b32.xlu0 %v191, 96
      %v266 = vpop.permute.xlu0 %265
      %267 = vrot.lane.b32.xlu0 %v192, 96
      %v268 = vpop.permute.xlu0 %267
      %269 = vrot.lane.b32.xlu0 %v193, 96
      %v270 = vpop.permute.xlu0 %269
      %271 = vrot.lane.b32.xlu0 %v194, 96
      %v272 = vpop.permute.xlu0 %271
      %273 = vrot.lane.b32.xlu0 %v195, 96
      %v274 = vpop.permute.xlu0 %273
      %275 = vrot.lane.b32.xlu0 %v196, 96
      %v276 = vpop.permute.xlu0 %275
      %277 = vrot.lane.b32.xlu0 %v197, 96
      %v278 = vpop.permute.xlu0 %277
      %279 = vrot.lane.b32.xlu0 %v198, 96
      %v280 = vpop.permute.xlu0 %279
      %281 = vrot.lane.b32.xlu0 %v199, 96
      %v282 = vpop.permute.xlu0 %281
      %283 = vrot.lane.b32.xlu0 %v200, 96
      %v284 = vpop.permute.xlu0 %283
      %285 = vrot.lane.b32.xlu0 %v201, 96
      %v286 = vpop.permute.xlu0 %285
      %287 = vrot.lane.b32.xlu0 %v202, 96
      %v288 = vpop.permute.xlu0 %287
      %289 = vrot.lane.b32.xlu0 %v203, 96
      %v290 = vpop.permute.xlu0 %289
      %291 = vrot.lane.b32.xlu0 %v204, 96
      %v292 = vpop.permute.xlu0 %291
      %293 = vrot.lane.b32.xlu0 %v205, 96
      %v294 = vpop.permute.xlu0 %293
      %295 = vrot.lane.b32.xlu0 %v206, 96
      %v296 = vpop.permute.xlu0 %295
      %v327 = vmax.f32 %v177, %v238
      %v328 = vmax.f32 %v178, %v240
      %v329 = vmax.f32 %v179, %v242
      %v330 = vmax.f32 %v180, %v244
      %v331 = vmax.f32 %v181, %v246
      %v332 = vmax.f32 %v182, %v248
      %v333 = vmax.f32 %v183, %v250
      %v334 = vmax.f32 %v184, %v252
      %v335 = vmax.f32 %v185, %v254
      %v336 = vmax.f32 %v186, %v256
      %v337 = vmax.f32 %v187, %v258
      %v338 = vmax.f32 %v188, %v260
      %v339 = vmax.f32 %v189, %v262
      %v340 = vmax.f32 %v190, %v264
      %v341 = vmax.f32 %v191, %v266
      %v342 = vmax.f32 %v192, %v268
      %v343 = vmax.f32 %v193, %v270
      %v344 = vmax.f32 %v194, %v272
      %v345 = vmax.f32 %v195, %v274
      %v346 = vmax.f32 %v196, %v276
      %v347 = vmax.f32 %v197, %v278
      %v348 = vmax.f32 %v198, %v280
      %v349 = vmax.f32 %v199, %v282
      %v350 = vmax.f32 %v200, %v284
      %v351 = vmax.f32 %v201, %v286
      %v352 = vmax.f32 %v202, %v288
      %v353 = vmax.f32 %v203, %v290
      %v354 = vmax.f32 %v204, %v292
      %v355 = vmax.f32 %v205, %v294
      %v356 = vmax.f32 %v206, %v296
      %v357 = vmax.f32 %v327, 0.0
      %v358 = vmax.f32 %v328, 0.0
      %v359 = vmax.f32 %v329, 0.0
      %v360 = vmax.f32 %v330, 0.0
      %v361 = vmax.f32 %v331, 0.0
      %v362 = vmax.f32 %v332, 0.0
      %v363 = vmax.f32 %v333, 0.0
      %v364 = vmax.f32 %v334, 0.0
      %v365 = vmax.f32 %v335, 0.0
      %v366 = vmax.f32 %v336, 0.0
      %v367 = vmax.f32 %v337, 0.0
      %v368 = vmax.f32 %v338, 0.0
      %v369 = vmax.f32 %v339, 0.0
      %v370 = vmax.f32 %v340, 0.0
      %v371 = vmax.f32 %v341, 0.0
      %v372 = vmax.f32 %v342, 0.0
      %v373 = vmax.f32 %v343, 0.0
      %v374 = vmax.f32 %v344, 0.0
      %v375 = vmax.f32 %v345, 0.0
      %v376 = vmax.f32 %v346, 0.0
      %v377 = vmax.f32 %v347, 0.0
      %v378 = vmax.f32 %v348, 0.0
      %v379 = vmax.f32 %v349, 0.0
      %v380 = vmax.f32 %v350, 0.0
      %v381 = vmax.f32 %v351, 0.0
      %v382 = vmax.f32 %v352, 0.0
      %v383 = vmax.f32 %v353, 0.0
      %v384 = vmax.f32 %v354, 0.0
      %v385 = vmax.f32 %v355, 0.0
      %v386 = vmax.f32 %v356, 0.0
      %vm387 = vcmask 261120
      %388 = vst.msk [vmem:[%s116] sm:$0xff] %vm387, %v357
      %vm389 = vcmask 260096
      %390 = vst.msk [vmem:[%s116 + $0x8] sm:$0x7f] %vm389, %v358
      %391 = vst.msk [vmem:[%s116 + $0x10] sm:$0xff] %vm387, %v359
      %392 = vst.msk [vmem:[%s116 + $0x18] sm:$0x7f] %vm389, %v360
      %393 = vst.msk [vmem:[%s116 + $0x20] sm:$0xff] %vm387, %v361
      %394 = vst.msk [vmem:[%s116 + $0x28] sm:$0x7f] %vm389, %v362
      %395 = vst.msk [vmem:[%s116 + $0x30] sm:$0xff] %vm387, %v363
      %396 = vst.msk [vmem:[%s116 + $0x38] sm:$0x7f] %vm389, %v364
      %397 = vst.msk [vmem:[%s116 + $0x40] sm:$0xff] %vm387, %v365
      %398 = vst.msk [vmem:[%s116 + $0x48] sm:$0x7f] %vm389, %v366
      %399 = vst.msk [vmem:[%s116 + $0x50] sm:$0xff] %vm387, %v367
      %400 = vst.msk [vmem:[%s116 + $0x58] sm:$0x7f] %vm389, %v368
      %401 = vst.msk [vmem:[%s116 + $0x60] sm:$0xff] %vm387, %v369
      %402 = vst.msk [vmem:[%s116 + $0x68] sm:$0x7f] %vm389, %v370
      %403 = vst.msk [vmem:[%s116 + $0x70] sm:$0xff] %vm387, %v371
      %404 = vst.msk [vmem:[%s116 + $0x78] sm:$0x7f] %vm389, %v372
      %405 = vst.msk [vmem:[%s116 + $0x80] sm:$0xff] %vm387, %v373
      %406 = vst.msk [vmem:[%s116 + $0x88] sm:$0x7f] %vm389, %v374
      %407 = vst.msk [vmem:[%s116 + $0x90] sm:$0xff] %vm387, %v375
      %408 = vst.msk [vmem:[%s116 + $0x98] sm:$0x7f] %vm389, %v376
      %409 = vst.msk [vmem:[%s116 + $0xa0] sm:$0xff] %vm387, %v377
      %410 = vst.msk [vmem:[%s116 + $0xa8] sm:$0x7f] %vm389, %v378
      %411 = vst.msk [vmem:[%s116 + $0xb0] sm:$0xff] %vm387, %v379
      %412 = vst.msk [vmem:[%s116 + $0xb8] sm:$0x7f] %vm389, %v380
      %413 = vst.msk [vmem:[%s116 + $0xc0] sm:$0xff] %vm387, %v381
      %414 = vst.msk [vmem:[%s116 + $0xc8] sm:$0x7f] %vm389, %v382
      %415 = vst.msk [vmem:[%s116 + $0xd0] sm:$0xff] %vm387, %v383
      %416 = vst.msk [vmem:[%s116 + $0xd8] sm:$0x7f] %vm389, %v384
      %417 = vst.msk [vmem:[%s116 + $0xe0] sm:$0xff] %vm387, %v385
      %418 = vst.msk [vmem:[%s116 + $0xe8] sm:$0x7f] %vm389, %v386
      %p419 = scmp.lt.s32.totalorder %s12, 1
      %s420 = scalar_select %p419, %s12, 1
      %s421 = smul.addr %s420, 30
      %s422 = smul.addr %s421, 8
      %s423 = scalar_lea.vmem %s1, %s422
      // Predicated region
      $region25: #{stn_tpn_forward.11} parent=23 // pred_check
        %p424 = pneg %p56
      $region26: #{stn_tpn_forward.11} parent=23 // pred_check_branch
        %426 = sbr.rel (%p424) target = $region28
      $region27: #{stn_tpn_forward.11} parent=23 // pred_region
        _
      $region28: #{stn_tpn_forward.11} parent=23 // pred_fallthru
        _
    $region24: #{stn_tpn_forward.11} parent=5 // pred_fallthru
      _
    %p427 = scmp.le.s32.totalorder 2, %s7
    // Predicated region
    $region29: #{stn_tpn_forward.11} parent=5 // pred_check
      %p428 = pneg %p427
    $region30: #{stn_tpn_forward.11} parent=5 // pred_check_branch
      %430 = sbr.rel (%p428) target = $region32
    $region31: #{stn_tpn_forward.11} parent=5 // pred_region
      %s431 = ssub.s32 %s7, 2
      // Predicated region
      $region33: #{stn_tpn_forward.11} parent=31 // pred_check
        %p432 = pneg %p62
      $region34: #{stn_tpn_forward.11} parent=31 // pred_check_branch
        %434 = sbr.rel (%p432) target = $region36
      $region35: #{stn_tpn_forward.11} parent=31 // pred_region
        %p435 = scmp.lt.s32.totalorder %s13, 1
        %s436 = scalar_select %p435, %s13, 1
        %s437 = smul.addr %s436, 30
        %s438 = smul.addr %s437, 8
        %s439 = scalar_lea.vmem %s1, %s438
      $region36: #{stn_tpn_forward.11} parent=31 // pred_fallthru
        _
    $region32: #{stn_tpn_forward.11} parent=5 // pred_fallthru
      _
  $region6: #{stn_tpn_forward.11} parent=0 // loop_footer
    %s11 = sadd.s32 1, %s7
  $region7: #{stn_tpn_forward.11} parent=0 // loop_footer_branch
    %6 = sbr.rel target = $region3
  $region8: #{stn_tpn_forward.11} parent=0 // loop_exit
    _

// kernel: stn_tpn_forward.12
$region0: #{stn_tpn_forward.12}
  #allocation0 [shape = 'u32[]', space=smem, size = 0x4, offset = 0x4, fixed_abs, tag = 'smem constant byte address 0x4 - core index']
  #allocation1 [shape = 'u32[144,128]{1,0:T(1,128)}', space=vmem, size = 0x12000, scoped, tag = 'internal scratch']
  %s0 = inlined_call_operand.vmem [shape: bf16[338,288], index: 0, kind: input, shape index: {}]
  %s1 = inlined_call_operand.vmem [shape: bf16[288,64], index: 1, kind: input, shape index: {}]
  %s2 = inlined_call_operand.vmem [shape: f32[1,64], index: 2, kind: input, shape index: {}]
  %s3 = inlined_call_operand.vmem [shape: f32[338,64], index: 3, kind: output, shape index: {}]
  %s4 = sld [smem:[#allocation0]]
  $region93: #{stn_tpn_forward.12} parent=0
    _
  %s6 = ssub.s32 1, %s4
  %s7 = scalar_select 0, %s6, %s4
  $region1: #{stn_tpn_forward.12} parent=0
    #allocation2 [shape = 'u8[262144]{0}', space=vmem, size = 0x40000, scoped, tag = 'output window, operand 0']
    loop: start=0, step=1, limit=4
    $region2: #{stn_tpn_forward.12} parent=1 // loop_pre_header
      _
    $region3: #{stn_tpn_forward.12} parent=1 // loop_header
      %s9 = sphi 0, %s13
      %p10 = scmp.ge.s32.totalorder %s9, 4
      %s19 = sphi 0, %s21
      %s22 = sphi 0, %s19
      %s23 = sphi 0, %s22
      %s39 = sphi 0, %s23
      %s43 = sphi 0, %s43
      %s45 = sphi 0, %s43
      %s46 = sphi 0, %s45
      %s60 = sphi 0, %s46
      %s64 = sphi 0, %s64
      %s66 = sphi 0, %s64
      %s67 = sphi 0, %s66
      %s81 = sphi 0, %s67
      %s87 = sphi 0, %s89
      %s90 = sphi 0, %s87
      %s91 = sphi 0, %s90
      %s107 = sphi 0, %s91
    $region4: #{stn_tpn_forward.12} parent=1 // loop_header_branch
      %12 = sbr.rel (%p10) target = $region8
    $region5: #{stn_tpn_forward.12} parent=1 // loop_body
      %s14 = ssub.s32 %s9, 1
      %s15 = ssub.s32 %s9, 2
      %s16 = sadd.s32 %s9, 1
      %s17 = ssub.s32 %s9, %s16
      %p18 = scmp.eq.s32.totalorder %s17, 0
      %s20 = sadd.s32 %s19, 1
      %s21 = scalar_select %p18, %s19, %s20
      %p24 = pneg %p18
      %p25 = scmp.eq.s32.totalorder %s9, 1
      %p26 = por %p24, %p25
      %p27 = scmp.ne.s32.totalorder %s19, %s22
      %p28 = scmp.eq.s32.totalorder %s9, 0
      %p29 = por %p27, %p28
      %p30 = scmp.ne.s32.totalorder %s19, %s22
      %p31 = scmp.eq.s32.totalorder %s14, 1
      %p32 = por %p30, %p31
      %p33 = scmp.ne.s32.totalorder %s22, %s23
      %p34 = scmp.eq.s32.totalorder %s14, 0
      %p35 = por %p33, %p34
      %p36 = scmp.ne.s32.totalorder %s22, %s23
      %p37 = scmp.eq.s32.totalorder %s15, 1
      %p38 = por %p36, %p37
      %p40 = scmp.ne.s32.totalorder %s23, %s39
      %p41 = scmp.eq.s32.totalorder %s15, 0
      %p42 = por %p40, %p41
      %s44 = sadd.s32 %s43, 1
      %p47 = scmp.eq.s32.totalorder %s9, 1
      %p48 = scmp.ne.s32.totalorder %s43, %s45
      %p49 = scmp.eq.s32.totalorder %s9, 0
      %p50 = por %p48, %p49
      %p51 = scmp.ne.s32.totalorder %s43, %s45
      %p52 = scmp.eq.s32.totalorder %s14, 1
      %p53 = por %p51, %p52
      %p54 = scmp.ne.s32.totalorder %s45, %s46
      %p55 = scmp.eq.s32.totalorder %s14, 0
      %p56 = por %p54, %p55
      %p57 = scmp.ne.s32.totalorder %s45, %s46
      %p58 = scmp.eq.s32.totalorder %s15, 1
      %p59 = por %p57, %p58
      %p61 = scmp.ne.s32.totalorder %s46, %s60
      %p62 = scmp.eq.s32.totalorder %s15, 0
      %p63 = por %p61, %p62
      %s65 = sadd.s32 %s64, 1
      %p68 = scmp.eq.s32.totalorder %s9, 1
      %p69 = scmp.ne.s32.totalorder %s64, %s66
      %p70 = scmp.eq.s32.totalorder %s9, 0
      %p71 = por %p69, %p70
      %p72 = scmp.ne.s32.totalorder %s64, %s66
      %p73 = scmp.eq.s32.totalorder %s14, 1
      %p74 = por %p72, %p73
      %p75 = scmp.ne.s32.totalorder %s66, %s67
      %p76 = scmp.eq.s32.totalorder %s14, 0
      %p77 = por %p75, %p76
      %p78 = scmp.ne.s32.totalorder %s66, %s67
      %p79 = scmp.eq.s32.totalorder %s15, 1
      %p80 = por %p78, %p79
      %p82 = scmp.ne.s32.totalorder %s67, %s81
      %p83 = scmp.eq.s32.totalorder %s15, 0
      %p84 = por %p82, %p83
      %s85 = ssub.s32 %s9, %s16
      %p86 = scmp.eq.s32.totalorder %s85, 0
      %s88 = sadd.s32 %s87, 1
      %s89 = scalar_select %p86, %s87, %s88
      %p92 = pneg %p86
      %p93 = scmp.eq.s32.totalorder %s9, 1
      %p94 = por %p92, %p93
      %p95 = scmp.ne.s32.totalorder %s87, %s90
      %p96 = scmp.eq.s32.totalorder %s9, 0
      %p97 = por %p95, %p96
      %p98 = scmp.ne.s32.totalorder %s87, %s90
      %p99 = scmp.eq.s32.totalorder %s14, 1
      %p100 = por %p98, %p99
      %p101 = scmp.ne.s32.totalorder %s90, %s91
      %p102 = scmp.eq.s32.totalorder %s14, 0
      %p103 = por %p101, %p102
      %p104 = scmp.ne.s32.totalorder %s90, %s91
      %p105 = scmp.eq.s32.totalorder %s15, 1
      %p106 = por %p104, %p105
      %p108 = scmp.ne.s32.totalorder %s91, %s107
      %p109 = scmp.eq.s32.totalorder %s15, 0
      %p110 = por %p108, %p109
      %p111 = scmp.le.s32.totalorder 1, %s9
      %p112 = scmp.lt.s32.totalorder %s9, 3
      %p113 = pnand %p111, %p112
      %p114 = pneg %p113
      // Predicated region
      $region9: #{stn_tpn_forward.12} parent=5 // pred_check
        _
      $region10: #{stn_tpn_forward.12} parent=5 // pred_check_branch
        %116 = sbr.rel (%p113) target = $region12
      $region11: #{stn_tpn_forward.12} parent=5 // pred_region
        %s117 = ssub.s32 %s9, 1
        // Predicated region
        $region13: #{stn_tpn_forward.12} parent=11 // pred_check
          %p118 = pneg %p56
        $region14: #{stn_tpn_forward.12} parent=11 // pred_check_branch
          %120 = sbr.rel (%p118) target = $region16
        $region15: #{stn_tpn_forward.12} parent=11 // pred_region
          _
        $region16: #{stn_tpn_forward.12} parent=11 // pred_fallthru
          _
        // Predicated region
        $region17: #{stn_tpn_forward.12} parent=11 // pred_check
          %p121 = pneg %p77
        $region18: #{stn_tpn_forward.12} parent=11 // pred_check_branch
          %123 = sbr.rel (%p121) target = $region20
        $region19: #{stn_tpn_forward.12} parent=11 // pred_region
          _
        $region20: #{stn_tpn_forward.12} parent=11 // pred_fallthru
          _
      $region12: #{stn_tpn_forward.12} parent=5 // pred_fallthru
        _
      %p124 = scmp.lt.s32.totalorder %s9, 2
      // Predicated region
      $region21: #{stn_tpn_forward.12} parent=5 // pred_check
        %p125 = pneg %p124
      $region22: #{stn_tpn_forward.12} parent=5 // pred_check_branch
        %127 = sbr.rel (%p125) target = $region24
      $region23: #{stn_tpn_forward.12} parent=5 // pred_region
        // Predicated region
        $region25: #{stn_tpn_forward.12} parent=23 // pred_check
          %p128 = pneg %p29
        $region26: #{stn_tpn_forward.12} parent=23 // pred_check_branch
          %130 = sbr.rel (%p128) target = $region28
        $region27: #{stn_tpn_forward.12} parent=23 // pred_region
          %s131 = smul.u32 32, %s9
          %s132 = ssub.s32 43, %s131
          %p133 = scmp.lt.s32.totalorder %s132, 32
          %s134 = scalar_select %p133, %s132, 32
          %s135 = smul.u32 64, %s134
          %s136 = smul.u32 %s135, 3
          %p137 = scmp.lt.s32.totalorder %s131, 42
          %s138 = scalar_select %p137, %s131, 42
          %s139 = smul.addr %s138, 3
          %s140 = smul.addr %s139, 4
          %s141 = scalar_lea.vmem %s0, %s140
          %s142 = smul.u32 32, %s9
          %s143 = ssub.s32 43, %s142
          %p144 = scmp.lt.s32.totalorder %s143, 32
          %s145 = scalar_select %p144, %s143, 32
          %s146 = smul.u32 64, %s145
          %s147 = smul.u32 %s146, 3
        $region28: #{stn_tpn_forward.12} parent=23 // pred_fallthru
          _
      $region24: #{stn_tpn_forward.12} parent=5 // pred_fallthru
        _
      %p148 = scmp.le.s32.totalorder 1, %s9
      %p149 = scmp.lt.s32.totalorder %s9, 3
      %p150 = pnand %p148, %p149
      %p151 = pneg %p150
      // Predicated region
      $region29: #{stn_tpn_forward.12} parent=5 // pred_check
        _
      $region30: #{stn_tpn_forward.12} parent=5 // pred_check_branch
        %153 = sbr.rel (%p150) target = $region32
      $region31: #{stn_tpn_forward.12} parent=5 // pred_region
        %s154 = ssub.s32 %s9, 1
        %s155 = smul.u32 32, %s14
        %s156 = ssub.s32 43, %s155
        %p157 = scmp.lt.s32.totalorder %s156, 32
        %s158 = scalar_select %p157, %s156, 32
        %s159 = smul.u32 64, %s158
        %s160 = smul.u32 %s159, 3
        %p161 = scmp.lt.s32.totalorder %s155, 42
        %s162 = scalar_select %p161, %s155, 42
        %s163 = smul.addr %s162, 3
        %s164 = smul.addr %s163, 4
        %s165 = scalar_lea.vmem %s0, %s164
        %p166 = pneg %p35
        %p167 = pneg %p32
        %p168 = pneg %p56
        %p169 = pneg %p53
        %p170 = pneg %p77
        %p171 = pneg %p74
        %p172 = pneg %p103
        %p173 = pneg %p100
        %s174 = sand.u32 %s90, 1
        %s175 = sand.u32 %s90, 1
        %s176 = smul.addr %s175, 256
        %s177 = scalar_lea.vmem [#allocation2], %s176
        %s178 = smul.u32 32, %s14
        %s179 = ssub.s32 43, %s178
        %p180 = scmp.lt.s32.totalorder %s179, 32
        %s181 = scalar_select %p180, %s179, 32
        %s182 = smul.u32 64, %s181
        %s183 = smul.u32 %s182, 3
        %p184 = scmp.lt.s32.totalorder %s178, 42
        %s185 = scalar_select %p184, %s178, 42
        %s186 = smul.addr %s185, 3
        %s187 = smul.addr %s186, 4
        %s188 = scalar_lea.vmem %s0, %s187
        %s189 = smul.u32 32, %s14
        %s190 = ssub.s32 43, %s189
        %p191 = scmp.lt.s32.totalorder %s190, 32
        %s192 = scalar_select %p191, %s190, 32
        %s193 = smul.u32 64, %s192
        %s194 = smul.u32 %s193, 3
        %s195 = smul.u32 32, %s14
        %s196 = ssub.s32 43, %s195
        %p197 = scmp.lt.s32.totalorder %s196, 32
        %s198 = scalar_select %p197, %s196, 32
        %s199 = smul.u32 128, %s198
        %v201 = vld [vmem:[%s188] sm:$0xff]
        %v202 = vld [vmem:[%s188 + $0x8] sm:$0xf]
        %v203 = vld [vmem:[%s188 + $0xc] sm:$0xff]
        %v204 = vld [vmem:[%s188 + $0x14] sm:$0xf]
        %v205 = vld [vmem:[%s188 + $0x18] sm:$0xff]
        %v206 = vld [vmem:[%s188 + $0x20] sm:$0xf]
        %v207 = vld [vmem:[%s188 + $0x24] sm:$0xff]
        %v208 = vld [vmem:[%s188 + $0x2c] sm:$0xf]
        %v209 = vld [vmem:[%s188 + $0x30] sm:$0xff]
        %v210 = vld [vmem:[%s188 + $0x38] sm:$0xf]
        %v211 = vld [vmem:[%s188 + $0x3c] sm:$0xff]
        %v212 = vld [vmem:[%s188 + $0x44] sm:$0xf]
        %v213 = vld [vmem:[%s188 + $0x48] sm:$0xff]
        %v214 = vld [vmem:[%s188 + $0x50] sm:$0xf]
        %v215 = vld [vmem:[%s188 + $0x54] sm:$0xff]
        %v216 = vld [vmem:[%s188 + $0x5c] sm:$0xf]
        %v217 = vld [vmem:[%s188 + $0x60] sm:$0xff]
        %v218 = vld [vmem:[%s188 + $0x68] sm:$0xf]
        %v219 = vld [vmem:[%s188 + $0x6c] sm:$0xff]
        %v220 = vld [vmem:[%s188 + $0x74] sm:$0xf]
        %v221 = vld [vmem:[%s188 + $0x78] sm:$0xff]
        %v222 = vld [vmem:[%s188 + $0x80] sm:$0xf]
        %v223 = vld [vmem:[%s188 + $0x84] sm:$0xff]
        %v224 = vld [vmem:[%s188 + $0x8c] sm:$0xf]
        %v225 = vld [vmem:[%s188 + $0x90] sm:$0xff]
        %v226 = vld [vmem:[%s188 + $0x98] sm:$0xf]
        %v227 = vld [vmem:[%s188 + $0x9c] sm:$0xff]
        %v228 = vld [vmem:[%s188 + $0xa4] sm:$0xf]
        %v229 = vld [vmem:[%s188 + $0xa8] sm:$0xff]
        %v230 = vld [vmem:[%s188 + $0xb0] sm:$0xf]
        %v231 = vld [vmem:[%s188 + $0xb4] sm:$0xff]
        %v232 = vld [vmem:[%s188 + $0xbc] sm:$0xf]
        %v233 = vld [vmem:[%s188 + $0xc0] sm:$0xff]
        %v234 = vld [vmem:[%s188 + $0xc8] sm:$0xf]
        %v235 = vld [vmem:[%s188 + $0xcc] sm:$0xff]
        %v236 = vld [vmem:[%s188 + $0xd4] sm:$0xf]
        %v237 = vld [vmem:[%s188 + $0xd8] sm:$0xff]
        %v238 = vld [vmem:[%s188 + $0xe0] sm:$0xf]
        %v239 = vld [vmem:[%s188 + $0xe4] sm:$0xff]
        %v240 = vld [vmem:[%s188 + $0xec] sm:$0xf]
        %v241 = vld [vmem:[%s188 + $0xf0] sm:$0xff]
        %v242 = vld [vmem:[%s188 + $0xf8] sm:$0xf]
        %v243 = vld [vmem:[%s188 + $0xfc] sm:$0xff]
        %v244 = vld [vmem:[%s188 + $0x104] sm:$0xf]
        %v245 = vld [vmem:[%s188 + $0x108] sm:$0xff]
        %v246 = vld [vmem:[%s188 + $0x110] sm:$0xf]
        %v247 = vld [vmem:[%s188 + $0x114] sm:$0xff]
        %v248 = vld [vmem:[%s188 + $0x11c] sm:$0xf]
        %v249 = vld [vmem:[%s188 + $0x120] sm:$0xff]
        %v250 = vld [vmem:[%s188 + $0x128] sm:$0xf]
        %v251 = vld [vmem:[%s188 + $0x12c] sm:$0xff]
        %v252 = vld [vmem:[%s188 + $0x134] sm:$0xf]
        %v253 = vld [vmem:[%s188 + $0x138] sm:$0xff]
        %v254 = vld [vmem:[%s188 + $0x140] sm:$0xf]
        %v255 = vld [vmem:[%s188 + $0x144] sm:$0xff]
        %v256 = vld [vmem:[%s188 + $0x14c] sm:$0xf]
        %v257 = vld [vmem:[%s188 + $0x150] sm:$0xff]
        %v258 = vld [vmem:[%s188 + $0x158] sm:$0xf]
        %v259 = vld [vmem:[%s188 + $0x15c] sm:$0xff]
        %v260 = vld [vmem:[%s188 + $0x164] sm:$0xf]
        %v261 = vld [vmem:[%s188 + $0x168] sm:$0xff]
        %v262 = vld [vmem:[%s188 + $0x170] sm:$0xf]
        %v263 = vld [vmem:[%s188 + $0x174] sm:$0xff]
        %v264 = vld [vmem:[%s188 + $0x17c] sm:$0xf]
        %v265 = vld [vmem:[%s1] sm:$0xf]
        %v266 = vld [vmem:[%s1 + $0x4] sm:$0xf]
        %v267 = vld [vmem:[%s1 + $0x8] sm:$0xf]
        %v268 = vld [vmem:[%s1 + $0xc] sm:$0xf]
        %v269 = vld [vmem:[%s1 + $0x10] sm:$0xf]
        %v270 = vld [vmem:[%s1 + $0x14] sm:$0xf]
        %v271 = vld [vmem:[%s1 + $0x18] sm:$0xf]
        %v272 = vld [vmem:[%s1 + $0x1c] sm:$0xf]
        %v273 = vld [vmem:[%s1 + $0x20] sm:$0xf]
        %v274 = vld [vmem:[%s1 + $0x24] sm:$0xf]
        %v275 = vld [vmem:[%s1 + $0x28] sm:$0xf]
        %v276 = vld [vmem:[%s1 + $0x2c] sm:$0xf]
        %v277 = vld [vmem:[%s1 + $0x30] sm:$0xf]
        %v278 = vld [vmem:[%s1 + $0x34] sm:$0xf]
        %v279 = vld [vmem:[%s1 + $0x38] sm:$0xf]
        %v280 = vld [vmem:[%s1 + $0x3c] sm:$0xf]
        %v281 = vld [vmem:[%s1 + $0x40] sm:$0xf]
        %v282 = vld [vmem:[%s1 + $0x44] sm:$0xf]
        %v283 = vld [vmem:[%s1 + $0x48] sm:$0xf]
        %v284 = vld [vmem:[%s1 + $0x4c] sm:$0xf]
        %v285 = vld [vmem:[%s1 + $0x50] sm:$0xf]
        %v286 = vld [vmem:[%s1 + $0x54] sm:$0xf]
        %v287 = vld [vmem:[%s1 + $0x58] sm:$0xf]
        %v288 = vld [vmem:[%s1 + $0x5c] sm:$0xf]
        %v289 = vld [vmem:[%s1 + $0x60] sm:$0xf]
        %v290 = vld [vmem:[%s1 + $0x64] sm:$0xf]
        %v291 = vld [vmem:[%s1 + $0x68] sm:$0xf]
        %v292 = vld [vmem:[%s1 + $0x6c] sm:$0xf]
        %v293 = vld [vmem:[%s1 + $0x70] sm:$0xf]
        %v294 = vld [vmem:[%s1 + $0x74] sm:$0xf]
        %v295 = vld [vmem:[%s1 + $0x78] sm:$0xf]
        %v296 = vld [vmem:[%s1 + $0x7c] sm:$0xf]
        %v297 = vld [vmem:[%s1 + $0x80] sm:$0xf]
        %v298 = vld [vmem:[%s1 + $0x84] sm:$0xf]
        %v299 = vld [vmem:[%s1 + $0x88] sm:$0xf]
        %v300 = vld [vmem:[%s1 + $0x8c] sm:$0xf]
        %v301 = vld [vmem:[%s2] sm:$0x1]
        %v303 = vlaneseq
        %v304 = vshrl.u32 %v303, 7
        %v305 = vsub.s32 0, %v304
        %v306 = vrot.slane %v301, %v305
        %v372 = vunpack.c.l.b16 %v201
        %v373 = vunpack.c.h.b16 %v201
        %v374 = vunpack.c.l.b16 %v202
        %v375 = vunpack.c.l.b16 %v203
        %v376 = vunpack.c.h.b16 %v203
        %v377 = vunpack.c.l.b16 %v204
        %v378 = vunpack.c.l.b16 %v205
        %v379 = vunpack.c.h.b16 %v205
        %v380 = vunpack.c.l.b16 %v206
        %v381 = vunpack.c.l.b16 %v207
        %v382 = vunpack.c.h.b16 %v207
        %v383 = vunpack.c.l.b16 %v208
        %v384 = vunpack.c.l.b16 %v209
        %v385 = vunpack.c.h.b16 %v209
        %v386 = vunpack.c.l.b16 %v210
        %v387 = vunpack.c.l.b16 %v211
        %v388 = vunpack.c.h.b16 %v211
        %v389 = vunpack.c.l.b16 %v212
        %v390 = vunpack.c.l.b16 %v213
        %v391 = vunpack.c.h.b16 %v213
        %v392 = vunpack.c.l.b16 %v214
        %v393 = vunpack.c.l.b16 %v215
        %v394 = vunpack.c.h.b16 %v215
        %v395 = vunpack.c.l.b16 %v216
        %v396 = vunpack.c.l.b16 %v217
        %v397 = vunpack.c.h.b16 %v217
        %v398 = vunpack.c.l.b16 %v218
        %v399 = vunpack.c.l.b16 %v219
        %v400 = vunpack.c.h.b16 %v219
        %v401 = vunpack.c.l.b16 %v220
        %v402 = vunpack.c.l.b16 %v221
        %v403 = vunpack.c.h.b16 %v221
        %v404 = vunpack.c.l.b16 %v222
        %v405 = vunpack.c.l.b16 %v223
        %v406 = vunpack.c.h.b16 %v223
        %v407 = vunpack.c.l.b16 %v224
        %v408 = vunpack.c.l.b16 %v225
        %v409 = vunpack.c.h.b16 %v225
        %v410 = vunpack.c.l.b16 %v226
        %v411 = vunpack.c.l.b16 %v227
        %v412 = vunpack.c.h.b16 %v227
        %v413 = vunpack.c.l.b16 %v228
        %v414 = vunpack.c.l.b16 %v229
        %v415 = vunpack.c.h.b16 %v229
        %v416 = vunpack.c.l.b16 %v230
        %v417 = vunpack.c.l.b16 %v231
        %v418 = vunpack.c.h.b16 %v231
        %v419 = vunpack.c.l.b16 %v232
        %v420 = vunpack.c.l.b16 %v233
        %v421 = vunpack.c.h.b16 %v233
        %v422 = vunpack.c.l.b16 %v234
        %v423 = vunpack.c.l.b16 %v235
        %v424 = vunpack.c.h.b16 %v235
        %v425 = vunpack.c.l.b16 %v236
        %v426 = vunpack.c.l.b16 %v237
        %v427 = vunpack.c.h.b16 %v237
        %v428 = vunpack.c.l.b16 %v238
        %v429 = vunpack.c.l.b16 %v239
        %v430 = vunpack.c.h.b16 %v239
        %v431 = vunpack.c.l.b16 %v240
        %v432 = vunpack.c.l.b16 %v241
        %v433 = vunpack.c.h.b16 %v241
        %v434 = vunpack.c.l.b16 %v242
        %v435 = vunpack.c.l.b16 %v243
        %v436 = vunpack.c.h.b16 %v243
        %v437 = vunpack.c.l.b16 %v244
        %v438 = vunpack.c.l.b16 %v245
        %v439 = vunpack.c.h.b16 %v245
        %v440 = vunpack.c.l.b16 %v246
        %v441 = vunpack.c.l.b16 %v247
        %v442 = vunpack.c.h.b16 %v247
        %v443 = vunpack.c.l.b16 %v248
        %v444 = vunpack.c.l.b16 %v249
        %v445 = vunpack.c.h.b16 %v249
        %v446 = vunpack.c.l.b16 %v250
        %v447 = vunpack.c.l.b16 %v251
        %v448 = vunpack.c.h.b16 %v251
        %v449 = vunpack.c.l.b16 %v252
        %v450 = vunpack.c.l.b16 %v253
        %v451 = vunpack.c.h.b16 %v253
        %v452 = vunpack.c.l.b16 %v254
        %v453 = vunpack.c.l.b16 %v255
        %v454 = vunpack.c.h.b16 %v255
        %v455 = vunpack.c.l.b16 %v256
        %v456 = vunpack.c.l.b16 %v257
        %v457 = vunpack.c.h.b16 %v257
        %v458 = vunpack.c.l.b16 %v258
        %v459 = vunpack.c.l.b16 %v259
        %v460 = vunpack.c.h.b16 %v259
        %v461 = vunpack.c.l.b16 %v260
        %v462 = vunpack.c.l.b16 %v261
        %v463 = vunpack.c.h.b16 %v261
        %v464 = vunpack.c.l.b16 %v262
        %v465 = vunpack.c.l.b16 %v263
        %v466 = vunpack.c.h.b16 %v263
        %v467 = vunpack.c.l.b16 %v264
        %v468 = vpack.c.b16 %v375, %v372
        %v469 = vpack.c.b16 %v376, %v373
        %v470 = vpack.c.b16 %v377, %v374
        %v471 = vpack.c.b16 %v381, %v378
        %v472 = vpack.c.b16 %v382, %v379
        %v473 = vpack.c.b16 %v383, %v380
        %v474 = vpack.c.b16 %v387, %v384
        %v475 = vpack.c.b16 %v388, %v385
        %v476 = vpack.c.b16 %v389, %v386
        %v477 = vpack.c.b16 %v393, %v390
        %v478 = vpack.c.b16 %v394, %v391
        %v479 = vpack.c.b16 %v395, %v392
        %v480 = vpack.c.b16 %v399, %v396
        %v481 = vpack.c.b16 %v400, %v397
        %v482 = vpack.c.b16 %v401, %v398
        %v483 = vpack.c.b16 %v405, %v402
        %v484 = vpack.c.b16 %v406, %v403
        %v485 = vpack.c.b16 %v407, %v404
        %v486 = vpack.c.b16 %v411, %v408
        %v487 = vpack.c.b16 %v412, %v409
        %v488 = vpack.c.b16 %v413, %v410
        %v489 = vpack.c.b16 %v417, %v414
        %v490 = vpack.c.b16 %v418, %v415
        %v491 = vpack.c.b16 %v419, %v416
        %v492 = vpack.c.b16 %v423, %v420
        %v493 = vpack.c.b16 %v424, %v421
        %v494 = vpack.c.b16 %v425, %v422
        %v495 = vpack.c.b16 %v429, %v426
        %v496 = vpack.c.b16 %v430, %v427
        %v497 = vpack.c.b16 %v431, %v428
        %v498 = vpack.c.b16 %v435, %v432
        %v499 = vpack.c.b16 %v436, %v433
        %v500 = vpack.c.b16 %v437, %v434
        %v501 = vpack.c.b16 %v441, %v438
        %v502 = vpack.c.b16 %v442, %v439
        %v503 = vpack.c.b16 %v443, %v440
        %v504 = vpack.c.b16 %v447, %v444
        %v505 = vpack.c.b16 %v448, %v445
        %v506 = vpack.c.b16 %v449, %v446
        %v507 = vpack.c.b16 %v453, %v450
        %v508 = vpack.c.b16 %v454, %v451
        %v509 = vpack.c.b16 %v455, %v452
        %v510 = vpack.c.b16 %v459, %v456
        %v511 = vpack.c.b16 %v460, %v457
        %v512 = vpack.c.b16 %v461, %v458
        %v513 = vpack.c.b16 %v465, %v462
        %v514 = vpack.c.b16 %v466, %v463
        %v515 = vpack.c.b16 %v467, %v464
        %v584 = vunpack.c.l.b16 %v265
        %v585 = vunpack.c.l.b16 %v266
        %v586 = vunpack.c.l.b16 %v267
        %v587 = vunpack.c.l.b16 %v268
        %v588 = vunpack.c.l.b16 %v269
        %v589 = vunpack.c.l.b16 %v270
        %v590 = vunpack.c.l.b16 %v271
        %v591 = vunpack.c.l.b16 %v272
        %v592 = vunpack.c.l.b16 %v273
        %v593 = vunpack.c.l.b16 %v274
        %v594 = vunpack.c.l.b16 %v275
        %v595 = vunpack.c.l.b16 %v276
        %v596 = vunpack.c.l.b16 %v277
        %v597 = vunpack.c.l.b16 %v278
        %v598 = vunpack.c.l.b16 %v279
        %v599 = vunpack.c.l.b16 %v280
        %v600 = vunpack.c.l.b16 %v281
        %v601 = vunpack.c.l.b16 %v282
        %v602 = vunpack.c.l.b16 %v283
        %v603 = vunpack.c.l.b16 %v284
        %v604 = vunpack.c.l.b16 %v285
        %v605 = vunpack.c.l.b16 %v286
        %v606 = vunpack.c.l.b16 %v287
        %v607 = vunpack.c.l.b16 %v288
        %v608 = vunpack.c.l.b16 %v289
        %v609 = vunpack.c.l.b16 %v290
        %v610 = vunpack.c.l.b16 %v291
        %v611 = vunpack.c.l.b16 %v292
        %v612 = vunpack.c.l.b16 %v293
        %v613 = vunpack.c.l.b16 %v294
        %v614 = vunpack.c.l.b16 %v295
        %v615 = vunpack.c.l.b16 %v296
        %v616 = vunpack.c.l.b16 %v297
        %v617 = vunpack.c.l.b16 %v298
        %v618 = vunpack.c.l.b16 %v299
        %v619 = vunpack.c.l.b16 %v300
        %v620 = vpack.c.b16 %v585, %v584
        %v621 = vpack.c.b16 %v587, %v586
        %v622 = vpack.c.b16 %v589, %v588
        %v623 = vpack.c.b16 %v591, %v590
        %v624 = vpack.c.b16 %v593, %v592
        %v625 = vpack.c.b16 %v595, %v594
        %v626 = vpack.c.b16 %v597, %v596
        %v627 = vpack.c.b16 %v599, %v598
        %v628 = vpack.c.b16 %v601, %v600
        %v629 = vpack.c.b16 %v603, %v602
        %v630 = vpack.c.b16 %v605, %v604
        %v631 = vpack.c.b16 %v607, %v606
        %v632 = vpack.c.b16 %v609, %v608
        %v633 = vpack.c.b16 %v611, %v610
        %v634 = vpack.c.b16 %v613, %v612
        %v635 = vpack.c.b16 %v615, %v614
        %v636 = vpack.c.b16 %v617, %v616
        %v637 = vpack.c.b16 %v619, %v618
        %vm656 = vcmask 261120
        %v658 = vsel %vm656, %v470, 0
        %v661 = vsel %vm656, %v473, 0
        %v664 = vsel %vm656, %v476, 0
        %v667 = vsel %vm656, %v479, 0
        %v670 = vsel %vm656, %v482, 0
        %v673 = vsel %vm656, %v485, 0
        %v676 = vsel %vm656, %v488, 0
        %v679 = vsel %vm656, %v491, 0
        %v682 = vsel %vm656, %v494, 0
        %v685 = vsel %vm656, %v497, 0
        %v688 = vsel %vm656, %v500, 0
        %v691 = vsel %vm656, %v503, 0
        %v694 = vsel %vm656, %v506, 0
        %v697 = vsel %vm656, %v509, 0
        %v700 = vsel %vm656, %v512, 0
        %v703 = vsel %vm656, %v515, 0
        %705 = vmatprep.subr.bf16.mxu0 0
        %706 = vmatpush1.bf16.msra.mxu0 %v620
        %707 = vmatprep.subr.bf16.mxu0 0
        %708 = vmatpush1.bf16.msra.mxu0 %v621
        %709 = vmatprep.subr.bf16.mxu0 0
        %710 = vmatpush1.bf16.msra.mxu0 %v622
        %711 = vmatprep.subr.bf16.mxu0 0
        %712 = vmatpush1.bf16.msra.mxu0 %v623
        %713 = vmatprep.subr.bf16.mxu0 0
        %714 = vmatpush1.bf16.msra.mxu0 %v624
        %715 = vmatprep.subr.bf16.mxu0 0
        %716 = vmatpush1.bf16.msra.mxu0 %v625
        %717 = vmatprep.subr.bf16.mxu0 0
        %718 = vmatpush1.bf16.msra.mxu0 %v626
        %719 = vmatprep.subr.bf16.mxu0 0
        %720 = vmatpush1.bf16.msra.mxu0 %v627
        %721 = vmatprep.subr.bf16.mxu0 0
        %722 = vmatpush1.bf16.msra.mxu0 %v628
        %723 = vmatprep.subr.bf16.mxu0 0
        %724 = vmatpush1.bf16.msra.mxu0 %v629
        %725 = vmatprep.subr.bf16.mxu0 0
        %726 = vmatpush1.bf16.msra.mxu0 %v630
        %727 = vmatprep.subr.bf16.mxu0 0
        %728 = vmatpush1.bf16.msra.mxu0 %v631
        %729 = vmatprep.subr.bf16.mxu0 0
        %730 = vmatpush1.bf16.msra.mxu0 %v632
        %731 = vmatprep.subr.bf16.mxu0 0
        %732 = vmatpush1.bf16.msra.mxu0 %v633
        %733 = vmatprep.subr.bf16.mxu0 0
        %734 = vmatpush1.bf16.msra.mxu0 %v634
        %735 = vmatprep.subr.bf16.mxu0 0
        %736 = vmatpush1.bf16.msra.mxu0 %v635
        %737 = vmatprep.mubr.bf16.mxu0 %v469
        %738 = vmatmul.mubr.bf16.gmra.mrb[0].mxu0 %v468
        %v739 = vpop.f32.mrb[0].mxu0
        %v740 = vadd.f32 %v306, %v739
        %v741 = vpop.f32.mrb[0].mxu0
        %v742 = vpop.f32.mrb[0].mxu0
        %v743 = vadd.f32 %v306, %v742
        %v744 = vpop.f32.mrb[0].mxu0
        %745 = vmatprep.mubr.bf16.mxu0 %v472
        %746 = vmatmul.mubr.bf16.gmra.mrb[0].mxu0 %v471
        %v747 = vpop.f32.mrb[0].mxu0
        %v748 = vadd.f32 %v306, %v747
        %v749 = vpop.f32.mrb[0].mxu0
        %v750 = vpop.f32.mrb[0].mxu0
        %v751 = vadd.f32 %v306, %v750
        %v752 = vpop.f32.mrb[0].mxu0
        %753 = vmatprep.mubr.bf16.mxu0 %v475
        %754 = vmatmul.mubr.bf16.gmra.mrb[0].mxu0 %v474
        %v755 = vpop.f32.mrb[0].mxu0
        %v756 = vadd.f32 %v306, %v755
        %v757 = vpop.f32.mrb[0].mxu0
        %v758 = vpop.f32.mrb[0].mxu0
        %v759 = vadd.f32 %v306, %v758
        %v760 = vpop.f32.mrb[0].mxu0
        %761 = vmatprep.mubr.bf16.mxu0 %v478
        %762 = vmatmul.mubr.bf16.gmra.mrb[0].mxu0 %v477
        %v763 = vpop.f32.mrb[0].mxu0
        %v764 = vadd.f32 %v306, %v763
        %v765 = vpop.f32.mrb[0].mxu0
        %v766 = vpop.f32.mrb[0].mxu0
        %v767 = vadd.f32 %v306, %v766
        %v768 = vpop.f32.mrb[0].mxu0
        %769 = vmatprep.mubr.bf16.mxu0 %v481
        %770 = vmatmul.mubr.bf16.gmra.mrb[0].mxu0 %v480
        %v771 = vpop.f32.mrb[0].mxu0
        %v772 = vadd.f32 %v306, %v771
        %v773 = vpop.f32.mrb[0].mxu0
        %v774 = vpop.f32.mrb[0].mxu0
        %v775 = vadd.f32 %v306, %v774
        %v776 = vpop.f32.mrb[0].mxu0
        %777 = vmatprep.mubr.bf16.mxu0 %v484
        %778 = vmatmul.mubr.bf16.gmra.mrb[0].mxu0 %v483
        %v779 = vpop.f32.mrb[0].mxu0
        %v780 = vadd.f32 %v306, %v779
        %v781 = vpop.f32.mrb[0].mxu0
        %v782 = vpop.f32.mrb[0].mxu0
        %v783 = vadd.f32 %v306, %v782
        %v784 = vpop.f32.mrb[0].mxu0
        %785 = vmatprep.mubr.bf16.mxu0 %v487
        %786 = vmatmul.mubr.bf16.gmra.mrb[0].mxu0 %v486
        %v787 = vpop.f32.mrb[0].mxu0
        %v788 = vadd.f32 %v306, %v787
        %v789 = vpop.f32.mrb[0].mxu0
        %v790 = vpop.f32.mrb[0].mxu0
        %v791 = vadd.f32 %v306, %v790
        %v792 = vpop.f32.mrb[0].mxu0
        %793 = vmatprep.mubr.bf16.mxu0 %v490
        %794 = vmatmul.mubr.bf16.gmra.mrb[0].mxu0 %v489
        %v795 = vpop.f32.mrb[0].mxu0
        %v796 = vadd.f32 %v306, %v795
        %v797 = vpop.f32.mrb[0].mxu0
        %v798 = vpop.f32.mrb[0].mxu0
        %v799 = vadd.f32 %v306, %v798
        %v800 = vpop.f32.mrb[0].mxu0
        %801 = vmatprep.mubr.bf16.mxu0 %v493
        %802 = vmatmul.mubr.bf16.gmra.mrb[0].mxu0 %v492
        %v803 = vpop.f32.mrb[0].mxu0
        %v804 = vadd.f32 %v306, %v803
        %v805 = vpop.f32.mrb[0].mxu0
        %v806 = vpop.f32.mrb[0].mxu0
        %v807 = vadd.f32 %v306, %v806
        %v808 = vpop.f32.mrb[0].mxu0
        %809 = vmatprep.mubr.bf16.mxu0 %v496
        %810 = vmatmul.mubr.bf16.gmra.mrb[0].mxu0 %v495
        %v811 = vpop.f32.mrb[0].mxu0
        %v812 = vadd.f32 %v306, %v811
        %v813 = vpop.f32.mrb[0].mxu0
        %v814 = vpop.f32.mrb[0].mxu0
        %v815 = vadd.f32 %v306, %v814
        %v816 = vpop.f32.mrb[0].mxu0
        %817 = vmatprep.mubr.bf16.mxu0 %v499
        %818 = vmatmul.mubr.bf16.gmra.mrb[0].mxu0 %v498
        %v819 = vpop.f32.mrb[0].mxu0
        %v820 = vadd.f32 %v306, %v819
        %v821 = vpop.f32.mrb[0].mxu0
        %v822 = vpop.f32.mrb[0].mxu0
        %v823 = vadd.f32 %v306, %v822
        %v824 = vpop.f32.mrb[0].mxu0
        %825 = vmatprep.mubr.bf16.mxu0 %v502
        %826 = vmatmul.mubr.bf16.gmra.mrb[0].mxu0 %v501
        %v827 = vpop.f32.mrb[0].mxu0
        %v828 = vadd.f32 %v306, %v827
        %v829 = vpop.f32.mrb[0].mxu0
        %v830 = vpop.f32.mrb[0].mxu0
        %v831 = vadd.f32 %v306, %v830
        %v832 = vpop.f32.mrb[0].mxu0
        %833 = vmatprep.mubr.bf16.mxu0 %v505
        %834 = vmatmul.mubr.bf16.gmra.mrb[0].mxu0 %v504
        %v835 = vpop.f32.mrb[0].mxu0
        %v836 = vadd.f32 %v306, %v835
        %v837 = vpop.f32.mrb[0].mxu0
        %v838 = vpop.f32.mrb[0].mxu0
        %v839 = vadd.f32 %v306, %v838
        %v840 = vpop.f32.mrb[0].mxu0
        %841 = vmatprep.mubr.bf16.mxu0 %v508
        %842 = vmatmul.mubr.bf16.gmra.mrb[0].mxu0 %v507
        %v843 = vpop.f32.mrb[0].mxu0
        %v844 = vadd.f32 %v306, %v843
        %v845 = vpop.f32.mrb[0].mxu0
        %v846 = vpop.f32.mrb[0].mxu0
        %v847 = vadd.f32 %v306, %v846
        %v848 = vpop.f32.mrb[0].mxu0
        %849 = vmatprep.mubr.bf16.mxu0 %v511
        %850 = vmatmul.mubr.bf16.gmra.mrb[0].mxu0 %v510
        %v851 = vpop.f32.mrb[0].mxu0
        %v852 = vadd.f32 %v306, %v851
        %v853 = vpop.f32.mrb[0].mxu0
        %v854 = vpop.f32.mrb[0].mxu0
        %v855 = vadd.f32 %v306, %v854
        %v856 = vpop.f32.mrb[0].mxu0
        %857 = vmatprep.mubr.bf16.mxu0 %v514
        %858 = vmatmul.mubr.bf16.gmra.mrb[0].mxu0 %v513
        %v859 = vpop.f32.mrb[0].mxu0
        %v860 = vadd.f32 %v306, %v859
        %v861 = vpop.f32.mrb[0].mxu0
        %v862 = vpop.f32.mrb[0].mxu0
        %v863 = vadd.f32 %v306, %v862
        %v864 = vpop.f32.mrb[0].mxu0
        %865 = vdwg.mxu0
        %866 = vmatprep.subr.bf16.mxu0 0
        %867 = vmatpush1.bf16.msra.mxu0 %v636
        %868 = vmatprep.subr.bf16.mxu0 0
        %869 = vmatpush1.bf16.msra.mxu0 %v637
        %870 = vmatprep.subr.bf16.mxu0 0
        %871 = vmatpush1.bf16.msra.mxu0 0
        %872 = vmatprep.subr.bf16.mxu0 0
        %873 = vmatpush1.bf16.msra.mxu0 0
        %874 = vmatprep.subr.bf16.mxu0 0
        %875 = vmatpush1.bf16.msra.mxu0 0
        %876 = vmatprep.subr.bf16.mxu0 0
        %877 = vmatpush1.bf16.msra.mxu0 0
        %878 = vmatprep.subr.bf16.mxu0 0
        %879 = vmatpush1.bf16.msra.mxu0 0
        %880 = vmatprep.subr.bf16.mxu0 0
        %881 = vmatpush1.bf16.msra.mxu0 0
        %882 = vmatprep.subr.bf16.mxu0 0
        %883 = vmatpush1.bf16.msra.mxu0 0
        %884 = vmatprep.subr.bf16.mxu0 0
        %885 = vmatpush1.bf16.msra.mxu0 0
        %886 = vmatprep.subr.bf16.mxu0 0
        %887 = vmatpush1.bf16.msra.mxu0 0
        %888 = vmatprep.subr.bf16.mxu0 0
        %889 = vmatpush1.bf16.msra.mxu0 0
        %890 = vmatprep.subr.bf16.mxu0 0
        %891 = vmatpush1.bf16.msra.mxu0 0
        %892 = vmatprep.subr.bf16.mxu0 0
        %893 = vmatpush1.bf16.msra.mxu0 0
        %894 = vmatprep.subr.bf16.mxu0 0
        %895 = vmatpush1.bf16.msra.mxu0 0
        %896 = vmatprep.subr.bf16.mxu0 0
        %897 = vmatpush1.bf16.msra.mxu0 0
        %898 = vmatprep.mubr.bf16.mxu0 0
        %899 = vmatmul.mubr.bf16.gmra.mrb[0].mxu0 %v658
        %v900 = vpop.f32.mrb[0].mxu0
        %v901 = vadd.f32 %v740, %v900
        %v902 = vpop.f32.mrb[0].mxu0
        %v903 = vpop.f32.mrb[0].mxu0
        %v904 = vadd.f32 %v743, %v903
        %v905 = vpop.f32.mrb[0].mxu0
        %906 = vmatprep.mubr.bf16.mxu0 0
        %907 = vmatmul.mubr.bf16.gmra.mrb[0].mxu0 %v661
        %v908 = vpop.f32.mrb[0].mxu0
        %v909 = vadd.f32 %v748, %v908
        %v910 = vpop.f32.mrb[0].mxu0
        %v911 = vpop.f32.mrb[0].mxu0
        %v912 = vadd.f32 %v751, %v911
        %v913 = vpop.f32.mrb[0].mxu0
        %914 = vmatprep.mubr.bf16.mxu0 0
        %915 = vmatmul.mubr.bf16.gmra.mrb[0].mxu0 %v664
        %v916 = vpop.f32.mrb[0].mxu0
        %v917 = vadd.f32 %v756, %v916
        %v918 = vpop.f32.mrb[0].mxu0
        %v919 = vpop.f32.mrb[0].mxu0
        %v920 = vadd.f32 %v759, %v919
        %v921 = vpop.f32.mrb[0].mxu0
        %922 = vmatprep.mubr.bf16.mxu0 0
        %923 = vmatmul.mubr.bf16.gmra.mrb[0].mxu0 %v667
        %v924 = vpop.f32.mrb[0].mxu0
        %v925 = vadd.f32 %v764, %v924
        %v926 = vpop.f32.mrb[0].mxu0
        %v927 = vpop.f32.mrb[0].mxu0
        %v928 = vadd.f32 %v767, %v927
        %v929 = vpop.f32.mrb[0].mxu0
        %930 = vmatprep.mubr.bf16.mxu0 0
        %931 = vmatmul.mubr.bf16.gmra.mrb[0].mxu0 %v670
        %v932 = vpop.f32.mrb[0].mxu0
        %v933 = vadd.f32 %v772, %v932
        %v934 = vpop.f32.mrb[0].mxu0
        %v935 = vpop.f32.mrb[0].mxu0
        %v936 = vadd.f32 %v775, %v935
        %v937 = vpop.f32.mrb[0].mxu0
        %938 = vmatprep.mubr.bf16.mxu0 0
        %939 = vmatmul.mubr.bf16.gmra.mrb[0].mxu0 %v673
        %v940 = vpop.f32.mrb[0].mxu0
        %v941 = vadd.f32 %v780, %v940
        %v942 = vpop.f32.mrb[0].mxu0
        %v943 = vpop.f32.mrb[0].mxu0
        %v944 = vadd.f32 %v783, %v943
        %v945 = vpop.f32.mrb[0].mxu0
        %946 = vmatprep.mubr.bf16.mxu0 0
        %947 = vmatmul.mubr.bf16.gmra.mrb[0].mxu0 %v676
        %v948 = vpop.f32.mrb[0].mxu0
        %v949 = vadd.f32 %v788, %v948
        %v950 = vpop.f32.mrb[0].mxu0
        %v951 = vpop.f32.mrb[0].mxu0
        %v952 = vadd.f32 %v791, %v951
        %v953 = vpop.f32.mrb[0].mxu0
        %954 = vmatprep.mubr.bf16.mxu0 0
        %955 = vmatmul.mubr.bf16.gmra.mrb[0].mxu0 %v679
        %v956 = vpop.f32.mrb[0].mxu0
        %v957 = vadd.f32 %v796, %v956
        %v958 = vpop.f32.mrb[0].mxu0
        %v959 = vpop.f32.mrb[0].mxu0
        %v960 = vadd.f32 %v799, %v959
        %v961 = vpop.f32.mrb[0].mxu0
        %962 = vmatprep.mubr.bf16.mxu0 0
        %963 = vmatmul.mubr.bf16.gmra.mrb[0].mxu0 %v682
        %v964 = vpop.f32.mrb[0].mxu0
        %v965 = vadd.f32 %v804, %v964
        %v966 = vpop.f32.mrb[0].mxu0
        %v967 = vpop.f32.mrb[0].mxu0
        %v968 = vadd.f32 %v807, %v967
        %v969 = vpop.f32.mrb[0].mxu0
        %970 = vmatprep.mubr.bf16.mxu0 0
        %971 = vmatmul.mubr.bf16.gmra.mrb[0].mxu0 %v685
        %v972 = vpop.f32.mrb[0].mxu0
        %v973 = vadd.f32 %v812, %v972
        %v974 = vpop.f32.mrb[0].mxu0
        %v975 = vpop.f32.mrb[0].mxu0
        %v976 = vadd.f32 %v815, %v975
        %v977 = vpop.f32.mrb[0].mxu0
        %978 = vmatprep.mubr.bf16.mxu0 0
        %979 = vmatmul.mubr.bf16.gmra.mrb[0].mxu0 %v688
        %v980 = vpop.f32.mrb[0].mxu0
        %v981 = vadd.f32 %v820, %v980
        %v982 = vpop.f32.mrb[0].mxu0
        %v983 = vpop.f32.mrb[0].mxu0
        %v984 = vadd.f32 %v823, %v983
        %v985 = vpop.f32.mrb[0].mxu0
        %986 = vmatprep.mubr.bf16.mxu0 0
        %987 = vmatmul.mubr.bf16.gmra.mrb[0].mxu0 %v691
        %v988 = vpop.f32.mrb[0].mxu0
        %v989 = vadd.f32 %v828, %v988
        %v990 = vpop.f32.mrb[0].mxu0
        %v991 = vpop.f32.mrb[0].mxu0
        %v992 = vadd.f32 %v831, %v991
        %v993 = vpop.f32.mrb[0].mxu0
        %994 = vmatprep.mubr.bf16.mxu0 0
        %995 = vmatmul.mubr.bf16.gmra.mrb[0].mxu0 %v694
        %v996 = vpop.f32.mrb[0].mxu0
        %v997 = vadd.f32 %v836, %v996
        %v998 = vpop.f32.mrb[0].mxu0
        %v999 = vpop.f32.mrb[0].mxu0
        %v1000 = vadd.f32 %v839, %v999
        %v1001 = vpop.f32.mrb[0].mxu0
        %1002 = vmatprep.mubr.bf16.mxu0 0
        %1003 = vmatmul.mubr.bf16.gmra.mrb[0].mxu0 %v697
        %v1004 = vpop.f32.mrb[0].mxu0
        %v1005 = vadd.f32 %v844, %v1004
        %v1006 = vpop.f32.mrb[0].mxu0
        %v1007 = vpop.f32.mrb[0].mxu0
        %v1008 = vadd.f32 %v847, %v1007
        %v1009 = vpop.f32.mrb[0].mxu0
        %1010 = vmatprep.mubr.bf16.mxu0 0
        %1011 = vmatmul.mubr.bf16.gmra.mrb[0].mxu0 %v700
        %v1012 = vpop.f32.mrb[0].mxu0
        %v1013 = vadd.f32 %v852, %v1012
        %v1014 = vpop.f32.mrb[0].mxu0
        %v1015 = vpop.f32.mrb[0].mxu0
        %v1016 = vadd.f32 %v855, %v1015
        %v1017 = vpop.f32.mrb[0].mxu0
        %1018 = vmatprep.mubr.bf16.mxu0 0
        %1019 = vmatmul.mubr.bf16.gmra.mrb[0].mxu0 %v703
        %v1020 = vpop.f32.mrb[0].mxu0
        %v1021 = vadd.f32 %v860, %v1020
        %v1022 = vpop.f32.mrb[0].mxu0
        %v1023 = vpop.f32.mrb[0].mxu0
        %v1024 = vadd.f32 %v863, %v1023
        %v1025 = vpop.f32.mrb[0].mxu0
        %1026 = vdwg.mxu0
        %vm1027 = vcmask 523264
        %1028 = vst.msk [vmem:[%s177] sm:$0xff] %vm1027, %v901
        %1029 = vst.msk [vmem:[%s177 + $0x8] sm:$0xff] %vm1027, %v904
        %1030 = vst.msk [vmem:[%s177 + $0x10] sm:$0xff] %vm1027, %v909
        %1031 = vst.msk [vmem:[%s177 + $0x18] sm:$0xff] %vm1027, %v912
        %1032 = vst.msk [vmem:[%s177 + $0x20] sm:$0xff] %vm1027, %v917
        %1033 = vst.msk [vmem:[%s177 + $0x28] sm:$0xff] %vm1027, %v920
        %1034 = vst.msk [vmem:[%s177 + $0x30] sm:$0xff] %vm1027, %v925
        %1035 = vst.msk [vmem:[%s177 + $0x38] sm:$0xff] %vm1027, %v928
        %1036 = vst.msk [vmem:[%s177 + $0x40] sm:$0xff] %vm1027, %v933
        %1037 = vst.msk [vmem:[%s177 + $0x48] sm:$0xff] %vm1027, %v936
        %1038 = vst.msk [vmem:[%s177 + $0x50] sm:$0xff] %vm1027, %v941
        %1039 = vst.msk [vmem:[%s177 + $0x58] sm:$0xff] %vm1027, %v944
        %1040 = vst.msk [vmem:[%s177 + $0x60] sm:$0xff] %vm1027, %v949
        %1041 = vst.msk [vmem:[%s177 + $0x68] sm:$0xff] %vm1027, %v952
        %1042 = vst.msk [vmem:[%s177 + $0x70] sm:$0xff] %vm1027, %v957
        %1043 = vst.msk [vmem:[%s177 + $0x78] sm:$0xff] %vm1027, %v960
        %1044 = vst.msk [vmem:[%s177 + $0x80] sm:$0xff] %vm1027, %v965
        %1045 = vst.msk [vmem:[%s177 + $0x88] sm:$0xff] %vm1027, %v968
        %1046 = vst.msk [vmem:[%s177 + $0x90] sm:$0xff] %vm1027, %v973
        %1047 = vst.msk [vmem:[%s177 + $0x98] sm:$0xff] %vm1027, %v976
        %1048 = vst.msk [vmem:[%s177 + $0xa0] sm:$0xff] %vm1027, %v981
        %1049 = vst.msk [vmem:[%s177 + $0xa8] sm:$0xff] %vm1027, %v984
        %1050 = vst.msk [vmem:[%s177 + $0xb0] sm:$0xff] %vm1027, %v989
        %1051 = vst.msk [vmem:[%s177 + $0xb8] sm:$0xff] %vm1027, %v992
        %1052 = vst.msk [vmem:[%s177 + $0xc0] sm:$0xff] %vm1027, %v997
        %1053 = vst.msk [vmem:[%s177 + $0xc8] sm:$0xff] %vm1027, %v1000
        %1054 = vst.msk [vmem:[%s177 + $0xd0] sm:$0xff] %vm1027, %v1005
        %1055 = vst.msk [vmem:[%s177 + $0xd8] sm:$0xff] %vm1027, %v1008
        %1056 = vst.msk [vmem:[%s177 + $0xe0] sm:$0xff] %vm1027, %v1013
        %1057 = vst.msk [vmem:[%s177 + $0xe8] sm:$0xff] %vm1027, %v1016
        %1058 = vst.msk [vmem:[%s177 + $0xf0] sm:$0xff] %vm1027, %v1021
        %1059 = vst.msk [vmem:[%s177 + $0xf8] sm:$0xff] %vm1027, %v1024
        %s1060 = sand.u32 %s90, 1
        %s1061 = sand.u32 %s90, 1
        %s1062 = smul.addr %s1061, 256
        %s1063 = scalar_lea.vmem [#allocation2], %s1062
        // Predicated region
        $region33: #{stn_tpn_forward.12} parent=31 // pred_check
          %p1064 = pneg %p100
        $region34: #{stn_tpn_forward.12} parent=31 // pred_check_branch
          %1066 = sbr.rel (%p1064) target = $region36
        $region35: #{stn_tpn_forward.12} parent=31 // pred_region
          %s1067 = smul.u32 32, %s14
          %s1068 = ssub.s32 43, %s1067
          %p1069 = scmp.lt.s32.totalorder %s1068, 32
          %s1070 = scalar_select %p1069, %s1068, 32
          %s1071 = smul.u32 128, %s1070
          %p1072 = scmp.ne.s32.totalorder 0, %s1071
          %s1073 = smul.addr %s1067, 8
          %s1074 = scalar_lea.vmem %s3, %s1073
          // Predicated region
          $region37: #{stn_tpn_forward.12} parent=35 // pred_check
            %p1075 = pneg %p1072
          $region38: #{stn_tpn_forward.12} parent=35 // pred_check_branch
            %1077 = sbr.rel (%p1075) target = $region40
          $region39: #{stn_tpn_forward.12} parent=35 // pred_region
            // Predicated region
            $region41: #{stn_tpn_forward.12} parent=39 // pred_check
              _
            $region42: #{stn_tpn_forward.12} parent=39 // pred_check_branch
              %1079 = sbr.rel (0) target = $region44
            $region43: #{stn_tpn_forward.12} parent=39 // pred_region
              // Predicated region
              $region63: #{stn_tpn_forward.12} parent=43 // pred_check
                _
              $region64: #{stn_tpn_forward.12} parent=43 // pred_check_branch
                %1190 = sbr.rel (0) target = $region66
              $region65: #{stn_tpn_forward.12} parent=43 // pred_region
                %s1191 = sshrl.u32 %s1070, 5
                // While loop
                $region67: #{stn_tpn_forward.12} parent=65 // loop_pre_header
                  _
                $region68: #{stn_tpn_forward.12} parent=65 // loop_header
                  %s1193 = sphi 0, %s1195
                  %p1194 = scmp.ge.s32.totalorder %s1193, %s1191
                  %s1198 = sphi 0, %s1267
                  %s1199 = sphi %s1063, %s1270
                  %s1200 = sphi %s1074, %s1271
                $region69: #{stn_tpn_forward.12} parent=65 // loop_header_branch
                  %1197 = sbr.rel (%p1194) target = $region73
                $region70: #{stn_tpn_forward.12} parent=65 // loop_body
                  %v1201 = vld [vmem:[%s1199] sm:$0xff]
                  %1202 = vst [vmem:[%s1200] sm:$0xff] %v1201
                  %v1203 = vld [vmem:[%s1199 + $0x8] sm:$0xff]
                  %1204 = vst [vmem:[%s1200 + $0x8] sm:$0xff] %v1203
                  %v1205 = vld [vmem:[%s1199 + $0x10] sm:$0xff]
                  %1206 = vst [vmem:[%s1200 + $0x10] sm:$0xff] %v1205
                  %v1207 = vld [vmem:[%s1199 + $0x18] sm:$0xff]
                  %1208 = vst [vmem:[%s1200 + $0x18] sm:$0xff] %v1207
                  %v1209 = vld [vmem:[%s1199 + $0x20] sm:$0xff]
                  %1210 = vst [vmem:[%s1200 + $0x20] sm:$0xff] %v1209
                  %v1211 = vld [vmem:[%s1199 + $0x28] sm:$0xff]
                  %1212 = vst [vmem:[%s1200 + $0x28] sm:$0xff] %v1211
                  %v1213 = vld [vmem:[%s1199 + $0x30] sm:$0xff]
                  %1214 = vst [vmem:[%s1200 + $0x30] sm:$0xff] %v1213
                  %v1215 = vld [vmem:[%s1199 + $0x38] sm:$0xff]
                  %1216 = vst [vmem:[%s1200 + $0x38] sm:$0xff] %v1215
                  %v1217 = vld [vmem:[%s1199 + $0x40] sm:$0xff]
                  %1218 = vst [vmem:[%s1200 + $0x40] sm:$0xff] %v1217
                  %v1219 = vld [vmem:[%s1199 + $0x48] sm:$0xff]
                  %1220 = vst [vmem:[%s1200 + $0x48] sm:$0xff] %v1219
                  %v1221 = vld [vmem:[%s1199 + $0x50] sm:$0xff]
                  %1222 = vst [vmem:[%s1200 + $0x50] sm:$0xff] %v1221
                  %v1223 = vld [vmem:[%s1199 + $0x58] sm:$0xff]
                  %1224 = vst [vmem:[%s1200 + $0x58] sm:$0xff] %v1223
                  %v1225 = vld [vmem:[%s1199 + $0x60] sm:$0xff]
                  %1226 = vst [vmem:[%s1200 + $0x60] sm:$0xff] %v1225
                  %v1227 = vld [vmem:[%s1199 + $0x68] sm:$0xff]
                  %1228 = vst [vmem:[%s1200 + $0x68] sm:$0xff] %v1227
                  %v1229 = vld [vmem:[%s1199 + $0x70] sm:$0xff]
                  %1230 = vst [vmem:[%s1200 + $0x70] sm:$0xff] %v1229
                  %v1231 = vld [vmem:[%s1199 + $0x78] sm:$0xff]
                  %1232 = vst [vmem:[%s1200 + $0x78] sm:$0xff] %v1231
                  %v1233 = vld [vmem:[%s1199 + $0x80] sm:$0xff]
                  %1234 = vst [vmem:[%s1200 + $0x80] sm:$0xff] %v1233
                  %v1235 = vld [vmem:[%s1199 + $0x88] sm:$0xff]
                  %1236 = vst [vmem:[%s1200 + $0x88] sm:$0xff] %v1235
                  %v1237 = vld [vmem:[%s1199 + $0x90] sm:$0xff]
                  %1238 = vst [vmem:[%s1200 + $0x90] sm:$0xff] %v1237
                  %v1239 = vld [vmem:[%s1199 + $0x98] sm:$0xff]
                  %1240 = vst [vmem:[%s1200 + $0x98] sm:$0xff] %v1239
                  %v1241 = vld [vmem:[%s1199 + $0xa0] sm:$0xff]
                  %1242 = vst [vmem:[%s1200 + $0xa0] sm:$0xff] %v1241
                  %v1243 = vld [vmem:[%s1199 + $0xa8] sm:$0xff]
                  %1244 = vst [vmem:[%s1200 + $0xa8] sm:$0xff] %v1243
                  %v1245 = vld [vmem:[%s1199 + $0xb0] sm:$0xff]
                  %1246 = vst [vmem:[%s1200 + $0xb0] sm:$0xff] %v1245
                  %v1247 = vld [vmem:[%s1199 + $0xb8] sm:$0xff]
                  %1248 = vst [vmem:[%s1200 + $0xb8] sm:$0xff] %v1247
                  %v1249 = vld [vmem:[%s1199 + $0xc0] sm:$0xff]
                  %1250 = vst [vmem:[%s1200 + $0xc0] sm:$0xff] %v1249
                  %v1251 = vld [vmem:[%s1199 + $0xc8] sm:$0xff]
                  %1252 = vst [vmem:[%s1200 + $0xc8] sm:$0xff] %v1251
                  %v1253 = vld [vmem:[%s1199 + $0xd0] sm:$0xff]
                  %1254 = vst [vmem:[%s1200 + $0xd0] sm:$0xff] %v1253
                  %v1255 = vld [vmem:[%s1199 + $0xd8] sm:$0xff]
                  %1256 = vst [vmem:[%s1200 + $0xd8] sm:$0xff] %v1255
                  %v1257 = vld [vmem:[%s1199 + $0xe0] sm:$0xff]
                  %1258 = vst [vmem:[%s1200 + $0xe0] sm:$0xff] %v1257
                  %v1259 = vld [vmem:[%s1199 + $0xe8] sm:$0xff]
                  %1260 = vst [vmem:[%s1200 + $0xe8] sm:$0xff] %v1259
                  %v1261 = vld [vmem:[%s1199 + $0xf0] sm:$0xff]
                  %1262 = vst [vmem:[%s1200 + $0xf0] sm:$0xff] %v1261
                  %v1263 = vld [vmem:[%s1199 + $0xf8] sm:$0xff]
                  %1264 = vst [vmem:[%s1200 + $0xf8] sm:$0xff] %v1263
                  %s1265 = sadd.s32 1, %s1198
                  %p1266 = scmp.ge.s32.totalorder %s1265, %s1191
                  %s1267 = scalar_select %p1266, 0, %s1265
                  %s1268 = smul.u32 %s1267, 256
                  %s1269 = smul.u32 %s1267, 256
                  %s1270 = scalar_lea.vmem %s1063, %s1268 [#allocation2]
                  %s1271 = scalar_lea.vmem %s1074, %s1269
                $region71: #{stn_tpn_forward.12} parent=65 // loop_footer
                  %s1195 = sadd.s32 %s1193, 1
                $region72: #{stn_tpn_forward.12} parent=65 // loop_footer_branch
                  %1192 = sbr.rel target = $region68
                $region73: #{stn_tpn_forward.12} parent=65 // loop_exit
                  _
                %s1272 = sshrl.u32 %s1070, 5
                %s1273 = sand.u32 %s1070, 31
                %s1274 = smul.u32 %s1272, 32
                %s1275 = smul.u32 8, %s1274
                %s1276 = scalar_lea.vmem %s1063, %s1275 [#allocation2]
                %s1277 = smul.u32 8, %s1274
                %s1278 = scalar_lea.vmem %s1074, %s1277
                // While loop
                $region74: #{stn_tpn_forward.12} parent=65 // loop_pre_header
                  _
                $region75: #{stn_tpn_forward.12} parent=65 // loop_header
                  %s1280 = sphi 0, %s1282
                  %p1281 = scmp.ge.s32.totalorder %s1280, %s1273
                  %s1285 = sphi 0, %s1292
                  %s1286 = sphi %s1276, %s1295
                  %s1287 = sphi %s1278, %s1296
                $region76: #{stn_tpn_forward.12} parent=65 // loop_header_branch
                  %1284 = sbr.rel (%p1281) target = $region80
                $region77: #{stn_tpn_forward.12} parent=65 // loop_body
                  %v1288 = vld [vmem:[%s1286] sm:$0xff]
                  %1289 = vst [vmem:[%s1287] sm:$0xff] %v1288
                  %s1290 = sadd.s32 1, %s1285
                  %p1291 = scmp.ge.s32.totalorder %s1290, %s1273
                  %s1292 = scalar_select %p1291, 0, %s1290
                  %s1293 = smul.u32 %s1292, 8
                  %s1294 = smul.u32 %s1292, 8
                  %s1295 = scalar_lea.vmem %s1276, %s1293 [#allocation2]
                  %s1296 = scalar_lea.vmem %s1278, %s1294
                $region78: #{stn_tpn_forward.12} parent=65 // loop_footer
                  %s1282 = sadd.s32 %s1280, 1
                $region79: #{stn_tpn_forward.12} parent=65 // loop_footer_branch
                  %1279 = sbr.rel target = $region75
                $region80: #{stn_tpn_forward.12} parent=65 // loop_exit
                  _
              $region66: #{stn_tpn_forward.12} parent=43 // pred_fallthru
                _
              // Predicated region
              $region81: #{stn_tpn_forward.12} parent=43 // pred_check
                _
              $region82: #{stn_tpn_forward.12} parent=43 // pred_check_branch
                %1298 = sbr.rel target = $region84
              $region83: #{stn_tpn_forward.12} parent=43 // pred_region
                _
              $region84: #{stn_tpn_forward.12} parent=43 // pred_fallthru
                _
            $region44: #{stn_tpn_forward.12} parent=39 // pred_fallthru
              _
            // Predicated region
            $region45: #{stn_tpn_forward.12} parent=39 // pred_check
              _
            $region46: #{stn_tpn_forward.12} parent=39 // pred_check_branch
              %1081 = sbr.rel target = $region48
            $region47: #{stn_tpn_forward.12} parent=39 // pred_region
              %s1083 = sshrl.u32 %s1070, 5
              // While loop
              $region49: #{stn_tpn_forward.12} parent=47 // loop_pre_header
                _
              $region50: #{stn_tpn_forward.12} parent=47 // loop_header
                %s1085 = sphi 0, %s1087
                %p1086 = scmp.ge.s32.totalorder %s1085, %s1083
                %s1090 = sphi 0, %s1159
                %s1091 = sphi %s1063, %s1162
                %s1092 = sphi %s1074, %s1163
              $region51: #{stn_tpn_forward.12} parent=47 // loop_header_branch
                %1089 = sbr.rel (%p1086) target = $region55
              $region52: #{stn_tpn_forward.12} parent=47 // loop_body
                %v1093 = vld [vmem:[%s1091] sm:$0xff]
                %1094 = vst [vmem:[%s1092] sm:$0xff] %v1093
                %v1095 = vld [vmem:[%s1091 + $0x8] sm:$0xff]
                %1096 = vst [vmem:[%s1092 + $0x8] sm:$0xff] %v1095
                %v1097 = vld [vmem:[%s1091 + $0x10] sm:$0xff]
                %1098 = vst [vmem:[%s1092 + $0x10] sm:$0xff] %v1097
                %v1099 = vld [vmem:[%s1091 + $0x18] sm:$0xff]
                %1100 = vst [vmem:[%s1092 + $0x18] sm:$0xff] %v1099
                %v1101 = vld [vmem:[%s1091 + $0x20] sm:$0xff]
                %1102 = vst [vmem:[%s1092 + $0x20] sm:$0xff] %v1101
                %v1103 = vld [vmem:[%s1091 + $0x28] sm:$0xff]
                %1104 = vst [vmem:[%s1092 + $0x28] sm:$0xff] %v1103
                %v1105 = vld [vmem:[%s1091 + $0x30] sm:$0xff]
                %1106 = vst [vmem:[%s1092 + $0x30] sm:$0xff] %v1105
                %v1107 = vld [vmem:[%s1091 + $0x38] sm:$0xff]
                %1108 = vst [vmem:[%s1092 + $0x38] sm:$0xff] %v1107
                %v1109 = vld [vmem:[%s1091 + $0x40] sm:$0xff]
                %1110 = vst [vmem:[%s1092 + $0x40] sm:$0xff] %v1109
                %v1111 = vld [vmem:[%s1091 + $0x48] sm:$0xff]
                %1112 = vst [vmem:[%s1092 + $0x48] sm:$0xff] %v1111
                %v1113 = vld [vmem:[%s1091 + $0x50] sm:$0xff]
                %1114 = vst [vmem:[%s1092 + $0x50] sm:$0xff] %v1113
                %v1115 = vld [vmem:[%s1091 + $0x58] sm:$0xff]
                %1116 = vst [vmem:[%s1092 + $0x58] sm:$0xff] %v1115
                %v1117 = vld [vmem:[%s1091 + $0x60] sm:$0xff]
                %1118 = vst [vmem:[%s1092 + $0x60] sm:$0xff] %v1117
                %v1119 = vld [vmem:[%s1091 + $0x68] sm:$0xff]
                %1120 = vst [vmem:[%s1092 + $0x68] sm:$0xff] %v1119
                %v1121 = vld [vmem:[%s1091 + $0x70] sm:$0xff]
                %1122 = vst [vmem:[%s1092 + $0x70] sm:$0xff] %v1121
                %v1123 = vld [vmem:[%s1091 + $0x78] sm:$0xff]
                %1124 = vst [vmem:[%s1092 + $0x78] sm:$0xff] %v1123
                %v1125 = vld [vmem:[%s1091 + $0x80] sm:$0xff]
                %1126 = vst [vmem:[%s1092 + $0x80] sm:$0xff] %v1125
                %v1127 = vld [vmem:[%s1091 + $0x88] sm:$0xff]
                %1128 = vst [vmem:[%s1092 + $0x88] sm:$0xff] %v1127
                %v1129 = vld [vmem:[%s1091 + $0x90] sm:$0xff]
                %1130 = vst [vmem:[%s1092 + $0x90] sm:$0xff] %v1129
                %v1131 = vld [vmem:[%s1091 + $0x98] sm:$0xff]
                %1132 = vst [vmem:[%s1092 + $0x98] sm:$0xff] %v1131
                %v1133 = vld [vmem:[%s1091 + $0xa0] sm:$0xff]
                %1134 = vst [vmem:[%s1092 + $0xa0] sm:$0xff] %v1133
                %v1135 = vld [vmem:[%s1091 + $0xa8] sm:$0xff]
                %1136 = vst [vmem:[%s1092 + $0xa8] sm:$0xff] %v1135
                %v1137 = vld [vmem:[%s1091 + $0xb0] sm:$0xff]
                %1138 = vst [vmem:[%s1092 + $0xb0] sm:$0xff] %v1137
                %v1139 = vld [vmem:[%s1091 + $0xb8] sm:$0xff]
                %1140 = vst [vmem:[%s1092 + $0xb8] sm:$0xff] %v1139
                %v1141 = vld [vmem:[%s1091 + $0xc0] sm:$0xff]
                %1142 = vst [vmem:[%s1092 + $0xc0] sm:$0xff] %v1141
                %v1143 = vld [vmem:[%s1091 + $0xc8] sm:$0xff]
                %1144 = vst [vmem:[%s1092 + $0xc8] sm:$0xff] %v1143
                %v1145 = vld [vmem:[%s1091 + $0xd0] sm:$0xff]
                %1146 = vst [vmem:[%s1092 + $0xd0] sm:$0xff] %v1145
                %v1147 = vld [vmem:[%s1091 + $0xd8] sm:$0xff]
                %1148 = vst [vmem:[%s1092 + $0xd8] sm:$0xff] %v1147
                %v1149 = vld [vmem:[%s1091 + $0xe0] sm:$0xff]
                %1150 = vst [vmem:[%s1092 + $0xe0] sm:$0xff] %v1149
                %v1151 = vld [vmem:[%s1091 + $0xe8] sm:$0xff]
                %1152 = vst [vmem:[%s1092 + $0xe8] sm:$0xff] %v1151
                %v1153 = vld [vmem:[%s1091 + $0xf0] sm:$0xff]
                %1154 = vst [vmem:[%s1092 + $0xf0] sm:$0xff] %v1153
                %v1155 = vld [vmem:[%s1091 + $0xf8] sm:$0xff]
                %1156 = vst [vmem:[%s1092 + $0xf8] sm:$0xff] %v1155
                %s1157 = sadd.s32 1, %s1090
                %p1158 = scmp.ge.s32.totalorder %s1157, %s1083
                %s1159 = scalar_select %p1158, 0, %s1157
                %s1160 = smul.u32 %s1159, 256
                %s1161 = smul.u32 %s1159, 256
                %s1162 = scalar_lea.vmem %s1063, %s1160 [#allocation2]
                %s1163 = scalar_lea.vmem %s1074, %s1161
              $region53: #{stn_tpn_forward.12} parent=47 // loop_footer
                %s1087 = sadd.s32 %s1085, 1
              $region54: #{stn_tpn_forward.12} parent=47 // loop_footer_branch
                %1084 = sbr.rel target = $region50
              $region55: #{stn_tpn_forward.12} parent=47 // loop_exit
                _
              %s1164 = sshrl.u32 %s1070, 5
              %s1165 = sand.u32 %s1070, 31
              %s1166 = smul.u32 %s1164, 32
              %s1167 = smul.u32 8, %s1166
              %s1168 = scalar_lea.vmem %s1063, %s1167 [#allocation2]
              %s1169 = smul.u32 8, %s1166
              %s1170 = scalar_lea.vmem %s1074, %s1169
              // While loop
              $region56: #{stn_tpn_forward.12} parent=47 // loop_pre_header
                _
              $region57: #{stn_tpn_forward.12} parent=47 // loop_header
                %s1172 = sphi 0, %s1174
                %p1173 = scmp.ge.s32.totalorder %s1172, %s1165
                %s1177 = sphi 0, %s1184
                %s1178 = sphi %s1168, %s1187
                %s1179 = sphi %s1170, %s1188
              $region58: #{stn_tpn_forward.12} parent=47 // loop_header_branch
                %1176 = sbr.rel (%p1173) target = $region62
              $region59: #{stn_tpn_forward.12} parent=47 // loop_body
                %v1180 = vld [vmem:[%s1178] sm:$0xff]
                %1181 = vst [vmem:[%s1179] sm:$0xff] %v1180
                %s1182 = sadd.s32 1, %s1177
                %p1183 = scmp.ge.s32.totalorder %s1182, %s1165
                %s1184 = scalar_select %p1183, 0, %s1182
                %s1185 = smul.u32 %s1184, 8
                %s1186 = smul.u32 %s1184, 8
                %s1187 = scalar_lea.vmem %s1168, %s1185 [#allocation2]
                %s1188 = scalar_lea.vmem %s1170, %s1186
              $region60: #{stn_tpn_forward.12} parent=47 // loop_footer
                %s1174 = sadd.s32 %s1172, 1
              $region61: #{stn_tpn_forward.12} parent=47 // loop_footer_branch
                %1171 = sbr.rel target = $region57
              $region62: #{stn_tpn_forward.12} parent=47 // loop_exit
                _
            $region48: #{stn_tpn_forward.12} parent=39 // pred_fallthru
              _
          $region40: #{stn_tpn_forward.12} parent=35 // pred_fallthru
            _
          %1299 = vnop
        $region36: #{stn_tpn_forward.12} parent=31 // pred_fallthru
          _
      $region32: #{stn_tpn_forward.12} parent=5 // pred_fallthru
        _
      %p1300 = scmp.le.s32.totalorder 2, %s9
      // Predicated region
      $region85: #{stn_tpn_forward.12} parent=5 // pred_check
        %p1301 = pneg %p1300
      $region86: #{stn_tpn_forward.12} parent=5 // pred_check_branch
        %1303 = sbr.rel (%p1301) target = $region88
      $region87: #{stn_tpn_forward.12} parent=5 // pred_region
        %s1304 = ssub.s32 %s9, 2
        // Predicated region
        $region89: #{stn_tpn_forward.12} parent=87 // pred_check
          %p1305 = pneg %p106
        $region90: #{stn_tpn_forward.12} parent=87 // pred_check_branch
          %1307 = sbr.rel (%p1305) target = $region92
        $region91: #{stn_tpn_forward.12} parent=87 // pred_region
          %s1308 = sand.u32 %s91, 1
          %s1309 = sand.u32 %s91, 1
          %s1310 = smul.addr %s1309, 256
          %s1311 = scalar_lea.vmem [#allocation2], %s1310
        $region92: #{stn_tpn_forward.12} parent=87 // pred_fallthru
          _
      $region88: #{stn_tpn_forward.12} parent=5 // pred_fallthru
        _
    $region6: #{stn_tpn_forward.12} parent=1 // loop_footer
      %s13 = sadd.s32 1, %s9
    $region7: #{stn_tpn_forward.12} parent=1 // loop_footer_branch
      %8 = sbr.rel target = $region3
    $region8: #{stn_tpn_forward.12} parent=1 // loop_exit
      _

// kernel: stn_tpn_forward.13
$region0: #{stn_tpn_forward.13}
  #allocation0 [shape = 'u32[]', space=smem, size = 0x4, offset = 0x4, fixed_abs, tag = 'smem constant byte address 0x4 - core index']
  #allocation1 [shape = 'u32[144,128]{1,0:T(1,128)}', space=vmem, size = 0x12000, scoped, tag = 'internal scratch']
  %s0 = inlined_call_operand.vmem [shape: f32[2,6,2,6,128], index: 0, kind: input, shape index: {}]
  %s1 = inlined_call_operand.vmem [shape: f32[2,6,6,64], index: 1, kind: output, shape index: {}]
  %s2 = sld [smem:[#allocation0]]
  $region37: #{stn_tpn_forward.13} parent=0
    _
  %s4 = ssub.s32 1, %s2
  %s5 = scalar_select 0, %s4, %s2
  loop: start=0, step=1, limit=4
  $region2: #{stn_tpn_forward.13} parent=0 // loop_pre_header
    _
  $region3: #{stn_tpn_forward.13} parent=0 // loop_header
    %s7 = sphi 0, %s11
    %p8 = scmp.ge.s32.totalorder %s7, 4
    %s17 = sphi 0, %s19
    %s20 = sphi 0, %s17
    %s21 = sphi 0, %s20
    %s37 = sphi 0, %s21
    %s43 = sphi 0, %s45
    %s46 = sphi 0, %s43
    %s47 = sphi 0, %s46
    %s63 = sphi 0, %s47
  $region4: #{stn_tpn_forward.13} parent=0 // loop_header_branch
    %10 = sbr.rel (%p8) target = $region8
  $region5: #{stn_tpn_forward.13} parent=0 // loop_body
    %s12 = ssub.s32 %s7, 1
    %s13 = ssub.s32 %s7, 2
    %s14 = sadd.s32 %s7, 1
    %s15 = ssub.s32 %s7, %s14
    %p16 = scmp.eq.s32.totalorder %s15, 0
    %s18 = sadd.s32 %s17, 1
    %s19 = scalar_select %p16, %s17, %s18
    %p22 = pneg %p16
    %p23 = scmp.eq.s32.totalorder %s7, 1
    %p24 = por %p22, %p23
    %p25 = scmp.ne.s32.totalorder %s17, %s20
    %p26 = scmp.eq.s32.totalorder %s7, 0
    %p27 = por %p25, %p26
    %p28 = scmp.ne.s32.totalorder %s17, %s20
    %p29 = scmp.eq.s32.totalorder %s12, 1
    %p30 = por %p28, %p29
    %p31 = scmp.ne.s32.totalorder %s20, %s21
    %p32 = scmp.eq.s32.totalorder %s12, 0
    %p33 = por %p31, %p32
    %p34 = scmp.ne.s32.totalorder %s20, %s21
    %p35 = scmp.eq.s32.totalorder %s13, 1
    %p36 = por %p34, %p35
    %p38 = scmp.ne.s32.totalorder %s21, %s37
    %p39 = scmp.eq.s32.totalorder %s13, 0
    %p40 = por %p38, %p39
    %s41 = ssub.s32 %s7, %s14
    %p42 = scmp.eq.s32.totalorder %s41, 0
    %s44 = sadd.s32 %s43, 1
    %s45 = scalar_select %p42, %s43, %s44
    %p48 = pneg %p42
    %p49 = scmp.eq.s32.totalorder %s7, 1
    %p50 = por %p48, %p49
    %p51 = scmp.ne.s32.totalorder %s43, %s46
    %p52 = scmp.eq.s32.totalorder %s7, 0
    %p53 = por %p51, %p52
    %p54 = scmp.ne.s32.totalorder %s43, %s46
    %p55 = scmp.eq.s32.totalorder %s12, 1
    %p56 = por %p54, %p55
    %p57 = scmp.ne.s32.totalorder %s46, %s47
    %p58 = scmp.eq.s32.totalorder %s12, 0
    %p59 = por %p57, %p58
    %p60 = scmp.ne.s32.totalorder %s46, %s47
    %p61 = scmp.eq.s32.totalorder %s13, 1
    %p62 = por %p60, %p61
    %p64 = scmp.ne.s32.totalorder %s47, %s63
    %p65 = scmp.eq.s32.totalorder %s13, 0
    %p66 = por %p64, %p65
    %p67 = scmp.le.s32.totalorder 1, %s7
    %p68 = scmp.lt.s32.totalorder %s7, 3
    %p69 = pnand %p67, %p68
    %p70 = pneg %p69
    // Predicated region
    $region9: #{stn_tpn_forward.13} parent=5 // pred_check
      _
    $region10: #{stn_tpn_forward.13} parent=5 // pred_check_branch
      %72 = sbr.rel (%p69) target = $region12
    $region11: #{stn_tpn_forward.13} parent=5 // pred_region
      %s73 = ssub.s32 %s7, 1
    $region12: #{stn_tpn_forward.13} parent=5 // pred_fallthru
      _
    %p74 = scmp.lt.s32.totalorder %s7, 2
    // Predicated region
    $region13: #{stn_tpn_forward.13} parent=5 // pred_check
      %p75 = pneg %p74
    $region14: #{stn_tpn_forward.13} parent=5 // pred_check_branch
      %77 = sbr.rel (%p75) target = $region16
    $region15: #{stn_tpn_forward.13} parent=5 // pred_region
      // Predicated region
      $region17: #{stn_tpn_forward.13} parent=15 // pred_check
        %p78 = pneg %p27
      $region18: #{stn_tpn_forward.13} parent=15 // pred_check_branch
        %80 = sbr.rel (%p78) target = $region20
      $region19: #{stn_tpn_forward.13} parent=15 // pred_region
        %p81 = scmp.lt.s32.totalorder %s7, 1
        %s82 = scalar_select %p81, %s7, 1
        %s83 = smul.addr %s82, 12
        %s84 = smul.addr %s83, 8
        %s85 = scalar_lea.vmem %s0, %s84
      $region20: #{stn_tpn_forward.13} parent=15 // pred_fallthru
        _
    $region16: #{stn_tpn_forward.13} parent=5 // pred_fallthru
      _
    %p86 = scmp.le.s32.totalorder 1, %s7
    %p87 = scmp.lt.s32.totalorder %s7, 3
    %p88 = pnand %p86, %p87
    %p89 = pneg %p88
    // Predicated region
    $region21: #{stn_tpn_forward.13} parent=5 // pred_check
      _
    $region22: #{stn_tpn_forward.13} parent=5 // pred_check_branch
      %91 = sbr.rel (%p88) target = $region24
    $region23: #{stn_tpn_forward.13} parent=5 // pred_region
      %s92 = ssub.s32 %s7, 1
      %p93 = scmp.lt.s32.totalorder %s12, 1
      %s94 = scalar_select %p93, %s12, 1
      %s95 = smul.addr %s94, 12
      %s96 = smul.addr %s95, 8
      %s97 = scalar_lea.vmem %s0, %s96
      %p98 = pneg %p33
      %p99 = pneg %p30
      %p100 = pneg %p59
      %p101 = pneg %p56
      %p102 = scmp.lt.s32.totalorder %s12, 1
      %s103 = scalar_select %p102, %s12, 1
      %s104 = smul.addr %s103, 6
      %s105 = smul.addr %s104, 8
      %s106 = scalar_lea.vmem %s1, %s105
      %p107 = scmp.lt.s32.totalorder %s12, 1
      %s108 = scalar_select %p107, %s12, 1
      %s109 = smul.addr %s108, 12
      %s110 = smul.addr %s109, 8
      %s111 = scalar_lea.vmem %s0, %s110
      %p112 = scmp.lt.s32.totalorder %s12, 1
      %s113 = scalar_select %p112, %s12, 1
      %s114 = smul.addr %s113, 6
      %s115 = smul.addr %s114, 8
      %s116 = scalar_lea.vmem %s1, %s115
      %v117 = vld [vmem:[%s111] sm:$0x3f]
      %v118 = vld [vmem:[%s111 + $0x8] sm:$0x3f]
      %v119 = vld [vmem:[%s111 + $0x10] sm:$0x3f]
      %v120 = vld [vmem:[%s111 + $0x18] sm:$0x3f]
      %v121 = vld [vmem:[%s111 + $0x20] sm:$0x3f]
      %v122 = vld [vmem:[%s111 + $0x28] sm:$0x3f]
      %v123 = vld [vmem:[%s111 + $0x30] sm:$0x3f]
      %v124 = vld [vmem:[%s111 + $0x38] sm:$0x3f]
      %v125 = vld [vmem:[%s111 + $0x40] sm:$0x3f]
      %v126 = vld [vmem:[%s111 + $0x48] sm:$0x3f]
      %v127 = vld [vmem:[%s111 + $0x50] sm:$0x3f]
      %v128 = vld [vmem:[%s111 + $0x58] sm:$0x3f]
      %v129 = vmax.f32 %v117, %v118
      %v130 = vmax.f32 %v119, %v120
      %v131 = vmax.f32 %v121, %v122
      %v132 = vmax.f32 %v123, %v124
      %v133 = vmax.f32 %v125, %v126
      %v134 = vmax.f32 %v127, %v128
      %141 = vrot.lane.b32.xlu0 %v129, 64
      %v142 = vpop.permute.xlu0 %141
      %143 = vrot.lane.b32.xlu0 %v130, 64
      %v144 = vpop.permute.xlu0 %143
      %145 = vrot.lane.b32.xlu0 %v131, 64
      %v146 = vpop.permute.xlu0 %145
      %147 = vrot.lane.b32.xlu0 %v132, 64
      %v148 = vpop.permute.xlu0 %147
      %149 = vrot.lane.b32.xlu0 %v133, 64
      %v150 = vpop.permute.xlu0 %149
      %151 = vrot.lane.b32.xlu0 %v134, 64
      %v152 = vpop.permute.xlu0 %151
      %v159 = vmax.f32 %v129, %v142
      %v160 = vmax.f32 %v130, %v144
      %v161 = vmax.f32 %v131, %v146
      %v162 = vmax.f32 %v132, %v148
      %v163 = vmax.f32 %v133, %v150
      %v164 = vmax.f32 %v134, %v152
      %v165 = vmax.f32 %v159, 0.0
      %v166 = vmax.f32 %v160, 0.0
      %v167 = vmax.f32 %v161, 0.0
      %v168 = vmax.f32 %v162, 0.0
      %v169 = vmax.f32 %v163, 0.0
      %v170 = vmax.f32 %v164, 0.0
      %vm171 = vcmask 521216
      %172 = vst.msk [vmem:[%s116] sm:$0x3f] %vm171, %v165
      %173 = vst.msk [vmem:[%s116 + $0x8] sm:$0x3f] %vm171, %v166
      %174 = vst.msk [vmem:[%s116 + $0x10] sm:$0x3f] %vm171, %v167
      %175 = vst.msk [vmem:[%s116 + $0x18] sm:$0x3f] %vm171, %v168
      %176 = vst.msk [vmem:[%s116 + $0x20] sm:$0x3f] %vm171, %v169
      %177 = vst.msk [vmem:[%s116 + $0x28] sm:$0x3f] %vm171, %v170
      %p178 = scmp.lt.s32.totalorder %s12, 1
      %s179 = scalar_select %p178, %s12, 1
      %s180 = smul.addr %s179, 6
      %s181 = smul.addr %s180, 8
      %s182 = scalar_lea.vmem %s1, %s181
      // Predicated region
      $region25: #{stn_tpn_forward.13} parent=23 // pred_check
        %p183 = pneg %p56
      $region26: #{stn_tpn_forward.13} parent=23 // pred_check_branch
        %185 = sbr.rel (%p183) target = $region28
      $region27: #{stn_tpn_forward.13} parent=23 // pred_region
        _
      $region28: #{stn_tpn_forward.13} parent=23 // pred_fallthru
        _
    $region24: #{stn_tpn_forward.13} parent=5 // pred_fallthru
      _
    %p186 = scmp.le.s32.totalorder 2, %s7
    // Predicated region
    $region29: #{stn_tpn_forward.13} parent=5 // pred_check
      %p187 = pneg %p186
    $region30: #{stn_tpn_forward.13} parent=5 // pred_check_branch
      %189 = sbr.rel (%p187) target = $region32
    $region31: #{stn_tpn_forward.13} parent=5 // pred_region
      %s190 = ssub.s32 %s7, 2
      // Predicated region
      $region33: #{stn_tpn_forward.13} parent=31 // pred_check
        %p191 = pneg %p62
      $region34: #{stn_tpn_forward.13} parent=31 // pred_check_branch
        %193 = sbr.rel (%p191) target = $region36
      $region35: #{stn_tpn_forward.13} parent=31 // pred_region
        %p194 = scmp.lt.s32.totalorder %s13, 1
        %s195 = scalar_select %p194, %s13, 1
        %s196 = smul.addr %s195, 6
        %s197 = smul.addr %s196, 8
        %s198 = scalar_lea.vmem %s1, %s197
      $region36: #{stn_tpn_forward.13} parent=31 // pred_fallthru
        _
    $region32: #{stn_tpn_forward.13} parent=5 // pred_fallthru
      _
  $region6: #{stn_tpn_forward.13} parent=0 // loop_footer
    %s11 = sadd.s32 1, %s7
  $region7: #{stn_tpn_forward.13} parent=0 // loop_footer_branch
    %6 = sbr.rel target = $region3
  $region8: #{stn_tpn_forward.13} parent=0 // loop_exit
    _

// kernel: stn_tpn_forward.15
$region0: #{stn_tpn_forward.15}
  #allocation0 [shape = 'u32[]', space=smem, size = 0x4, offset = 0x4, fixed_abs, tag = 'smem constant byte address 0x4 - core index']
  #allocation1 [shape = 'u32[144,128]{1,0:T(1,128)}', space=vmem, size = 0x12000, scoped, tag = 'internal scratch']
  %s0 = inlined_call_operand.vmem [shape: f32[2,2,2,2,256], index: 0, kind: input, shape index: {}]
  %s1 = inlined_call_operand.vmem [shape: f32[2,2,2,128], index: 1, kind: output, shape index: {}]
  %s2 = sld [smem:[#allocation0]]
  $region37: #{stn_tpn_forward.15} parent=0
    _
  %s4 = ssub.s32 1, %s2
  %s5 = scalar_select 0, %s4, %s2
  loop: start=0, step=1, limit=4
  $region2: #{stn_tpn_forward.15} parent=0 // loop_pre_header
    _
  $region3: #{stn_tpn_forward.15} parent=0 // loop_header
    %s7 = sphi 0, %s11
    %p8 = scmp.ge.s32.totalorder %s7, 4
    %s17 = sphi 0, %s19
    %s20 = sphi 0, %s17
    %s21 = sphi 0, %s20
    %s37 = sphi 0, %s21
    %s43 = sphi 0, %s45
    %s46 = sphi 0, %s43
    %s47 = sphi 0, %s46
    %s63 = sphi 0, %s47
  $region4: #{stn_tpn_forward.15} parent=0 // loop_header_branch
    %10 = sbr.rel (%p8) target = $region8
  $region5: #{stn_tpn_forward.15} parent=0 // loop_body
    %s12 = ssub.s32 %s7, 1
    %s13 = ssub.s32 %s7, 2
    %s14 = sadd.s32 %s7, 1
    %s15 = ssub.s32 %s7, %s14
    %p16 = scmp.eq.s32.totalorder %s15, 0
    %s18 = sadd.s32 %s17, 1
    %s19 = scalar_select %p16, %s17, %s18
    %p22 = pneg %p16
    %p23 = scmp.eq.s32.totalorder %s7, 1
    %p24 = por %p22, %p23
    %p25 = scmp.ne.s32.totalorder %s17, %s20
    %p26 = scmp.eq.s32.totalorder %s7, 0
    %p27 = por %p25, %p26
    %p28 = scmp.ne.s32.totalorder %s17, %s20
    %p29 = scmp.eq.s32.totalorder %s12, 1
    %p30 = por %p28, %p29
    %p31 = scmp.ne.s32.totalorder %s20, %s21
    %p32 = scmp.eq.s32.totalorder %s12, 0
    %p33 = por %p31, %p32
    %p34 = scmp.ne.s32.totalorder %s20, %s21
    %p35 = scmp.eq.s32.totalorder %s13, 1
    %p36 = por %p34, %p35
    %p38 = scmp.ne.s32.totalorder %s21, %s37
    %p39 = scmp.eq.s32.totalorder %s13, 0
    %p40 = por %p38, %p39
    %s41 = ssub.s32 %s7, %s14
    %p42 = scmp.eq.s32.totalorder %s41, 0
    %s44 = sadd.s32 %s43, 1
    %s45 = scalar_select %p42, %s43, %s44
    %p48 = pneg %p42
    %p49 = scmp.eq.s32.totalorder %s7, 1
    %p50 = por %p48, %p49
    %p51 = scmp.ne.s32.totalorder %s43, %s46
    %p52 = scmp.eq.s32.totalorder %s7, 0
    %p53 = por %p51, %p52
    %p54 = scmp.ne.s32.totalorder %s43, %s46
    %p55 = scmp.eq.s32.totalorder %s12, 1
    %p56 = por %p54, %p55
    %p57 = scmp.ne.s32.totalorder %s46, %s47
    %p58 = scmp.eq.s32.totalorder %s12, 0
    %p59 = por %p57, %p58
    %p60 = scmp.ne.s32.totalorder %s46, %s47
    %p61 = scmp.eq.s32.totalorder %s13, 1
    %p62 = por %p60, %p61
    %p64 = scmp.ne.s32.totalorder %s47, %s63
    %p65 = scmp.eq.s32.totalorder %s13, 0
    %p66 = por %p64, %p65
    %p67 = scmp.le.s32.totalorder 1, %s7
    %p68 = scmp.lt.s32.totalorder %s7, 3
    %p69 = pnand %p67, %p68
    %p70 = pneg %p69
    // Predicated region
    $region9: #{stn_tpn_forward.15} parent=5 // pred_check
      _
    $region10: #{stn_tpn_forward.15} parent=5 // pred_check_branch
      %72 = sbr.rel (%p69) target = $region12
    $region11: #{stn_tpn_forward.15} parent=5 // pred_region
      %s73 = ssub.s32 %s7, 1
    $region12: #{stn_tpn_forward.15} parent=5 // pred_fallthru
      _
    %p74 = scmp.lt.s32.totalorder %s7, 2
    // Predicated region
    $region13: #{stn_tpn_forward.15} parent=5 // pred_check
      %p75 = pneg %p74
    $region14: #{stn_tpn_forward.15} parent=5 // pred_check_branch
      %77 = sbr.rel (%p75) target = $region16
    $region15: #{stn_tpn_forward.15} parent=5 // pred_region
      // Predicated region
      $region17: #{stn_tpn_forward.15} parent=15 // pred_check
        %p78 = pneg %p27
      $region18: #{stn_tpn_forward.15} parent=15 // pred_check_branch
        %80 = sbr.rel (%p78) target = $region20
      $region19: #{stn_tpn_forward.15} parent=15 // pred_region
        %p81 = scmp.lt.s32.totalorder %s7, 1
        %s82 = scalar_select %p81, %s7, 1
        %s83 = smul.addr %s82, 8
        %s84 = smul.addr %s83, 2
        %s85 = scalar_lea.vmem %s0, %s84
      $region20: #{stn_tpn_forward.15} parent=15 // pred_fallthru
        _
    $region16: #{stn_tpn_forward.15} parent=5 // pred_fallthru
      _
    %p86 = scmp.le.s32.totalorder 1, %s7
    %p87 = scmp.lt.s32.totalorder %s7, 3
    %p88 = pnand %p86, %p87
    %p89 = pneg %p88
    // Predicated region
    $region21: #{stn_tpn_forward.15} parent=5 // pred_check
      _
    $region22: #{stn_tpn_forward.15} parent=5 // pred_check_branch
      %91 = sbr.rel (%p88) target = $region24
    $region23: #{stn_tpn_forward.15} parent=5 // pred_region
      %s92 = ssub.s32 %s7, 1
      %p93 = scmp.lt.s32.totalorder %s12, 1
      %s94 = scalar_select %p93, %s12, 1
      %s95 = smul.addr %s94, 8
      %s96 = smul.addr %s95, 2
      %s97 = scalar_lea.vmem %s0, %s96
      %p98 = pneg %p33
      %p99 = pneg %p30
      %p100 = pneg %p59
      %p101 = pneg %p56
      %p102 = scmp.lt.s32.totalorder %s12, 1
      %s103 = scalar_select %p102, %s12, 1
      %s104 = smul.addr %s103, 2
      %s105 = smul.addr %s104, 2
      %s106 = scalar_lea.vmem %s1, %s105
      %p107 = scmp.lt.s32.totalorder %s12, 1
      %s108 = scalar_select %p107, %s12, 1
      %s109 = smul.addr %s108, 8
      %s110 = smul.addr %s109, 2
      %s111 = scalar_lea.vmem %s0, %s110
      %p112 = scmp.lt.s32.totalorder %s12, 1
      %s113 = scalar_select %p112, %s12, 1
      %s114 = smul.addr %s113, 2
      %s115 = smul.addr %s114, 2
      %s116 = scalar_lea.vmem %s1, %s115
      %v117 = vld [vmem:[%s111] sm:$0xf]
      %v118 = vld [vmem:[%s111 + $0x4] sm:$0xf]
      %v119 = vld [vmem:[%s111 + $0x8] sm:$0xf]
      %v120 = vld [vmem:[%s111 + $0xc] sm:$0xf]
      %v121 = vmax.f32 %v117, %v118
      %v122 = vmax.f32 %v119, %v120
      %v125 = vrot.slane %v121, 2
      %v126 = vrot.slane %v122, 2
      %v129 = vmax.f32 %v121, %v125
      %v130 = vmax.f32 %v122, %v126
      %v131 = vmax.f32 %v129, 0.0
      %v132 = vmax.f32 %v130, 0.0
      %133 = vst [vmem:[%s116] sm:$0x3] %v131
      %134 = vst [vmem:[%s116 + $0x2] sm:$0x3] %v132
      %p135 = scmp.lt.s32.totalorder %s12, 1
      %s136 = scalar_select %p135, %s12, 1
      %s137 = smul.addr %s136, 2
      %s138 = smul.addr %s137, 2
      %s139 = scalar_lea.vmem %s1, %s138
      // Predicated region
      $region25: #{stn_tpn_forward.15} parent=23 // pred_check
        %p140 = pneg %p56
      $region26: #{stn_tpn_forward.15} parent=23 // pred_check_branch
        %142 = sbr.rel (%p140) target = $region28
      $region27: #{stn_tpn_forward.15} parent=23 // pred_region
        _
      $region28: #{stn_tpn_forward.15} parent=23 // pred_fallthru
        _
    $region24: #{stn_tpn_forward.15} parent=5 // pred_fallthru
      _
    %p143 = scmp.le.s32.totalorder 2, %s7
    // Predicated region
    $region29: #{stn_tpn_forward.15} parent=5 // pred_check
      %p144 = pneg %p143
    $region30: #{stn_tpn_forward.15} parent=5 // pred_check_branch
      %146 = sbr.rel (%p144) target = $region32
    $region31: #{stn_tpn_forward.15} parent=5 // pred_region
      %s147 = ssub.s32 %s7, 2
      // Predicated region
      $region33: #{stn_tpn_forward.15} parent=31 // pred_check
        %p148 = pneg %p62
      $region34: #{stn_tpn_forward.15} parent=31 // pred_check_branch
        %150 = sbr.rel (%p148) target = $region36
      $region35: #{stn_tpn_forward.15} parent=31 // pred_region
        %p151 = scmp.lt.s32.totalorder %s13, 1
        %s152 = scalar_select %p151, %s13, 1
        %s153 = smul.addr %s152, 2
        %s154 = smul.addr %s153, 2
        %s155 = scalar_lea.vmem %s1, %s154
      $region36: #{stn_tpn_forward.15} parent=31 // pred_fallthru
        _
    $region32: #{stn_tpn_forward.15} parent=5 // pred_fallthru
      _
  $region6: #{stn_tpn_forward.15} parent=0 // loop_footer
    %s11 = sadd.s32 1, %s7
  $region7: #{stn_tpn_forward.15} parent=0 // loop_footer_branch
    %6 = sbr.rel target = $region3
  $region8: #{stn_tpn_forward.15} parent=0 // loop_exit
    _

// kernel: stn_tpn_forward.14
$region0: #{stn_tpn_forward.14}
  #allocation0 [shape = 'u32[]', space=smem, size = 0x4, offset = 0x4, fixed_abs, tag = 'smem constant byte address 0x4 - core index']
  #allocation1 [shape = 'u32[144,128]{1,0:T(1,128)}', space=vmem, size = 0x12000, scoped, tag = 'internal scratch']
  %s0 = inlined_call_operand.vmem [shape: bf16[32,576], index: 0, kind: input, shape index: {}]
  %s1 = inlined_call_operand.vmem [shape: bf16[576,128], index: 1, kind: input, shape index: {}]
  %s2 = inlined_call_operand.vmem [shape: f32[1,128], index: 2, kind: input, shape index: {}]
  %s3 = inlined_call_operand.vmem [shape: f32[32,128], index: 3, kind: output, shape index: {}]
  %s4 = sld [smem:[#allocation0]]
  $region22: #{stn_tpn_forward.14} parent=0
    _
  %s6 = ssub.s32 1, %s4
  %s7 = scalar_select 0, %s6, %s4
  // Predicated region
  $region2: #{stn_tpn_forward.14} parent=0 // pred_check
    _
  $region3: #{stn_tpn_forward.14} parent=0 // pred_check_branch
    %9 = sbr.rel (0) target = $region5
  $region4: #{stn_tpn_forward.14} parent=0 // pred_region
    _
  $region5: #{stn_tpn_forward.14} parent=0 // pred_fallthru
    _
  // Predicated region
  $region6: #{stn_tpn_forward.14} parent=0 // pred_check
    _
  $region7: #{stn_tpn_forward.14} parent=0 // pred_check_branch
    %11 = sbr.rel (0) target = $region9
  $region8: #{stn_tpn_forward.14} parent=0 // pred_region
    _
  $region9: #{stn_tpn_forward.14} parent=0 // pred_fallthru
    _
  // Predicated region
  $region10: #{stn_tpn_forward.14} parent=0 // pred_check
    _
  $region11: #{stn_tpn_forward.14} parent=0 // pred_check_branch
    %13 = sbr.rel (0) target = $region13
  $region12: #{stn_tpn_forward.14} parent=0 // pred_region
    _
  $region13: #{stn_tpn_forward.14} parent=0 // pred_fallthru
    _
  %v15 = vld [vmem:[%s0] sm:$0xff]
  %v16 = vld [vmem:[%s0 + $0x8] sm:$0xff]
  %v17 = vld [vmem:[%s0 + $0x10] sm:$0xf]
  %v18 = vld [vmem:[%s0 + $0x14] sm:$0xff]
  %v19 = vld [vmem:[%s0 + $0x1c] sm:$0xff]
  %v20 = vld [vmem:[%s0 + $0x24] sm:$0xf]
  %v21 = vld [vmem:[%s0 + $0x28] sm:$0xff]
  %v22 = vld [vmem:[%s0 + $0x30] sm:$0xff]
  %v23 = vld [vmem:[%s0 + $0x38] sm:$0xf]
  %v24 = vld [vmem:[%s0 + $0x3c] sm:$0xff]
  %v25 = vld [vmem:[%s0 + $0x44] sm:$0xff]
  %v26 = vld [vmem:[%s0 + $0x4c] sm:$0xf]
  %v27 = vld [vmem:[%s1] sm:$0xf]
  %v28 = vld [vmem:[%s1 + $0x4] sm:$0xf]
  %v29 = vld [vmem:[%s1 + $0x8] sm:$0xf]
  %v30 = vld [vmem:[%s1 + $0xc] sm:$0xf]
  %v31 = vld [vmem:[%s1 + $0x10] sm:$0xf]
  %v32 = vld [vmem:[%s1 + $0x14] sm:$0xf]
  %v33 = vld [vmem:[%s1 + $0x18] sm:$0xf]
  %v34 = vld [vmem:[%s1 + $0x1c] sm:$0xf]
  %v35 = vld [vmem:[%s1 + $0x20] sm:$0xf]
  %v36 = vld [vmem:[%s1 + $0x24] sm:$0xf]
  %v37 = vld [vmem:[%s1 + $0x28] sm:$0xf]
  %v38 = vld [vmem:[%s1 + $0x2c] sm:$0xf]
  %v39 = vld [vmem:[%s1 + $0x30] sm:$0xf]
  %v40 = vld [vmem:[%s1 + $0x34] sm:$0xf]
  %v41 = vld [vmem:[%s1 + $0x38] sm:$0xf]
  %v42 = vld [vmem:[%s1 + $0x3c] sm:$0xf]
  %v43 = vld [vmem:[%s1 + $0x40] sm:$0xf]
  %v44 = vld [vmem:[%s1 + $0x44] sm:$0xf]
  %v45 = vld [vmem:[%s1 + $0x48] sm:$0xf]
  %v46 = vld [vmem:[%s1 + $0x4c] sm:$0xf]
  %v47 = vld [vmem:[%s1 + $0x50] sm:$0xf]
  %v48 = vld [vmem:[%s1 + $0x54] sm:$0xf]
  %v49 = vld [vmem:[%s1 + $0x58] sm:$0xf]
  %v50 = vld [vmem:[%s1 + $0x5c] sm:$0xf]
  %v51 = vld [vmem:[%s1 + $0x60] sm:$0xf]
  %v52 = vld [vmem:[%s1 + $0x64] sm:$0xf]
  %v53 = vld [vmem:[%s1 + $0x68] sm:$0xf]
  %v54 = vld [vmem:[%s1 + $0x6c] sm:$0xf]
  %v55 = vld [vmem:[%s1 + $0x70] sm:$0xf]
  %v56 = vld [vmem:[%s1 + $0x74] sm:$0xf]
  %v57 = vld [vmem:[%s1 + $0x78] sm:$0xf]
  %v58 = vld [vmem:[%s1 + $0x7c] sm:$0xf]
  %v59 = vld [vmem:[%s1 + $0x80] sm:$0xf]
  %v60 = vld [vmem:[%s1 + $0x84] sm:$0xf]
  %v61 = vld [vmem:[%s1 + $0x88] sm:$0xf]
  %v62 = vld [vmem:[%s1 + $0x8c] sm:$0xf]
  %v63 = vld [vmem:[%s1 + $0x90] sm:$0xf]
  %v64 = vld [vmem:[%s1 + $0x94] sm:$0xf]
  %v65 = vld [vmem:[%s1 + $0x98] sm:$0xf]
  %v66 = vld [vmem:[%s1 + $0x9c] sm:$0xf]
  %v67 = vld [vmem:[%s1 + $0xa0] sm:$0xf]
  %v68 = vld [vmem:[%s1 + $0xa4] sm:$0xf]
  %v69 = vld [vmem:[%s1 + $0xa8] sm:$0xf]
  %v70 = vld [vmem:[%s1 + $0xac] sm:$0xf]
  %v71 = vld [vmem:[%s1 + $0xb0] sm:$0xf]
  %v72 = vld [vmem:[%s1 + $0xb4] sm:$0xf]
  %v73 = vld [vmem:[%s1 + $0xb8] sm:$0xf]
  %v74 = vld [vmem:[%s1 + $0xbc] sm:$0xf]
  %v75 = vld [vmem:[%s1 + $0xc0] sm:$0xf]
  %v76 = vld [vmem:[%s1 + $0xc4] sm:$0xf]
  %v77 = vld [vmem:[%s1 + $0xc8] sm:$0xf]
  %v78 = vld [vmem:[%s1 + $0xcc] sm:$0xf]
  %v79 = vld [vmem:[%s1 + $0xd0] sm:$0xf]
  %v80 = vld [vmem:[%s1 + $0xd4] sm:$0xf]
  %v81 = vld [vmem:[%s1 + $0xd8] sm:$0xf]
  %v82 = vld [vmem:[%s1 + $0xdc] sm:$0xf]
  %v83 = vld [vmem:[%s1 + $0xe0] sm:$0xf]
  %v84 = vld [vmem:[%s1 + $0xe4] sm:$0xf]
  %v85 = vld [vmem:[%s1 + $0xe8] sm:$0xf]
  %v86 = vld [vmem:[%s1 + $0xec] sm:$0xf]
  %v87 = vld [vmem:[%s1 + $0xf0] sm:$0xf]
  %v88 = vld [vmem:[%s1 + $0xf4] sm:$0xf]
  %v89 = vld [vmem:[%s1 + $0xf8] sm:$0xf]
  %v90 = vld [vmem:[%s1 + $0xfc] sm:$0xf]
  %v91 = vld [vmem:[%s1 + $0x100] sm:$0xf]
  %v92 = vld [vmem:[%s1 + $0x104] sm:$0xf]
  %v93 = vld [vmem:[%s1 + $0x108] sm:$0xf]
  %v94 = vld [vmem:[%s1 + $0x10c] sm:$0xf]
  %v95 = vld [vmem:[%s1 + $0x110] sm:$0xf]
  %v96 = vld [vmem:[%s1 + $0x114] sm:$0xf]
  %v97 = vld [vmem:[%s1 + $0x118] sm:$0xf]
  %v98 = vld [vmem:[%s1 + $0x11c] sm:$0xf]
  %v99 = vld [vmem:[%s2] sm:$0x1]
  %v101 = vlaneseq
  %v102 = vshrl.u32 %v101, 7
  %v103 = vsub.s32 0, %v102
  %v104 = vrot.slane %v99, %v103
  %v118 = vunpack.c.l.b16 %v15
  %v119 = vunpack.c.h.b16 %v15
  %v120 = vunpack.c.l.b16 %v16
  %v121 = vunpack.c.h.b16 %v16
  %v122 = vunpack.c.l.b16 %v17
  %v123 = vunpack.c.l.b16 %v18
  %v124 = vunpack.c.h.b16 %v18
  %v125 = vunpack.c.l.b16 %v19
  %v126 = vunpack.c.h.b16 %v19
  %v127 = vunpack.c.l.b16 %v20
  %v128 = vunpack.c.l.b16 %v21
  %v129 = vunpack.c.h.b16 %v21
  %v130 = vunpack.c.l.b16 %v22
  %v131 = vunpack.c.h.b16 %v22
  %v132 = vunpack.c.l.b16 %v23
  %v133 = vunpack.c.l.b16 %v24
  %v134 = vunpack.c.h.b16 %v24
  %v135 = vunpack.c.l.b16 %v25
  %v136 = vunpack.c.h.b16 %v25
  %v137 = vunpack.c.l.b16 %v26
  %v138 = vpack.c.b16 %v123, %v118
  %v139 = vpack.c.b16 %v124, %v119
  %v140 = vpack.c.b16 %v125, %v120
  %v141 = vpack.c.b16 %v126, %v121
  %v142 = vpack.c.b16 %v127, %v122
  %v143 = vpack.c.b16 %v133, %v128
  %v144 = vpack.c.b16 %v134, %v129
  %v145 = vpack.c.b16 %v135, %v130
  %v146 = vpack.c.b16 %v136, %v131
  %v147 = vpack.c.b16 %v137, %v132
  %v228 = vunpack.c.l.b16 %v27
  %v229 = vunpack.c.l.b16 %v28
  %v230 = vunpack.c.l.b16 %v29
  %v231 = vunpack.c.l.b16 %v30
  %v232 = vunpack.c.l.b16 %v31
  %v233 = vunpack.c.l.b16 %v32
  %v234 = vunpack.c.l.b16 %v33
  %v235 = vunpack.c.l.b16 %v34
  %v236 = vunpack.c.l.b16 %v35
  %v237 = vunpack.c.l.b16 %v36
  %v238 = vunpack.c.l.b16 %v37
  %v239 = vunpack.c.l.b16 %v38
  %v240 = vunpack.c.l.b16 %v39
  %v241 = vunpack.c.l.b16 %v40
  %v242 = vunpack.c.l.b16 %v41
  %v243 = vunpack.c.l.b16 %v42
  %v244 = vunpack.c.l.b16 %v43
  %v245 = vunpack.c.l.b16 %v44
  %v246 = vunpack.c.l.b16 %v45
  %v247 = vunpack.c.l.b16 %v46
  %v248 = vunpack.c.l.b16 %v47
  %v249 = vunpack.c.l.b16 %v48
  %v250 = vunpack.c.l.b16 %v49
  %v251 = vunpack.c.l.b16 %v50
  %v252 = vunpack.c.l.b16 %v51
  %v253 = vunpack.c.l.b16 %v52
  %v254 = vunpack.c.l.b16 %v53
  %v255 = vunpack.c.l.b16 %v54
  %v256 = vunpack.c.l.b16 %v55
  %v257 = vunpack.c.l.b16 %v56
  %v258 = vunpack.c.l.b16 %v57
  %v259 = vunpack.c.l.b16 %v58
  %v260 = vunpack.c.l.b16 %v59
  %v261 = vunpack.c.l.b16 %v60
  %v262 = vunpack.c.l.b16 %v61
  %v263 = vunpack.c.l.b16 %v62
  %v264 = vunpack.c.l.b16 %v63
  %v265 = vunpack.c.l.b16 %v64
  %v266 = vunpack.c.l.b16 %v65
  %v267 = vunpack.c.l.b16 %v66
  %v268 = vunpack.c.l.b16 %v67
  %v269 = vunpack.c.l.b16 %v68
  %v270 = vunpack.c.l.b16 %v69
  %v271 = vunpack.c.l.b16 %v70
  %v272 = vunpack.c.l.b16 %v71
  %v273 = vunpack.c.l.b16 %v72
  %v274 = vunpack.c.l.b16 %v73
  %v275 = vunpack.c.l.b16 %v74
  %v276 = vunpack.c.l.b16 %v75
  %v277 = vunpack.c.l.b16 %v76
  %v278 = vunpack.c.l.b16 %v77
  %v279 = vunpack.c.l.b16 %v78
  %v280 = vunpack.c.l.b16 %v79
  %v281 = vunpack.c.l.b16 %v80
  %v282 = vunpack.c.l.b16 %v81
  %v283 = vunpack.c.l.b16 %v82
  %v284 = vunpack.c.l.b16 %v83
  %v285 = vunpack.c.l.b16 %v84
  %v286 = vunpack.c.l.b16 %v85
  %v287 = vunpack.c.l.b16 %v86
  %v288 = vunpack.c.l.b16 %v87
  %v289 = vunpack.c.l.b16 %v88
  %v290 = vunpack.c.l.b16 %v89
  %v291 = vunpack.c.l.b16 %v90
  %v292 = vunpack.c.l.b16 %v91
  %v293 = vunpack.c.l.b16 %v92
  %v294 = vunpack.c.l.b16 %v93
  %v295 = vunpack.c.l.b16 %v94
  %v296 = vunpack.c.l.b16 %v95
  %v297 = vunpack.c.l.b16 %v96
  %v298 = vunpack.c.l.b16 %v97
  %v299 = vunpack.c.l.b16 %v98
  %v300 = vpack.c.b16 %v229, %v228
  %v301 = vpack.c.b16 %v231, %v230
  %v302 = vpack.c.b16 %v233, %v232
  %v303 = vpack.c.b16 %v235, %v234
  %v304 = vpack.c.b16 %v237, %v236
  %v305 = vpack.c.b16 %v239, %v238
  %v306 = vpack.c.b16 %v241, %v240
  %v307 = vpack.c.b16 %v243, %v242
  %v308 = vpack.c.b16 %v245, %v244
  %v309 = vpack.c.b16 %v247, %v246
  %v310 = vpack.c.b16 %v249, %v248
  %v311 = vpack.c.b16 %v251, %v250
  %v312 = vpack.c.b16 %v253, %v252
  %v313 = vpack.c.b16 %v255, %v254
  %v314 = vpack.c.b16 %v257, %v256
  %v315 = vpack.c.b16 %v259, %v258
  %v316 = vpack.c.b16 %v261, %v260
  %v317 = vpack.c.b16 %v263, %v262
  %v318 = vpack.c.b16 %v265, %v264
  %v319 = vpack.c.b16 %v267, %v266
  %v320 = vpack.c.b16 %v269, %v268
  %v321 = vpack.c.b16 %v271, %v270
  %v322 = vpack.c.b16 %v273, %v272
  %v323 = vpack.c.b16 %v275, %v274
  %v324 = vpack.c.b16 %v277, %v276
  %v325 = vpack.c.b16 %v279, %v278
  %v326 = vpack.c.b16 %v281, %v280
  %v327 = vpack.c.b16 %v283, %v282
  %v328 = vpack.c.b16 %v285, %v284
  %v329 = vpack.c.b16 %v287, %v286
  %v330 = vpack.c.b16 %v289, %v288
  %v331 = vpack.c.b16 %v291, %v290
  %v332 = vpack.c.b16 %v293, %v292
  %v333 = vpack.c.b16 %v295, %v294
  %v334 = vpack.c.b16 %v297, %v296
  %v335 = vpack.c.b16 %v299, %v298
  %vm372 = vcmask 523264
  %v374 = vsel %vm372, %v142, 0
  %v377 = vsel %vm372, %v147, 0
  %379 = vmatprep.subr.bf16.mxu0 0
  %380 = vmatpush1.bf16.msra.mxu0 %v300
  %381 = vmatprep.subr.bf16.mxu0 0
  %382 = vmatpush1.bf16.msra.mxu0 %v301
  %383 = vmatprep.subr.bf16.mxu0 0
  %384 = vmatpush1.bf16.msra.mxu0 %v302
  %385 = vmatprep.subr.bf16.mxu0 0
  %386 = vmatpush1.bf16.msra.mxu0 %v303
  %387 = vmatprep.subr.bf16.mxu0 0
  %388 = vmatpush1.bf16.msra.mxu0 %v304
  %389 = vmatprep.subr.bf16.mxu0 0
  %390 = vmatpush1.bf16.msra.mxu0 %v305
  %391 = vmatprep.subr.bf16.mxu0 0
  %392 = vmatpush1.bf16.msra.mxu0 %v306
  %393 = vmatprep.subr.bf16.mxu0 0
  %394 = vmatpush1.bf16.msra.mxu0 %v307
  %395 = vmatprep.subr.bf16.mxu0 0
  %396 = vmatpush1.bf16.msra.mxu0 %v308
  %397 = vmatprep.subr.bf16.mxu0 0
  %398 = vmatpush1.bf16.msra.mxu0 %v309
  %399 = vmatprep.subr.bf16.mxu0 0
  %400 = vmatpush1.bf16.msra.mxu0 %v310
  %401 = vmatprep.subr.bf16.mxu0 0
  %402 = vmatpush1.bf16.msra.mxu0 %v311
  %403 = vmatprep.subr.bf16.mxu0 0
  %404 = vmatpush1.bf16.msra.mxu0 %v312
  %405 = vmatprep.subr.bf16.mxu0 0
  %406 = vmatpush1.bf16.msra.mxu0 %v313
  %407 = vmatprep.subr.bf16.mxu0 0
  %408 = vmatpush1.bf16.msra.mxu0 %v314
  %409 = vmatprep.subr.bf16.mxu0 0
  %410 = vmatpush1.bf16.msra.mxu0 %v315
  %411 = vmatprep.mubr.bf16.mxu0 %v139
  %412 = vmatmul.mubr.bf16.gmra.mrb[0].mxu0 %v138
  %v413 = vpop.f32.mrb[0].mxu0
  %v414 = vadd.f32 %v104, %v413
  %v415 = vpop.f32.mrb[0].mxu0
  %v416 = vpop.f32.mrb[0].mxu0
  %v417 = vadd.f32 %v104, %v416
  %v418 = vpop.f32.mrb[0].mxu0
  %419 = vmatprep.mubr.bf16.mxu0 %v144
  %420 = vmatmul.mubr.bf16.gmra.mrb[0].mxu0 %v143
  %v421 = vpop.f32.mrb[0].mxu0
  %v422 = vadd.f32 %v104, %v421
  %v423 = vpop.f32.mrb[0].mxu0
  %v424 = vpop.f32.mrb[0].mxu0
  %v425 = vadd.f32 %v104, %v424
  %v426 = vpop.f32.mrb[0].mxu0
  %427 = vdwg.mxu0
  %428 = vmatprep.subr.bf16.mxu0 0
  %429 = vmatpush1.bf16.msra.mxu0 %v316
  %430 = vmatprep.subr.bf16.mxu0 0
  %431 = vmatpush1.bf16.msra.mxu0 %v317
  %432 = vmatprep.subr.bf16.mxu0 0
  %433 = vmatpush1.bf16.msra.mxu0 %v318
  %434 = vmatprep.subr.bf16.mxu0 0
  %435 = vmatpush1.bf16.msra.mxu0 %v319
  %436 = vmatprep.subr.bf16.mxu0 0
  %437 = vmatpush1.bf16.msra.mxu0 %v320
  %438 = vmatprep.subr.bf16.mxu0 0
  %439 = vmatpush1.bf16.msra.mxu0 %v321
  %440 = vmatprep.subr.bf16.mxu0 0
  %441 = vmatpush1.bf16.msra.mxu0 %v322
  %442 = vmatprep.subr.bf16.mxu0 0
  %443 = vmatpush1.bf16.msra.mxu0 %v323
  %444 = vmatprep.subr.bf16.mxu0 0
  %445 = vmatpush1.bf16.msra.mxu0 %v324
  %446 = vmatprep.subr.bf16.mxu0 0
  %447 = vmatpush1.bf16.msra.mxu0 %v325
  %448 = vmatprep.subr.bf16.mxu0 0
  %449 = vmatpush1.bf16.msra.mxu0 %v326
  %450 = vmatprep.subr.bf16.mxu0 0
  %451 = vmatpush1.bf16.msra.mxu0 %v327
  %452 = vmatprep.subr.bf16.mxu0 0
  %453 = vmatpush1.bf16.msra.mxu0 %v328
  %454 = vmatprep.subr.bf16.mxu0 0
  %455 = vmatpush1.bf16.msra.mxu0 %v329
  %456 = vmatprep.subr.bf16.mxu0 0
  %457 = vmatpush1.bf16.msra.mxu0 %v330
  %458 = vmatprep.subr.bf16.mxu0 0
  %459 = vmatpush1.bf16.msra.mxu0 %v331
  %460 = vmatprep.mubr.bf16.mxu0 %v141
  %461 = vmatmul.mubr.bf16.gmra.mrb[0].mxu0 %v140
  %v462 = vpop.f32.mrb[0].mxu0
  %v463 = vadd.f32 %v414, %v462
  %v464 = vpop.f32.mrb[0].mxu0
  %v465 = vpop.f32.mrb[0].mxu0
  %v466 = vadd.f32 %v417, %v465
  %v467 = vpop.f32.mrb[0].mxu0
  %468 = vmatprep.mubr.bf16.mxu0 %v146
  %469 = vmatmul.mubr.bf16.gmra.mrb[0].mxu0 %v145
  %v470 = vpop.f32.mrb[0].mxu0
  %v471 = vadd.f32 %v422, %v470
  %v472 = vpop.f32.mrb[0].mxu0
  %v473 = vpop.f32.mrb[0].mxu0
  %v474 = vadd.f32 %v425, %v473
  %v475 = vpop.f32.mrb[0].mxu0
  %476 = vdwg.mxu0
  %477 = vmatprep.subr.bf16.mxu0 0
  %478 = vmatpush1.bf16.msra.mxu0 %v332
  %479 = vmatprep.subr.bf16.mxu0 0
  %480 = vmatpush1.bf16.msra.mxu0 %v333
  %481 = vmatprep.subr.bf16.mxu0 0
  %482 = vmatpush1.bf16.msra.mxu0 %v334
  %483 = vmatprep.subr.bf16.mxu0 0
  %484 = vmatpush1.bf16.msra.mxu0 %v335
  %485 = vmatprep.subr.bf16.mxu0 0
  %486 = vmatpush1.bf16.msra.mxu0 0
  %487 = vmatprep.subr.bf16.mxu0 0
  %488 = vmatpush1.bf16.msra.mxu0 0
  %489 = vmatprep.subr.bf16.mxu0 0
  %490 = vmatpush1.bf16.msra.mxu0 0
  %491 = vmatprep.subr.bf16.mxu0 0
  %492 = vmatpush1.bf16.msra.mxu0 0
  %493 = vmatprep.subr.bf16.mxu0 0
  %494 = vmatpush1.bf16.msra.mxu0 0
  %495 = vmatprep.subr.bf16.mxu0 0
  %496 = vmatpush1.bf16.msra.mxu0 0
  %497 = vmatprep.subr.bf16.mxu0 0
  %498 = vmatpush1.bf16.msra.mxu0 0
  %499 = vmatprep.subr.bf16.mxu0 0
  %500 = vmatpush1.bf16.msra.mxu0 0
  %501 = vmatprep.subr.bf16.mxu0 0
  %502 = vmatpush1.bf16.msra.mxu0 0
  %503 = vmatprep.subr.bf16.mxu0 0
  %504 = vmatpush1.bf16.msra.mxu0 0
  %505 = vmatprep.subr.bf16.mxu0 0
  %506 = vmatpush1.bf16.msra.mxu0 0
  %507 = vmatprep.subr.bf16.mxu0 0
  %508 = vmatpush1.bf16.msra.mxu0 0
  %509 = vmatprep.mubr.bf16.mxu0 0
  %510 = vmatmul.mubr.bf16.gmra.mrb[0].mxu0 %v374
  %v511 = vpop.f32.mrb[0].mxu0
  %v512 = vadd.f32 %v463, %v511
  %v513 = vpop.f32.mrb[0].mxu0
  %v514 = vpop.f32.mrb[0].mxu0
  %v515 = vadd.f32 %v466, %v514
  %v516 = vpop.f32.mrb[0].mxu0
  %517 = vmatprep.mubr.bf16.mxu0 0
  %518 = vmatmul.mubr.bf16.gmra.mrb[0].mxu0 %v377
  %v519 = vpop.f32.mrb[0].mxu0
  %v520 = vadd.f32 %v471, %v519
  %v521 = vpop.f32.mrb[0].mxu0
  %v522 = vpop.f32.mrb[0].mxu0
  %v523 = vadd.f32 %v474, %v522
  %v524 = vpop.f32.mrb[0].mxu0
  %525 = vdwg.mxu0
  %526 = vst [vmem:[%s3] sm:$0xff] %v512
  %527 = vst [vmem:[%s3 + $0x8] sm:$0xff] %v515
  %528 = vst [vmem:[%s3 + $0x10] sm:$0xff] %v520
  %529 = vst [vmem:[%s3 + $0x18] sm:$0xff] %v523
  // Predicated region
  $region14: #{stn_tpn_forward.14} parent=0 // pred_check
    _
  $region15: #{stn_tpn_forward.14} parent=0 // pred_check_branch
    %531 = sbr.rel (0) target = $region17
  $region16: #{stn_tpn_forward.14} parent=0 // pred_region
    _
  $region17: #{stn_tpn_forward.14} parent=0 // pred_fallthru
    _
  // Predicated region
  $region18: #{stn_tpn_forward.14} parent=0 // pred_check
    _
  $region19: #{stn_tpn_forward.14} parent=0 // pred_check_branch
    %533 = sbr.rel (0) target = $region21
  $region20: #{stn_tpn_forward.14} parent=0 // pred_region
    _
  $region21: #{stn_tpn_forward.14} parent=0 // pred_fallthru
    _

// kernel: stn_tpn_forward.16
$region0: #{stn_tpn_forward.16}
  #allocation0 [shape = 'u32[]', space=smem, size = 0x4, offset = 0x4, fixed_abs, tag = 'smem constant byte address 0x4 - core index']
  #allocation1 [shape = 'u32[144,128]{1,0:T(1,128)}', space=vmem, size = 0x12000, scoped, tag = 'internal scratch']
  %s0 = inlined_call_operand.vmem [shape: bf16[2,512], index: 0, kind: input, shape index: {}]
  %s1 = inlined_call_operand.vmem [shape: bf16[512,512], index: 1, kind: input, shape index: {}]
  %s2 = inlined_call_operand.vmem [shape: f32[1,512], index: 2, kind: input, shape index: {}]
  %s3 = inlined_call_operand.vmem [shape: f32[2,512], index: 3, kind: output, shape index: {}]
  %s4 = sld [smem:[#allocation0]]
  $region22: #{stn_tpn_forward.16} parent=0
    _
  %s6 = ssub.s32 1, %s4
  %s7 = scalar_select 0, %s6, %s4
  // Predicated region
  $region2: #{stn_tpn_forward.16} parent=0 // pred_check
    _
  $region3: #{stn_tpn_forward.16} parent=0 // pred_check_branch
    %9 = sbr.rel (0) target = $region5
  $region4: #{stn_tpn_forward.16} parent=0 // pred_region
    _
  $region5: #{stn_tpn_forward.16} parent=0 // pred_fallthru
    _
  // Predicated region
  $region6: #{stn_tpn_forward.16} parent=0 // pred_check
    _
  $region7: #{stn_tpn_forward.16} parent=0 // pred_check_branch
    %11 = sbr.rel (0) target = $region9
  $region8: #{stn_tpn_forward.16} parent=0 // pred_region
    _
  $region9: #{stn_tpn_forward.16} parent=0 // pred_fallthru
    _
  // Predicated region
  $region10: #{stn_tpn_forward.16} parent=0 // pred_check
    _
  $region11: #{stn_tpn_forward.16} parent=0 // pred_check_branch
    %13 = sbr.rel (0) target = $region13
  $region12: #{stn_tpn_forward.16} parent=0 // pred_region
    _
  $region13: #{stn_tpn_forward.16} parent=0 // pred_fallthru
    _
  %v14 = vld [vmem:[%s0] sm:$0xf]
  %v15 = vld [vmem:[%s1] sm:$0xff]
  %v16 = vld [vmem:[%s1 + $0x8] sm:$0xff]
  %v17 = vld [vmem:[%s1 + $0x10] sm:$0xff]
  %v18 = vld [vmem:[%s1 + $0x18] sm:$0xff]
  %v19 = vld [vmem:[%s1 + $0x20] sm:$0xff]
  %v20 = vld [vmem:[%s1 + $0x28] sm:$0xff]
  %v21 = vld [vmem:[%s1 + $0x30] sm:$0xff]
  %v22 = vld [vmem:[%s1 + $0x38] sm:$0xff]
  %v23 = vld [vmem:[%s1 + $0x40] sm:$0xff]
  %v24 = vld [vmem:[%s1 + $0x48] sm:$0xff]
  %v25 = vld [vmem:[%s1 + $0x50] sm:$0xff]
  %v26 = vld [vmem:[%s1 + $0x58] sm:$0xff]
  %v27 = vld [vmem:[%s1 + $0x60] sm:$0xff]
  %v28 = vld [vmem:[%s1 + $0x68] sm:$0xff]
  %v29 = vld [vmem:[%s1 + $0x70] sm:$0xff]
  %v30 = vld [vmem:[%s1 + $0x78] sm:$0xff]
  %v31 = vld [vmem:[%s1 + $0x80] sm:$0xff]
  %v32 = vld [vmem:[%s1 + $0x88] sm:$0xff]
  %v33 = vld [vmem:[%s1 + $0x90] sm:$0xff]
  %v34 = vld [vmem:[%s1 + $0x98] sm:$0xff]
  %v35 = vld [vmem:[%s1 + $0xa0] sm:$0xff]
  %v36 = vld [vmem:[%s1 + $0xa8] sm:$0xff]
  %v37 = vld [vmem:[%s1 + $0xb0] sm:$0xff]
  %v38 = vld [vmem:[%s1 + $0xb8] sm:$0xff]
  %v39 = vld [vmem:[%s1 + $0xc0] sm:$0xff]
  %v40 = vld [vmem:[%s1 + $0xc8] sm:$0xff]
  %v41 = vld [vmem:[%s1 + $0xd0] sm:$0xff]
  %v42 = vld [vmem:[%s1 + $0xd8] sm:$0xff]
  %v43 = vld [vmem:[%s1 + $0xe0] sm:$0xff]
  %v44 = vld [vmem:[%s1 + $0xe8] sm:$0xff]
  %v45 = vld [vmem:[%s1 + $0xf0] sm:$0xff]
  %v46 = vld [vmem:[%s1 + $0xf8] sm:$0xff]
  %v47 = vld [vmem:[%s1 + $0x100] sm:$0xff]
  %v48 = vld [vmem:[%s1 + $0x108] sm:$0xff]
  %v49 = vld [vmem:[%s1 + $0x110] sm:$0xff]
  %v50 = vld [vmem:[%s1 + $0x118] sm:$0xff]
  %v51 = vld [vmem:[%s1 + $0x120] sm:$0xff]
  %v52 = vld [vmem:[%s1 + $0x128] sm:$0xff]
  %v53 = vld [vmem:[%s1 + $0x130] sm:$0xff]
  %v54 = vld [vmem:[%s1 + $0x138] sm:$0xff]
  %v55 = vld [vmem:[%s1 + $0x140] sm:$0xff]
  %v56 = vld [vmem:[%s1 + $0x148] sm:$0xff]
  %v57 = vld [vmem:[%s1 + $0x150] sm:$0xff]
  %v58 = vld [vmem:[%s1 + $0x158] sm:$0xff]
  %v59 = vld [vmem:[%s1 + $0x160] sm:$0xff]
  %v60 = vld [vmem:[%s1 + $0x168] sm:$0xff]
  %v61 = vld [vmem:[%s1 + $0x170] sm:$0xff]
  %v62 = vld [vmem:[%s1 + $0x178] sm:$0xff]
  %v63 = vld [vmem:[%s1 + $0x180] sm:$0xff]
  %v64 = vld [vmem:[%s1 + $0x188] sm:$0xff]
  %v65 = vld [vmem:[%s1 + $0x190] sm:$0xff]
  %v66 = vld [vmem:[%s1 + $0x198] sm:$0xff]
  %v67 = vld [vmem:[%s1 + $0x1a0] sm:$0xff]
  %v68 = vld [vmem:[%s1 + $0x1a8] sm:$0xff]
  %v69 = vld [vmem:[%s1 + $0x1b0] sm:$0xff]
  %v70 = vld [vmem:[%s1 + $0x1b8] sm:$0xff]
  %v71 = vld [vmem:[%s1 + $0x1c0] sm:$0xff]
  %v72 = vld [vmem:[%s1 + $0x1c8] sm:$0xff]
  %v73 = vld [vmem:[%s1 + $0x1d0] sm:$0xff]
  %v74 = vld [vmem:[%s1 + $0x1d8] sm:$0xff]
  %v75 = vld [vmem:[%s1 + $0x1e0] sm:$0xff]
  %v76 = vld [vmem:[%s1 + $0x1e8] sm:$0xff]
  %v77 = vld [vmem:[%s1 + $0x1f0] sm:$0xff]
  %v78 = vld [vmem:[%s1 + $0x1f8] sm:$0xff]
  %v79 = vld [vmem:[%s1 + $0x200] sm:$0xff]
  %v80 = vld [vmem:[%s1 + $0x208] sm:$0xff]
  %v81 = vld [vmem:[%s1 + $0x210] sm:$0xff]
  %v82 = vld [vmem:[%s1 + $0x218] sm:$0xff]
  %v83 = vld [vmem:[%s1 + $0x220] sm:$0xff]
  %v84 = vld [vmem:[%s1 + $0x228] sm:$0xff]
  %v85 = vld [vmem:[%s1 + $0x230] sm:$0xff]
  %v86 = vld [vmem:[%s1 + $0x238] sm:$0xff]
  %v87 = vld [vmem:[%s1 + $0x240] sm:$0xff]
  %v88 = vld [vmem:[%s1 + $0x248] sm:$0xff]
  %v89 = vld [vmem:[%s1 + $0x250] sm:$0xff]
  %v90 = vld [vmem:[%s1 + $0x258] sm:$0xff]
  %v91 = vld [vmem:[%s1 + $0x260] sm:$0xff]
  %v92 = vld [vmem:[%s1 + $0x268] sm:$0xff]
  %v93 = vld [vmem:[%s1 + $0x270] sm:$0xff]
  %v94 = vld [vmem:[%s1 + $0x278] sm:$0xff]
  %v95 = vld [vmem:[%s1 + $0x280] sm:$0xff]
  %v96 = vld [vmem:[%s1 + $0x288] sm:$0xff]
  %v97 = vld [vmem:[%s1 + $0x290] sm:$0xff]
  %v98 = vld [vmem:[%s1 + $0x298] sm:$0xff]
  %v99 = vld [vmem:[%s1 + $0x2a0] sm:$0xff]
  %v100 = vld [vmem:[%s1 + $0x2a8] sm:$0xff]
  %v101 = vld [vmem:[%s1 + $0x2b0] sm:$0xff]
  %v102 = vld [vmem:[%s1 + $0x2b8] sm:$0xff]
  %v103 = vld [vmem:[%s1 + $0x2c0] sm:$0xff]
  %v104 = vld [vmem:[%s1 + $0x2c8] sm:$0xff]
  %v105 = vld [vmem:[%s1 + $0x2d0] sm:$0xff]
  %v106 = vld [vmem:[%s1 + $0x2d8] sm:$0xff]
  %v107 = vld [vmem:[%s1 + $0x2e0] sm:$0xff]
  %v108 = vld [vmem:[%s1 + $0x2e8] sm:$0xff]
  %v109 = vld [vmem:[%s1 + $0x2f0] sm:$0xff]
  %v110 = vld [vmem:[%s1 + $0x2f8] sm:$0xff]
  %v111 = vld [vmem:[%s1 + $0x300] sm:$0xff]
  %v112 = vld [vmem:[%s1 + $0x308] sm:$0xff]
  %v113 = vld [vmem:[%s1 + $0x310] sm:$0xff]
  %v114 = vld [vmem:[%s1 + $0x318] sm:$0xff]
  %v115 = vld [vmem:[%s1 + $0x320] sm:$0xff]
  %v116 = vld [vmem:[%s1 + $0x328] sm:$0xff]
  %v117 = vld [vmem:[%s1 + $0x330] sm:$0xff]
  %v118 = vld [vmem:[%s1 + $0x338] sm:$0xff]
  %v119 = vld [vmem:[%s1 + $0x340] sm:$0xff]
  %v120 = vld [vmem:[%s1 + $0x348] sm:$0xff]
  %v121 = vld [vmem:[%s1 + $0x350] sm:$0xff]
  %v122 = vld [vmem:[%s1 + $0x358] sm:$0xff]
  %v123 = vld [vmem:[%s1 + $0x360] sm:$0xff]
  %v124 = vld [vmem:[%s1 + $0x368] sm:$0xff]
  %v125 = vld [vmem:[%s1 + $0x370] sm:$0xff]
  %v126 = vld [vmem:[%s1 + $0x378] sm:$0xff]
  %v127 = vld [vmem:[%s1 + $0x380] sm:$0xff]
  %v128 = vld [vmem:[%s1 + $0x388] sm:$0xff]
  %v129 = vld [vmem:[%s1 + $0x390] sm:$0xff]
  %v130 = vld [vmem:[%s1 + $0x398] sm:$0xff]
  %v131 = vld [vmem:[%s1 + $0x3a0] sm:$0xff]
  %v132 = vld [vmem:[%s1 + $0x3a8] sm:$0xff]
  %v133 = vld [vmem:[%s1 + $0x3b0] sm:$0xff]
  %v134 = vld [vmem:[%s1 + $0x3b8] sm:$0xff]
  %v135 = vld [vmem:[%s1 + $0x3c0] sm:$0xff]
  %v136 = vld [vmem:[%s1 + $0x3c8] sm:$0xff]
  %v137 = vld [vmem:[%s1 + $0x3d0] sm:$0xff]
  %v138 = vld [vmem:[%s1 + $0x3d8] sm:$0xff]
  %v139 = vld [vmem:[%s1 + $0x3e0] sm:$0xff]
  %v140 = vld [vmem:[%s1 + $0x3e8] sm:$0xff]
  %v141 = vld [vmem:[%s1 + $0x3f0] sm:$0xff]
  %v142 = vld [vmem:[%s1 + $0x3f8] sm:$0xff]
  %v143 = vld [vmem:[%s2] sm:$0xf]
  %v145 = vlaneseq
  %v146 = vshrl.u32 %v145, 7
  %v147 = vsub.s32 0, %v146
  %v148 = vrot.slane %v143, %v147
  %v149 = vlaneseq
  %v150 = vshrl.u32 %v149, 7
  %v151 = vsub.s32 1, %v150
  %v152 = vrot.slane %v143, %v151
  %v153 = vlaneseq
  %v154 = vshrl.u32 %v153, 7
  %v155 = vsub.s32 2, %v154
  %v156 = vrot.slane %v143, %v155
  %v157 = vlaneseq
  %v158 = vshrl.u32 %v157, 7
  %v159 = vsub.s32 3, %v158
  %v160 = vrot.slane %v143, %v159
  %v167 = vunpack.c.l.s4 1966171168
  %v168 = vunpack.c.0.s8 %v167
  %v169 = vlaneseq
  %v170 = vshrl.u32 %v169, 7
  %v171 = vsub.s32 %v168, %v170
  %v172 = vrot.slane %v14, %v171
  %v173 = vcombine.high %v172, %v172
  %v175 = vunpack.c.l.s4 1966171168
  %v176 = vunpack.c.0.s8 %v175
  %v177 = vlaneseq
  %v178 = vshrl.u32 %v177, 7
  %v179 = vsub.s32 %v176, %v178
  %v180 = vrot.slane %v172, %v179
  %v182 = vunpack.c.l.s4 1966171168
  %v183 = vunpack.c.0.s8 %v182
  %v184 = vlaneseq
  %v185 = vshrl.u32 %v184, 7
  %v186 = vsub.s32 %v183, %v185
  %v187 = vrot.slane %v173, %v186
  %v188 = vcombine.high %v180, %v180
  %v189 = vcombine.high %v187, %v187
  %v322 = vunpack.c.l.b16 %v15
  %v323 = vunpack.c.h.b16 %v15
  %v324 = vunpack.c.l.b16 %v16
  %v325 = vunpack.c.h.b16 %v16
  %v326 = vunpack.c.l.b16 %v17
  %v327 = vunpack.c.h.b16 %v17
  %v328 = vunpack.c.l.b16 %v18
  %v329 = vunpack.c.h.b16 %v18
  %v330 = vunpack.c.l.b16 %v19
  %v331 = vunpack.c.h.b16 %v19
  %v332 = vunpack.c.l.b16 %v20
  %v333 = vunpack.c.h.b16 %v20
  %v334 = vunpack.c.l.b16 %v21
  %v335 = vunpack.c.h.b16 %v21
  %v336 = vunpack.c.l.b16 %v22
  %v337 = vunpack.c.h.b16 %v22
  %v338 = vunpack.c.l.b16 %v23
  %v339 = vunpack.c.h.b16 %v23
  %v340 = vunpack.c.l.b16 %v24
  %v341 = vunpack.c.h.b16 %v24
  %v342 = vunpack.c.l.b16 %v25
  %v343 = vunpack.c.h.b16 %v25
  %v344 = vunpack.c.l.b16 %v26
  %v345 = vunpack.c.h.b16 %v26
  %v346 = vunpack.c.l.b16 %v27
  %v347 = vunpack.c.h.b16 %v27
  %v348 = vunpack.c.l.b16 %v28
  %v349 = vunpack.c.h.b16 %v28
  %v350 = vunpack.c.l.b16 %v29
  %v351 = vunpack.c.h.b16 %v29
  %v352 = vunpack.c.l.b16 %v30
  %v353 = vunpack.c.h.b16 %v30
  %v354 = vunpack.c.l.b16 %v31
  %v355 = vunpack.c.h.b16 %v31
  %v356 = vunpack.c.l.b16 %v32
  %v357 = vunpack.c.h.b16 %v32
  %v358 = vunpack.c.l.b16 %v33
  %v359 = vunpack.c.h.b16 %v33
  %v360 = vunpack.c.l.b16 %v34
  %v361 = vunpack.c.h.b16 %v34
  %v362 = vunpack.c.l.b16 %v35
  %v363 = vunpack.c.h.b16 %v35
  %v364 = vunpack.c.l.b16 %v36
  %v365 = vunpack.c.h.b16 %v36
  %v366 = vunpack.c.l.b16 %v37
  %v367 = vunpack.c.h.b16 %v37
  %v368 = vunpack.c.l.b16 %v38
  %v369 = vunpack.c.h.b16 %v38
  %v370 = vunpack.c.l.b16 %v39
  %v371 = vunpack.c.h.b16 %v39
  %v372 = vunpack.c.l.b16 %v40
  %v373 = vunpack.c.h.b16 %v40
  %v374 = vunpack.c.l.b16 %v41
  %v375 = vunpack.c.h.b16 %v41
  %v376 = vunpack.c.l.b16 %v42
  %v377 = vunpack.c.h.b16 %v42
  %v378 = vunpack.c.l.b16 %v43
  %v379 = vunpack.c.h.b16 %v43
  %v380 = vunpack.c.l.b16 %v44
  %v381 = vunpack.c.h.b16 %v44
  %v382 = vunpack.c.l.b16 %v45
  %v383 = vunpack.c.h.b16 %v45
  %v384 = vunpack.c.l.b16 %v46
  %v385 = vunpack.c.h.b16 %v46
  %v386 = vunpack.c.l.b16 %v47
  %v387 = vunpack.c.h.b16 %v47
  %v388 = vunpack.c.l.b16 %v48
  %v389 = vunpack.c.h.b16 %v48
  %v390 = vunpack.c.l.b16 %v49
  %v391 = vunpack.c.h.b16 %v49
  %v392 = vunpack.c.l.b16 %v50
  %v393 = vunpack.c.h.b16 %v50
  %v394 = vunpack.c.l.b16 %v51
  %v395 = vunpack.c.h.b16 %v51
  %v396 = vunpack.c.l.b16 %v52
  %v397 = vunpack.c.h.b16 %v52
  %v398 = vunpack.c.l.b16 %v53
  %v399 = vunpack.c.h.b16 %v53
  %v400 = vunpack.c.l.b16 %v54
  %v401 = vunpack.c.h.b16 %v54
  %v402 = vunpack.c.l.b16 %v55
  %v403 = vunpack.c.h.b16 %v55
  %v404 = vunpack.c.l.b16 %v56
  %v405 = vunpack.c.h.b16 %v56
  %v406 = vunpack.c.l.b16 %v57
  %v407 = vunpack.c.h.b16 %v57
  %v408 = vunpack.c.l.b16 %v58
  %v409 = vunpack.c.h.b16 %v58
  %v410 = vunpack.c.l.b16 %v59
  %v411 = vunpack.c.h.b16 %v59
  %v412 = vunpack.c.l.b16 %v60
  %v413 = vunpack.c.h.b16 %v60
  %v414 = vunpack.c.l.b16 %v61
  %v415 = vunpack.c.h.b16 %v61
  %v416 = vunpack.c.l.b16 %v62
  %v417 = vunpack.c.h.b16 %v62
  %v418 = vunpack.c.l.b16 %v63
  %v419 = vunpack.c.h.b16 %v63
  %v420 = vunpack.c.l.b16 %v64
  %v421 = vunpack.c.h.b16 %v64
  %v422 = vunpack.c.l.b16 %v65
  %v423 = vunpack.c.h.b16 %v65
  %v424 = vunpack.c.l.b16 %v66
  %v425 = vunpack.c.h.b16 %v66
  %v426 = vunpack.c.l.b16 %v67
  %v427 = vunpack.c.h.b16 %v67
  %v428 = vunpack.c.l.b16 %v68
  %v429 = vunpack.c.h.b16 %v68
  %v430 = vunpack.c.l.b16 %v69
  %v431 = vunpack.c.h.b16 %v69
  %v432 = vunpack.c.l.b16 %v70
  %v433 = vunpack.c.h.b16 %v70
  %v434 = vunpack.c.l.b16 %v71
  %v435 = vunpack.c.h.b16 %v71
  %v436 = vunpack.c.l.b16 %v72
  %v437 = vunpack.c.h.b16 %v72
  %v438 = vunpack.c.l.b16 %v73
  %v439 = vunpack.c.h.b16 %v73
  %v440 = vunpack.c.l.b16 %v74
  %v441 = vunpack.c.h.b16 %v74
  %v442 = vunpack.c.l.b16 %v75
  %v443 = vunpack.c.h.b16 %v75
  %v444 = vunpack.c.l.b16 %v76
  %v445 = vunpack.c.h.b16 %v76
  %v446 = vunpack.c.l.b16 %v77
  %v447 = vunpack.c.h.b16 %v77
  %v448 = vunpack.c.l.b16 %v78
  %v449 = vunpack.c.h.b16 %v78
  %v450 = vunpack.c.l.b16 %v79
  %v451 = vunpack.c.h.b16 %v79
  %v452 = vunpack.c.l.b16 %v80
  %v453 = vunpack.c.h.b16 %v80
  %v454 = vunpack.c.l.b16 %v81
  %v455 = vunpack.c.h.b16 %v81
  %v456 = vunpack.c.l.b16 %v82
  %v457 = vunpack.c.h.b16 %v82
  %v458 = vunpack.c.l.b16 %v83
  %v459 = vunpack.c.h.b16 %v83
  %v460 = vunpack.c.l.b16 %v84
  %v461 = vunpack.c.h.b16 %v84
  %v462 = vunpack.c.l.b16 %v85
  %v463 = vunpack.c.h.b16 %v85
  %v464 = vunpack.c.l.b16 %v86
  %v465 = vunpack.c.h.b16 %v86
  %v466 = vunpack.c.l.b16 %v87
  %v467 = vunpack.c.h.b16 %v87
  %v468 = vunpack.c.l.b16 %v88
  %v469 = vunpack.c.h.b16 %v88
  %v470 = vunpack.c.l.b16 %v89
  %v471 = vunpack.c.h.b16 %v89
  %v472 = vunpack.c.l.b16 %v90
  %v473 = vunpack.c.h.b16 %v90
  %v474 = vunpack.c.l.b16 %v91
  %v475 = vunpack.c.h.b16 %v91
  %v476 = vunpack.c.l.b16 %v92
  %v477 = vunpack.c.h.b16 %v92
  %v478 = vunpack.c.l.b16 %v93
  %v479 = vunpack.c.h.b16 %v93
  %v480 = vunpack.c.l.b16 %v94
  %v481 = vunpack.c.h.b16 %v94
  %v482 = vunpack.c.l.b16 %v95
  %v483 = vunpack.c.h.b16 %v95
  %v484 = vunpack.c.l.b16 %v96
  %v485 = vunpack.c.h.b16 %v96
  %v486 = vunpack.c.l.b16 %v97
  %v487 = vunpack.c.h.b16 %v97
  %v488 = vunpack.c.l.b16 %v98
  %v489 = vunpack.c.h.b16 %v98
  %v490 = vunpack.c.l.b16 %v99
  %v491 = vunpack.c.h.b16 %v99
  %v492 = vunpack.c.l.b16 %v100
  %v493 = vunpack.c.h.b16 %v100
  %v494 = vunpack.c.l.b16 %v101
  %v495 = vunpack.c.h.b16 %v101
  %v496 = vunpack.c.l.b16 %v102
  %v497 = vunpack.c.h.b16 %v102
  %v498 = vunpack.c.l.b16 %v103
  %v499 = vunpack.c.h.b16 %v103
  %v500 = vunpack.c.l.b16 %v104
  %v501 = vunpack.c.h.b16 %v104
  %v502 = vunpack.c.l.b16 %v105
  %v503 = vunpack.c.h.b16 %v105
  %v504 = vunpack.c.l.b16 %v106
  %v505 = vunpack.c.h.b16 %v106
  %v506 = vunpack.c.l.b16 %v107
  %v507 = vunpack.c.h.b16 %v107
  %v508 = vunpack.c.l.b16 %v108
  %v509 = vunpack.c.h.b16 %v108
  %v510 = vunpack.c.l.b16 %v109
  %v511 = vunpack.c.h.b16 %v109
  %v512 = vunpack.c.l.b16 %v110
  %v513 = vunpack.c.h.b16 %v110
  %v514 = vunpack.c.l.b16 %v111
  %v515 = vunpack.c.h.b16 %v111
  %v516 = vunpack.c.l.b16 %v112
  %v517 = vunpack.c.h.b16 %v112
  %v518 = vunpack.c.l.b16 %v113
  %v519 = vunpack.c.h.b16 %v113
  %v520 = vunpack.c.l.b16 %v114
  %v521 = vunpack.c.h.b16 %v114
  %v522 = vunpack.c.l.b16 %v115
  %v523 = vunpack.c.h.b16 %v115
  %v524 = vunpack.c.l.b16 %v116
  %v525 = vunpack.c.h.b16 %v116
  %v526 = vunpack.c.l.b16 %v117
  %v527 = vunpack.c.h.b16 %v117
  %v528 = vunpack.c.l.b16 %v118
  %v529 = vunpack.c.h.b16 %v118
  %v530 = vunpack.c.l.b16 %v119
  %v531 = vunpack.c.h.b16 %v119
  %v532 = vunpack.c.l.b16 %v120
  %v533 = vunpack.c.h.b16 %v120
  %v534 = vunpack.c.l.b16 %v121
  %v535 = vunpack.c.h.b16 %v121
  %v536 = vunpack.c.l.b16 %v122
  %v537 = vunpack.c.h.b16 %v122
  %v538 = vunpack.c.l.b16 %v123
  %v539 = vunpack.c.h.b16 %v123
  %v540 = vunpack.c.l.b16 %v124
  %v541 = vunpack.c.h.b16 %v124
  %v542 = vunpack.c.l.b16 %v125
  %v543 = vunpack.c.h.b16 %v125
  %v544 = vunpack.c.l.b16 %v126
  %v545 = vunpack.c.h.b16 %v126
  %v546 = vunpack.c.l.b16 %v127
  %v547 = vunpack.c.h.b16 %v127
  %v548 = vunpack.c.l.b16 %v128
  %v549 = vunpack.c.h.b16 %v128
  %v550 = vunpack.c.l.b16 %v129
  %v551 = vunpack.c.h.b16 %v129
  %v552 = vunpack.c.l.b16 %v130
  %v553 = vunpack.c.h.b16 %v130
  %v554 = vunpack.c.l.b16 %v131
  %v555 = vunpack.c.h.b16 %v131
  %v556 = vunpack.c.l.b16 %v132
  %v557 = vunpack.c.h.b16 %v132
  %v558 = vunpack.c.l.b16 %v133
  %v559 = vunpack.c.h.b16 %v133
  %v560 = vunpack.c.l.b16 %v134
  %v561 = vunpack.c.h.b16 %v134
  %v562 = vunpack.c.l.b16 %v135
  %v563 = vunpack.c.h.b16 %v135
  %v564 = vunpack.c.l.b16 %v136
  %v565 = vunpack.c.h.b16 %v136
  %v566 = vunpack.c.l.b16 %v137
  %v567 = vunpack.c.h.b16 %v137
  %v568 = vunpack.c.l.b16 %v138
  %v569 = vunpack.c.h.b16 %v138
  %v570 = vunpack.c.l.b16 %v139
  %v571 = vunpack.c.h.b16 %v139
  %v572 = vunpack.c.l.b16 %v140
  %v573 = vunpack.c.h.b16 %v140
  %v574 = vunpack.c.l.b16 %v141
  %v575 = vunpack.c.h.b16 %v141
  %v576 = vunpack.c.l.b16 %v142
  %v577 = vunpack.c.h.b16 %v142
  %v578 = vpack.c.b16 %v326, %v322
  %v579 = vpack.c.b16 %v327, %v323
  %v580 = vpack.c.b16 %v328, %v324
  %v581 = vpack.c.b16 %v329, %v325
  %v582 = vpack.c.b16 %v334, %v330
  %v583 = vpack.c.b16 %v335, %v331
  %v584 = vpack.c.b16 %v336, %v332
  %v585 = vpack.c.b16 %v337, %v333
  %v586 = vpack.c.b16 %v342, %v338
  %v587 = vpack.c.b16 %v343, %v339
  %v588 = vpack.c.b16 %v344, %v340
  %v589 = vpack.c.b16 %v345, %v341
  %v590 = vpack.c.b16 %v350, %v346
  %v591 = vpack.c.b16 %v351, %v347
  %v592 = vpack.c.b16 %v352, %v348
  %v593 = vpack.c.b16 %v353, %v349
  %v594 = vpack.c.b16 %v358, %v354
  %v595 = vpack.c.b16 %v359, %v355
  %v596 = vpack.c.b16 %v360, %v356
  %v597 = vpack.c.b16 %v361, %v357
  %v598 = vpack.c.b16 %v366, %v362
  %v599 = vpack.c.b16 %v367, %v363
  %v600 = vpack.c.b16 %v368, %v364
  %v601 = vpack.c.b16 %v369, %v365
  %v602 = vpack.c.b16 %v374, %v370
  %v603 = vpack.c.b16 %v375, %v371
  %v604 = vpack.c.b16 %v376, %v372
  %v605 = vpack.c.b16 %v377, %v373
  %v606 = vpack.c.b16 %v382, %v378
  %v607 = vpack.c.b16 %v383, %v379
  %v608 = vpack.c.b16 %v384, %v380
  %v609 = vpack.c.b16 %v385, %v381
  %v610 = vpack.c.b16 %v390, %v386
  %v611 = vpack.c.b16 %v391, %v387
  %v612 = vpack.c.b16 %v392, %v388
  %v613 = vpack.c.b16 %v393, %v389
  %v614 = vpack.c.b16 %v398, %v394
  %v615 = vpack.c.b16 %v399, %v395
  %v616 = vpack.c.b16 %v400, %v396
  %v617 = vpack.c.b16 %v401, %v397
  %v618 = vpack.c.b16 %v406, %v402
  %v619 = vpack.c.b16 %v407, %v403
  %v620 = vpack.c.b16 %v408, %v404
  %v621 = vpack.c.b16 %v409, %v405
  %v622 = vpack.c.b16 %v414, %v410
  %v623 = vpack.c.b16 %v415, %v411
  %v624 = vpack.c.b16 %v416, %v412
  %v625 = vpack.c.b16 %v417, %v413
  %v626 = vpack.c.b16 %v422, %v418
  %v627 = vpack.c.b16 %v423, %v419
  %v628 = vpack.c.b16 %v424, %v420
  %v629 = vpack.c.b16 %v425, %v421
  %v630 = vpack.c.b16 %v430, %v426
  %v631 = vpack.c.b16 %v431, %v427
  %v632 = vpack.c.b16 %v432, %v428
  %v633 = vpack.c.b16 %v433, %v429
  %v634 = vpack.c.b16 %v438, %v434
  %v635 = vpack.c.b16 %v439, %v435
  %v636 = vpack.c.b16 %v440, %v436
  %v637 = vpack.c.b16 %v441, %v437
  %v638 = vpack.c.b16 %v446, %v442
  %v639 = vpack.c.b16 %v447, %v443
  %v640 = vpack.c.b16 %v448, %v444
  %v641 = vpack.c.b16 %v449, %v445
  %v642 = vpack.c.b16 %v454, %v450
  %v643 = vpack.c.b16 %v455, %v451
  %v644 = vpack.c.b16 %v456, %v452
  %v645 = vpack.c.b16 %v457, %v453
  %v646 = vpack.c.b16 %v462, %v458
  %v647 = vpack.c.b16 %v463, %v459
  %v648 = vpack.c.b16 %v464, %v460
  %v649 = vpack.c.b16 %v465, %v461
  %v650 = vpack.c.b16 %v470, %v466
  %v651 = vpack.c.b16 %v471, %v467
  %v652 = vpack.c.b16 %v472, %v468
  %v653 = vpack.c.b16 %v473, %v469
  %v654 = vpack.c.b16 %v478, %v474
  %v655 = vpack.c.b16 %v479, %v475
  %v656 = vpack.c.b16 %v480, %v476
  %v657 = vpack.c.b16 %v481, %v477
  %v658 = vpack.c.b16 %v486, %v482
  %v659 = vpack.c.b16 %v487, %v483
  %v660 = vpack.c.b16 %v488, %v484
  %v661 = vpack.c.b16 %v489, %v485
  %v662 = vpack.c.b16 %v494, %v490
  %v663 = vpack.c.b16 %v495, %v491
  %v664 = vpack.c.b16 %v496, %v492
  %v665 = vpack.c.b16 %v497, %v493
  %v666 = vpack.c.b16 %v502, %v498
  %v667 = vpack.c.b16 %v503, %v499
  %v668 = vpack.c.b16 %v504, %v500
  %v669 = vpack.c.b16 %v505, %v501
  %v670 = vpack.c.b16 %v510, %v506
  %v671 = vpack.c.b16 %v511, %v507
  %v672 = vpack.c.b16 %v512, %v508
  %v673 = vpack.c.b16 %v513, %v509
  %v674 = vpack.c.b16 %v518, %v514
  %v675 = vpack.c.b16 %v519, %v515
  %v676 = vpack.c.b16 %v520, %v516
  %v677 = vpack.c.b16 %v521, %v517
  %v678 = vpack.c.b16 %v526, %v522
  %v679 = vpack.c.b16 %v527, %v523
  %v680 = vpack.c.b16 %v528, %v524
  %v681 = vpack.c.b16 %v529, %v525
  %v682 = vpack.c.b16 %v534, %v530
  %v683 = vpack.c.b16 %v535, %v531
  %v684 = vpack.c.b16 %v536, %v532
  %v685 = vpack.c.b16 %v537, %v533
  %v686 = vpack.c.b16 %v542, %v538
  %v687 = vpack.c.b16 %v543, %v539
  %v688 = vpack.c.b16 %v544, %v540
  %v689 = vpack.c.b16 %v545, %v541
  %v690 = vpack.c.b16 %v550, %v546
  %v691 = vpack.c.b16 %v551, %v547
  %v692 = vpack.c.b16 %v552, %v548
  %v693 = vpack.c.b16 %v553, %v549
  %v694 = vpack.c.b16 %v558, %v554
  %v695 = vpack.c.b16 %v559, %v555
  %v696 = vpack.c.b16 %v560, %v556
  %v697 = vpack.c.b16 %v561, %v557
  %v698 = vpack.c.b16 %v566, %v562
  %v699 = vpack.c.b16 %v567, %v563
  %v700 = vpack.c.b16 %v568, %v564
  %v701 = vpack.c.b16 %v569, %v565
  %v702 = vpack.c.b16 %v574, %v570
  %v703 = vpack.c.b16 %v575, %v571
  %v704 = vpack.c.b16 %v576, %v572
  %v705 = vpack.c.b16 %v577, %v573
  %834 = vmatprep.subr.bf16.mxu0 %v579
  %835 = vmatpush1.bf16.msra.mxu0 %v578
  %836 = vmatprep.subr.bf16.mxu0 %v583
  %837 = vmatpush1.bf16.msra.mxu0 %v582
  %838 = vmatprep.subr.bf16.mxu0 %v587
  %839 = vmatpush1.bf16.msra.mxu0 %v586
  %840 = vmatprep.subr.bf16.mxu0 %v591
  %841 = vmatpush1.bf16.msra.mxu0 %v590
  %842 = vmatprep.subr.bf16.mxu0 %v595
  %843 = vmatpush1.bf16.msra.mxu0 %v594
  %844 = vmatprep.subr.bf16.mxu0 %v599
  %845 = vmatpush1.bf16.msra.mxu0 %v598
  %846 = vmatprep.subr.bf16.mxu0 %v603
  %847 = vmatpush1.bf16.msra.mxu0 %v602
  %848 = vmatprep.subr.bf16.mxu0 %v607
  %849 = vmatpush1.bf16.msra.mxu0 %v606
  %850 = vmatprep.subr.bf16.mxu0 %v611
  %851 = vmatpush1.bf16.msra.mxu0 %v610
  %852 = vmatprep.subr.bf16.mxu0 %v615
  %853 = vmatpush1.bf16.msra.mxu0 %v614
  %854 = vmatprep.subr.bf16.mxu0 %v619
  %855 = vmatpush1.bf16.msra.mxu0 %v618
  %856 = vmatprep.subr.bf16.mxu0 %v623
  %857 = vmatpush1.bf16.msra.mxu0 %v622
  %858 = vmatprep.subr.bf16.mxu0 %v627
  %859 = vmatpush1.bf16.msra.mxu0 %v626
  %860 = vmatprep.subr.bf16.mxu0 %v631
  %861 = vmatpush1.bf16.msra.mxu0 %v630
  %862 = vmatprep.subr.bf16.mxu0 %v635
  %863 = vmatpush1.bf16.msra.mxu0 %v634
  %864 = vmatprep.subr.bf16.mxu0 %v639
  %865 = vmatpush1.bf16.msra.mxu0 %v638
  %866 = vmatprep.mubr.bf16.mxu0 %v187
  %867 = vmatmul.mubr.bf16.gmra.mrb[0].mxu0 %v180
  %v868 = vpop.f32.mrb[0].mxu0
  %v869 = vadd.f32 %v148, %v868
  %v870 = vpop.f32.mrb[0].mxu0
  %v871 = vadd.f32 %v152, %v870
  %v872 = vpop.f32.mrb[0].mxu0
  %v873 = vpop.f32.mrb[0].mxu0
  %874 = vdwg.mxu0
  %875 = vmatprep.subr.bf16.mxu0 %v643
  %876 = vmatpush1.bf16.msra.mxu0 %v642
  %877 = vmatprep.subr.bf16.mxu0 %v647
  %878 = vmatpush1.bf16.msra.mxu0 %v646
  %879 = vmatprep.subr.bf16.mxu0 %v651
  %880 = vmatpush1.bf16.msra.mxu0 %v650
  %881 = vmatprep.subr.bf16.mxu0 %v655
  %882 = vmatpush1.bf16.msra.mxu0 %v654
  %883 = vmatprep.subr.bf16.mxu0 %v659
  %884 = vmatpush1.bf16.msra.mxu0 %v658
  %885 = vmatprep.subr.bf16.mxu0 %v663
  %886 = vmatpush1.bf16.msra.mxu0 %v662
  %887 = vmatprep.subr.bf16.mxu0 %v667
  %888 = vmatpush1.bf16.msra.mxu0 %v666
  %889 = vmatprep.subr.bf16.mxu0 %v671
  %890 = vmatpush1.bf16.msra.mxu0 %v670
  %891 = vmatprep.subr.bf16.mxu0 %v675
  %892 = vmatpush1.bf16.msra.mxu0 %v674
  %893 = vmatprep.subr.bf16.mxu0 %v679
  %894 = vmatpush1.bf16.msra.mxu0 %v678
  %895 = vmatprep.subr.bf16.mxu0 %v683
  %896 = vmatpush1.bf16.msra.mxu0 %v682
  %897 = vmatprep.subr.bf16.mxu0 %v687
  %898 = vmatpush1.bf16.msra.mxu0 %v686
  %899 = vmatprep.subr.bf16.mxu0 %v691
  %900 = vmatpush1.bf16.msra.mxu0 %v690
  %901 = vmatprep.subr.bf16.mxu0 %v695
  %902 = vmatpush1.bf16.msra.mxu0 %v694
  %903 = vmatprep.subr.bf16.mxu0 %v699
  %904 = vmatpush1.bf16.msra.mxu0 %v698
  %905 = vmatprep.subr.bf16.mxu0 %v703
  %906 = vmatpush1.bf16.msra.mxu0 %v702
  %907 = vmatprep.mubr.bf16.mxu0 %v189
  %908 = vmatmul.mubr.bf16.gmra.mrb[0].mxu0 %v188
  %v909 = vpop.f32.mrb[0].mxu0
  %v910 = vadd.f32 %v869, %v909
  %v911 = vpop.f32.mrb[0].mxu0
  %v912 = vadd.f32 %v871, %v911
  %v913 = vpop.f32.mrb[0].mxu0
  %v914 = vpop.f32.mrb[0].mxu0
  %915 = vdwg.mxu0
  %916 = vmatprep.subr.bf16.mxu0 %v581
  %917 = vmatpush1.bf16.msra.mxu0 %v580
  %918 = vmatprep.subr.bf16.mxu0 %v585
  %919 = vmatpush1.bf16.msra.mxu0 %v584
  %920 = vmatprep.subr.bf16.mxu0 %v589
  %921 = vmatpush1.bf16.msra.mxu0 %v588
  %922 = vmatprep.subr.bf16.mxu0 %v593
  %923 = vmatpush1.bf16.msra.mxu0 %v592
  %924 = vmatprep.subr.bf16.mxu0 %v597
  %925 = vmatpush1.bf16.msra.mxu0 %v596
  %926 = vmatprep.subr.bf16.mxu0 %v601
  %927 = vmatpush1.bf16.msra.mxu0 %v600
  %928 = vmatprep.subr.bf16.mxu0 %v605
  %929 = vmatpush1.bf16.msra.mxu0 %v604
  %930 = vmatprep.subr.bf16.mxu0 %v609
  %931 = vmatpush1.bf16.msra.mxu0 %v608
  %932 = vmatprep.subr.bf16.mxu0 %v613
  %933 = vmatpush1.bf16.msra.mxu0 %v612
  %934 = vmatprep.subr.bf16.mxu0 %v617
  %935 = vmatpush1.bf16.msra.mxu0 %v616
  %936 = vmatprep.subr.bf16.mxu0 %v621
  %937 = vmatpush1.bf16.msra.mxu0 %v620
  %938 = vmatprep.subr.bf16.mxu0 %v625
  %939 = vmatpush1.bf16.msra.mxu0 %v624
  %940 = vmatprep.subr.bf16.mxu0 %v629
  %941 = vmatpush1.bf16.msra.mxu0 %v628
  %942 = vmatprep.subr.bf16.mxu0 %v633
  %943 = vmatpush1.bf16.msra.mxu0 %v632
  %944 = vmatprep.subr.bf16.mxu0 %v637
  %945 = vmatpush1.bf16.msra.mxu0 %v636
  %946 = vmatprep.subr.bf16.mxu0 %v641
  %947 = vmatpush1.bf16.msra.mxu0 %v640
  %948 = vmatprep.mubr.bf16.mxu0 %v187
  %949 = vmatmul.mubr.bf16.gmra.mrb[0].mxu0 %v180
  %v950 = vpop.f32.mrb[0].mxu0
  %v951 = vadd.f32 %v156, %v950
  %v952 = vpop.f32.mrb[0].mxu0
  %v953 = vadd.f32 %v160, %v952
  %v954 = vpop.f32.mrb[0].mxu0
  %v955 = vpop.f32.mrb[0].mxu0
  %956 = vdwg.mxu0
  %957 = vmatprep.subr.bf16.mxu0 %v645
  %958 = vmatpush1.bf16.msra.mxu0 %v644
  %959 = vmatprep.subr.bf16.mxu0 %v649
  %960 = vmatpush1.bf16.msra.mxu0 %v648
  %961 = vmatprep.subr.bf16.mxu0 %v653
  %962 = vmatpush1.bf16.msra.mxu0 %v652
  %963 = vmatprep.subr.bf16.mxu0 %v657
  %964 = vmatpush1.bf16.msra.mxu0 %v656
  %965 = vmatprep.subr.bf16.mxu0 %v661
  %966 = vmatpush1.bf16.msra.mxu0 %v660
  %967 = vmatprep.subr.bf16.mxu0 %v665
  %968 = vmatpush1.bf16.msra.mxu0 %v664
  %969 = vmatprep.subr.bf16.mxu0 %v669
  %970 = vmatpush1.bf16.msra.mxu0 %v668
  %971 = vmatprep.subr.bf16.mxu0 %v673
  %972 = vmatpush1.bf16.msra.mxu0 %v672
  %973 = vmatprep.subr.bf16.mxu0 %v677
  %974 = vmatpush1.bf16.msra.mxu0 %v676
  %975 = vmatprep.subr.bf16.mxu0 %v681
  %976 = vmatpush1.bf16.msra.mxu0 %v680
  %977 = vmatprep.subr.bf16.mxu0 %v685
  %978 = vmatpush1.bf16.msra.mxu0 %v684
  %979 = vmatprep.subr.bf16.mxu0 %v689
  %980 = vmatpush1.bf16.msra.mxu0 %v688
  %981 = vmatprep.subr.bf16.mxu0 %v693
  %982 = vmatpush1.bf16.msra.mxu0 %v692
  %983 = vmatprep.subr.bf16.mxu0 %v697
  %984 = vmatpush1.bf16.msra.mxu0 %v696
  %985 = vmatprep.subr.bf16.mxu0 %v701
  %986 = vmatpush1.bf16.msra.mxu0 %v700
  %987 = vmatprep.subr.bf16.mxu0 %v705
  %988 = vmatpush1.bf16.msra.mxu0 %v704
  %989 = vmatprep.mubr.bf16.mxu0 %v189
  %990 = vmatmul.mubr.bf16.gmra.mrb[0].mxu0 %v188
  %v991 = vpop.f32.mrb[0].mxu0
  %v992 = vadd.f32 %v951, %v991
  %v993 = vpop.f32.mrb[0].mxu0
  %v994 = vadd.f32 %v953, %v993
  %v995 = vpop.f32.mrb[0].mxu0
  %v996 = vpop.f32.mrb[0].mxu0
  %997 = vdwg.mxu0
  %v998 = vmax.f32 %v910, 0.0
  %v999 = vmax.f32 %v912, 0.0
  %v1000 = vmax.f32 %v992, 0.0
  %v1001 = vmax.f32 %v994, 0.0
  %v1006 = vcombine.low %v998, %v999
  %v1007 = vcombine.low %v1000, %v1001
  %v1009 = vunpack.c.l.s4 1983009808
  %v1010 = vunpack.c.0.s8 %v1009
  %v1011 = vlaneseq
  %v1012 = vshrl.u32 %v1011, 7
  %v1013 = vsub.s32 %v1010, %v1012
  %v1014 = vrot.slane %v1006, %v1013
  %v1016 = vunpack.c.l.s4 1983009808
  %v1017 = vunpack.c.0.s8 %v1016
  %v1018 = vlaneseq
  %v1019 = vshrl.u32 %v1018, 7
  %v1020 = vsub.s32 %v1017, %v1019
  %v1021 = vrot.slane %v1007, %v1020
  %v1022 = vcombine.low %v1014, %v1021
  %1024 = vst [vmem:[%s3] sm:$0xff] %v1022
  // Predicated region
  $region14: #{stn_tpn_forward.16} parent=0 // pred_check
    _
  $region15: #{stn_tpn_forward.16} parent=0 // pred_check_branch
    %1026 = sbr.rel (0) target = $region17
  $region16: #{stn_tpn_forward.16} parent=0 // pred_region
    _
  $region17: #{stn_tpn_forward.16} parent=0 // pred_fallthru
    _
  // Predicated region
  $region18: #{stn_tpn_forward.16} parent=0 // pred_check
    _
  $region19: #{stn_tpn_forward.16} parent=0 // pred_check_branch
    %1028 = sbr.rel (0) target = $region21
  $region20: #{stn_tpn_forward.16} parent=0 // pred_region
    _
  $region21: #{stn_tpn_forward.16} parent=0 // pred_fallthru
    _

// kernel: tile.8
$region0: #{tile.8}
  #allocation0 [shape = 's32[1]{0}', space=sflag, size = 0x4, scoped, tag = 'scoped memory for tile.8']
  %s0 = inlined_call_operand.vmem [shape: f32[32], index: 0, kind: input, shape index: {}]
  %s1 = inlined_call_operand.vmem [shape: f32[32,32], index: 1, kind: output, shape index: {}]
  // Predicated region
  $region2: #{tile.8} parent=0 // pred_check
    _
  $region3: #{tile.8} parent=0 // pred_check_branch
    %3 = sbr.rel (0) target = $region5
  $region4: #{tile.8} parent=0 // pred_region
    _
  $region5: #{tile.8} parent=0 // pred_fallthru
    _
  %v4 = vld [vmem:[%s0] ss:$0 sm:$0xff]
  %5 = vst [vmem:[%s1] sm:$0xff] %v4
  %s6 = scalar_lea.vmem %s1, 8
  %7 = vst [vmem:[%s6] sm:$0xff] %v4
  %s8 = scalar_lea.vmem %s1, 16
  %9 = vst [vmem:[%s8] sm:$0xff] %v4
  %s10 = scalar_lea.vmem %s1, 24
  %11 = vst [vmem:[%s10] sm:$0xff] %v4

// kernel: stn_tpn_forward.17
$region0: #{stn_tpn_forward.17}
  #allocation0 [shape = 'u32[]', space=smem, size = 0x4, offset = 0x4, fixed_abs, tag = 'smem constant byte address 0x4 - core index']
  #allocation1 [shape = 'u32[144,128]{1,0:T(1,128)}', space=vmem, size = 0x12000, scoped, tag = 'internal scratch']
  %s0 = inlined_call_operand.vmem [shape: bf16[2,512], index: 0, kind: input, shape index: {}]
  %s1 = inlined_call_operand.vmem [shape: bf16[512,76], index: 1, kind: input, shape index: {}]
  %s2 = inlined_call_operand.vmem [shape: f32[1,76], index: 2, kind: input, shape index: {}]
  %s3 = inlined_call_operand.vmem [shape: f32[2,76], index: 3, kind: output, shape index: {}]
  %s4 = sld [smem:[#allocation0]]
  $region22: #{stn_tpn_forward.17} parent=0
    _
  %s6 = ssub.s32 1, %s4
  %s7 = scalar_select 0, %s6, %s4
  // Predicated region
  $region2: #{stn_tpn_forward.17} parent=0 // pred_check
    _
  $region3: #{stn_tpn_forward.17} parent=0 // pred_check_branch
    %9 = sbr.rel (0) target = $region5
  $region4: #{stn_tpn_forward.17} parent=0 // pred_region
    _
  $region5: #{stn_tpn_forward.17} parent=0 // pred_fallthru
    _
  // Predicated region
  $region6: #{stn_tpn_forward.17} parent=0 // pred_check
    _
  $region7: #{stn_tpn_forward.17} parent=0 // pred_check_branch
    %11 = sbr.rel (0) target = $region9
  $region8: #{stn_tpn_forward.17} parent=0 // pred_region
    _
  $region9: #{stn_tpn_forward.17} parent=0 // pred_fallthru
    _
  // Predicated region
  $region10: #{stn_tpn_forward.17} parent=0 // pred_check
    _
  $region11: #{stn_tpn_forward.17} parent=0 // pred_check_branch
    %13 = sbr.rel (0) target = $region13
  $region12: #{stn_tpn_forward.17} parent=0 // pred_region
    _
  $region13: #{stn_tpn_forward.17} parent=0 // pred_fallthru
    _
  %v15 = vld [vmem:[%s0] sm:$0xf]
  %v16 = vld [vmem:[%s1] sm:$0xf]
  %v17 = vld [vmem:[%s1 + $0x4] sm:$0xf]
  %v18 = vld [vmem:[%s1 + $0x8] sm:$0xf]
  %v19 = vld [vmem:[%s1 + $0xc] sm:$0xf]
  %v20 = vld [vmem:[%s1 + $0x10] sm:$0xf]
  %v21 = vld [vmem:[%s1 + $0x14] sm:$0xf]
  %v22 = vld [vmem:[%s1 + $0x18] sm:$0xf]
  %v23 = vld [vmem:[%s1 + $0x1c] sm:$0xf]
  %v24 = vld [vmem:[%s1 + $0x20] sm:$0xf]
  %v25 = vld [vmem:[%s1 + $0x24] sm:$0xf]
  %v26 = vld [vmem:[%s1 + $0x28] sm:$0xf]
  %v27 = vld [vmem:[%s1 + $0x2c] sm:$0xf]
  %v28 = vld [vmem:[%s1 + $0x30] sm:$0xf]
  %v29 = vld [vmem:[%s1 + $0x34] sm:$0xf]
  %v30 = vld [vmem:[%s1 + $0x38] sm:$0xf]
  %v31 = vld [vmem:[%s1 + $0x3c] sm:$0xf]
  %v32 = vld [vmem:[%s1 + $0x40] sm:$0xf]
  %v33 = vld [vmem:[%s1 + $0x44] sm:$0xf]
  %v34 = vld [vmem:[%s1 + $0x48] sm:$0xf]
  %v35 = vld [vmem:[%s1 + $0x4c] sm:$0xf]
  %v36 = vld [vmem:[%s1 + $0x50] sm:$0xf]
  %v37 = vld [vmem:[%s1 + $0x54] sm:$0xf]
  %v38 = vld [vmem:[%s1 + $0x58] sm:$0xf]
  %v39 = vld [vmem:[%s1 + $0x5c] sm:$0xf]
  %v40 = vld [vmem:[%s1 + $0x60] sm:$0xf]
  %v41 = vld [vmem:[%s1 + $0x64] sm:$0xf]
  %v42 = vld [vmem:[%s1 + $0x68] sm:$0xf]
  %v43 = vld [vmem:[%s1 + $0x6c] sm:$0xf]
  %v44 = vld [vmem:[%s1 + $0x70] sm:$0xf]
  %v45 = vld [vmem:[%s1 + $0x74] sm:$0xf]
  %v46 = vld [vmem:[%s1 + $0x78] sm:$0xf]
  %v47 = vld [vmem:[%s1 + $0x7c] sm:$0xf]
  %v48 = vld [vmem:[%s1 + $0x80] sm:$0xf]
  %v49 = vld [vmem:[%s1 + $0x84] sm:$0xf]
  %v50 = vld [vmem:[%s1 + $0x88] sm:$0xf]
  %v51 = vld [vmem:[%s1 + $0x8c] sm:$0xf]
  %v52 = vld [vmem:[%s1 + $0x90] sm:$0xf]
  %v53 = vld [vmem:[%s1 + $0x94] sm:$0xf]
  %v54 = vld [vmem:[%s1 + $0x98] sm:$0xf]
  %v55 = vld [vmem:[%s1 + $0x9c] sm:$0xf]
  %v56 = vld [vmem:[%s1 + $0xa0] sm:$0xf]
  %v57 = vld [vmem:[%s1 + $0xa4] sm:$0xf]
  %v58 = vld [vmem:[%s1 + $0xa8] sm:$0xf]
  %v59 = vld [vmem:[%s1 + $0xac] sm:$0xf]
  %v60 = vld [vmem:[%s1 + $0xb0] sm:$0xf]
  %v61 = vld [vmem:[%s1 + $0xb4] sm:$0xf]
  %v62 = vld [vmem:[%s1 + $0xb8] sm:$0xf]
  %v63 = vld [vmem:[%s1 + $0xbc] sm:$0xf]
  %v64 = vld [vmem:[%s1 + $0xc0] sm:$0xf]
  %v65 = vld [vmem:[%s1 + $0xc4] sm:$0xf]
  %v66 = vld [vmem:[%s1 + $0xc8] sm:$0xf]
  %v67 = vld [vmem:[%s1 + $0xcc] sm:$0xf]
  %v68 = vld [vmem:[%s1 + $0xd0] sm:$0xf]
  %v69 = vld [vmem:[%s1 + $0xd4] sm:$0xf]
  %v70 = vld [vmem:[%s1 + $0xd8] sm:$0xf]
  %v71 = vld [vmem:[%s1 + $0xdc] sm:$0xf]
  %v72 = vld [vmem:[%s1 + $0xe0] sm:$0xf]
  %v73 = vld [vmem:[%s1 + $0xe4] sm:$0xf]
  %v74 = vld [vmem:[%s1 + $0xe8] sm:$0xf]
  %v75 = vld [vmem:[%s1 + $0xec] sm:$0xf]
  %v76 = vld [vmem:[%s1 + $0xf0] sm:$0xf]
  %v77 = vld [vmem:[%s1 + $0xf4] sm:$0xf]
  %v78 = vld [vmem:[%s1 + $0xf8] sm:$0xf]
  %v79 = vld [vmem:[%s1 + $0xfc] sm:$0xf]
  %v80 = vld [vmem:[%s2] sm:$0x1]
  %v82 = vlaneseq
  %v83 = vshrl.u32 %v82, 7
  %v84 = vsub.s32 0, %v83
  %v85 = vrot.slane %v80, %v84
  %v89 = vunpack.c.l.s4 1966171168
  %v90 = vunpack.c.0.s8 %v89
  %v91 = vlaneseq
  %v92 = vshrl.u32 %v91, 7
  %v93 = vsub.s32 %v90, %v92
  %v94 = vrot.slane %v15, %v93
  %v95 = vcombine.high %v94, %v94
  %v97 = vunpack.c.l.s4 1966171168
  %v98 = vunpack.c.0.s8 %v97
  %v99 = vlaneseq
  %v100 = vshrl.u32 %v99, 7
  %v101 = vsub.s32 %v98, %v100
  %v102 = vrot.slane %v94, %v101
  %v104 = vunpack.c.l.s4 1966171168
  %v105 = vunpack.c.0.s8 %v104
  %v106 = vlaneseq
  %v107 = vshrl.u32 %v106, 7
  %v108 = vsub.s32 %v105, %v107
  %v109 = vrot.slane %v95, %v108
  %v110 = vcombine.high %v102, %v102
  %v111 = vcombine.high %v109, %v109
  %v180 = vunpack.c.l.b16 %v16
  %v181 = vunpack.c.l.b16 %v17
  %v182 = vunpack.c.l.b16 %v18
  %v183 = vunpack.c.l.b16 %v19
  %v184 = vunpack.c.l.b16 %v20
  %v185 = vunpack.c.l.b16 %v21
  %v186 = vunpack.c.l.b16 %v22
  %v187 = vunpack.c.l.b16 %v23
  %v188 = vunpack.c.l.b16 %v24
  %v189 = vunpack.c.l.b16 %v25
  %v190 = vunpack.c.l.b16 %v26
  %v191 = vunpack.c.l.b16 %v27
  %v192 = vunpack.c.l.b16 %v28
  %v193 = vunpack.c.l.b16 %v29
  %v194 = vunpack.c.l.b16 %v30
  %v195 = vunpack.c.l.b16 %v31
  %v196 = vunpack.c.l.b16 %v32
  %v197 = vunpack.c.l.b16 %v33
  %v198 = vunpack.c.l.b16 %v34
  %v199 = vunpack.c.l.b16 %v35
  %v200 = vunpack.c.l.b16 %v36
  %v201 = vunpack.c.l.b16 %v37
  %v202 = vunpack.c.l.b16 %v38
  %v203 = vunpack.c.l.b16 %v39
  %v204 = vunpack.c.l.b16 %v40
  %v205 = vunpack.c.l.b16 %v41
  %v206 = vunpack.c.l.b16 %v42
  %v207 = vunpack.c.l.b16 %v43
  %v208 = vunpack.c.l.b16 %v44
  %v209 = vunpack.c.l.b16 %v45
  %v210 = vunpack.c.l.b16 %v46
  %v211 = vunpack.c.l.b16 %v47
  %v212 = vunpack.c.l.b16 %v48
  %v213 = vunpack.c.l.b16 %v49
  %v214 = vunpack.c.l.b16 %v50
  %v215 = vunpack.c.l.b16 %v51
  %v216 = vunpack.c.l.b16 %v52
  %v217 = vunpack.c.l.b16 %v53
  %v218 = vunpack.c.l.b16 %v54
  %v219 = vunpack.c.l.b16 %v55
  %v220 = vunpack.c.l.b16 %v56
  %v221 = vunpack.c.l.b16 %v57
  %v222 = vunpack.c.l.b16 %v58
  %v223 = vunpack.c.l.b16 %v59
  %v224 = vunpack.c.l.b16 %v60
  %v225 = vunpack.c.l.b16 %v61
  %v226 = vunpack.c.l.b16 %v62
  %v227 = vunpack.c.l.b16 %v63
  %v228 = vunpack.c.l.b16 %v64
  %v229 = vunpack.c.l.b16 %v65
  %v230 = vunpack.c.l.b16 %v66
  %v231 = vunpack.c.l.b16 %v67
  %v232 = vunpack.c.l.b16 %v68
  %v233 = vunpack.c.l.b16 %v69
  %v234 = vunpack.c.l.b16 %v70
  %v235 = vunpack.c.l.b16 %v71
  %v236 = vunpack.c.l.b16 %v72
  %v237 = vunpack.c.l.b16 %v73
  %v238 = vunpack.c.l.b16 %v74
  %v239 = vunpack.c.l.b16 %v75
  %v240 = vunpack.c.l.b16 %v76
  %v241 = vunpack.c.l.b16 %v77
  %v242 = vunpack.c.l.b16 %v78
  %v243 = vunpack.c.l.b16 %v79
  %v244 = vpack.c.b16 %v181, %v180
  %v245 = vpack.c.b16 %v183, %v182
  %v246 = vpack.c.b16 %v185, %v184
  %v247 = vpack.c.b16 %v187, %v186
  %v248 = vpack.c.b16 %v189, %v188
  %v249 = vpack.c.b16 %v191, %v190
  %v250 = vpack.c.b16 %v193, %v192
  %v251 = vpack.c.b16 %v195, %v194
  %v252 = vpack.c.b16 %v197, %v196
  %v253 = vpack.c.b16 %v199, %v198
  %v254 = vpack.c.b16 %v201, %v200
  %v255 = vpack.c.b16 %v203, %v202
  %v256 = vpack.c.b16 %v205, %v204
  %v257 = vpack.c.b16 %v207, %v206
  %v258 = vpack.c.b16 %v209, %v208
  %v259 = vpack.c.b16 %v211, %v210
  %v260 = vpack.c.b16 %v213, %v212
  %v261 = vpack.c.b16 %v215, %v214
  %v262 = vpack.c.b16 %v217, %v216
  %v263 = vpack.c.b16 %v219, %v218
  %v264 = vpack.c.b16 %v221, %v220
  %v265 = vpack.c.b16 %v223, %v222
  %v266 = vpack.c.b16 %v225, %v224
  %v267 = vpack.c.b16 %v227, %v226
  %v268 = vpack.c.b16 %v229, %v228
  %v269 = vpack.c.b16 %v231, %v230
  %v270 = vpack.c.b16 %v233, %v232
  %v271 = vpack.c.b16 %v235, %v234
  %v272 = vpack.c.b16 %v237, %v236
  %v273 = vpack.c.b16 %v239, %v238
  %v274 = vpack.c.b16 %v241, %v240
  %v275 = vpack.c.b16 %v243, %v242
  %308 = vmatprep.subr.bf16.mxu0 0
  %309 = vmatpush1.bf16.msra.mxu0 %v244
  %310 = vmatprep.subr.bf16.mxu0 0
  %311 = vmatpush1.bf16.msra.mxu0 %v245
  %312 = vmatprep.subr.bf16.mxu0 0
  %313 = vmatpush1.bf16.msra.mxu0 %v246
  %314 = vmatprep.subr.bf16.mxu0 0
  %315 = vmatpush1.bf16.msra.mxu0 %v247
  %316 = vmatprep.subr.bf16.mxu0 0
  %317 = vmatpush1.bf16.msra.mxu0 %v248
  %318 = vmatprep.subr.bf16.mxu0 0
  %319 = vmatpush1.bf16.msra.mxu0 %v249
  %320 = vmatprep.subr.bf16.mxu0 0
  %321 = vmatpush1.bf16.msra.mxu0 %v250
  %322 = vmatprep.subr.bf16.mxu0 0
  %323 = vmatpush1.bf16.msra.mxu0 %v251
  %324 = vmatprep.subr.bf16.mxu0 0
  %325 = vmatpush1.bf16.msra.mxu0 %v252
  %326 = vmatprep.subr.bf16.mxu0 0
  %327 = vmatpush1.bf16.msra.mxu0 %v253
  %328 = vmatprep.subr.bf16.mxu0 0
  %329 = vmatpush1.bf16.msra.mxu0 %v254
  %330 = vmatprep.subr.bf16.mxu0 0
  %331 = vmatpush1.bf16.msra.mxu0 %v255
  %332 = vmatprep.subr.bf16.mxu0 0
  %333 = vmatpush1.bf16.msra.mxu0 %v256
  %334 = vmatprep.subr.bf16.mxu0 0
  %335 = vmatpush1.bf16.msra.mxu0 %v257
  %336 = vmatprep.subr.bf16.mxu0 0
  %337 = vmatpush1.bf16.msra.mxu0 %v258
  %338 = vmatprep.subr.bf16.mxu0 0
  %339 = vmatpush1.bf16.msra.mxu0 %v259
  %340 = vmatprep.mubr.bf16.mxu0 %v109
  %341 = vmatmul.mubr.bf16.gmra.mrb[0].mxu0 %v102
  %v342 = vpop.f32.mrb[0].mxu0
  %v343 = vadd.f32 %v85, %v342
  %v344 = vpop.f32.mrb[0].mxu0
  %v345 = vpop.f32.mrb[0].mxu0
  %v346 = vpop.f32.mrb[0].mxu0
  %347 = vdwg.mxu0
  %348 = vmatprep.subr.bf16.mxu0 0
  %349 = vmatpush1.bf16.msra.mxu0 %v260
  %350 = vmatprep.subr.bf16.mxu0 0
  %351 = vmatpush1.bf16.msra.mxu0 %v261
  %352 = vmatprep.subr.bf16.mxu0 0
  %353 = vmatpush1.bf16.msra.mxu0 %v262
  %354 = vmatprep.subr.bf16.mxu0 0
  %355 = vmatpush1.bf16.msra.mxu0 %v263
  %356 = vmatprep.subr.bf16.mxu0 0
  %357 = vmatpush1.bf16.msra.mxu0 %v264
  %358 = vmatprep.subr.bf16.mxu0 0
  %359 = vmatpush1.bf16.msra.mxu0 %v265
  %360 = vmatprep.subr.bf16.mxu0 0
  %361 = vmatpush1.bf16.msra.mxu0 %v266
  %362 = vmatprep.subr.bf16.mxu0 0
  %363 = vmatpush1.bf16.msra.mxu0 %v267
  %364 = vmatprep.subr.bf16.mxu0 0
  %365 = vmatpush1.bf16.msra.mxu0 %v268
  %366 = vmatprep.subr.bf16.mxu0 0
  %367 = vmatpush1.bf16.msra.mxu0 %v269
  %368 = vmatprep.subr.bf16.mxu0 0
  %369 = vmatpush1.bf16.msra.mxu0 %v270
  %370 = vmatprep.subr.bf16.mxu0 0
  %371 = vmatpush1.bf16.msra.mxu0 %v271
  %372 = vmatprep.subr.bf16.mxu0 0
  %373 = vmatpush1.bf16.msra.mxu0 %v272
  %374 = vmatprep.subr.bf16.mxu0 0
  %375 = vmatpush1.bf16.msra.mxu0 %v273
  %376 = vmatprep.subr.bf16.mxu0 0
  %377 = vmatpush1.bf16.msra.mxu0 %v274
  %378 = vmatprep.subr.bf16.mxu0 0
  %379 = vmatpush1.bf16.msra.mxu0 %v275
  %380 = vmatprep.mubr.bf16.mxu0 %v111
  %381 = vmatmul.mubr.bf16.gmra.mrb[0].mxu0 %v110
  %v382 = vpop.f32.mrb[0].mxu0
  %v383 = vadd.f32 %v343, %v382
  %v384 = vpop.f32.mrb[0].mxu0
  %v385 = vpop.f32.mrb[0].mxu0
  %v386 = vpop.f32.mrb[0].mxu0
  %387 = vdwg.mxu0
  %v388 = vtanh.pop %v383
  %vm389 = vcmask 615424
  %390 = vst.msk [vmem:[%s3] sm:$0x3] %vm389, %v388
  // Predicated region
  $region14: #{stn_tpn_forward.17} parent=0 // pred_check
    _
  $region15: #{stn_tpn_forward.17} parent=0 // pred_check_branch
    %392 = sbr.rel (0) target = $region17
  $region16: #{stn_tpn_forward.17} parent=0 // pred_region
    _
  $region17: #{stn_tpn_forward.17} parent=0 // pred_fallthru
    _
  // Predicated region
  $region18: #{stn_tpn_forward.17} parent=0 // pred_check
    _
  $region19: #{stn_tpn_forward.17} parent=0 // pred_check_branch
    %394 = sbr.rel (0) target = $region21
  $region20: #{stn_tpn_forward.17} parent=0 // pred_region
    _
  $region21: #{stn_tpn_forward.17} parent=0 // pred_fallthru
    _

// kernel: stn_tpn_forward.18
$region0: #{stn_tpn_forward.18}
  #allocation0 [shape = 'u32[]', space=smem, size = 0x4, offset = 0x4, fixed_abs, tag = 'smem constant byte address 0x4 - core index']
  #allocation1 [shape = 'u32[144,128]{1,0:T(1,128)}', space=vmem, size = 0x12000, scoped, tag = 'internal scratch']
  %s0 = inlined_call_operand.vmem [shape: f32[2,1024], index: 0, kind: input, shape index: {}]
  %s1 = inlined_call_operand.vmem [shape: f32[36,2], index: 1, kind: input, shape index: {}]
  %s2 = inlined_call_operand.vmem [shape: f32[2,2,36], index: 2, kind: input, shape index: {}]
  %s3 = inlined_call_operand.vmem [shape: f32[2,2,3], index: 3, kind: input, shape index: {}]
  %s4 = inlined_call_operand.vmem [shape: f32[2,2,1024], index: 4, kind: output, shape index: {}]
  %s5 = sld [smem:[#allocation0]]
  $region49: #{stn_tpn_forward.18} parent=0
    _
  %s7 = ssub.s32 1, %s5
  %s8 = scalar_select 0, %s7, %s5
  loop: start=0, step=1, limit=6
  $region2: #{stn_tpn_forward.18} parent=0 // loop_pre_header
    _
  $region3: #{stn_tpn_forward.18} parent=0 // loop_header
    %s10 = sphi 0, %s14
    %p11 = scmp.ge.s32.totalorder %s10, 6
    %s17 = sphi 0, %s29
    %s18 = sphi 0, %s25
    %s19 = sphi 0, %s17
    %s20 = sphi 0, %s18
    %s21 = sphi 0, %s19
    %s22 = sphi 0, %s20
    %s32 = sphi 0, %s34
    %s35 = sphi 0, %s32
    %s36 = sphi 0, %s35
    %s52 = sphi 0, %s36
    %s56 = sphi 0, %s56
    %s58 = sphi 0, %s56
    %s59 = sphi 0, %s58
    %s73 = sphi 0, %s59
    %s79 = sphi 0, %s81
    %s82 = sphi 0, %s79
    %s83 = sphi 0, %s82
    %s99 = sphi 0, %s83
    %s105 = sphi 0, %s107
    %s108 = sphi 0, %s105
    %s109 = sphi 0, %s108
    %s125 = sphi 0, %s109
    %s133 = sphi 0, %s135
    %s136 = sphi 0, %s133
    %s137 = sphi 0, %s136
    %s153 = sphi 0, %s137
  $region4: #{stn_tpn_forward.18} parent=0 // loop_header_branch
    %13 = sbr.rel (%p11) target = $region8
  $region5: #{stn_tpn_forward.18} parent=0 // loop_body
    %s15 = ssub.s32 %s10, 1
    %s16 = ssub.s32 %s10, 2
    %s23 = sadd.s32 1, %s18
    %p24 = scmp.ge.s32.totalorder %s23, 2
    %s25 = scalar_select %p24, 0, %s23
    %s26 = sadd.s32 1, %s17
    %s27 = scalar_select %p24, %s26, %s17
    %p28 = scmp.ge.s32.totalorder %s27, 2
    %s29 = scalar_select %p28, 0, %s27
    %s30 = ssub.s32 %s18, %s25
    %p31 = scmp.eq.s32.totalorder %s30, 0
    %s33 = sadd.s32 %s32, 1
    %s34 = scalar_select %p31, %s32, %s33
    %p37 = pneg %p31
    %p38 = scmp.eq.s32.totalorder %s10, 3
    %p39 = por %p37, %p38
    %p40 = scmp.ne.s32.totalorder %s32, %s35
    %p41 = scmp.eq.s32.totalorder %s10, 0
    %p42 = por %p40, %p41
    %p43 = scmp.ne.s32.totalorder %s32, %s35
    %p44 = scmp.eq.s32.totalorder %s15, 3
    %p45 = por %p43, %p44
    %p46 = scmp.ne.s32.totalorder %s35, %s36
    %p47 = scmp.eq.s32.totalorder %s15, 0
    %p48 = por %p46, %p47
    %p49 = scmp.ne.s32.totalorder %s35, %s36
    %p50 = scmp.eq.s32.totalorder %s16, 3
    %p51 = por %p49, %p50
    %p53 = scmp.ne.s32.totalorder %s36, %s52
    %p54 = scmp.eq.s32.totalorder %s16, 0
    %p55 = por %p53, %p54
    %s57 = sadd.s32 %s56, 1
    %p60 = scmp.eq.s32.totalorder %s10, 3
    %p61 = scmp.ne.s32.totalorder %s56, %s58
    %p62 = scmp.eq.s32.totalorder %s10, 0
    %p63 = por %p61, %p62
    %p64 = scmp.ne.s32.totalorder %s56, %s58
    %p65 = scmp.eq.s32.totalorder %s15, 3
    %p66 = por %p64, %p65
    %p67 = scmp.ne.s32.totalorder %s58, %s59
    %p68 = scmp.eq.s32.totalorder %s15, 0
    %p69 = por %p67, %p68
    %p70 = scmp.ne.s32.totalorder %s58, %s59
    %p71 = scmp.eq.s32.totalorder %s16, 3
    %p72 = por %p70, %p71
    %p74 = scmp.ne.s32.totalorder %s59, %s73
    %p75 = scmp.eq.s32.totalorder %s16, 0
    %p76 = por %p74, %p75
    %s77 = ssub.s32 %s17, %s29
    %p78 = scmp.eq.s32.totalorder %s77, 0
    %s80 = sadd.s32 %s79, 1
    %s81 = scalar_select %p78, %s79, %s80
    %p84 = pneg %p78
    %p85 = scmp.eq.s32.totalorder %s10, 3
    %p86 = por %p84, %p85
    %p87 = scmp.ne.s32.totalorder %s79, %s82
    %p88 = scmp.eq.s32.totalorder %s10, 0
    %p89 = por %p87, %p88
    %p90 = scmp.ne.s32.totalorder %s79, %s82
    %p91 = scmp.eq.s32.totalorder %s15, 3
    %p92 = por %p90, %p91
    %p93 = scmp.ne.s32.totalorder %s82, %s83
    %p94 = scmp.eq.s32.totalorder %s15, 0
    %p95 = por %p93, %p94
    %p96 = scmp.ne.s32.totalorder %s82, %s83
    %p97 = scmp.eq.s32.totalorder %s16, 3
    %p98 = por %p96, %p97
    %p100 = scmp.ne.s32.totalorder %s83, %s99
    %p101 = scmp.eq.s32.totalorder %s16, 0
    %p102 = por %p100, %p101
    %s103 = ssub.s32 %s17, %s29
    %p104 = scmp.eq.s32.totalorder %s103, 0
    %s106 = sadd.s32 %s105, 1
    %s107 = scalar_select %p104, %s105, %s106
    %p110 = pneg %p104
    %p111 = scmp.eq.s32.totalorder %s10, 3
    %p112 = por %p110, %p111
    %p113 = scmp.ne.s32.totalorder %s105, %s108
    %p114 = scmp.eq.s32.totalorder %s10, 0
    %p115 = por %p113, %p114
    %p116 = scmp.ne.s32.totalorder %s105, %s108
    %p117 = scmp.eq.s32.totalorder %s15, 3
    %p118 = por %p116, %p117
    %p119 = scmp.ne.s32.totalorder %s108, %s109
    %p120 = scmp.eq.s32.totalorder %s15, 0
    %p121 = por %p119, %p120
    %p122 = scmp.ne.s32.totalorder %s108, %s109
    %p123 = scmp.eq.s32.totalorder %s16, 3
    %p124 = por %p122, %p123
    %p126 = scmp.ne.s32.totalorder %s109, %s125
    %p127 = scmp.eq.s32.totalorder %s16, 0
    %p128 = por %p126, %p127
    %s129 = ssub.s32 %s17, %s29
    %s130 = ssub.s32 %s18, %s25
    %s131 = sor.u32 %s129, %s130
    %p132 = scmp.eq.s32.totalorder %s131, 0
    %s134 = sadd.s32 %s133, 1
    %s135 = scalar_select %p132, %s133, %s134
    %p138 = pneg %p132
    %p139 = scmp.eq.s32.totalorder %s10, 3
    %p140 = por %p138, %p139
    %p141 = scmp.ne.s32.totalorder %s133, %s136
    %p142 = scmp.eq.s32.totalorder %s10, 0
    %p143 = por %p141, %p142
    %p144 = scmp.ne.s32.totalorder %s133, %s136
    %p145 = scmp.eq.s32.totalorder %s15, 3
    %p146 = por %p144, %p145
    %p147 = scmp.ne.s32.totalorder %s136, %s137
    %p148 = scmp.eq.s32.totalorder %s15, 0
    %p149 = por %p147, %p148
    %p150 = scmp.ne.s32.totalorder %s136, %s137
    %p151 = scmp.eq.s32.totalorder %s16, 3
    %p152 = por %p150, %p151
    %p154 = scmp.ne.s32.totalorder %s137, %s153
    %p155 = scmp.eq.s32.totalorder %s16, 0
    %p156 = por %p154, %p155
    %p157 = scmp.le.s32.totalorder 1, %s10
    %p158 = scmp.lt.s32.totalorder %s10, 5
    %p159 = pnand %p157, %p158
    %p160 = pneg %p159
    // Predicated region
    $region9: #{stn_tpn_forward.18} parent=5 // pred_check
      _
    $region10: #{stn_tpn_forward.18} parent=5 // pred_check_branch
      %162 = sbr.rel (%p159) target = $region12
    $region11: #{stn_tpn_forward.18} parent=5 // pred_region
      %s163 = ssub.s32 %s10, 1
      // Predicated region
      $region13: #{stn_tpn_forward.18} parent=11 // pred_check
        %p164 = pneg %p69
      $region14: #{stn_tpn_forward.18} parent=11 // pred_check_branch
        %166 = sbr.rel (%p164) target = $region16
      $region15: #{stn_tpn_forward.18} parent=11 // pred_region
        _
      $region16: #{stn_tpn_forward.18} parent=11 // pred_fallthru
        _
    $region12: #{stn_tpn_forward.18} parent=5 // pred_fallthru
      _
    %p167 = scmp.lt.s32.totalorder %s10, 4
    // Predicated region
    $region17: #{stn_tpn_forward.18} parent=5 // pred_check
      %p168 = pneg %p167
    $region18: #{stn_tpn_forward.18} parent=5 // pred_check_branch
      %170 = sbr.rel (%p168) target = $region20
    $region19: #{stn_tpn_forward.18} parent=5 // pred_region
      // Predicated region
      $region21: #{stn_tpn_forward.18} parent=19 // pred_check
        %p171 = pneg %p42
      $region22: #{stn_tpn_forward.18} parent=19 // pred_check_branch
        %173 = sbr.rel (%p171) target = $region24
      $region23: #{stn_tpn_forward.18} parent=19 // pred_region
        %s174 = smul.u32 4, %s18
        %p175 = scmp.lt.s32.totalorder %s174, 7
        %s176 = scalar_select %p175, %s174, 7
        %s177 = smul.addr %s176, 2
        %s178 = scalar_lea.vmem %s0, %s177
        %s179 = smul.u32 4, %s18
      $region24: #{stn_tpn_forward.18} parent=19 // pred_fallthru
        _
      // Predicated region
      $region25: #{stn_tpn_forward.18} parent=19 // pred_check
        %p180 = pneg %p89
      $region26: #{stn_tpn_forward.18} parent=19 // pred_check_branch
        %182 = sbr.rel (%p180) target = $region28
      $region27: #{stn_tpn_forward.18} parent=19 // pred_region
        %p183 = scmp.lt.s32.totalorder %s17, 1
        %s184 = scalar_select %p183, %s17, 1
        %s185 = smul.addr %s184, 2
        %s186 = scalar_lea.vmem %s2, %s185
      $region28: #{stn_tpn_forward.18} parent=19 // pred_fallthru
        _
      // Predicated region
      $region29: #{stn_tpn_forward.18} parent=19 // pred_check
        %p187 = pneg %p115
      $region30: #{stn_tpn_forward.18} parent=19 // pred_check_branch
        %189 = sbr.rel (%p187) target = $region32
      $region31: #{stn_tpn_forward.18} parent=19 // pred_region
        %p190 = scmp.lt.s32.totalorder %s17, 1
        %s191 = scalar_select %p190, %s17, 1
        %s192 = smul.addr %s191, 2
        %s193 = scalar_lea.vmem %s3, %s192
      $region32: #{stn_tpn_forward.18} parent=19 // pred_fallthru
        _
    $region20: #{stn_tpn_forward.18} parent=5 // pred_fallthru
      _
    %p194 = scmp.le.s32.totalorder 1, %s10
    %p195 = scmp.lt.s32.totalorder %s10, 5
    %p196 = pnand %p194, %p195
    %p197 = pneg %p196
    // Predicated region
    $region33: #{stn_tpn_forward.18} parent=5 // pred_check
      _
    $region34: #{stn_tpn_forward.18} parent=5 // pred_check_branch
      %199 = sbr.rel (%p196) target = $region36
    $region35: #{stn_tpn_forward.18} parent=5 // pred_region
      %s200 = ssub.s32 %s10, 1
      %s201 = smul.u32 4, %s20
      %p202 = scmp.lt.s32.totalorder %s201, 7
      %s203 = scalar_select %p202, %s201, 7
      %s204 = smul.addr %s203, 2
      %s205 = scalar_lea.vmem %s0, %s204
      %p206 = pneg %p48
      %p207 = pneg %p45
      %p208 = pneg %p69
      %p209 = pneg %p66
      %p210 = scmp.lt.s32.totalorder %s19, 1
      %s211 = scalar_select %p210, %s19, 1
      %s212 = smul.addr %s211, 2
      %s213 = scalar_lea.vmem %s2, %s212
      %p214 = pneg %p95
      %p215 = pneg %p92
      %p216 = scmp.lt.s32.totalorder %s19, 1
      %s217 = scalar_select %p216, %s19, 1
      %s218 = smul.addr %s217, 2
      %s219 = scalar_lea.vmem %s3, %s218
      %p220 = pneg %p121
      %p221 = pneg %p118
      %p222 = pneg %p149
      %p223 = pneg %p146
      %s224 = smul.u32 4, %s20
      %p225 = scmp.lt.s32.totalorder %s19, 1
      %s226 = scalar_select %p225, %s19, 1
      %p227 = scmp.lt.s32.totalorder %s224, 7
      %s228 = scalar_select %p227, %s224, 7
      %s229 = smul.addr %s226, 8
      %s230 = sadd.s32 %s228, %s229
      %s231 = smul.addr %s230, 2
      %s232 = scalar_lea.vmem %s4, %s231
      %s233 = smul.u32 4, %s20
      %p234 = scmp.lt.s32.totalorder %s233, 7
      %s235 = scalar_select %p234, %s233, 7
      %s236 = smul.addr %s235, 2
      %s237 = scalar_lea.vmem %s0, %s236
      %s238 = smul.u32 4, %s20
      %p239 = scmp.lt.s32.totalorder %s19, 1
      %s240 = scalar_select %p239, %s19, 1
      %s241 = smul.addr %s240, 2
      %s242 = scalar_lea.vmem %s2, %s241
      %p243 = scmp.lt.s32.totalorder %s19, 1
      %s244 = scalar_select %p243, %s19, 1
      %s245 = smul.addr %s244, 2
      %s246 = scalar_lea.vmem %s3, %s245
      %s247 = smul.u32 4, %s20
      %p248 = scmp.lt.s32.totalorder %s19, 1
      %s249 = scalar_select %p248, %s19, 1
      %p250 = scmp.lt.s32.totalorder %s247, 7
      %s251 = scalar_select %p250, %s247, 7
      %s252 = smul.addr %s249, 8
      %s253 = sadd.s32 %s251, %s252
      %s254 = smul.addr %s253, 2
      %s255 = scalar_lea.vmem %s4, %s254
      %s256 = smul.u32 4, %s20
      %v257 = vld [vmem:[%s237] ss:$2 sm:$0xf]
      %s258 = scalar_lea.vmem %s237, 1
      %v259 = vld [vmem:[%s258] ss:$2 sm:$0xf]
      %v260 = vld [vmem:[%s1] sm:$0xff]
      %v261 = vld [vmem:[%s1 + $0x8] sm:$0xff]
      %v262 = vld [vmem:[%s1 + $0x10] sm:$0xff]
      %v263 = vld [vmem:[%s1 + $0x18] sm:$0xff]
      %v264 = vld [vmem:[%s1 + $0x20] sm:$0xf]
      %v266 = vlaneseq
      %v267 = vshrl.u32 %v266, 7
      %v268 = vsub.s32 0, %v267
      %v269 = vrot.slane %v257, %v268
      %v270 = vlaneseq
      %v271 = vshrl.u32 %v270, 7
      %v272 = vsub.s32 1, %v271
      %v273 = vrot.slane %v257, %v272
      %v274 = vlaneseq
      %v275 = vshrl.u32 %v274, 7
      %v276 = vsub.s32 2, %v275
      %v277 = vrot.slane %v257, %v276
      %v278 = vlaneseq
      %v279 = vshrl.u32 %v278, 7
      %v280 = vsub.s32 3, %v279
      %v281 = vrot.slane %v257, %v280
      %287 = vset.pattern.permute.xlu0 0
      %288 = vperm.xlu0 %287, %v260
      %v289 = vpop.permute.xlu0 %288
      %292 = vset.pattern.permute.xlu0 0
      %293 = vperm.xlu0 %292, %v261
      %v294 = vpop.permute.xlu0 %293
      %297 = vset.pattern.permute.xlu0 0
      %298 = vperm.xlu0 %297, %v262
      %v299 = vpop.permute.xlu0 %298
      %302 = vset.pattern.permute.xlu0 0
      %303 = vperm.xlu0 %302, %v263
      %v304 = vpop.permute.xlu0 %303
      %307 = vset.pattern.permute.xlu0 0
      %308 = vperm.xlu0 %307, %v264
      %v309 = vpop.permute.xlu0 %308
      %v311 = vsub.f32 %v269, %v289
      %v312 = vsub.f32 %v273, %v289
      %v313 = vsub.f32 %v277, %v289
      %v314 = vsub.f32 %v281, %v289
      %v315 = vsub.f32 %v269, %v294
      %v316 = vsub.f32 %v273, %v294
      %v317 = vsub.f32 %v277, %v294
      %v318 = vsub.f32 %v281, %v294
      %v319 = vsub.f32 %v269, %v299
      %v320 = vsub.f32 %v273, %v299
      %v321 = vsub.f32 %v277, %v299
      %v322 = vsub.f32 %v281, %v299
      %v323 = vsub.f32 %v269, %v304
      %v324 = vsub.f32 %v273, %v304
      %v325 = vsub.f32 %v277, %v304
      %v326 = vsub.f32 %v281, %v304
      %v327 = vsub.f32 %v269, %v309
      %v328 = vsub.f32 %v273, %v309
      %v329 = vsub.f32 %v277, %v309
      %v330 = vsub.f32 %v281, %v309
      %v332 = vlaneseq
      %v333 = vshrl.u32 %v332, 7
      %v334 = vsub.s32 0, %v333
      %v335 = vrot.slane %v259, %v334
      %v336 = vlaneseq
      %v337 = vshrl.u32 %v336, 7
      %v338 = vsub.s32 1, %v337
      %v339 = vrot.slane %v259, %v338
      %v340 = vlaneseq
      %v341 = vshrl.u32 %v340, 7
      %v342 = vsub.s32 2, %v341
      %v343 = vrot.slane %v259, %v342
      %v344 = vlaneseq
      %v345 = vshrl.u32 %v344, 7
      %v346 = vsub.s32 3, %v345
      %v347 = vrot.slane %v259, %v346
      %352 = vset.pattern.permute.xlu0 1
      %353 = vperm.xlu0 %352, %v260
      %v354 = vpop.permute.xlu0 %353
      %356 = vset.pattern.permute.xlu0 1
      %357 = vperm.xlu0 %356, %v261
      %v358 = vpop.permute.xlu0 %357
      %360 = vset.pattern.permute.xlu0 1
      %361 = vperm.xlu0 %360, %v262
      %v362 = vpop.permute.xlu0 %361
      %364 = vset.pattern.permute.xlu0 1
      %365 = vperm.xlu0 %364, %v263
      %v366 = vpop.permute.xlu0 %365
      %368 = vset.pattern.permute.xlu0 1
      %369 = vperm.xlu0 %368, %v264
      %v370 = vpop.permute.xlu0 %369
      %v372 = vsub.f32 %v335, %v354
      %v373 = vsub.f32 %v339, %v354
      %v374 = vsub.f32 %v343, %v354
      %v375 = vsub.f32 %v347, %v354
      %v376 = vsub.f32 %v335, %v358
      %v377 = vsub.f32 %v339, %v358
      %v378 = vsub.f32 %v343, %v358
      %v379 = vsub.f32 %v347, %v358
      %v380 = vsub.f32 %v335, %v362
      %v381 = vsub.f32 %v339, %v362
      %v382 = vsub.f32 %v343, %v362
      %v383 = vsub.f32 %v347, %v362
      %v384 = vsub.f32 %v335, %v366
      %v385 = vsub.f32 %v339, %v366
      %v386 = vsub.f32 %v343, %v366
      %v387 = vsub.f32 %v347, %v366
      %v388 = vsub.f32 %v335, %v370
      %v389 = vsub.f32 %v339, %v370
      %v390 = vsub.f32 %v343, %v370
      %v391 = vsub.f32 %v347, %v370
      %v392 = vmul.f32 %v311, %v311
      %v393 = vmul.f32 %v312, %v312
      %v394 = vmul.f32 %v313, %v313
      %v395 = vmul.f32 %v314, %v314
      %v396 = vmul.f32 %v315, %v315
      %v397 = vmul.f32 %v316, %v316
      %v398 = vmul.f32 %v317, %v317
      %v399 = vmul.f32 %v318, %v318
      %v400 = vmul.f32 %v319, %v319
      %v401 = vmul.f32 %v320, %v320
      %v402 = vmul.f32 %v321, %v321
      %v403 = vmul.f32 %v322, %v322
      %v404 = vmul.f32 %v323, %v323
      %v405 = vmul.f32 %v324, %v324
      %v406 = vmul.f32 %v325, %v325
      %v407 = vmul.f32 %v326, %v326
      %v408 = vmul.f32 %v327, %v327
      %v409 = vmul.f32 %v328, %v328
      %v410 = vmul.f32 %v329, %v329
      %v411 = vmul.f32 %v330, %v330
      %v412 = vmul.f32 %v372, %v372
      %v413 = vmul.f32 %v373, %v373
      %v414 = vmul.f32 %v374, %v374
      %v415 = vmul.f32 %v375, %v375
      %v416 = vmul.f32 %v376, %v376
      %v417 = vmul.f32 %v377, %v377
      %v418 = vmul.f32 %v378, %v378
      %v419 = vmul.f32 %v379, %v379
      %v420 = vmul.f32 %v380, %v380
      %v421 = vmul.f32 %v381, %v381
      %v422 = vmul.f32 %v382, %v382
      %v423 = vmul.f32 %v383, %v383
      %v424 = vmul.f32 %v384, %v384
      %v425 = vmul.f32 %v385, %v385
      %v426 = vmul.f32 %v386, %v386
      %v427 = vmul.f32 %v387, %v387
      %v428 = vmul.f32 %v388, %v388
      %v429 = vmul.f32 %v389, %v389
      %v430 = vmul.f32 %v390, %v390
      %v431 = vmul.f32 %v391, %v391
      %v432 = vadd.f32 %v392, %v412
      %v433 = vadd.f32 %v393, %v413
      %v434 = vadd.f32 %v394, %v414
      %v435 = vadd.f32 %v395, %v415
      %v436 = vadd.f32 %v396, %v416
      %v437 = vadd.f32 %v397, %v417
      %v438 = vadd.f32 %v398, %v418
      %v439 = vadd.f32 %v399, %v419
      %v440 = vadd.f32 %v400, %v420
      %v441 = vadd.f32 %v401, %v421
      %v442 = vadd.f32 %v402, %v422
      %v443 = vadd.f32 %v403, %v423
      %v444 = vadd.f32 %v404, %v424
      %v445 = vadd.f32 %v405, %v425
      %v446 = vadd.f32 %v406, %v426
      %v447 = vadd.f32 %v407, %v427
      %v448 = vadd.f32 %v408, %v428
      %v449 = vadd.f32 %v409, %v429
      %v450 = vadd.f32 %v410, %v430
      %v451 = vadd.f32 %v411, %v431
      %v452 = vmul.f32 %v432, 0.5
      %v453 = vmul.f32 %v433, 0.5
      %v454 = vmul.f32 %v434, 0.5
      %v455 = vmul.f32 %v435, 0.5
      %v456 = vmul.f32 %v436, 0.5
      %v457 = vmul.f32 %v437, 0.5
      %v458 = vmul.f32 %v438, 0.5
      %v459 = vmul.f32 %v439, 0.5
      %v460 = vmul.f32 %v440, 0.5
      %v461 = vmul.f32 %v441, 0.5
      %v462 = vmul.f32 %v442, 0.5
      %v463 = vmul.f32 %v443, 0.5
      %v464 = vmul.f32 %v444, 0.5
      %v465 = vmul.f32 %v445, 0.5
      %v466 = vmul.f32 %v446, 0.5
      %v467 = vmul.f32 %v447, 0.5
      %v468 = vmul.f32 %v448, 0.5
      %v469 = vmul.f32 %v449, 0.5
      %v470 = vmul.f32 %v450, 0.5
      %v471 = vmul.f32 %v451, 0.5
      %v472 = vadd.f32 %v432, 1e-12
      %v473 = vadd.f32 %v433, 1e-12
      %v474 = vadd.f32 %v434, 1e-12
      %v475 = vadd.f32 %v435, 1e-12
      %v476 = vadd.f32 %v436, 1e-12
      %v477 = vadd.f32 %v437, 1e-12
      %v478 = vadd.f32 %v438, 1e-12
      %v479 = vadd.f32 %v439, 1e-12
      %v480 = vadd.f32 %v440, 1e-12
      %v481 = vadd.f32 %v441, 1e-12
      %v482 = vadd.f32 %v442, 1e-12
      %v483 = vadd.f32 %v443, 1e-12
      %v484 = vadd.f32 %v444, 1e-12
      %v485 = vadd.f32 %v445, 1e-12
      %v486 = vadd.f32 %v446, 1e-12
      %v487 = vadd.f32 %v447, 1e-12
      %v488 = vadd.f32 %v448, 1e-12
      %v489 = vadd.f32 %v449, 1e-12
      %v490 = vadd.f32 %v450, 1e-12
      %v491 = vadd.f32 %v451, 1e-12
      %v492 = vlog2.pop %v472
      %v493 = vmul.f32 %v492, 0.6931472
      %v494 = vlog2.pop %v473
      %v495 = vmul.f32 %v494, 0.6931472
      %v496 = vlog2.pop %v474
      %v497 = vmul.f32 %v496, 0.6931472
      %v498 = vlog2.pop %v475
      %v499 = vmul.f32 %v498, 0.6931472
      %v500 = vlog2.pop %v476
      %v501 = vmul.f32 %v500, 0.6931472
      %v502 = vlog2.pop %v477
      %v503 = vmul.f32 %v502, 0.6931472
      %v504 = vlog2.pop %v478
      %v505 = vmul.f32 %v504, 0.6931472
      %v506 = vlog2.pop %v479
      %v507 = vmul.f32 %v506, 0.6931472
      %v508 = vlog2.pop %v480
      %v509 = vmul.f32 %v508, 0.6931472
      %v510 = vlog2.pop %v481
      %v511 = vmul.f32 %v510, 0.6931472
      %v512 = vlog2.pop %v482
      %v513 = vmul.f32 %v512, 0.6931472
      %v514 = vlog2.pop %v483
      %v515 = vmul.f32 %v514, 0.6931472
      %v516 = vlog2.pop %v484
      %v517 = vmul.f32 %v516, 0.6931472
      %v518 = vlog2.pop %v485
      %v519 = vmul.f32 %v518, 0.6931472
      %v520 = vlog2.pop %v486
      %v521 = vmul.f32 %v520, 0.6931472
      %v522 = vlog2.pop %v487
      %v523 = vmul.f32 %v522, 0.6931472
      %v524 = vlog2.pop %v488
      %v525 = vmul.f32 %v524, 0.6931472
      %v526 = vlog2.pop %v489
      %v527 = vmul.f32 %v526, 0.6931472
      %v528 = vlog2.pop %v490
      %v529 = vmul.f32 %v528, 0.6931472
      %v530 = vlog2.pop %v491
      %v531 = vmul.f32 %v530, 0.6931472
      %v532 = vmul.f32 %v452, %v493
      %v533 = vmul.f32 %v453, %v495
      %v534 = vmul.f32 %v454, %v497
      %v535 = vmul.f32 %v455, %v499
      %v536 = vmul.f32 %v456, %v501
      %v537 = vmul.f32 %v457, %v503
      %v538 = vmul.f32 %v458, %v505
      %v539 = vmul.f32 %v459, %v507
      %v540 = vmul.f32 %v460, %v509
      %v541 = vmul.f32 %v461, %v511
      %v542 = vmul.f32 %v462, %v513
      %v543 = vmul.f32 %v463, %v515
      %v544 = vmul.f32 %v464, %v517
      %v545 = vmul.f32 %v465, %v519
      %v546 = vmul.f32 %v466, %v521
      %v547 = vmul.f32 %v467, %v523
      %v548 = vmul.f32 %v468, %v525
      %v549 = vmul.f32 %v469, %v527
      %v550 = vmul.f32 %v470, %v529
      %v551 = vmul.f32 %v471, %v531
      %v552 = vld [vmem:[%s242] sm:$0x3]
      %vm553 = vcmask 293888
      %v555 = vsel %vm553, %v552, 0
      %vm557 = vcmask 1043456
      %v559 = vsel %vm557, %v548, 0
      %v562 = vsel %vm557, %v549, 0
      %v565 = vsel %vm557, %v550, 0
      %v568 = vsel %vm557, %v551, 0
      %570 = vmatprep.subr.mxu0 %v533
      %571 = vmatpush1.msra.mxu0 %v532
      %572 = vmatprep.subr.mxu0 %v537
      %573 = vmatpush1.msra.mxu0 %v536
      %574 = vmatprep.subr.mxu0 %v541
      %575 = vmatpush1.msra.mxu0 %v540
      %576 = vmatprep.subr.mxu0 %v545
      %577 = vmatpush1.msra.mxu0 %v544
      %578 = vmatprep.subr.mxu0 %v562
      %579 = vmatpush1.msra.mxu0 %v559
      %580 = vmatprep.subr.mxu0 0.0
      %581 = vmatpush1.msra.mxu0 0.0
      %582 = vmatprep.subr.mxu0 0.0
      %583 = vmatpush1.msra.mxu0 0.0
      %584 = vmatprep.subr.mxu0 0.0
      %585 = vmatpush1.msra.mxu0 0.0
      %586 = vmatprep.subr.mxu0 0.0
      %587 = vmatpush1.msra.mxu0 0.0
      %588 = vmatprep.subr.mxu0 0.0
      %589 = vmatpush1.msra.mxu0 0.0
      %590 = vmatprep.subr.mxu0 0.0
      %591 = vmatpush1.msra.mxu0 0.0
      %592 = vmatprep.subr.mxu0 0.0
      %593 = vmatpush1.msra.mxu0 0.0
      %594 = vmatprep.subr.mxu0 0.0
      %595 = vmatpush1.msra.mxu0 0.0
      %596 = vmatprep.subr.mxu0 0.0
      %597 = vmatpush1.msra.mxu0 0.0
      %598 = vmatprep.subr.mxu0 0.0
      %599 = vmatpush1.msra.mxu0 0.0
      %600 = vmatprep.subr.mxu0 0.0
      %601 = vmatpush1.msra.mxu0 0.0
      %602 = vmatprep.subr.mxu0 0.0
      %603 = vmatpush1.msra.mxu0 0.0
      %604 = vmatprep.subr.mxu0 0.0
      %605 = vmatpush1.msra.mxu0 0.0
      %606 = vmatprep.subr.mxu0 0.0
      %607 = vmatpush1.msra.mxu0 0.0
      %608 = vmatprep.subr.mxu0 0.0
      %609 = vmatpush1.msra.mxu0 0.0
      %610 = vmatprep.subr.mxu0 0.0
      %611 = vmatpush1.msra.mxu0 0.0
      %612 = vmatprep.subr.mxu0 0.0
      %613 = vmatpush1.msra.mxu0 0.0
      %614 = vmatprep.subr.mxu0 0.0
      %615 = vmatpush1.msra.mxu0 0.0
      %616 = vmatprep.subr.mxu0 0.0
      %617 = vmatpush1.msra.mxu0 0.0
      %618 = vmatprep.subr.mxu0 0.0
      %619 = vmatpush1.msra.mxu0 0.0
      %620 = vmatprep.subr.mxu0 0.0
      %621 = vmatpush1.msra.mxu0 0.0
      %622 = vmatprep.subr.mxu0 0.0
      %623 = vmatpush1.msra.mxu0 0.0
      %624 = vmatprep.subr.mxu0 0.0
      %625 = vmatpush1.msra.mxu0 0.0
      %626 = vmatprep.subr.mxu0 0.0
      %627 = vmatpush1.msra.mxu0 0.0
      %628 = vmatprep.subr.mxu0 0.0
      %629 = vmatpush1.msra.mxu0 0.0
      %630 = vmatprep.subr.mxu0 0.0
      %631 = vmatpush1.msra.mxu0 0.0
      %632 = vmatprep.subr.mxu0 0.0
      %633 = vmatpush1.msra.mxu0 0.0
      %634 = vmatprep.mubr.f32.mxu0 0.0
      %635 = vmatmul.mubr.f32.gmra.mrb[0].mxu0 %v555
      %v636 = vpop.f32.mrb[0].mxu0
      %v637 = vadd.f32 0.0, %v636
      %v638 = vpop.f32.mrb[0].mxu0
      %v639 = vadd.f32 0.0, %v638
      %640 = vdwg.mxu0
      %641 = vmatprep.subr.mxu0 %v535
      %642 = vmatpush1.msra.mxu0 %v534
      %643 = vmatprep.subr.mxu0 %v539
      %644 = vmatpush1.msra.mxu0 %v538
      %645 = vmatprep.subr.mxu0 %v543
      %646 = vmatpush1.msra.mxu0 %v542
      %647 = vmatprep.subr.mxu0 %v547
      %648 = vmatpush1.msra.mxu0 %v546
      %649 = vmatprep.subr.mxu0 %v568
      %650 = vmatpush1.msra.mxu0 %v565
      %651 = vmatprep.subr.mxu0 0.0
      %652 = vmatpush1.msra.mxu0 0.0
      %653 = vmatprep.subr.mxu0 0.0
      %654 = vmatpush1.msra.mxu0 0.0
      %655 = vmatprep.subr.mxu0 0.0
      %656 = vmatpush1.msra.mxu0 0.0
      %657 = vmatprep.subr.mxu0 0.0
      %658 = vmatpush1.msra.mxu0 0.0
      %659 = vmatprep.subr.mxu0 0.0
      %660 = vmatpush1.msra.mxu0 0.0
      %661 = vmatprep.subr.mxu0 0.0
      %662 = vmatpush1.msra.mxu0 0.0
      %663 = vmatprep.subr.mxu0 0.0
      %664 = vmatpush1.msra.mxu0 0.0
      %665 = vmatprep.subr.mxu0 0.0
      %666 = vmatpush1.msra.mxu0 0.0
      %667 = vmatprep.subr.mxu0 0.0
      %668 = vmatpush1.msra.mxu0 0.0
      %669 = vmatprep.subr.mxu0 0.0
      %670 = vmatpush1.msra.mxu0 0.0
      %671 = vmatprep.subr.mxu0 0.0
      %672 = vmatpush1.msra.mxu0 0.0
      %673 = vmatprep.subr.mxu0 0.0
      %674 = vmatpush1.msra.mxu0 0.0
      %675 = vmatprep.subr.mxu0 0.0
      %676 = vmatpush1.msra.mxu0 0.0
      %677 = vmatprep.subr.mxu0 0.0
      %678 = vmatpush1.msra.mxu0 0.0
      %679 = vmatprep.subr.mxu0 0.0
      %680 = vmatpush1.msra.mxu0 0.0
      %681 = vmatprep.subr.mxu0 0.0
      %682 = vmatpush1.msra.mxu0 0.0
      %683 = vmatprep.subr.mxu0 0.0
      %684 = vmatpush1.msra.mxu0 0.0
      %685 = vmatprep.subr.mxu0 0.0
      %686 = vmatpush1.msra.mxu0 0.0
      %687 = vmatprep.subr.mxu0 0.0
      %688 = vmatpush1.msra.mxu0 0.0
      %689 = vmatprep.subr.mxu0 0.0
      %690 = vmatpush1.msra.mxu0 0.0
      %691 = vmatprep.subr.mxu0 0.0
      %692 = vmatpush1.msra.mxu0 0.0
      %693 = vmatprep.subr.mxu0 0.0
      %694 = vmatpush1.msra.mxu0 0.0
      %695 = vmatprep.subr.mxu0 0.0
      %696 = vmatpush1.msra.mxu0 0.0
      %697 = vmatprep.subr.mxu0 0.0
      %698 = vmatpush1.msra.mxu0 0.0
      %699 = vmatprep.subr.mxu0 0.0
      %700 = vmatpush1.msra.mxu0 0.0
      %701 = vmatprep.subr.mxu0 0.0
      %702 = vmatpush1.msra.mxu0 0.0
      %703 = vmatprep.subr.mxu0 0.0
      %704 = vmatpush1.msra.mxu0 0.0
      %705 = vmatprep.mubr.f32.mxu0 0.0
      %706 = vmatmul.mubr.f32.gmra.mrb[0].mxu0 %v555
      %v707 = vpop.f32.mrb[0].mxu0
      %v708 = vadd.f32 0.0, %v707
      %v709 = vpop.f32.mrb[0].mxu0
      %v710 = vadd.f32 0.0, %v709
      %711 = vdwg.mxu0
      %v712 = vld [vmem:[%s246] sm:$0x3]
      %714 = vset.pattern.permute.xlu0 1
      %715 = vperm.xlu0 %714, %v712
      %v716 = vpop.permute.xlu0 %715
      %v718 = vmul.f32 %v716, %v269
      %v719 = vmul.f32 %v716, %v273
      %v720 = vmul.f32 %v716, %v277
      %v721 = vmul.f32 %v716, %v281
      %722 = vset.pattern.permute.xlu0 0
      %723 = vperm.xlu0 %722, %v712
      %v724 = vpop.permute.xlu0 %723
      %v726 = vadd.f32 %v724, %v718
      %v727 = vadd.f32 %v724, %v719
      %v728 = vadd.f32 %v724, %v720
      %v729 = vadd.f32 %v724, %v721
      %730 = vset.pattern.permute.xlu0 2
      %731 = vperm.xlu0 %730, %v712
      %v732 = vpop.permute.xlu0 %731
      %v734 = vmul.f32 %v732, %v335
      %v735 = vmul.f32 %v732, %v339
      %v736 = vmul.f32 %v732, %v343
      %v737 = vmul.f32 %v732, %v347
      %v738 = vadd.f32 %v726, %v734
      %v739 = vadd.f32 %v727, %v735
      %v740 = vadd.f32 %v728, %v736
      %v741 = vadd.f32 %v729, %v737
      %v742 = vld [vmem:[%s237] sm:$0xff]
      %v747 = vcombine.low %v637, %v639
      %v748 = vcombine.low %v708, %v710
      %v750 = vunpack.c.l.s4 1983009808
      %v751 = vunpack.c.0.s8 %v750
      %v752 = vlaneseq
      %v753 = vshrl.u32 %v752, 7
      %v754 = vsub.s32 %v751, %v753
      %v755 = vrot.slane %v747, %v754
      %v757 = vunpack.c.l.s4 1983009808
      %v758 = vunpack.c.0.s8 %v757
      %v759 = vlaneseq
      %v760 = vshrl.u32 %v759, 7
      %v761 = vsub.s32 %v758, %v760
      %v762 = vrot.slane %v748, %v761
      %v763 = vcombine.low %v755, %v762
      %v765 = vadd.f32 %v742, %v763
      %v770 = vcombine.low %v738, %v739
      %v771 = vcombine.low %v740, %v741
      %v773 = vunpack.c.l.s4 1983009808
      %v774 = vunpack.c.0.s8 %v773
      %v775 = vlaneseq
      %v776 = vshrl.u32 %v775, 7
      %v777 = vsub.s32 %v774, %v776
      %v778 = vrot.slane %v770, %v777
      %v780 = vunpack.c.l.s4 1983009808
      %v781 = vunpack.c.0.s8 %v780
      %v782 = vlaneseq
      %v783 = vshrl.u32 %v782, 7
      %v784 = vsub.s32 %v781, %v783
      %v785 = vrot.slane %v771, %v784
      %v786 = vcombine.low %v778, %v785
      %v788 = vadd.f32 %v765, %v786
      %v789 = vmul.f32 %v788, 2.0
      %v790 = vsub.f32 %v789, 1.0
      %791 = vst [vmem:[%s255] sm:$0xff] %v790
      %s792 = smul.u32 4, %s20
      %p793 = scmp.lt.s32.totalorder %s19, 1
      %s794 = scalar_select %p793, %s19, 1
      %p795 = scmp.lt.s32.totalorder %s792, 7
      %s796 = scalar_select %p795, %s792, 7
      %s797 = smul.addr %s794, 8
      %s798 = sadd.s32 %s796, %s797
      %s799 = smul.addr %s798, 2
      %s800 = scalar_lea.vmem %s4, %s799
      // Predicated region
      $region37: #{stn_tpn_forward.18} parent=35 // pred_check
        %p801 = pneg %p146
      $region38: #{stn_tpn_forward.18} parent=35 // pred_check_branch
        %803 = sbr.rel (%p801) target = $region40
      $region39: #{stn_tpn_forward.18} parent=35 // pred_region
        %s804 = smul.u32 4, %s20
      $region40: #{stn_tpn_forward.18} parent=35 // pred_fallthru
        _
    $region36: #{stn_tpn_forward.18} parent=5 // pred_fallthru
      _
    %p805 = scmp.le.s32.totalorder 2, %s10
    // Predicated region
    $region41: #{stn_tpn_forward.18} parent=5 // pred_check
      %p806 = pneg %p805
    $region42: #{stn_tpn_forward.18} parent=5 // pred_check_branch
      %808 = sbr.rel (%p806) target = $region44
    $region43: #{stn_tpn_forward.18} parent=5 // pred_region
      %s809 = ssub.s32 %s10, 2
      // Predicated region
      $region45: #{stn_tpn_forward.18} parent=43 // pred_check
        %p810 = pneg %p152
      $region46: #{stn_tpn_forward.18} parent=43 // pred_check_branch
        %812 = sbr.rel (%p810) target = $region48
      $region47: #{stn_tpn_forward.18} parent=43 // pred_region
        %s813 = smul.u32 4, %s22
        %p814 = scmp.lt.s32.totalorder %s21, 1
        %s815 = scalar_select %p814, %s21, 1
        %p816 = scmp.lt.s32.totalorder %s813, 7
        %s817 = scalar_select %p816, %s813, 7
        %s818 = smul.addr %s815, 8
        %s819 = sadd.s32 %s817, %s818
        %s820 = smul.addr %s819, 2
        %s821 = scalar_lea.vmem %s4, %s820
      $region48: #{stn_tpn_forward.18} parent=43 // pred_fallthru
        _
    $region44: #{stn_tpn_forward.18} parent=5 // pred_fallthru
      _
  $region6: #{stn_tpn_forward.18} parent=0 // loop_footer
    %s14 = sadd.s32 1, %s10
  $region7: #{stn_tpn_forward.18} parent=0 // loop_footer_branch
    %9 = sbr.rel target = $region3
  $region8: #{stn_tpn_forward.18} parent=0 // loop_exit
    _

// kernel: stn_tpn_forward.19
$region0: #{stn_tpn_forward.19}
  #allocation0 [shape = 'u32[]', space=smem, size = 0x4, offset = 0x4, fixed_abs, tag = 'smem constant byte address 0x4 - core index']
  #allocation1 [shape = 'u32[144,128]{1,0:T(1,128)}', space=vmem, size = 0x12000, scoped, tag = 'internal scratch']
  %s0 = inlined_call_operand.vmem [shape: f32[2,2,1024], index: 0, kind: input, shape index: {}]
  %s1 = inlined_call_operand.vmem [shape: f32[2,3,32,32], index: 1, kind: input, shape index: {}]
  %s2 = inlined_call_operand.vmem [shape: f32[2,3,1024], index: 2, kind: output, shape index: {}]
  %s3 = sld [smem:[#allocation0]]
  $region41: #{stn_tpn_forward.19} parent=0
    _
  %s5 = ssub.s32 1, %s3
  %s6 = scalar_select 0, %s5, %s3
  loop: start=0, step=1, limit=6
  $region2: #{stn_tpn_forward.19} parent=0 // loop_pre_header
    _
  $region3: #{stn_tpn_forward.19} parent=0 // loop_header
    %s8 = sphi 0, %s12
    %p9 = scmp.ge.s32.totalorder %s8, 6
    %s15 = sphi 0, %s27
    %s16 = sphi 0, %s23
    %s17 = sphi 0, %s15
    %s18 = sphi 0, %s16
    %s19 = sphi 0, %s17
    %s20 = sphi 0, %s18
    %s32 = sphi 0, %s34
    %s35 = sphi 0, %s32
    %s36 = sphi 0, %s35
    %s52 = sphi 0, %s36
    %s58 = sphi 0, %s60
    %s61 = sphi 0, %s58
    %s62 = sphi 0, %s61
    %s78 = sphi 0, %s62
    %s86 = sphi 0, %s88
    %s89 = sphi 0, %s86
    %s90 = sphi 0, %s89
    %s106 = sphi 0, %s90
  $region4: #{stn_tpn_forward.19} parent=0 // loop_header_branch
    %11 = sbr.rel (%p9) target = $region8
  $region5: #{stn_tpn_forward.19} parent=0 // loop_body
    %s13 = ssub.s32 %s8, 1
    %s14 = ssub.s32 %s8, 2
    %s21 = sadd.s32 1, %s16
    %p22 = scmp.ge.s32.totalorder %s21, 2
    %s23 = scalar_select %p22, 0, %s21
    %s24 = sadd.s32 1, %s15
    %s25 = scalar_select %p22, %s24, %s15
    %p26 = scmp.ge.s32.totalorder %s25, 2
    %s27 = scalar_select %p26, 0, %s25
    %s28 = ssub.s32 %s15, %s27
    %s29 = ssub.s32 %s16, %s23
    %s30 = sor.u32 %s28, %s29
    %p31 = scmp.eq.s32.totalorder %s30, 0
    %s33 = sadd.s32 %s32, 1
    %s34 = scalar_select %p31, %s32, %s33
    %p37 = pneg %p31
    %p38 = scmp.eq.s32.totalorder %s8, 3
    %p39 = por %p37, %p38
    %p40 = scmp.ne.s32.totalorder %s32, %s35
    %p41 = scmp.eq.s32.totalorder %s8, 0
    %p42 = por %p40, %p41
    %p43 = scmp.ne.s32.totalorder %s32, %s35
    %p44 = scmp.eq.s32.totalorder %s13, 3
    %p45 = por %p43, %p44
    %p46 = scmp.ne.s32.totalorder %s35, %s36
    %p47 = scmp.eq.s32.totalorder %s13, 0
    %p48 = por %p46, %p47
    %p49 = scmp.ne.s32.totalorder %s35, %s36
    %p50 = scmp.eq.s32.totalorder %s14, 3
    %p51 = por %p49, %p50
    %p53 = scmp.ne.s32.totalorder %s36, %s52
    %p54 = scmp.eq.s32.totalorder %s14, 0
    %p55 = por %p53, %p54
    %s56 = ssub.s32 %s15, %s27
    %p57 = scmp.eq.s32.totalorder %s56, 0
    %s59 = sadd.s32 %s58, 1
    %s60 = scalar_select %p57, %s58, %s59
    %p63 = pneg %p57
    %p64 = scmp.eq.s32.totalorder %s8, 3
    %p65 = por %p63, %p64
    %p66 = scmp.ne.s32.totalorder %s58, %s61
    %p67 = scmp.eq.s32.totalorder %s8, 0
    %p68 = por %p66, %p67
    %p69 = scmp.ne.s32.totalorder %s58, %s61
    %p70 = scmp.eq.s32.totalorder %s13, 3
    %p71 = por %p69, %p70
    %p72 = scmp.ne.s32.totalorder %s61, %s62
    %p73 = scmp.eq.s32.totalorder %s13, 0
    %p74 = por %p72, %p73
    %p75 = scmp.ne.s32.totalorder %s61, %s62
    %p76 = scmp.eq.s32.totalorder %s14, 3
    %p77 = por %p75, %p76
    %p79 = scmp.ne.s32.totalorder %s62, %s78
    %p80 = scmp.eq.s32.totalorder %s14, 0
    %p81 = por %p79, %p80
    %s82 = ssub.s32 %s15, %s27
    %s83 = ssub.s32 %s16, %s23
    %s84 = sor.u32 %s82, %s83
    %p85 = scmp.eq.s32.totalorder %s84, 0
    %s87 = sadd.s32 %s86, 1
    %s88 = scalar_select %p85, %s86, %s87
    %p91 = pneg %p85
    %p92 = scmp.eq.s32.totalorder %s8, 3
    %p93 = por %p91, %p92
    %p94 = scmp.ne.s32.totalorder %s86, %s89
    %p95 = scmp.eq.s32.totalorder %s8, 0
    %p96 = por %p94, %p95
    %p97 = scmp.ne.s32.totalorder %s86, %s89
    %p98 = scmp.eq.s32.totalorder %s13, 3
    %p99 = por %p97, %p98
    %p100 = scmp.ne.s32.totalorder %s89, %s90
    %p101 = scmp.eq.s32.totalorder %s13, 0
    %p102 = por %p100, %p101
    %p103 = scmp.ne.s32.totalorder %s89, %s90
    %p104 = scmp.eq.s32.totalorder %s14, 3
    %p105 = por %p103, %p104
    %p107 = scmp.ne.s32.totalorder %s90, %s106
    %p108 = scmp.eq.s32.totalorder %s14, 0
    %p109 = por %p107, %p108
    %p110 = scmp.le.s32.totalorder 1, %s8
    %p111 = scmp.lt.s32.totalorder %s8, 5
    %p112 = pnand %p110, %p111
    %p113 = pneg %p112
    // Predicated region
    $region9: #{stn_tpn_forward.19} parent=5 // pred_check
      _
    $region10: #{stn_tpn_forward.19} parent=5 // pred_check_branch
      %115 = sbr.rel (%p112) target = $region12
    $region11: #{stn_tpn_forward.19} parent=5 // pred_region
      %s116 = ssub.s32 %s8, 1
    $region12: #{stn_tpn_forward.19} parent=5 // pred_fallthru
      _
    %p117 = scmp.lt.s32.totalorder %s8, 4
    // Predicated region
    $region13: #{stn_tpn_forward.19} parent=5 // pred_check
      %p118 = pneg %p117
    $region14: #{stn_tpn_forward.19} parent=5 // pred_check_branch
      %120 = sbr.rel (%p118) target = $region16
    $region15: #{stn_tpn_forward.19} parent=5 // pred_region
      // Predicated region
      $region17: #{stn_tpn_forward.19} parent=15 // pred_check
        %p121 = pneg %p42
      $region18: #{stn_tpn_forward.19} parent=15 // pred_check_branch
        %123 = sbr.rel (%p121) target = $region20
      $region19: #{stn_tpn_forward.19} parent=15 // pred_region
        %s124 = smul.u32 4, %s16
        %p125 = scmp.lt.s32.totalorder %s15, 1
        %s126 = scalar_select %p125, %s15, 1
        %p127 = scmp.lt.s32.totalorder %s124, 7
        %s128 = scalar_select %p127, %s124, 7
        %s129 = smul.addr %s126, 8
        %s130 = sadd.s32 %s128, %s129
        %s131 = smul.addr %s130, 2
        %s132 = scalar_lea.vmem %s0, %s131
        %s133 = smul.u32 4, %s16
      $region20: #{stn_tpn_forward.19} parent=15 // pred_fallthru
        _
      // Predicated region
      $region21: #{stn_tpn_forward.19} parent=15 // pred_check
        %p134 = pneg %p68
      $region22: #{stn_tpn_forward.19} parent=15 // pred_check_branch
        %136 = sbr.rel (%p134) target = $region24
      $region23: #{stn_tpn_forward.19} parent=15 // pred_region
        %p137 = scmp.lt.s32.totalorder %s15, 1
        %s138 = scalar_select %p137, %s15, 1
        %s139 = smul.addr %s138, 12
        %s140 = smul.addr %s139, 8
        %s141 = scalar_lea.vmem %s1, %s140
      $region24: #{stn_tpn_forward.19} parent=15 // pred_fallthru
        _
    $region16: #{stn_tpn_forward.19} parent=5 // pred_fallthru
      _
    %p142 = scmp.le.s32.totalorder 1, %s8
    %p143 = scmp.lt.s32.totalorder %s8, 5
    %p144 = pnand %p142, %p143
    %p145 = pneg %p144
    // Predicated region
    $region25: #{stn_tpn_forward.19} parent=5 // pred_check
      _
    $region26: #{stn_tpn_forward.19} parent=5 // pred_check_branch
      %147 = sbr.rel (%p144) target = $region28
    $region27: #{stn_tpn_forward.19} parent=5 // pred_region
      %s148 = ssub.s32 %s8, 1
      %s149 = smul.u32 4, %s18
      %p150 = scmp.lt.s32.totalorder %s17, 1
      %s151 = scalar_select %p150, %s17, 1
      %p152 = scmp.lt.s32.totalorder %s149, 7
      %s153 = scalar_select %p152, %s149, 7
      %s154 = smul.addr %s151, 8
      %s155 = sadd.s32 %s153, %s154
      %s156 = smul.addr %s155, 2
      %s157 = scalar_lea.vmem %s0, %s156
      %p158 = pneg %p48
      %p159 = pneg %p45
      %p160 = scmp.lt.s32.totalorder %s17, 1
      %s161 = scalar_select %p160, %s17, 1
      %s162 = smul.addr %s161, 12
      %s163 = smul.addr %s162, 8
      %s164 = scalar_lea.vmem %s1, %s163
      %p165 = pneg %p74
      %p166 = pneg %p71
      %p167 = pneg %p102
      %p168 = pneg %p99
      %s169 = smul.u32 4, %s18
      %p170 = scmp.lt.s32.totalorder %s17, 1
      %s171 = scalar_select %p170, %s17, 1
      %p172 = scmp.lt.s32.totalorder %s169, 7
      %s173 = scalar_select %p172, %s169, 7
      %s174 = smul.addr %s171, 8
      %s175 = sadd.s32 %s173, %s174
      %s176 = smul.addr %s175, 4
      %s177 = scalar_lea.vmem %s2, %s176
      %s178 = smul.u32 4, %s18
      %p179 = scmp.lt.s32.totalorder %s17, 1
      %s180 = scalar_select %p179, %s17, 1
      %p181 = scmp.lt.s32.totalorder %s178, 7
      %s182 = scalar_select %p181, %s178, 7
      %s183 = smul.addr %s180, 8
      %s184 = sadd.s32 %s182, %s183
      %s185 = smul.addr %s184, 2
      %s186 = scalar_lea.vmem %s0, %s185
      %s187 = smul.u32 4, %s18
      %p188 = scmp.lt.s32.totalorder %s17, 1
      %s189 = scalar_select %p188, %s17, 1
      %s190 = smul.addr %s189, 12
      %s191 = smul.addr %s190, 8
      %s192 = scalar_lea.vmem %s1, %s191
      %s193 = smul.u32 4, %s18
      %p194 = scmp.lt.s32.totalorder %s17, 1
      %s195 = scalar_select %p194, %s17, 1
      %p196 = scmp.lt.s32.totalorder %s193, 7
      %s197 = scalar_select %p196, %s193, 7
      %s198 = smul.addr %s195, 8
      %s199 = sadd.s32 %s197, %s198
      %s200 = smul.addr %s199, 4
      %s201 = scalar_lea.vmem %s2, %s200
      %s202 = smul.u32 4, %s18
      %v203 = vld [vmem:[%s186] sm:$0xff]
      %v204 = vadd.f32 %v203, 1.0
      %v205 = vmul.f32 %v204, 32.0
      %v206 = vsub.f32 %v205, 1.0
      %v207 = vmul.f32 %v206, 0.5
      %v208 = vfloor.f32 %v207
      %v209 = vcvt.f32.s32.to.zero.pseudo %v208
      %v210 = vsub.f32 %v207, %v208
      %v211 = vsub.f32 1.0, %v210
      %v212 = vlaneseq
      %v213 = vshrl.u32 %v212, 7
      %v214 = vadd.s32 %v213, 8
      %v215 = vadd.s32 %v213, 16
      %v216 = vadd.s32 %v213, 24
      %v217 = vlaneseq
      %v218 = vshrl.u32 %v217, 7
      %v219 = vsub.s32 1, %v218
      %v220 = vrot.slane %v209, %v219
      %v221 = vlaneseq
      %v222 = vshrl.u32 %v221, 7
      %v223 = vsub.s32 3, %v222
      %v224 = vrot.slane %v209, %v223
      %v225 = vlaneseq
      %v226 = vshrl.u32 %v225, 7
      %v227 = vsub.s32 5, %v226
      %v228 = vrot.slane %v209, %v227
      %v229 = vlaneseq
      %v230 = vshrl.u32 %v229, 7
      %v231 = vsub.s32 7, %v230
      %v232 = vrot.slane %v209, %v231
      %v233 = vlaneseq
      %v234 = vshrl.u32 %v233, 7
      %v235 = vsub.s32 1, %v234
      %v236 = vrot.slane %v220, %v235
      %v237 = vlaneseq
      %v238 = vshrl.u32 %v237, 7
      %v239 = vsub.s32 1, %v238
      %v240 = vrot.slane %v224, %v239
      %v241 = vlaneseq
      %v242 = vshrl.u32 %v241, 7
      %v243 = vsub.s32 1, %v242
      %v244 = vrot.slane %v228, %v243
      %v245 = vlaneseq
      %v246 = vshrl.u32 %v245, 7
      %v247 = vsub.s32 1, %v246
      %v248 = vrot.slane %v232, %v247
      %vm249 = vcmp.eq.s32.totalorder %v213, %v236
      %vm250 = vcmp.eq.s32.totalorder %v213, %v240
      %vm251 = vcmp.eq.s32.totalorder %v213, %v244
      %vm252 = vcmp.eq.s32.totalorder %v213, %v248
      %vm253 = vcmp.eq.s32.totalorder %v214, %v236
      %vm254 = vcmp.eq.s32.totalorder %v214, %v240
      %vm255 = vcmp.eq.s32.totalorder %v214, %v244
      %vm256 = vcmp.eq.s32.totalorder %v214, %v248
      %vm257 = vcmp.eq.s32.totalorder %v215, %v236
      %vm258 = vcmp.eq.s32.totalorder %v215, %v240
      %vm259 = vcmp.eq.s32.totalorder %v215, %v244
      %vm260 = vcmp.eq.s32.totalorder %v215, %v248
      %vm261 = vcmp.eq.s32.totalorder %v216, %v236
      %vm262 = vcmp.eq.s32.totalorder %v216, %v240
      %vm263 = vcmp.eq.s32.totalorder %v216, %v244
      %vm264 = vcmp.eq.s32.totalorder %v216, %v248
      %v266 = vlaneseq
      %v267 = vshrl.u32 %v266, 7
      %v268 = vsub.s32 1, %v267
      %v269 = vrot.slane %v211, %v268
      %v270 = vlaneseq
      %v271 = vshrl.u32 %v270, 7
      %v272 = vsub.s32 3, %v271
      %v273 = vrot.slane %v211, %v272
      %v274 = vlaneseq
      %v275 = vshrl.u32 %v274, 7
      %v276 = vsub.s32 5, %v275
      %v277 = vrot.slane %v211, %v276
      %v278 = vlaneseq
      %v279 = vshrl.u32 %v278, 7
      %v280 = vsub.s32 7, %v279
      %v281 = vrot.slane %v211, %v280
      %v286 = vlaneseq
      %v287 = vshrl.u32 %v286, 7
      %v288 = vsub.s32 1, %v287
      %v289 = vrot.slane %v269, %v288
      %v290 = vlaneseq
      %v291 = vshrl.u32 %v290, 7
      %v292 = vsub.s32 1, %v291
      %v293 = vrot.slane %v273, %v292
      %v294 = vlaneseq
      %v295 = vshrl.u32 %v294, 7
      %v296 = vsub.s32 1, %v295
      %v297 = vrot.slane %v277, %v296
      %v298 = vlaneseq
      %v299 = vshrl.u32 %v298, 7
      %v300 = vsub.s32 1, %v299
      %v301 = vrot.slane %v281, %v300
      %v302 = vsel %vm249, %v289, 0.0
      %v303 = vsel %vm250, %v293, 0.0
      %v304 = vsel %vm251, %v297, 0.0
      %v305 = vsel %vm252, %v301, 0.0
      %v306 = vsel %vm253, %v289, 0.0
      %v307 = vsel %vm254, %v293, 0.0
      %v308 = vsel %vm255, %v297, 0.0
      %v309 = vsel %vm256, %v301, 0.0
      %v310 = vsel %vm257, %v289, 0.0
      %v311 = vsel %vm258, %v293, 0.0
      %v312 = vsel %vm259, %v297, 0.0
      %v313 = vsel %vm260, %v301, 0.0
      %v314 = vsel %vm261, %v289, 0.0
      %v315 = vsel %vm262, %v293, 0.0
      %v316 = vsel %vm263, %v297, 0.0
      %v317 = vsel %vm264, %v301, 0.0
      %v318 = vadd.s32 %v209, 1
      %v319 = vlaneseq
      %v320 = vshrl.u32 %v319, 7
      %v321 = vsub.s32 1, %v320
      %v322 = vrot.slane %v318, %v321
      %v323 = vlaneseq
      %v324 = vshrl.u32 %v323, 7
      %v325 = vsub.s32 3, %v324
      %v326 = vrot.slane %v318, %v325
      %v327 = vlaneseq
      %v328 = vshrl.u32 %v327, 7
      %v329 = vsub.s32 5, %v328
      %v330 = vrot.slane %v318, %v329
      %v331 = vlaneseq
      %v332 = vshrl.u32 %v331, 7
      %v333 = vsub.s32 7, %v332
      %v334 = vrot.slane %v318, %v333
      %v335 = vlaneseq
      %v336 = vshrl.u32 %v335, 7
      %v337 = vsub.s32 1, %v336
      %v338 = vrot.slane %v322, %v337
      %v339 = vlaneseq
      %v340 = vshrl.u32 %v339, 7
      %v341 = vsub.s32 1, %v340
      %v342 = vrot.slane %v326, %v341
      %v343 = vlaneseq
      %v344 = vshrl.u32 %v343, 7
      %v345 = vsub.s32 1, %v344
      %v346 = vrot.slane %v330, %v345
      %v347 = vlaneseq
      %v348 = vshrl.u32 %v347, 7
      %v349 = vsub.s32 1, %v348
      %v350 = vrot.slane %v334, %v349
      %vm351 = vcmp.eq.s32.totalorder %v213, %v338
      %vm352 = vcmp.eq.s32.totalorder %v213, %v342
      %vm353 = vcmp.eq.s32.totalorder %v213, %v346
      %vm354 = vcmp.eq.s32.totalorder %v213, %v350
      %vm355 = vcmp.eq.s32.totalorder %v214, %v338
      %vm356 = vcmp.eq.s32.totalorder %v214, %v342
      %vm357 = vcmp.eq.s32.totalorder %v214, %v346
      %vm358 = vcmp.eq.s32.totalorder %v214, %v350
      %vm359 = vcmp.eq.s32.totalorder %v215, %v338
      %vm360 = vcmp.eq.s32.totalorder %v215, %v342
      %vm361 = vcmp.eq.s32.totalorder %v215, %v346
      %vm362 = vcmp.eq.s32.totalorder %v215, %v350
      %vm363 = vcmp.eq.s32.totalorder %v216, %v338
      %vm364 = vcmp.eq.s32.totalorder %v216, %v342
      %vm365 = vcmp.eq.s32.totalorder %v216, %v346
      %vm366 = vcmp.eq.s32.totalorder %v216, %v350
      %v368 = vlaneseq
      %v369 = vshrl.u32 %v368, 7
      %v370 = vsub.s32 1, %v369
      %v371 = vrot.slane %v210, %v370
      %v372 = vlaneseq
      %v373 = vshrl.u32 %v372, 7
      %v374 = vsub.s32 3, %v373
      %v375 = vrot.slane %v210, %v374
      %v376 = vlaneseq
      %v377 = vshrl.u32 %v376, 7
      %v378 = vsub.s32 5, %v377
      %v379 = vrot.slane %v210, %v378
      %v380 = vlaneseq
      %v381 = vshrl.u32 %v380, 7
      %v382 = vsub.s32 7, %v381
      %v383 = vrot.slane %v210, %v382
      %v388 = vlaneseq
      %v389 = vshrl.u32 %v388, 7
      %v390 = vsub.s32 1, %v389
      %v391 = vrot.slane %v371, %v390
      %v392 = vlaneseq
      %v393 = vshrl.u32 %v392, 7
      %v394 = vsub.s32 1, %v393
      %v395 = vrot.slane %v375, %v394
      %v396 = vlaneseq
      %v397 = vshrl.u32 %v396, 7
      %v398 = vsub.s32 1, %v397
      %v399 = vrot.slane %v379, %v398
      %v400 = vlaneseq
      %v401 = vshrl.u32 %v400, 7
      %v402 = vsub.s32 1, %v401
      %v403 = vrot.slane %v383, %v402
      %v404 = vsel %vm351, %v391, 0.0
      %v405 = vsel %vm352, %v395, 0.0
      %v406 = vsel %vm353, %v399, 0.0
      %v407 = vsel %vm354, %v403, 0.0
      %v408 = vsel %vm355, %v391, 0.0
      %v409 = vsel %vm356, %v395, 0.0
      %v410 = vsel %vm357, %v399, 0.0
      %v411 = vsel %vm358, %v403, 0.0
      %v412 = vsel %vm359, %v391, 0.0
      %v413 = vsel %vm360, %v395, 0.0
      %v414 = vsel %vm361, %v399, 0.0
      %v415 = vsel %vm362, %v403, 0.0
      %v416 = vsel %vm363, %v391, 0.0
      %v417 = vsel %vm364, %v395, 0.0
      %v418 = vsel %vm365, %v399, 0.0
      %v419 = vsel %vm366, %v403, 0.0
      %v420 = vadd.f32 %v302, %v404
      %v421 = vadd.f32 %v303, %v405
      %v422 = vadd.f32 %v304, %v406
      %v423 = vadd.f32 %v305, %v407
      %v424 = vadd.f32 %v306, %v408
      %v425 = vadd.f32 %v307, %v409
      %v426 = vadd.f32 %v308, %v410
      %v427 = vadd.f32 %v309, %v411
      %v428 = vadd.f32 %v310, %v412
      %v429 = vadd.f32 %v311, %v413
      %v430 = vadd.f32 %v312, %v414
      %v431 = vadd.f32 %v313, %v415
      %v432 = vadd.f32 %v314, %v416
      %v433 = vadd.f32 %v315, %v417
      %v434 = vadd.f32 %v316, %v418
      %v435 = vadd.f32 %v317, %v419
      %v436 = vlaneseq
      %v437 = vshrl.u32 %v436, 7
      %v438 = vsub.s32 0, %v437
      %v439 = vrot.slane %v209, %v438
      %v440 = vlaneseq
      %v441 = vshrl.u32 %v440, 7
      %v442 = vsub.s32 2, %v441
      %v443 = vrot.slane %v209, %v442
      %v444 = vlaneseq
      %v445 = vshrl.u32 %v444, 7
      %v446 = vsub.s32 4, %v445
      %v447 = vrot.slane %v209, %v446
      %v448 = vlaneseq
      %v449 = vshrl.u32 %v448, 7
      %v450 = vsub.s32 6, %v449
      %v451 = vrot.slane %v209, %v450
      %v452 = vlaneseq
      %v453 = vshrl.u32 %v452, 7
      %v454 = vsub.s32 0, %v453
      %v455 = vrot.slane %v439, %v454
      %v456 = vlaneseq
      %v457 = vshrl.u32 %v456, 7
      %v458 = vsub.s32 0, %v457
      %v459 = vrot.slane %v443, %v458
      %v460 = vlaneseq
      %v461 = vshrl.u32 %v460, 7
      %v462 = vsub.s32 0, %v461
      %v463 = vrot.slane %v447, %v462
      %v464 = vlaneseq
      %v465 = vshrl.u32 %v464, 7
      %v466 = vsub.s32 0, %v465
      %v467 = vrot.slane %v451, %v466
      %vm468 = vcmp.eq.s32.totalorder %v213, %v455
      %vm469 = vcmp.eq.s32.totalorder %v213, %v459
      %vm470 = vcmp.eq.s32.totalorder %v213, %v463
      %vm471 = vcmp.eq.s32.totalorder %v213, %v467
      %vm472 = vcmp.eq.s32.totalorder %v214, %v455
      %vm473 = vcmp.eq.s32.totalorder %v214, %v459
      %vm474 = vcmp.eq.s32.totalorder %v214, %v463
      %vm475 = vcmp.eq.s32.totalorder %v214, %v467
      %vm476 = vcmp.eq.s32.totalorder %v215, %v455
      %vm477 = vcmp.eq.s32.totalorder %v215, %v459
      %vm478 = vcmp.eq.s32.totalorder %v215, %v463
      %vm479 = vcmp.eq.s32.totalorder %v215, %v467
      %vm480 = vcmp.eq.s32.totalorder %v216, %v455
      %vm481 = vcmp.eq.s32.totalorder %v216, %v459
      %vm482 = vcmp.eq.s32.totalorder %v216, %v463
      %vm483 = vcmp.eq.s32.totalorder %v216, %v467
      %v484 = vlaneseq
      %v485 = vshrl.u32 %v484, 7
      %v486 = vsub.s32 0, %v485
      %v487 = vrot.slane %v211, %v486
      %v488 = vlaneseq
      %v489 = vshrl.u32 %v488, 7
      %v490 = vsub.s32 2, %v489
      %v491 = vrot.slane %v211, %v490
      %v492 = vlaneseq
      %v493 = vshrl.u32 %v492, 7
      %v494 = vsub.s32 4, %v493
      %v495 = vrot.slane %v211, %v494
      %v496 = vlaneseq
      %v497 = vshrl.u32 %v496, 7
      %v498 = vsub.s32 6, %v497
      %v499 = vrot.slane %v211, %v498
      %v504 = vlaneseq
      %v505 = vshrl.u32 %v504, 7
      %v506 = vsub.s32 0, %v505
      %v507 = vrot.slane %v487, %v506
      %v508 = vlaneseq
      %v509 = vshrl.u32 %v508, 7
      %v510 = vsub.s32 0, %v509
      %v511 = vrot.slane %v491, %v510
      %v512 = vlaneseq
      %v513 = vshrl.u32 %v512, 7
      %v514 = vsub.s32 0, %v513
      %v515 = vrot.slane %v495, %v514
      %v516 = vlaneseq
      %v517 = vshrl.u32 %v516, 7
      %v518 = vsub.s32 0, %v517
      %v519 = vrot.slane %v499, %v518
      %v520 = vsel %vm468, %v507, 0.0
      %v521 = vsel %vm469, %v511, 0.0
      %v522 = vsel %vm470, %v515, 0.0
      %v523 = vsel %vm471, %v519, 0.0
      %v524 = vsel %vm472, %v507, 0.0
      %v525 = vsel %vm473, %v511, 0.0
      %v526 = vsel %vm474, %v515, 0.0
      %v527 = vsel %vm475, %v519, 0.0
      %v528 = vsel %vm476, %v507, 0.0
      %v529 = vsel %vm477, %v511, 0.0
      %v530 = vsel %vm478, %v515, 0.0
      %v531 = vsel %vm479, %v519, 0.0
      %v532 = vsel %vm480, %v507, 0.0
      %v533 = vsel %vm481, %v511, 0.0
      %v534 = vsel %vm482, %v515, 0.0
      %v535 = vsel %vm483, %v519, 0.0
      %v536 = vlaneseq
      %v537 = vshrl.u32 %v536, 7
      %v538 = vsub.s32 0, %v537
      %v539 = vrot.slane %v318, %v538
      %v540 = vlaneseq
      %v541 = vshrl.u32 %v540, 7
      %v542 = vsub.s32 2, %v541
      %v543 = vrot.slane %v318, %v542
      %v544 = vlaneseq
      %v545 = vshrl.u32 %v544, 7
      %v546 = vsub.s32 4, %v545
      %v547 = vrot.slane %v318, %v546
      %v548 = vlaneseq
      %v549 = vshrl.u32 %v548, 7
      %v550 = vsub.s32 6, %v549
      %v551 = vrot.slane %v318, %v550
      %v552 = vlaneseq
      %v553 = vshrl.u32 %v552, 7
      %v554 = vsub.s32 0, %v553
      %v555 = vrot.slane %v539, %v554
      %v556 = vlaneseq
      %v557 = vshrl.u32 %v556, 7
      %v558 = vsub.s32 0, %v557
      %v559 = vrot.slane %v543, %v558
      %v560 = vlaneseq
      %v561 = vshrl.u32 %v560, 7
      %v562 = vsub.s32 0, %v561
      %v563 = vrot.slane %v547, %v562
      %v564 = vlaneseq
      %v565 = vshrl.u32 %v564, 7
      %v566 = vsub.s32 0, %v565
      %v567 = vrot.slane %v551, %v566
      %vm568 = vcmp.eq.s32.totalorder %v213, %v555
      %vm569 = vcmp.eq.s32.totalorder %v213, %v559
      %vm570 = vcmp.eq.s32.totalorder %v213, %v563
      %vm571 = vcmp.eq.s32.totalorder %v213, %v567
      %vm572 = vcmp.eq.s32.totalorder %v214, %v555
      %vm573 = vcmp.eq.s32.totalorder %v214, %v559
      %vm574 = vcmp.eq.s32.totalorder %v214, %v563
      %vm575 = vcmp.eq.s32.totalorder %v214, %v567
      %vm576 = vcmp.eq.s32.totalorder %v215, %v555
      %vm577 = vcmp.eq.s32.totalorder %v215, %v559
      %vm578 = vcmp.eq.s32.totalorder %v215, %v563
      %vm579 = vcmp.eq.s32.totalorder %v215, %v567
      %vm580 = vcmp.eq.s32.totalorder %v216, %v555
      %vm581 = vcmp.eq.s32.totalorder %v216, %v559
      %vm582 = vcmp.eq.s32.totalorder %v216, %v563
      %vm583 = vcmp.eq.s32.totalorder %v216, %v567
      %v584 = vlaneseq
      %v585 = vshrl.u32 %v584, 7
      %v586 = vsub.s32 0, %v585
      %v587 = vrot.slane %v210, %v586
      %v588 = vlaneseq
      %v589 = vshrl.u32 %v588, 7
      %v590 = vsub.s32 2, %v589
      %v591 = vrot.slane %v210, %v590
      %v592 = vlaneseq
      %v593 = vshrl.u32 %v592, 7
      %v594 = vsub.s32 4, %v593
      %v595 = vrot.slane %v210, %v594
      %v596 = vlaneseq
      %v597 = vshrl.u32 %v596, 7
      %v598 = vsub.s32 6, %v597
      %v599 = vrot.slane %v210, %v598
      %v604 = vlaneseq
      %v605 = vshrl.u32 %v604, 7
      %v606 = vsub.s32 0, %v605
      %v607 = vrot.slane %v587, %v606
      %v608 = vlaneseq
      %v609 = vshrl.u32 %v608, 7
      %v610 = vsub.s32 0, %v609
      %v611 = vrot.slane %v591, %v610
      %v612 = vlaneseq
      %v613 = vshrl.u32 %v612, 7
      %v614 = vsub.s32 0, %v613
      %v615 = vrot.slane %v595, %v614
      %v616 = vlaneseq
      %v617 = vshrl.u32 %v616, 7
      %v618 = vsub.s32 0, %v617
      %v619 = vrot.slane %v599, %v618
      %v620 = vsel %vm568, %v607, 0.0
      %v621 = vsel %vm569, %v611, 0.0
      %v622 = vsel %vm570, %v615, 0.0
      %v623 = vsel %vm571, %v619, 0.0
      %v624 = vsel %vm572, %v607, 0.0
      %v625 = vsel %vm573, %v611, 0.0
      %v626 = vsel %vm574, %v615, 0.0
      %v627 = vsel %vm575, %v619, 0.0
      %v628 = vsel %vm576, %v607, 0.0
      %v629 = vsel %vm577, %v611, 0.0
      %v630 = vsel %vm578, %v615, 0.0
      %v631 = vsel %vm579, %v619, 0.0
      %v632 = vsel %vm580, %v607, 0.0
      %v633 = vsel %vm581, %v611, 0.0
      %v634 = vsel %vm582, %v615, 0.0
      %v635 = vsel %vm583, %v619, 0.0
      %v636 = vadd.f32 %v520, %v620
      %v637 = vadd.f32 %v521, %v621
      %v638 = vadd.f32 %v522, %v622
      %v639 = vadd.f32 %v523, %v623
      %v640 = vadd.f32 %v524, %v624
      %v641 = vadd.f32 %v525, %v625
      %v642 = vadd.f32 %v526, %v626
      %v643 = vadd.f32 %v527, %v627
      %v644 = vadd.f32 %v528, %v628
      %v645 = vadd.f32 %v529, %v629
      %v646 = vadd.f32 %v530, %v630
      %v647 = vadd.f32 %v531, %v631
      %v648 = vadd.f32 %v532, %v632
      %v649 = vadd.f32 %v533, %v633
      %v650 = vadd.f32 %v534, %v634
      %v651 = vadd.f32 %v535, %v635
      %v652 = vld [vmem:[%s192] sm:$0xff]
      %v653 = vld [vmem:[%s192 + $0x8] sm:$0xff]
      %v654 = vld [vmem:[%s192 + $0x10] sm:$0xff]
      %v655 = vld [vmem:[%s192 + $0x18] sm:$0xff]
      %v656 = vld [vmem:[%s192 + $0x20] sm:$0xff]
      %v657 = vld [vmem:[%s192 + $0x28] sm:$0xff]
      %v658 = vld [vmem:[%s192 + $0x30] sm:$0xff]
      %v659 = vld [vmem:[%s192 + $0x38] sm:$0xff]
      %v660 = vld [vmem:[%s192 + $0x40] sm:$0xff]
      %v661 = vld [vmem:[%s192 + $0x48] sm:$0xff]
      %v662 = vld [vmem:[%s192 + $0x50] sm:$0xff]
      %v663 = vld [vmem:[%s192 + $0x58] sm:$0xff]
      %vm664 = vcmask 261120
      %v666 = vsel %vm664, %v652, 0
      %v669 = vsel %vm664, %v653, 0
      %v672 = vsel %vm664, %v654, 0
      %v675 = vsel %vm664, %v655, 0
      %677 = vmatprep.subr.mxu0 %v421
      %678 = vmatpush1.msra.mxu0 %v420
      %679 = vmatprep.subr.mxu0 %v425
      %680 = vmatpush1.msra.mxu0 %v424
      %681 = vmatprep.subr.mxu0 %v429
      %682 = vmatpush1.msra.mxu0 %v428
      %683 = vmatprep.subr.mxu0 %v433
      %684 = vmatpush1.msra.mxu0 %v432
      %685 = vmatprep.subr.mxu0 0.0
      %686 = vmatpush1.msra.mxu0 0.0
      %687 = vmatprep.subr.mxu0 0.0
      %688 = vmatpush1.msra.mxu0 0.0
      %689 = vmatprep.subr.mxu0 0.0
      %690 = vmatpush1.msra.mxu0 0.0
      %691 = vmatprep.subr.mxu0 0.0
      %692 = vmatpush1.msra.mxu0 0.0
      %693 = vmatprep.subr.mxu0 0.0
      %694 = vmatpush1.msra.mxu0 0.0
      %695 = vmatprep.subr.mxu0 0.0
      %696 = vmatpush1.msra.mxu0 0.0
      %697 = vmatprep.subr.mxu0 0.0
      %698 = vmatpush1.msra.mxu0 0.0
      %699 = vmatprep.subr.mxu0 0.0
      %700 = vmatpush1.msra.mxu0 0.0
      %701 = vmatprep.subr.mxu0 0.0
      %702 = vmatpush1.msra.mxu0 0.0
      %703 = vmatprep.subr.mxu0 0.0
      %704 = vmatpush1.msra.mxu0 0.0
      %705 = vmatprep.subr.mxu0 0.0
      %706 = vmatpush1.msra.mxu0 0.0
      %707 = vmatprep.subr.mxu0 0.0
      %708 = vmatpush1.msra.mxu0 0.0
      %709 = vmatprep.subr.mxu0 0.0
      %710 = vmatpush1.msra.mxu0 0.0
      %711 = vmatprep.subr.mxu0 0.0
      %712 = vmatpush1.msra.mxu0 0.0
      %713 = vmatprep.subr.mxu0 0.0
      %714 = vmatpush1.msra.mxu0 0.0
      %715 = vmatprep.subr.mxu0 0.0
      %716 = vmatpush1.msra.mxu0 0.0
      %717 = vmatprep.subr.mxu0 0.0
      %718 = vmatpush1.msra.mxu0 0.0
      %719 = vmatprep.subr.mxu0 0.0
      %720 = vmatpush1.msra.mxu0 0.0
      %721 = vmatprep.subr.mxu0 0.0
      %722 = vmatpush1.msra.mxu0 0.0
      %723 = vmatprep.subr.mxu0 0.0
      %724 = vmatpush1.msra.mxu0 0.0
      %725 = vmatprep.subr.mxu0 0.0
      %726 = vmatpush1.msra.mxu0 0.0
      %727 = vmatprep.subr.mxu0 0.0
      %728 = vmatpush1.msra.mxu0 0.0
      %729 = vmatprep.subr.mxu0 0.0
      %730 = vmatpush1.msra.mxu0 0.0
      %731 = vmatprep.subr.mxu0 0.0
      %732 = vmatpush1.msra.mxu0 0.0
      %733 = vmatprep.subr.mxu0 0.0
      %734 = vmatpush1.msra.mxu0 0.0
      %735 = vmatprep.subr.mxu0 0.0
      %736 = vmatpush1.msra.mxu0 0.0
      %737 = vmatprep.subr.mxu0 0.0
      %738 = vmatpush1.msra.mxu0 0.0
      %739 = vmatprep.subr.mxu0 0.0
      %740 = vmatpush1.msra.mxu0 0.0
      %741 = vmatprep.mubr.f32.mxu0 0.0
      %742 = vmatmul.mubr.f32.gmra.mrb[0].mxu0 %v666
      %v743 = vpop.f32.mrb[0].mxu0
      %v744 = vadd.f32 0.0, %v743
      %v745 = vpop.f32.mrb[0].mxu0
      %v746 = vadd.f32 0.0, %v745
      %747 = vmatprep.mubr.f32.mxu0 0.0
      %748 = vmatmul.mubr.f32.gmra.mrb[0].mxu0 %v669
      %v749 = vpop.f32.mrb[0].mxu0
      %v750 = vadd.f32 0.0, %v749
      %v751 = vpop.f32.mrb[0].mxu0
      %v752 = vadd.f32 0.0, %v751
      %753 = vmatprep.mubr.f32.mxu0 0.0
      %754 = vmatmul.mubr.f32.gmra.mrb[0].mxu0 %v672
      %v755 = vpop.f32.mrb[0].mxu0
      %v756 = vadd.f32 0.0, %v755
      %v757 = vpop.f32.mrb[0].mxu0
      %v758 = vadd.f32 0.0, %v757
      %759 = vmatprep.mubr.f32.mxu0 0.0
      %760 = vmatmul.mubr.f32.gmra.mrb[0].mxu0 %v675
      %v761 = vpop.f32.mrb[0].mxu0
      %v762 = vadd.f32 0.0, %v761
      %v763 = vpop.f32.mrb[0].mxu0
      %v764 = vadd.f32 0.0, %v763
      %765 = vdwg.mxu0
      %766 = vmatprep.subr.mxu0 %v423
      %767 = vmatpush1.msra.mxu0 %v422
      %768 = vmatprep.subr.mxu0 %v427
      %769 = vmatpush1.msra.mxu0 %v426
      %770 = vmatprep.subr.mxu0 %v431
      %771 = vmatpush1.msra.mxu0 %v430
      %772 = vmatprep.subr.mxu0 %v435
      %773 = vmatpush1.msra.mxu0 %v434
      %774 = vmatprep.subr.mxu0 0.0
      %775 = vmatpush1.msra.mxu0 0.0
      %776 = vmatprep.subr.mxu0 0.0
      %777 = vmatpush1.msra.mxu0 0.0
      %778 = vmatprep.subr.mxu0 0.0
      %779 = vmatpush1.msra.mxu0 0.0
      %780 = vmatprep.subr.mxu0 0.0
      %781 = vmatpush1.msra.mxu0 0.0
      %782 = vmatprep.subr.mxu0 0.0
      %783 = vmatpush1.msra.mxu0 0.0
      %784 = vmatprep.subr.mxu0 0.0
      %785 = vmatpush1.msra.mxu0 0.0
      %786 = vmatprep.subr.mxu0 0.0
      %787 = vmatpush1.msra.mxu0 0.0
      %788 = vmatprep.subr.mxu0 0.0
      %789 = vmatpush1.msra.mxu0 0.0
      %790 = vmatprep.subr.mxu0 0.0
      %791 = vmatpush1.msra.mxu0 0.0
      %792 = vmatprep.subr.mxu0 0.0
      %793 = vmatpush1.msra.mxu0 0.0
      %794 = vmatprep.subr.mxu0 0.0
      %795 = vmatpush1.msra.mxu0 0.0
      %796 = vmatprep.subr.mxu0 0.0
      %797 = vmatpush1.msra.mxu0 0.0
      %798 = vmatprep.subr.mxu0 0.0
      %799 = vmatpush1.msra.mxu0 0.0
      %800 = vmatprep.subr.mxu0 0.0
      %801 = vmatpush1.msra.mxu0 0.0
      %802 = vmatprep.subr.mxu0 0.0
      %803 = vmatpush1.msra.mxu0 0.0
      %804 = vmatprep.subr.mxu0 0.0
      %805 = vmatpush1.msra.mxu0 0.0
      %806 = vmatprep.subr.mxu0 0.0
      %807 = vmatpush1.msra.mxu0 0.0
      %808 = vmatprep.subr.mxu0 0.0
      %809 = vmatpush1.msra.mxu0 0.0
      %810 = vmatprep.subr.mxu0 0.0
      %811 = vmatpush1.msra.mxu0 0.0
      %812 = vmatprep.subr.mxu0 0.0
      %813 = vmatpush1.msra.mxu0 0.0
      %814 = vmatprep.subr.mxu0 0.0
      %815 = vmatpush1.msra.mxu0 0.0
      %816 = vmatprep.subr.mxu0 0.0
      %817 = vmatpush1.msra.mxu0 0.0
      %818 = vmatprep.subr.mxu0 0.0
      %819 = vmatpush1.msra.mxu0 0.0
      %820 = vmatprep.subr.mxu0 0.0
      %821 = vmatpush1.msra.mxu0 0.0
      %822 = vmatprep.subr.mxu0 0.0
      %823 = vmatpush1.msra.mxu0 0.0
      %824 = vmatprep.subr.mxu0 0.0
      %825 = vmatpush1.msra.mxu0 0.0
      %826 = vmatprep.subr.mxu0 0.0
      %827 = vmatpush1.msra.mxu0 0.0
      %828 = vmatprep.subr.mxu0 0.0
      %829 = vmatpush1.msra.mxu0 0.0
      %830 = vmatprep.mubr.f32.mxu0 0.0
      %831 = vmatmul.mubr.f32.gmra.mrb[0].mxu0 %v666
      %v832 = vpop.f32.mrb[0].mxu0
      %v833 = vadd.f32 0.0, %v832
      %v834 = vpop.f32.mrb[0].mxu0
      %v835 = vadd.f32 0.0, %v834
      %836 = vmatprep.mubr.f32.mxu0 0.0
      %837 = vmatmul.mubr.f32.gmra.mrb[0].mxu0 %v669
      %v838 = vpop.f32.mrb[0].mxu0
      %v839 = vadd.f32 0.0, %v838
      %v840 = vpop.f32.mrb[0].mxu0
      %v841 = vadd.f32 0.0, %v840
      %842 = vmatprep.mubr.f32.mxu0 0.0
      %843 = vmatmul.mubr.f32.gmra.mrb[0].mxu0 %v672
      %v844 = vpop.f32.mrb[0].mxu0
      %v845 = vadd.f32 0.0, %v844
      %v846 = vpop.f32.mrb[0].mxu0
      %v847 = vadd.f32 0.0, %v846
      %848 = vmatprep.mubr.f32.mxu0 0.0
      %849 = vmatmul.mubr.f32.gmra.mrb[0].mxu0 %v675
      %v850 = vpop.f32.mrb[0].mxu0
      %v851 = vadd.f32 0.0, %v850
      %v852 = vpop.f32.mrb[0].mxu0
      %v853 = vadd.f32 0.0, %v852
      %854 = vdwg.mxu0
      %v855 = vmul.f32 %v636, %v744
      %v856 = vmul.f32 %v637, %v746
      %v857 = vmul.f32 %v638, %v833
      %v858 = vmul.f32 %v639, %v835
      %v859 = vmul.f32 %v640, %v750
      %v860 = vmul.f32 %v641, %v752
      %v861 = vmul.f32 %v642, %v839
      %v862 = vmul.f32 %v643, %v841
      %v863 = vmul.f32 %v644, %v756
      %v864 = vmul.f32 %v645, %v758
      %v865 = vmul.f32 %v646, %v845
      %v866 = vmul.f32 %v647, %v847
      %v867 = vmul.f32 %v648, %v762
      %v868 = vmul.f32 %v649, %v764
      %v869 = vmul.f32 %v650, %v851
      %v870 = vmul.f32 %v651, %v853
      %v871 = vadd.f32 %v855, %v859
      %v872 = vadd.f32 %v871, %v863
      %v873 = vadd.f32 %v872, %v867
      %v874 = vrot.slane %v873, 4
      %v875 = vadd.f32 %v873, %v874
      %v876 = vrot.slane %v875, 2
      %v877 = vadd.f32 %v875, %v876
      %v878 = vrot.slane %v877, 1
      %v879 = vadd.f32 %v877, %v878
      %v880 = vadd.f32 %v856, %v860
      %v881 = vadd.f32 %v880, %v864
      %v882 = vadd.f32 %v881, %v868
      %v883 = vrot.slane %v882, 4
      %v884 = vadd.f32 %v882, %v883
      %v885 = vrot.slane %v884, 2
      %v886 = vadd.f32 %v884, %v885
      %v887 = vrot.slane %v886, 1
      %v888 = vadd.f32 %v886, %v887
      %v889 = vadd.f32 %v857, %v861
      %v890 = vadd.f32 %v889, %v865
      %v891 = vadd.f32 %v890, %v869
      %v892 = vrot.slane %v891, 4
      %v893 = vadd.f32 %v891, %v892
      %v894 = vrot.slane %v893, 2
      %v895 = vadd.f32 %v893, %v894
      %v896 = vrot.slane %v895, 1
      %v897 = vadd.f32 %v895, %v896
      %v898 = vadd.f32 %v858, %v862
      %v899 = vadd.f32 %v898, %v866
      %v900 = vadd.f32 %v899, %v870
      %v901 = vrot.slane %v900, 4
      %v902 = vadd.f32 %v900, %v901
      %v903 = vrot.slane %v902, 2
      %v904 = vadd.f32 %v902, %v903
      %v905 = vrot.slane %v904, 1
      %v906 = vadd.f32 %v904, %v905
      %v908 = vsel %vm664, %v656, 0
      %v911 = vsel %vm664, %v657, 0
      %v914 = vsel %vm664, %v658, 0
      %v917 = vsel %vm664, %v659, 0
      %919 = vmatprep.subr.mxu0 %v421
      %920 = vmatpush1.msra.mxu0 %v420
      %921 = vmatprep.subr.mxu0 %v425
      %922 = vmatpush1.msra.mxu0 %v424
      %923 = vmatprep.subr.mxu0 %v429
      %924 = vmatpush1.msra.mxu0 %v428
      %925 = vmatprep.subr.mxu0 %v433
      %926 = vmatpush1.msra.mxu0 %v432
      %927 = vmatprep.subr.mxu0 0.0
      %928 = vmatpush1.msra.mxu0 0.0
      %929 = vmatprep.subr.mxu0 0.0
      %930 = vmatpush1.msra.mxu0 0.0
      %931 = vmatprep.subr.mxu0 0.0
      %932 = vmatpush1.msra.mxu0 0.0
      %933 = vmatprep.subr.mxu0 0.0
      %934 = vmatpush1.msra.mxu0 0.0
      %935 = vmatprep.subr.mxu0 0.0
      %936 = vmatpush1.msra.mxu0 0.0
      %937 = vmatprep.subr.mxu0 0.0
      %938 = vmatpush1.msra.mxu0 0.0
      %939 = vmatprep.subr.mxu0 0.0
      %940 = vmatpush1.msra.mxu0 0.0
      %941 = vmatprep.subr.mxu0 0.0
      %942 = vmatpush1.msra.mxu0 0.0
      %943 = vmatprep.subr.mxu0 0.0
      %944 = vmatpush1.msra.mxu0 0.0
      %945 = vmatprep.subr.mxu0 0.0
      %946 = vmatpush1.msra.mxu0 0.0
      %947 = vmatprep.subr.mxu0 0.0
      %948 = vmatpush1.msra.mxu0 0.0
      %949 = vmatprep.subr.mxu0 0.0
      %950 = vmatpush1.msra.mxu0 0.0
      %951 = vmatprep.subr.mxu0 0.0
      %952 = vmatpush1.msra.mxu0 0.0
      %953 = vmatprep.subr.mxu0 0.0
      %954 = vmatpush1.msra.mxu0 0.0
      %955 = vmatprep.subr.mxu0 0.0
      %956 = vmatpush1.msra.mxu0 0.0
      %957 = vmatprep.subr.mxu0 0.0
      %958 = vmatpush1.msra.mxu0 0.0
      %959 = vmatprep.subr.mxu0 0.0
      %960 = vmatpush1.msra.mxu0 0.0
      %961 = vmatprep.subr.mxu0 0.0
      %962 = vmatpush1.msra.mxu0 0.0
      %963 = vmatprep.subr.mxu0 0.0
      %964 = vmatpush1.msra.mxu0 0.0
      %965 = vmatprep.subr.mxu0 0.0
      %966 = vmatpush1.msra.mxu0 0.0
      %967 = vmatprep.subr.mxu0 0.0
      %968 = vmatpush1.msra.mxu0 0.0
      %969 = vmatprep.subr.mxu0 0.0
      %970 = vmatpush1.msra.mxu0 0.0
      %971 = vmatprep.subr.mxu0 0.0
      %972 = vmatpush1.msra.mxu0 0.0
      %973 = vmatprep.subr.mxu0 0.0
      %974 = vmatpush1.msra.mxu0 0.0
      %975 = vmatprep.subr.mxu0 0.0
      %976 = vmatpush1.msra.mxu0 0.0
      %977 = vmatprep.subr.mxu0 0.0
      %978 = vmatpush1.msra.mxu0 0.0
      %979 = vmatprep.subr.mxu0 0.0
      %980 = vmatpush1.msra.mxu0 0.0
      %981 = vmatprep.subr.mxu0 0.0
      %982 = vmatpush1.msra.mxu0 0.0
      %983 = vmatprep.mubr.f32.mxu0 0.0
      %984 = vmatmul.mubr.f32.gmra.mrb[0].mxu0 %v908
      %v985 = vpop.f32.mrb[0].mxu0
      %v986 = vadd.f32 0.0, %v985
      %v987 = vpop.f32.mrb[0].mxu0
      %v988 = vadd.f32 0.0, %v987
      %989 = vmatprep.mubr.f32.mxu0 0.0
      %990 = vmatmul.mubr.f32.gmra.mrb[0].mxu0 %v911
      %v991 = vpop.f32.mrb[0].mxu0
      %v992 = vadd.f32 0.0, %v991
      %v993 = vpop.f32.mrb[0].mxu0
      %v994 = vadd.f32 0.0, %v993
      %995 = vmatprep.mubr.f32.mxu0 0.0
      %996 = vmatmul.mubr.f32.gmra.mrb[0].mxu0 %v914
      %v997 = vpop.f32.mrb[0].mxu0
      %v998 = vadd.f32 0.0, %v997
      %v999 = vpop.f32.mrb[0].mxu0
      %v1000 = vadd.f32 0.0, %v999
      %1001 = vmatprep.mubr.f32.mxu0 0.0
      %1002 = vmatmul.mubr.f32.gmra.mrb[0].mxu0 %v917
      %v1003 = vpop.f32.mrb[0].mxu0
      %v1004 = vadd.f32 0.0, %v1003
      %v1005 = vpop.f32.mrb[0].mxu0
      %v1006 = vadd.f32 0.0, %v1005
      %1007 = vdwg.mxu0
      %1008 = vmatprep.subr.mxu0 %v423
      %1009 = vmatpush1.msra.mxu0 %v422
      %1010 = vmatprep.subr.mxu0 %v427
      %1011 = vmatpush1.msra.mxu0 %v426
      %1012 = vmatprep.subr.mxu0 %v431
      %1013 = vmatpush1.msra.mxu0 %v430
      %1014 = vmatprep.subr.mxu0 %v435
      %1015 = vmatpush1.msra.mxu0 %v434
      %1016 = vmatprep.subr.mxu0 0.0
      %1017 = vmatpush1.msra.mxu0 0.0
      %1018 = vmatprep.subr.mxu0 0.0
      %1019 = vmatpush1.msra.mxu0 0.0
      %1020 = vmatprep.subr.mxu0 0.0
      %1021 = vmatpush1.msra.mxu0 0.0
      %1022 = vmatprep.subr.mxu0 0.0
      %1023 = vmatpush1.msra.mxu0 0.0
      %1024 = vmatprep.subr.mxu0 0.0
      %1025 = vmatpush1.msra.mxu0 0.0
      %1026 = vmatprep.subr.mxu0 0.0
      %1027 = vmatpush1.msra.mxu0 0.0
      %1028 = vmatprep.subr.mxu0 0.0
      %1029 = vmatpush1.msra.mxu0 0.0
      %1030 = vmatprep.subr.mxu0 0.0
      %1031 = vmatpush1.msra.mxu0 0.0
      %1032 = vmatprep.subr.mxu0 0.0
      %1033 = vmatpush1.msra.mxu0 0.0
      %1034 = vmatprep.subr.mxu0 0.0
      %1035 = vmatpush1.msra.mxu0 0.0
      %1036 = vmatprep.subr.mxu0 0.0
      %1037 = vmatpush1.msra.mxu0 0.0
      %1038 = vmatprep.subr.mxu0 0.0
      %1039 = vmatpush1.msra.mxu0 0.0
      %1040 = vmatprep.subr.mxu0 0.0
      %1041 = vmatpush1.msra.mxu0 0.0
      %1042 = vmatprep.subr.mxu0 0.0
      %1043 = vmatpush1.msra.mxu0 0.0
      %1044 = vmatprep.subr.mxu0 0.0
      %1045 = vmatpush1.msra.mxu0 0.0
      %1046 = vmatprep.subr.mxu0 0.0
      %1047 = vmatpush1.msra.mxu0 0.0
      %1048 = vmatprep.subr.mxu0 0.0
      %1049 = vmatpush1.msra.mxu0 0.0
      %1050 = vmatprep.subr.mxu0 0.0
      %1051 = vmatpush1.msra.mxu0 0.0
      %1052 = vmatprep.subr.mxu0 0.0
      %1053 = vmatpush1.msra.mxu0 0.0
      %1054 = vmatprep.subr.mxu0 0.0
      %1055 = vmatpush1.msra.mxu0 0.0
      %1056 = vmatprep.subr.mxu0 0.0
      %1057 = vmatpush1.msra.mxu0 0.0
      %1058 = vmatprep.subr.mxu0 0.0
      %1059 = vmatpush1.msra.mxu0 0.0
      %1060 = vmatprep.subr.mxu0 0.0
      %1061 = vmatpush1.msra.mxu0 0.0
      %1062 = vmatprep.subr.mxu0 0.0
      %1063 = vmatpush1.msra.mxu0 0.0
      %1064 = vmatprep.subr.mxu0 0.0
      %1065 = vmatpush1.msra.mxu0 0.0
      %1066 = vmatprep.subr.mxu0 0.0
      %1067 = vmatpush1.msra.mxu0 0.0
      %1068 = vmatprep.subr.mxu0 0.0
      %1069 = vmatpush1.msra.mxu0 0.0
      %1070 = vmatprep.subr.mxu0 0.0
      %1071 = vmatpush1.msra.mxu0 0.0
      %1072 = vmatprep.mubr.f32.mxu0 0.0
      %1073 = vmatmul.mubr.f32.gmra.mrb[0].mxu0 %v908
      %v1074 = vpop.f32.mrb[0].mxu0
      %v1075 = vadd.f32 0.0, %v1074
      %v1076 = vpop.f32.mrb[0].mxu0
      %v1077 = vadd.f32 0.0, %v1076
      %1078 = vmatprep.mubr.f32.mxu0 0.0
      %1079 = vmatmul.mubr.f32.gmra.mrb[0].mxu0 %v911
      %v1080 = vpop.f32.mrb[0].mxu0
      %v1081 = vadd.f32 0.0, %v1080
      %v1082 = vpop.f32.mrb[0].mxu0
      %v1083 = vadd.f32 0.0, %v1082
      %1084 = vmatprep.mubr.f32.mxu0 0.0
      %1085 = vmatmul.mubr.f32.gmra.mrb[0].mxu0 %v914
      %v1086 = vpop.f32.mrb[0].mxu0
      %v1087 = vadd.f32 0.0, %v1086
      %v1088 = vpop.f32.mrb[0].mxu0
      %v1089 = vadd.f32 0.0, %v1088
      %1090 = vmatprep.mubr.f32.mxu0 0.0
      %1091 = vmatmul.mubr.f32.gmra.mrb[0].mxu0 %v917
      %v1092 = vpop.f32.mrb[0].mxu0
      %v1093 = vadd.f32 0.0, %v1092
      %v1094 = vpop.f32.mrb[0].mxu0
      %v1095 = vadd.f32 0.0, %v1094
      %1096 = vdwg.mxu0
      %v1097 = vmul.f32 %v636, %v986
      %v1098 = vmul.f32 %v637, %v988
      %v1099 = vmul.f32 %v638, %v1075
      %v1100 = vmul.f32 %v639, %v1077
      %v1101 = vmul.f32 %v640, %v992
      %v1102 = vmul.f32 %v641, %v994
      %v1103 = vmul.f32 %v642, %v1081
      %v1104 = vmul.f32 %v643, %v1083
      %v1105 = vmul.f32 %v644, %v998
      %v1106 = vmul.f32 %v645, %v1000
      %v1107 = vmul.f32 %v646, %v1087
      %v1108 = vmul.f32 %v647, %v1089
      %v1109 = vmul.f32 %v648, %v1004
      %v1110 = vmul.f32 %v649, %v1006
      %v1111 = vmul.f32 %v650, %v1093
      %v1112 = vmul.f32 %v651, %v1095
      %v1113 = vadd.f32 %v1097, %v1101
      %v1114 = vadd.f32 %v1113, %v1105
      %v1115 = vadd.f32 %v1114, %v1109
      %v1116 = vrot.slane %v1115, 4
      %v1117 = vadd.f32 %v1115, %v1116
      %v1118 = vrot.slane %v1117, 2
      %v1119 = vadd.f32 %v1117, %v1118
      %v1120 = vrot.slane %v1119, 1
      %v1121 = vadd.f32 %v1119, %v1120
      %v1122 = vadd.f32 %v1098, %v1102
      %v1123 = vadd.f32 %v1122, %v1106
      %v1124 = vadd.f32 %v1123, %v1110
      %v1125 = vrot.slane %v1124, 4
      %v1126 = vadd.f32 %v1124, %v1125
      %v1127 = vrot.slane %v1126, 2
      %v1128 = vadd.f32 %v1126, %v1127
      %v1129 = vrot.slane %v1128, 1
      %v1130 = vadd.f32 %v1128, %v1129
      %v1131 = vadd.f32 %v1099, %v1103
      %v1132 = vadd.f32 %v1131, %v1107
      %v1133 = vadd.f32 %v1132, %v1111
      %v1134 = vrot.slane %v1133, 4
      %v1135 = vadd.f32 %v1133, %v1134
      %v1136 = vrot.slane %v1135, 2
      %v1137 = vadd.f32 %v1135, %v1136
      %v1138 = vrot.slane %v1137, 1
      %v1139 = vadd.f32 %v1137, %v1138
      %v1140 = vadd.f32 %v1100, %v1104
      %v1141 = vadd.f32 %v1140, %v1108
      %v1142 = vadd.f32 %v1141, %v1112
      %v1143 = vrot.slane %v1142, 4
      %v1144 = vadd.f32 %v1142, %v1143
      %v1145 = vrot.slane %v1144, 2
      %v1146 = vadd.f32 %v1144, %v1145
      %v1147 = vrot.slane %v1146, 1
      %v1148 = vadd.f32 %v1146, %v1147
      %v1150 = vsel %vm664, %v660, 0
      %v1153 = vsel %vm664, %v661, 0
      %v1156 = vsel %vm664, %v662, 0
      %v1159 = vsel %vm664, %v663, 0
      %1161 = vmatprep.subr.mxu0 %v421
      %1162 = vmatpush1.msra.mxu0 %v420
      %1163 = vmatprep.subr.mxu0 %v425
      %1164 = vmatpush1.msra.mxu0 %v424
      %1165 = vmatprep.subr.mxu0 %v429
      %1166 = vmatpush1.msra.mxu0 %v428
      %1167 = vmatprep.subr.mxu0 %v433
      %1168 = vmatpush1.msra.mxu0 %v432
      %1169 = vmatprep.subr.mxu0 0.0
      %1170 = vmatpush1.msra.mxu0 0.0
      %1171 = vmatprep.subr.mxu0 0.0
      %1172 = vmatpush1.msra.mxu0 0.0
      %1173 = vmatprep.subr.mxu0 0.0
      %1174 = vmatpush1.msra.mxu0 0.0
      %1175 = vmatprep.subr.mxu0 0.0
      %1176 = vmatpush1.msra.mxu0 0.0
      %1177 = vmatprep.subr.mxu0 0.0
      %1178 = vmatpush1.msra.mxu0 0.0
      %1179 = vmatprep.subr.mxu0 0.0
      %1180 = vmatpush1.msra.mxu0 0.0
      %1181 = vmatprep.subr.mxu0 0.0
      %1182 = vmatpush1.msra.mxu0 0.0
      %1183 = vmatprep.subr.mxu0 0.0
      %1184 = vmatpush1.msra.mxu0 0.0
      %1185 = vmatprep.subr.mxu0 0.0
      %1186 = vmatpush1.msra.mxu0 0.0
      %1187 = vmatprep.subr.mxu0 0.0
      %1188 = vmatpush1.msra.mxu0 0.0
      %1189 = vmatprep.subr.mxu0 0.0
      %1190 = vmatpush1.msra.mxu0 0.0
      %1191 = vmatprep.subr.mxu0 0.0
      %1192 = vmatpush1.msra.mxu0 0.0
      %1193 = vmatprep.subr.mxu0 0.0
      %1194 = vmatpush1.msra.mxu0 0.0
      %1195 = vmatprep.subr.mxu0 0.0
      %1196 = vmatpush1.msra.mxu0 0.0
      %1197 = vmatprep.subr.mxu0 0.0
      %1198 = vmatpush1.msra.mxu0 0.0
      %1199 = vmatprep.subr.mxu0 0.0
      %1200 = vmatpush1.msra.mxu0 0.0
      %1201 = vmatprep.subr.mxu0 0.0
      %1202 = vmatpush1.msra.mxu0 0.0
      %1203 = vmatprep.subr.mxu0 0.0
      %1204 = vmatpush1.msra.mxu0 0.0
      %1205 = vmatprep.subr.mxu0 0.0
      %1206 = vmatpush1.msra.mxu0 0.0
      %1207 = vmatprep.subr.mxu0 0.0
      %1208 = vmatpush1.msra.mxu0 0.0
      %1209 = vmatprep.subr.mxu0 0.0
      %1210 = vmatpush1.msra.mxu0 0.0
      %1211 = vmatprep.subr.mxu0 0.0
      %1212 = vmatpush1.msra.mxu0 0.0
      %1213 = vmatprep.subr.mxu0 0.0
      %1214 = vmatpush1.msra.mxu0 0.0
      %1215 = vmatprep.subr.mxu0 0.0
      %1216 = vmatpush1.msra.mxu0 0.0
      %1217 = vmatprep.subr.mxu0 0.0
      %1218 = vmatpush1.msra.mxu0 0.0
      %1219 = vmatprep.subr.mxu0 0.0
      %1220 = vmatpush1.msra.mxu0 0.0
      %1221 = vmatprep.subr.mxu0 0.0
      %1222 = vmatpush1.msra.mxu0 0.0
      %1223 = vmatprep.subr.mxu0 0.0
      %1224 = vmatpush1.msra.mxu0 0.0
      %1225 = vmatprep.mubr.f32.mxu0 0.0
      %1226 = vmatmul.mubr.f32.gmra.mrb[0].mxu0 %v1150
      %v1227 = vpop.f32.mrb[0].mxu0
      %v1228 = vadd.f32 0.0, %v1227
      %v1229 = vpop.f32.mrb[0].mxu0
      %v1230 = vadd.f32 0.0, %v1229
      %1231 = vmatprep.mubr.f32.mxu0 0.0
      %1232 = vmatmul.mubr.f32.gmra.mrb[0].mxu0 %v1153
      %v1233 = vpop.f32.mrb[0].mxu0
      %v1234 = vadd.f32 0.0, %v1233
      %v1235 = vpop.f32.mrb[0].mxu0
      %v1236 = vadd.f32 0.0, %v1235
      %1237 = vmatprep.mubr.f32.mxu0 0.0
      %1238 = vmatmul.mubr.f32.gmra.mrb[0].mxu0 %v1156
      %v1239 = vpop.f32.mrb[0].mxu0
      %v1240 = vadd.f32 0.0, %v1239
      %v1241 = vpop.f32.mrb[0].mxu0
      %v1242 = vadd.f32 0.0, %v1241
      %1243 = vmatprep.mubr.f32.mxu0 0.0
      %1244 = vmatmul.mubr.f32.gmra.mrb[0].mxu0 %v1159
      %v1245 = vpop.f32.mrb[0].mxu0
      %v1246 = vadd.f32 0.0, %v1245
      %v1247 = vpop.f32.mrb[0].mxu0
      %v1248 = vadd.f32 0.0, %v1247
      %1249 = vdwg.mxu0
      %1250 = vmatprep.subr.mxu0 %v423
      %1251 = vmatpush1.msra.mxu0 %v422
      %1252 = vmatprep.subr.mxu0 %v427
      %1253 = vmatpush1.msra.mxu0 %v426
      %1254 = vmatprep.subr.mxu0 %v431
      %1255 = vmatpush1.msra.mxu0 %v430
      %1256 = vmatprep.subr.mxu0 %v435
      %1257 = vmatpush1.msra.mxu0 %v434
      %1258 = vmatprep.subr.mxu0 0.0
      %1259 = vmatpush1.msra.mxu0 0.0
      %1260 = vmatprep.subr.mxu0 0.0
      %1261 = vmatpush1.msra.mxu0 0.0
      %1262 = vmatprep.subr.mxu0 0.0
      %1263 = vmatpush1.msra.mxu0 0.0
      %1264 = vmatprep.subr.mxu0 0.0
      %1265 = vmatpush1.msra.mxu0 0.0
      %1266 = vmatprep.subr.mxu0 0.0
      %1267 = vmatpush1.msra.mxu0 0.0
      %1268 = vmatprep.subr.mxu0 0.0
      %1269 = vmatpush1.msra.mxu0 0.0
      %1270 = vmatprep.subr.mxu0 0.0
      %1271 = vmatpush1.msra.mxu0 0.0
      %1272 = vmatprep.subr.mxu0 0.0
      %1273 = vmatpush1.msra.mxu0 0.0
      %1274 = vmatprep.subr.mxu0 0.0
      %1275 = vmatpush1.msra.mxu0 0.0
      %1276 = vmatprep.subr.mxu0 0.0
      %1277 = vmatpush1.msra.mxu0 0.0
      %1278 = vmatprep.subr.mxu0 0.0
      %1279 = vmatpush1.msra.mxu0 0.0
      %1280 = vmatprep.subr.mxu0 0.0
      %1281 = vmatpush1.msra.mxu0 0.0
      %1282 = vmatprep.subr.mxu0 0.0
      %1283 = vmatpush1.msra.mxu0 0.0
      %1284 = vmatprep.subr.mxu0 0.0
      %1285 = vmatpush1.msra.mxu0 0.0
      %1286 = vmatprep.subr.mxu0 0.0
      %1287 = vmatpush1.msra.mxu0 0.0
      %1288 = vmatprep.subr.mxu0 0.0
      %1289 = vmatpush1.msra.mxu0 0.0
      %1290 = vmatprep.subr.mxu0 0.0
      %1291 = vmatpush1.msra.mxu0 0.0
      %1292 = vmatprep.subr.mxu0 0.0
      %1293 = vmatpush1.msra.mxu0 0.0
      %1294 = vmatprep.subr.mxu0 0.0
      %1295 = vmatpush1.msra.mxu0 0.0
      %1296 = vmatprep.subr.mxu0 0.0
      %1297 = vmatpush1.msra.mxu0 0.0
      %1298 = vmatprep.subr.mxu0 0.0
      %1299 = vmatpush1.msra.mxu0 0.0
      %1300 = vmatprep.subr.mxu0 0.0
      %1301 = vmatpush1.msra.mxu0 0.0
      %1302 = vmatprep.subr.mxu0 0.0
      %1303 = vmatpush1.msra.mxu0 0.0
      %1304 = vmatprep.subr.mxu0 0.0
      %1305 = vmatpush1.msra.mxu0 0.0
      %1306 = vmatprep.subr.mxu0 0.0
      %1307 = vmatpush1.msra.mxu0 0.0
      %1308 = vmatprep.subr.mxu0 0.0
      %1309 = vmatpush1.msra.mxu0 0.0
      %1310 = vmatprep.subr.mxu0 0.0
      %1311 = vmatpush1.msra.mxu0 0.0
      %1312 = vmatprep.subr.mxu0 0.0
      %1313 = vmatpush1.msra.mxu0 0.0
      %1314 = vmatprep.mubr.f32.mxu0 0.0
      %1315 = vmatmul.mubr.f32.gmra.mrb[0].mxu0 %v1150
      %v1316 = vpop.f32.mrb[0].mxu0
      %v1317 = vadd.f32 0.0, %v1316
      %v1318 = vpop.f32.mrb[0].mxu0
      %v1319 = vadd.f32 0.0, %v1318
      %1320 = vmatprep.mubr.f32.mxu0 0.0
      %1321 = vmatmul.mubr.f32.gmra.mrb[0].mxu0 %v1153
      %v1322 = vpop.f32.mrb[0].mxu0
      %v1323 = vadd.f32 0.0, %v1322
      %v1324 = vpop.f32.mrb[0].mxu0
      %v1325 = vadd.f32 0.0, %v1324
      %1326 = vmatprep.mubr.f32.mxu0 0.0
      %1327 = vmatmul.mubr.f32.gmra.mrb[0].mxu0 %v1156
      %v1328 = vpop.f32.mrb[0].mxu0
      %v1329 = vadd.f32 0.0, %v1328
      %v1330 = vpop.f32.mrb[0].mxu0
      %v1331 = vadd.f32 0.0, %v1330
      %1332 = vmatprep.mubr.f32.mxu0 0.0
      %1333 = vmatmul.mubr.f32.gmra.mrb[0].mxu0 %v1159
      %v1334 = vpop.f32.mrb[0].mxu0
      %v1335 = vadd.f32 0.0, %v1334
      %v1336 = vpop.f32.mrb[0].mxu0
      %v1337 = vadd.f32 0.0, %v1336
      %1338 = vdwg.mxu0
      %v1339 = vmul.f32 %v636, %v1228
      %v1340 = vmul.f32 %v637, %v1230
      %v1341 = vmul.f32 %v638, %v1317
      %v1342 = vmul.f32 %v639, %v1319
      %v1343 = vmul.f32 %v640, %v1234
      %v1344 = vmul.f32 %v641, %v1236
      %v1345 = vmul.f32 %v642, %v1323
      %v1346 = vmul.f32 %v643, %v1325
      %v1347 = vmul.f32 %v644, %v1240
      %v1348 = vmul.f32 %v645, %v1242
      %v1349 = vmul.f32 %v646, %v1329
      %v1350 = vmul.f32 %v647, %v1331
      %v1351 = vmul.f32 %v648, %v1246
      %v1352 = vmul.f32 %v649, %v1248
      %v1353 = vmul.f32 %v650, %v1335
      %v1354 = vmul.f32 %v651, %v1337
      %v1355 = vadd.f32 %v1339, %v1343
      %v1356 = vadd.f32 %v1355, %v1347
      %v1357 = vadd.f32 %v1356, %v1351
      %v1358 = vrot.slane %v1357, 4
      %v1359 = vadd.f32 %v1357, %v1358
      %v1360 = vrot.slane %v1359, 2
      %v1361 = vadd.f32 %v1359, %v1360
      %v1362 = vrot.slane %v1361, 1
      %v1363 = vadd.f32 %v1361, %v1362
      %v1364 = vadd.f32 %v1340, %v1344
      %v1365 = vadd.f32 %v1364, %v1348
      %v1366 = vadd.f32 %v1365, %v1352
      %v1367 = vrot.slane %v1366, 4
      %v1368 = vadd.f32 %v1366, %v1367
      %v1369 = vrot.slane %v1368, 2
      %v1370 = vadd.f32 %v1368, %v1369
      %v1371 = vrot.slane %v1370, 1
      %v1372 = vadd.f32 %v1370, %v1371
      %v1373 = vadd.f32 %v1341, %v1345
      %v1374 = vadd.f32 %v1373, %v1349
      %v1375 = vadd.f32 %v1374, %v1353
      %v1376 = vrot.slane %v1375, 4
      %v1377 = vadd.f32 %v1375, %v1376
      %v1378 = vrot.slane %v1377, 2
      %v1379 = vadd.f32 %v1377, %v1378
      %v1380 = vrot.slane %v1379, 1
      %v1381 = vadd.f32 %v1379, %v1380
      %v1382 = vadd.f32 %v1342, %v1346
      %v1383 = vadd.f32 %v1382, %v1350
      %v1384 = vadd.f32 %v1383, %v1354
      %v1385 = vrot.slane %v1384, 4
      %v1386 = vadd.f32 %v1384, %v1385
      %v1387 = vrot.slane %v1386, 2
      %v1388 = vadd.f32 %v1386, %v1387
      %v1389 = vrot.slane %v1388, 1
      %v1390 = vadd.f32 %v1388, %v1389
      %vm1391 = vcmask 1040384
      %v1392 = vsel %vm1391, %v879, %v1121
      %v1393 = vsel %vm1391, %v888, %v1130
      %v1394 = vsel %vm1391, %v897, %v1139
      %v1395 = vsel %vm1391, %v906, %v1148
      %vm1396 = vcmask 1041408
      %v1397 = vsel %vm1396, %v1392, %v1363
      %v1398 = vsel %vm1396, %v1393, %v1372
      %v1399 = vsel %vm1396, %v1394, %v1381
      %v1400 = vsel %vm1396, %v1395, %v1390
      %v1405 = vcombine.low %v1397, %v1398
      %v1406 = vcombine.low %v1399, %v1400
      %1409 = vst [vmem:[%s201] sm:$0x77] %v1405
      %1410 = vst [vmem:[%s201 + $0x8] sm:$0x77] %v1406
      %s1411 = smul.u32 4, %s18
      %p1412 = scmp.lt.s32.totalorder %s17, 1
      %s1413 = scalar_select %p1412, %s17, 1
      %p1414 = scmp.lt.s32.totalorder %s1411, 7
      %s1415 = scalar_select %p1414, %s1411, 7
      %s1416 = smul.addr %s1413, 8
      %s1417 = sadd.s32 %s1415, %s1416
      %s1418 = smul.addr %s1417, 4
      %s1419 = scalar_lea.vmem %s2, %s1418
      // Predicated region
      $region29: #{stn_tpn_forward.19} parent=27 // pred_check
        %p1420 = pneg %p99
      $region30: #{stn_tpn_forward.19} parent=27 // pred_check_branch
        %1422 = sbr.rel (%p1420) target = $region32
      $region31: #{stn_tpn_forward.19} parent=27 // pred_region
        %s1423 = smul.u32 4, %s18
      $region32: #{stn_tpn_forward.19} parent=27 // pred_fallthru
        _
    $region28: #{stn_tpn_forward.19} parent=5 // pred_fallthru
      _
    %p1424 = scmp.le.s32.totalorder 2, %s8
    // Predicated region
    $region33: #{stn_tpn_forward.19} parent=5 // pred_check
      %p1425 = pneg %p1424
    $region34: #{stn_tpn_forward.19} parent=5 // pred_check_branch
      %1427 = sbr.rel (%p1425) target = $region36
    $region35: #{stn_tpn_forward.19} parent=5 // pred_region
      %s1428 = ssub.s32 %s8, 2
      // Predicated region
      $region37: #{stn_tpn_forward.19} parent=35 // pred_check
        %p1429 = pneg %p105
      $region38: #{stn_tpn_forward.19} parent=35 // pred_check_branch
        %1431 = sbr.rel (%p1429) target = $region40
      $region39: #{stn_tpn_forward.19} parent=35 // pred_region
        %s1432 = smul.u32 4, %s20
        %p1433 = scmp.lt.s32.totalorder %s19, 1
        %s1434 = scalar_select %p1433, %s19, 1
        %p1435 = scmp.lt.s32.totalorder %s1432, 7
        %s1436 = scalar_select %p1435, %s1432, 7
        %s1437 = smul.addr %s1434, 8
        %s1438 = sadd.s32 %s1436, %s1437
        %s1439 = smul.addr %s1438, 4
        %s1440 = scalar_lea.vmem %s2, %s1439
      $region40: #{stn_tpn_forward.19} parent=35 // pred_fallthru
        _
    $region36: #{stn_tpn_forward.19} parent=5 // pred_fallthru
      _
  $region6: #{stn_tpn_forward.19} parent=0 // loop_footer
    %s12 = sadd.s32 1, %s8
  $region7: #{stn_tpn_forward.19} parent=0 // loop_footer_branch
    %7 = sbr.rel target = $region3
  $region8: #{stn_tpn_forward.19} parent=0 // loop_exit
    _

</llo_original>
